<compile_context>
chip_gen: v6e
topology: v6e:2x2x1
jax: 0.10.0
libtpu: 0.0.40
codegen_flags: <defaults>
</compile_context>

<pallas_src>
from functools import partial

import jax
import jax.numpy as jnp
from jax import lax
from jax.experimental import pallas as pl
from jax.experimental.pallas import tpu as pltpu


HP = 128       # per-direction hidden padding (one 128-lane block per gate / per h)
GP = 4 * HP    # padded gate width per direction: [ i | f | g | o ], each 128 lanes


# ---------------------------------------------------------------------------
# In-kernel helpers (traced inline)
# ---------------------------------------------------------------------------
def _cell(t_act, c):
    """LSTM cell from t_act = tanh(pre-activations).

    The 0.5 sigmoid-as-tanh scale is folded into the i/f/o weight columns offline
    (sigmoid(z) = 0.5*tanh(z/2) + 0.5), so recovering i/f/o is a single VPU FMA.
    All slices are 128-lane aligned -> no XLU relayouts on the serial path.
    Padded gate lanes have zero pre-activation -> i=f=o=0.5, g=0 -> c,h stay 0.
    """
    i = t_act[:, 0 * HP:1 * HP] * 0.5 + 0.5
    f = t_act[:, 1 * HP:2 * HP] * 0.5 + 0.5
    g = t_act[:, 2 * HP:3 * HP]
    o = t_act[:, 3 * HP:4 * HP] * 0.5 + 0.5
    c_new = f * c + i * g
    h_new = o * jnp.tanh(c_new)
    return h_new, c_new


# ---------------------------------------------------------------------------
# Fused kernel: grid over layers; scratch carries the layer I/O between steps.
# ---------------------------------------------------------------------------
def _siamese_lstm_kernel(x_ref, wih_ref, whh_ref, b_ref, out_ref,
                         xin_ref, gxf_ref, gxb_ref):
    layer = pl.program_id(0)
    last = pl.num_programs(0) - 1
    TB = xin_ref.shape[0]
    Bp = out_ref.shape[0]
    T = TB // Bp
    f32 = jnp.float32

    # Stage the (padded) embeddings into the persistent layer-I/O buffer once.
    @pl.when(layer == 0)
    def _():
        xin_ref[...] = x_ref[...]

    # ---- Hoisted input projections: one big MXU matmul per direction, with the
    # folded bias added.  Done BEFORE any recurrence store overwrites xin.
    @pl.when(layer < last)          # fwd direction of the last layer is dead work
    def _():
        gxf_ref[...] = (jnp.dot(xin_ref[...], wih_ref[0, 0],
                                preferred_element_type=f32) + b_ref[0, 0])

    gxb_ref[...] = (jnp.dot(xin_ref[...], wih_ref[0, 1],
                            preferred_element_type=f32) + b_ref[0, 1])

    # ---- Forward-direction recurrence (skipped for the last layer: the module
    # only returns h[-1], the backward-direction final hidden state).
    @pl.when(layer < last)
    def _():
        hf = jnp.zeros((Bp, HP), f32)
        cf = jnp.zeros((Bp, HP), f32)
        for t in range(T):                         # small static T -> fully unrolled
            g = gxf_ref[pl.ds(t * Bp, Bp), :] + jnp.dot(
                hf, whh_ref[0, 0], preferred_element_type=f32)   # W_hh streamed from VMEM
            hf, cf = _cell(jnp.tanh(g), cf)        # single EUP tanh over the gate tile
            # ReLU fused; lane-dense (Bp,128) store into next layer's input buffer.
            xin_ref[pl.ds(t * Bp, Bp), pl.ds(0, HP)] = jnp.maximum(hf, 0.0)

    # ---- Backward-direction recurrence (time reversal by indexing, no flips).
    hb = jnp.zeros((Bp, HP), f32)
    cb = jnp.zeros((Bp, HP), f32)
    for t in range(T):
        tt = T - 1 - t
        g = gxb_ref[pl.ds(tt * Bp, Bp), :] + jnp.dot(
            hb, whh_ref[0, 1], preferred_element_type=f32)
        hb, cb = _cell(jnp.tanh(g), cb)
        xin_ref[pl.ds(tt * Bp, Bp), pl.ds(HP, HP)] = jnp.maximum(hb, 0.0)

    @pl.when(layer == last)
    def _():
        out_ref[...] = hb          # h[-1]: backward-direction final hidden state


# ---------------------------------------------------------------------------
# Wrapper
# ---------------------------------------------------------------------------
@partial(jax.jit, static_argnames=("out_dim",))
def siamese_lstm_forward(packed, seq1, seq2, out_dim):
    wih, whh, bias = packed                       # (L,2,in_p,GP), (L,2,HP,GP), (L,2,1,GP)
    n_layers, _, in_p, gp = wih.shape
    B, T, E = seq1.shape

    # Stack the two siamese branches (shared weights) into the batch and pad to a
    # full sublane tile; pad the feature axis to the packed input width.
    B2 = 2 * B
    Bp = max(8, ((B2 + 7) // 8) * 8)
    x = jnp.concatenate([seq1, seq2], axis=0).astype(jnp.float32)      # (2B, T, E)
    x = jnp.pad(x, ((0, Bp - B2), (0, 0), (0, in_p - E)))              # (Bp, T, in_p)
    x = jnp.transpose(x, (1, 0, 2)).reshape(T * Bp, in_p)              # time-major

    out = pl.pallas_call(
        _siamese_lstm_kernel,
        out_shape=jax.ShapeDtypeStruct((Bp, HP), jnp.float32),
        grid=(n_layers,),
        in_specs=[
            pl.BlockSpec((T * Bp, in_p), lambda l: (0, 0)),            # x (stays resident)
            pl.BlockSpec((1, 2, in_p, gp), lambda l: (l, 0, 0, 0)),    # W_ih  per layer
            pl.BlockSpec((1, 2, HP, gp), lambda l: (l, 0, 0, 0)),      # W_hh  per layer
            pl.BlockSpec((1, 2, 1, gp), lambda l: (l, 0, 0, 0)),       # bias  per layer
        ],
        out_specs=pl.BlockSpec((Bp, HP), lambda l: (0, 0)),
        scratch_shapes=[
            pltpu.VMEM((T * Bp, in_p), jnp.float32),   # xin: layer I/O (ReLU'd outputs)
            pltpu.VMEM((T * Bp, GP), jnp.float32),     # gxf: fwd hoisted input projections
            pltpu.VMEM((T * Bp, GP), jnp.float32),     # gxb: bwd hoisted input projections
        ],
        compiler_params=pltpu.CompilerParams(dimension_semantics=("arbitrary",)),
    )(x, wih, whh, bias)

    # TODO(synk): on v7x the fwd/bwd direction chains could be split across the two
    # TensorCores via core_map; at T=8 the per-layer barrier cost likely eats the win.
    return out[:B, :out_dim], out[B:B2, :out_dim]


# ---------------------------------------------------------------------------
# Offline weight repacking (done once, outside the per-call path)
# ---------------------------------------------------------------------------
def pack_params(params):
    """PyTorch-layout LSTM params -> kernel layout.

    * transpose for x @ W^T, fold b_ih + b_hh,
    * pre-scale i/f/o gate columns by 0.5 (sigmoid(z) = 0.5*tanh(z/2) + 0.5),
    * pad each gate to its own 128-lane block (aligned gate slices),
    * place input features at lanes [0,H_prev) (fwd) / [128,128+H_prev) (bwd),
    * pad hidden rows to 128; zero out the dead layer-3 forward direction,
    * stack per layer so the grid streams one layer's weights at a time.
    """
    (l1f, l1b), (l2f, l2b), (l3f, l3b) = params
    e = l1f[0].shape[1]
    h1, h2, h3 = l1f[1].shape[1], l2f[1].shape[1], l3b[1].shape[1]
    assert max(h1, h2, h3) <= HP
    in_p = max(2 * HP, ((e + 127) // 128) * 128)

    def prep_dir(dirp, feat_map):
        w_ih, w_hh, b_ih, b_hh = dirp
        H = w_hh.shape[1]
        scale = jnp.concatenate([
            jnp.full((H,), 0.5, jnp.float32), jnp.full((H,), 0.5, jnp.float32),
            jnp.ones((H,), jnp.float32), jnp.full((H,), 0.5, jnp.float32)])
        wih_t = w_ih.T.astype(jnp.float32) * scale[None, :]
        whh_t = w_hh.T.astype(jnp.float32) * scale[None, :]
        b = ((b_ih + b_hh).astype(jnp.float32) * scale)[None, :]

        def gate_pad(m):             # (rows, 4H) -> (rows, GP), gate k at lane k*128
            out = jnp.zeros((m.shape[0], GP), jnp.float32)
            for k in range(4):
                out = out.at[:, k * HP:k * HP + H].set(m[:, k * H:(k + 1) * H])
            return out

        wih_g, whh_g, b_g = gate_pad(wih_t), gate_pad(whh_t), gate_pad(b)
        wih_full = jnp.zeros((in_p, GP), jnp.float32)
        for src, dst, n in feat_map:
            wih_full = wih_full.at[dst:dst + n, :].set(wih_g[src:src + n, :])
        whh_full = jnp.zeros((HP, GP), jnp.float32).at[:H, :].set(whh_g)
        return wih_full, whh_full, b_g

    dead = (jnp.zeros((in_p, GP), jnp.float32),
            jnp.zeros((HP, GP), jnp.float32),
            jnp.zeros((1, GP), jnp.float32))

    fm1 = ((0, 0, e),)
    fm2 = ((0, 0, h1), (h1, HP, h1))
    fm3 = ((0, 0, h2), (h2, HP, h2))
    layers = [(prep_dir(l1f, fm1), prep_dir(l1b, fm1)),
              (prep_dir(l2f, fm2), prep_dir(l2b, fm2)),
              (dead,               prep_dir(l3b, fm3))]   # layer-3 fwd = dead work

    wih = jnp.stack([jnp.stack([f[0], bk[0]]) for f, bk in layers])    # (3,2,in_p,GP)
    whh = jnp.stack([jnp.stack([f[1], bk[1]]) for f, bk in layers])    # (3,2,HP,GP)
    bias = jnp.stack([jnp.stack([f[2], bk[2]]) for f, bk in layers])   # (3,2,1,GP)
    return wih, whh, bias


# ---------------------------------------------------------------------------
# Parameter construction (PyTorch-style uniform(-1/sqrt(H), 1/sqrt(H)), raw layout)
# ---------------------------------------------------------------------------
def _make_dir_params(key, input_dim, hidden_dim):
    k = 1.0 / float(hidden_dim) ** 0.5
    k1, k2, k3, k4 = jax.random.split(key, 4)
    w_ih = jax.random.uniform(k1, (4 * hidden_dim, input_dim), jnp.float32, -k, k)
    w_hh = jax.random.uniform(k2, (4 * hidden_dim, hidden_dim), jnp.float32, -k, k)
    b_ih = jax.random.uniform(k3, (4 * hidden_dim,), jnp.float32, -k, k)
    b_hh = jax.random.uniform(k4, (4 * hidden_dim,), jnp.float32, -k, k)
    return (w_ih, w_hh, b_ih, b_hh)


def make_lstmnet_params(key, embedding_dim, h1=48, h2=32, h3=16):
    keys = jax.random.split(key, 6)
    layer1 = (_make_dir_params(keys[0], embedding_dim, h1),
              _make_dir_params(keys[1], embedding_dim, h1))
    layer2 = (_make_dir_params(keys[2], 2 * h1, h2),
              _make_dir_params(keys[3], 2 * h1, h2))
    layer3 = (_make_dir_params(keys[4], 2 * h2, h3),
              _make_dir_params(keys[5], 2 * h2, h3))
    return (layer1, layer2, layer3)


# ---------------------------------------------------------------------------
# Pure-JAX reference (matches nn.LSTM bidirectional eval semantics)
# ---------------------------------------------------------------------------
def _ref_lstm_direction(x_tbd, dirp):
    w_ih, w_hh, b_ih, b_hh = dirp
    H = w_hh.shape[1]
    wih_t, whh_t = w_ih.T, w_hh.T
    b = (b_ih + b_hh)[None, :]
    hp = lax.Precision.HIGHEST

    def step(carry, x_t):
        h, c = carry
        g = jnp.dot(x_t, wih_t, precision=hp) + jnp.dot(h, whh_t, precision=hp) + b
        i = jax.nn.sigmoid(g[:, 0 * H:1 * H])
        f = jax.nn.sigmoid(g[:, 1 * H:2 * H])
        gg = jnp.tanh(g[:, 2 * H:3 * H])
        o = jax.nn.sigmoid(g[:, 3 * H:4 * H])
        c = f * c + i * gg
        h = o * jnp.tanh(c)
        return (h, c), h

    B = x_tbd.shape[1]
    init = (jnp.zeros((B, H), jnp.float32), jnp.zeros((B, H), jnp.float32))
    (h, _), ys = lax.scan(step, init, x_tbd)
    return ys, h


def _ref_bilstm(x_btd, layer_params):
    fwd, bwd = layer_params
    x_tbd = jnp.transpose(x_btd, (1, 0, 2))
    yf, _ = _ref_lstm_direction(x_tbd, fwd)
    yb_rev, hb = _ref_lstm_direction(x_tbd[::-1], bwd)
    y = jnp.concatenate([yf, yb_rev[::-1]], axis=-1)
    return jnp.transpose(y, (1, 0, 2)), hb


def _ref_lstmnet_forward(params, seq):
    l1, l2, l3 = params
    x, _ = _ref_bilstm(seq, l1)
    x = jnp.maximum(x, 0.0)
    x, _ = _ref_bilstm(x, l2)
    x = jnp.maximum(x, 0.0)
    _, h_bwd = _ref_bilstm(x, l3)
    return h_bwd                       # h[-1] = backward-direction final hidden


# ---------------------------------------------------------------------------
if __name__ == "__main__":
    B, T, E = 2, 8, 64                 # batch, seq len, embedding_dim

    key = jax.random.PRNGKey(0)
    kp, k1, k2 = jax.random.split(key, 3)
    params = make_lstmnet_params(kp, E)
    packed = pack_params(params)       # one-time repack into the kernel layout
    h3 = params[2][1][1].shape[1]      # 16

    seq1 = jax.random.normal(k1, (B, T, E), jnp.float32)
    seq2 = jax.random.normal(k2, (B, T, E), jnp.float32)

    out1, out2 = siamese_lstm_forward(packed, seq1, seq2, out_dim=h3)
    jax.block_until_ready((out1, out2))
    assert out1.shape == (B, h3) and out2.shape == (B, h3)

    # Correctness check against a pure-JAX reference.
    ref1 = _ref_lstmnet_forward(params, seq1)
    ref2 = _ref_lstmnet_forward(params, seq2)
    assert jnp.allclose(out1, ref1, atol=1e-3, rtol=1e-3), float(jnp.max(jnp.abs(out1 - ref1)))
    assert jnp.allclose(out2, ref2, atol=1e-3, rtol=1e-3), float(jnp.max(jnp.abs(out2 - ref2)))

    print("KERNEL_OK")
</pallas_src>

<mosaic_0001>
module attributes {stable_mosaic.version = 11 : i64} {
  func.func @_siamese_lstm_kernel(%arg0: i32, %arg1: memref<64x256xf32, #tpu.memory_space<vmem>>, %arg2: memref<1x2x256x512xf32, #tpu.memory_space<vmem>>, %arg3: memref<1x2x128x512xf32, #tpu.memory_space<vmem>>, %arg4: memref<1x2x1x512xf32, #tpu.memory_space<vmem>>, %arg5: memref<8x128xf32, #tpu.memory_space<vmem>>, %arg6: memref<64x256xf32, #tpu.memory_space<vmem>>, %arg7: memref<64x512xf32, #tpu.memory_space<vmem>>, %arg8: memref<64x512xf32, #tpu.memory_space<vmem>>) attributes {dimension_semantics = [#tpu.dimension_semantics<arbitrary>], iteration_bounds = array<i64: 3>, scalar_prefetch = 0 : i64, scratch_operands = 3 : i64, tpu.core_type = #tpu.core_type<tc>, window_params = [{pipeline_mode = #tpu.pipeline_mode<synchronous>, transform_indices = @transform_0, window_bounds = array<i64: 64, 256>}, {transform_indices = @transform_1, window_bounds = array<i64: 1, 2, 256, 512>}, {transform_indices = @transform_2, window_bounds = array<i64: 1, 2, 128, 512>}, {transform_indices = @transform_3, window_bounds = array<i64: 1, 2, 1, 512>}, {pipeline_mode = #tpu.pipeline_mode<synchronous>, transform_indices = @transform_4, window_bounds = array<i64: 8, 128>}]} {
    %c0_i32 = arith.constant 0 : i32
    %0 = arith.cmpi eq, %arg0, %c0_i32 : i32
    %1 = arith.extui %0 : i1 to i32
    %c0_i32_0 = arith.constant 0 : i32
    %2 = arith.cmpi ne, %1, %c0_i32_0 : i32
    scf.if %2 {
      %c0_138 = arith.constant 0 : index
      %c0_139 = arith.constant 0 : index
      %263 = vector.load %arg1[%c0_138, %c0_139] : memref<64x256xf32, #tpu.memory_space<vmem>>, vector<64x256xf32>
      %c0_140 = arith.constant 0 : index
      %c0_141 = arith.constant 0 : index
      %264 = vector.load %arg6[%c0_140, %c0_141] : memref<64x256xf32, #tpu.memory_space<vmem>>, vector<64x256xf32>
      tpu.vector_store %arg6[%c0_140, %c0_141], %263 {strides = array<i32>} : memref<64x256xf32, #tpu.memory_space<vmem>>, vector<64x256xf32>,
    } else {
    }
    %c2_i32 = arith.constant 2 : i32
    %3 = arith.cmpi slt, %arg0, %c2_i32 : i32
    %4 = arith.extui %3 : i1 to i32
    %c0_i32_1 = arith.constant 0 : i32
    %5 = arith.cmpi ne, %4, %c0_i32_1 : i32
    scf.if %5 {
      %c0_138 = arith.constant 0 : index
      %c0_139 = arith.constant 0 : index
      %263 = vector.load %arg6[%c0_138, %c0_139] : memref<64x256xf32, #tpu.memory_space<vmem>>, vector<64x256xf32>
      %c0_140 = arith.constant 0 : index
      %c0_141 = arith.constant 0 : index
      %c0_142 = arith.constant 0 : index
      %c0_143 = arith.constant 0 : index
      %264 = vector.load %arg2[%c0_140, %c0_141, %c0_142, %c0_143] : memref<1x2x256x512xf32, #tpu.memory_space<vmem>>, vector<1x1x256x512xf32>
      %265 = vector.shape_cast %264 : vector<1x1x256x512xf32> to vector<256x512xf32>
      %cst_144 = arith.constant dense<0.000000e+00> : vector<64x512xf32>
      %266 = tpu.matmul %263, %265, %cst_144 {dimension_numbers = #tpu.dot_dimension_numbers<[1], [0], [0], [1], [0, 0, 1, 1], [], []>} : vector<64x256xf32>, vector<256x512xf32>, vector<64x512xf32> -> vector<64x512xf32>
      %c0_145 = arith.constant 0 : index
      %c0_146 = arith.constant 0 : index
      %c0_147 = arith.constant 0 : index
      %c0_148 = arith.constant 0 : index
      %267 = vector.load %arg4[%c0_145, %c0_146, %c0_147, %c0_148] : memref<1x2x1x512xf32, #tpu.memory_space<vmem>>, vector<1x1x1x512xf32>
      %268 = vector.shape_cast %267 : vector<1x1x1x512xf32> to vector<1x512xf32>
      %269 = vector.broadcast %268 : vector<1x512xf32> to vector<64x512xf32>
      %270 = arith.addf %266, %269 : vector<64x512xf32>
      %c0_149 = arith.constant 0 : index
      %c0_150 = arith.constant 0 : index
      %271 = vector.load %arg7[%c0_149, %c0_150] : memref<64x512xf32, #tpu.memory_space<vmem>>, vector<64x512xf32>
      tpu.vector_store %arg7[%c0_149, %c0_150], %270 {strides = array<i32>} : memref<64x512xf32, #tpu.memory_space<vmem>>, vector<64x512xf32>,
    } else {
    }
    %c0 = arith.constant 0 : index
    %c0_2 = arith.constant 0 : index
    %6 = vector.load %arg6[%c0, %c0_2] : memref<64x256xf32, #tpu.memory_space<vmem>>, vector<64x256xf32>
    %c0_3 = arith.constant 0 : index
    %c1 = arith.constant 1 : index
    %c0_4 = arith.constant 0 : index
    %c0_5 = arith.constant 0 : index
    %7 = vector.load %arg2[%c0_3, %c1, %c0_4, %c0_5] : memref<1x2x256x512xf32, #tpu.memory_space<vmem>>, vector<1x1x256x512xf32>
    %8 = vector.shape_cast %7 : vector<1x1x256x512xf32> to vector<256x512xf32>
    %cst = arith.constant dense<0.000000e+00> : vector<64x512xf32>
    %9 = tpu.matmul %6, %8, %cst {dimension_numbers = #tpu.dot_dimension_numbers<[1], [0], [0], [1], [0, 0, 1, 1], [], []>} : vector<64x256xf32>, vector<256x512xf32>, vector<64x512xf32> -> vector<64x512xf32>
    %c0_6 = arith.constant 0 : index
    %c1_7 = arith.constant 1 : index
    %c0_8 = arith.constant 0 : index
    %c0_9 = arith.constant 0 : index
    %10 = vector.load %arg4[%c0_6, %c1_7, %c0_8, %c0_9] : memref<1x2x1x512xf32, #tpu.memory_space<vmem>>, vector<1x1x1x512xf32>
    %11 = vector.shape_cast %10 : vector<1x1x1x512xf32> to vector<1x512xf32>
    %12 = vector.broadcast %11 : vector<1x512xf32> to vector<64x512xf32>
    %13 = arith.addf %9, %12 : vector<64x512xf32>
    %c0_10 = arith.constant 0 : index
    %c0_11 = arith.constant 0 : index
    %14 = vector.load %arg8[%c0_10, %c0_11] : memref<64x512xf32, #tpu.memory_space<vmem>>, vector<64x512xf32>
    tpu.vector_store %arg8[%c0_10, %c0_11], %13 {strides = array<i32>} : memref<64x512xf32, #tpu.memory_space<vmem>>, vector<64x512xf32>,
    %c2_i32_12 = arith.constant 2 : i32
    %15 = arith.cmpi slt, %arg0, %c2_i32_12 : i32
    %16 = arith.extui %15 : i1 to i32
    %c0_i32_13 = arith.constant 0 : i32
    %17 = arith.cmpi ne, %16, %c0_i32_13 : i32
    scf.if %17 {
      %cst_138 = arith.constant 0.000000e+00 : f32
      %263 = vector.broadcast %cst_138 : f32 to vector<8x128xf32>
      %cst_139 = arith.constant 0.000000e+00 : f32
      %264 = vector.broadcast %cst_139 : f32 to vector<8x128xf32>
      %c0_140 = arith.constant 0 : index
      %c0_141 = arith.constant 0 : index
      %265 = vector.load %arg7[%c0_140, %c0_141] : memref<64x512xf32, #tpu.memory_space<vmem>>, vector<8x512xf32>
      %c0_142 = arith.constant 0 : index
      %c0_143 = arith.constant 0 : index
      %c0_144 = arith.constant 0 : index
      %c0_145 = arith.constant 0 : index
      %266 = vector.load %arg3[%c0_142, %c0_143, %c0_144, %c0_145] : memref<1x2x128x512xf32, #tpu.memory_space<vmem>>, vector<1x1x128x512xf32>
      %267 = vector.shape_cast %266 : vector<1x1x128x512xf32> to vector<128x512xf32>
      %cst_146 = arith.constant dense<0.000000e+00> : vector<8x512xf32>
      %268 = tpu.matmul %263, %267, %cst_146 {dimension_numbers = #tpu.dot_dimension_numbers<[1], [0], [0], [1], [0, 0, 1, 1], [], []>} : vector<8x128xf32>, vector<128x512xf32>, vector<8x512xf32> -> vector<8x512xf32>
      %269 = arith.addf %265, %268 : vector<8x512xf32>
      %270 = math.tanh %269 : vector<8x512xf32>
      %271 = vector.extract_strided_slice %270 {offsets = [0, 0], sizes = [8, 128], strides = [1, 1]} : vector<8x512xf32> to vector<8x128xf32>
      %cst_147 = arith.constant 5.000000e-01 : f32
      %272 = vector.broadcast %cst_147 : f32 to vector<8x128xf32>
      %273 = arith.mulf %271, %272 : vector<8x128xf32>
      %cst_148 = arith.constant 5.000000e-01 : f32
      %274 = vector.broadcast %cst_148 : f32 to vector<8x128xf32>
      %275 = arith.addf %273, %274 : vector<8x128xf32>
      %276 = vector.extract_strided_slice %270 {offsets = [0, 128], sizes = [8, 128], strides = [1, 1]} : vector<8x512xf32> to vector<8x128xf32>
      %cst_149 = arith.constant 5.000000e-01 : f32
      %277 = vector.broadcast %cst_149 : f32 to vector<8x128xf32>
      %278 = arith.mulf %276, %277 : vector<8x128xf32>
      %cst_150 = arith.constant 5.000000e-01 : f32
      %279 = vector.broadcast %cst_150 : f32 to vector<8x128xf32>
      %280 = arith.addf %278, %279 : vector<8x128xf32>
      %281 = vector.extract_strided_slice %270 {offsets = [0, 256], sizes = [8, 128], strides = [1, 1]} : vector<8x512xf32> to vector<8x128xf32>
      %282 = vector.extract_strided_slice %270 {offsets = [0, 384], sizes = [8, 128], strides = [1, 1]} : vector<8x512xf32> to vector<8x128xf32>
      %cst_151 = arith.constant 5.000000e-01 : f32
      %283 = vector.broadcast %cst_151 : f32 to vector<8x128xf32>
      %284 = arith.mulf %282, %283 : vector<8x128xf32>
      %cst_152 = arith.constant 5.000000e-01 : f32
      %285 = vector.broadcast %cst_152 : f32 to vector<8x128xf32>
      %286 = arith.addf %284, %285 : vector<8x128xf32>
      %287 = arith.mulf %280, %264 : vector<8x128xf32>
      %288 = arith.mulf %275, %281 : vector<8x128xf32>
      %289 = arith.addf %287, %288 : vector<8x128xf32>
      %290 = math.tanh %289 : vector<8x128xf32>
      %291 = arith.mulf %286, %290 : vector<8x128xf32>
      %cst_153 = arith.constant 0.000000e+00 : f32
      %292 = vector.broadcast %cst_153 : f32 to vector<8x128xf32>
      %293 = arith.maximumf %291, %292 : vector<8x128xf32>
      %c0_154 = arith.constant 0 : index
      %c0_155 = arith.constant 0 : index
      %294 = vector.load %arg6[%c0_154, %c0_155] : memref<64x256xf32, #tpu.memory_space<vmem>>, vector<8x128xf32>
      tpu.vector_store %arg6[%c0_154, %c0_155], %293 {strides = array<i32>} : memref<64x256xf32, #tpu.memory_space<vmem>>, vector<8x128xf32>,
      %c8_156 = arith.constant 8 : index
      %c0_157 = arith.constant 0 : index
      %295 = vector.load %arg7[%c8_156, %c0_157] : memref<64x512xf32, #tpu.memory_space<vmem>>, vector<8x512xf32>
      %c0_158 = arith.constant 0 : index
      %c0_159 = arith.constant 0 : index
      %c0_160 = arith.constant 0 : index
      %c0_161 = arith.constant 0 : index
      %296 = vector.load %arg3[%c0_158, %c0_159, %c0_160, %c0_161] : memref<1x2x128x512xf32, #tpu.memory_space<vmem>>, vector<1x1x128x512xf32>
      %297 = vector.shape_cast %296 : vector<1x1x128x512xf32> to vector<128x512xf32>
      %cst_162 = arith.constant dense<0.000000e+00> : vector<8x512xf32>
      %298 = tpu.matmul %291, %297, %cst_162 {dimension_numbers = #tpu.dot_dimension_numbers<[1], [0], [0], [1], [0, 0, 1, 1], [], []>} : vector<8x128xf32>, vector<128x512xf32>, vector<8x512xf32> -> vector<8x512xf32>
      %299 = arith.addf %295, %298 : vector<8x512xf32>
      %300 = math.tanh %299 : vector<8x512xf32>
      %301 = vector.extract_strided_slice %300 {offsets = [0, 0], sizes = [8, 128], strides = [1, 1]} : vector<8x512xf32> to vector<8x128xf32>
      %cst_163 = arith.constant 5.000000e-01 : f32
      %302 = vector.broadcast %cst_163 : f32 to vector<8x128xf32>
      %303 = arith.mulf %301, %302 : vector<8x128xf32>
      %cst_164 = arith.constant 5.000000e-01 : f32
      %304 = vector.broadcast %cst_164 : f32 to vector<8x128xf32>
      %305 = arith.addf %303, %304 : vector<8x128xf32>
      %306 = vector.extract_strided_slice %300 {offsets = [0, 128], sizes = [8, 128], strides = [1, 1]} : vector<8x512xf32> to vector<8x128xf32>
      %cst_165 = arith.constant 5.000000e-01 : f32
      %307 = vector.broadcast %cst_165 : f32 to vector<8x128xf32>
      %308 = arith.mulf %306, %307 : vector<8x128xf32>
      %cst_166 = arith.constant 5.000000e-01 : f32
      %309 = vector.broadcast %cst_166 : f32 to vector<8x128xf32>
      %310 = arith.addf %308, %309 : vector<8x128xf32>
      %311 = vector.extract_strided_slice %300 {offsets = [0, 256], sizes = [8, 128], strides = [1, 1]} : vector<8x512xf32> to vector<8x128xf32>
      %312 = vector.extract_strided_slice %300 {offsets = [0, 384], sizes = [8, 128], strides = [1, 1]} : vector<8x512xf32> to vector<8x128xf32>
      %cst_167 = arith.constant 5.000000e-01 : f32
      %313 = vector.broadcast %cst_167 : f32 to vector<8x128xf32>
      %314 = arith.mulf %312, %313 : vector<8x128xf32>
      %cst_168 = arith.constant 5.000000e-01 : f32
      %315 = vector.broadcast %cst_168 : f32 to vector<8x128xf32>
      %316 = arith.addf %314, %315 : vector<8x128xf32>
      %317 = arith.mulf %310, %289 : vector<8x128xf32>
      %318 = arith.mulf %305, %311 : vector<8x128xf32>
      %319 = arith.addf %317, %318 : vector<8x128xf32>
      %320 = math.tanh %319 : vector<8x128xf32>
      %321 = arith.mulf %316, %320 : vector<8x128xf32>
      %cst_169 = arith.constant 0.000000e+00 : f32
      %322 = vector.broadcast %cst_169 : f32 to vector<8x128xf32>
      %323 = arith.maximumf %321, %322 : vector<8x128xf32>
      %c8_170 = arith.constant 8 : index
      %c0_171 = arith.constant 0 : index
      %324 = vector.load %arg6[%c8_170, %c0_171] : memref<64x256xf32, #tpu.memory_space<vmem>>, vector<8x128xf32>
      tpu.vector_store %arg6[%c8_170, %c0_171], %323 {strides = array<i32>} : memref<64x256xf32, #tpu.memory_space<vmem>>, vector<8x128xf32>,
      %c16_172 = arith.constant 16 : index
      %c0_173 = arith.constant 0 : index
      %325 = vector.load %arg7[%c16_172, %c0_173] : memref<64x512xf32, #tpu.memory_space<vmem>>, vector<8x512xf32>
      %c0_174 = arith.constant 0 : index
      %c0_175 = arith.constant 0 : index
      %c0_176 = arith.constant 0 : index
      %c0_177 = arith.constant 0 : index
      %326 = vector.load %arg3[%c0_174, %c0_175, %c0_176, %c0_177] : memref<1x2x128x512xf32, #tpu.memory_space<vmem>>, vector<1x1x128x512xf32>
      %327 = vector.shape_cast %326 : vector<1x1x128x512xf32> to vector<128x512xf32>
      %cst_178 = arith.constant dense<0.000000e+00> : vector<8x512xf32>
      %328 = tpu.matmul %321, %327, %cst_178 {dimension_numbers = #tpu.dot_dimension_numbers<[1], [0], [0], [1], [0, 0, 1, 1], [], []>} : vector<8x128xf32>, vector<128x512xf32>, vector<8x512xf32> -> vector<8x512xf32>
      %329 = arith.addf %325, %328 : vector<8x512xf32>
      %330 = math.tanh %329 : vector<8x512xf32>
      %331 = vector.extract_strided_slice %330 {offsets = [0, 0], sizes = [8, 128], strides = [1, 1]} : vector<8x512xf32> to vector<8x128xf32>
      %cst_179 = arith.constant 5.000000e-01 : f32
      %332 = vector.broadcast %cst_179 : f32 to vector<8x128xf32>
      %333 = arith.mulf %331, %332 : vector<8x128xf32>
      %cst_180 = arith.constant 5.000000e-01 : f32
      %334 = vector.broadcast %cst_180 : f32 to vector<8x128xf32>
      %335 = arith.addf %333, %334 : vector<8x128xf32>
      %336 = vector.extract_strided_slice %330 {offsets = [0, 128], sizes = [8, 128], strides = [1, 1]} : vector<8x512xf32> to vector<8x128xf32>
      %cst_181 = arith.constant 5.000000e-01 : f32
      %337 = vector.broadcast %cst_181 : f32 to vector<8x128xf32>
      %338 = arith.mulf %336, %337 : vector<8x128xf32>
      %cst_182 = arith.constant 5.000000e-01 : f32
      %339 = vector.broadcast %cst_182 : f32 to vector<8x128xf32>
      %340 = arith.addf %338, %339 : vector<8x128xf32>
      %341 = vector.extract_strided_slice %330 {offsets = [0, 256], sizes = [8, 128], strides = [1, 1]} : vector<8x512xf32> to vector<8x128xf32>
      %342 = vector.extract_strided_slice %330 {offsets = [0, 384], sizes = [8, 128], strides = [1, 1]} : vector<8x512xf32> to vector<8x128xf32>
      %cst_183 = arith.constant 5.000000e-01 : f32
      %343 = vector.broadcast %cst_183 : f32 to vector<8x128xf32>
      %344 = arith.mulf %342, %343 : vector<8x128xf32>
      %cst_184 = arith.constant 5.000000e-01 : f32
      %345 = vector.broadcast %cst_184 : f32 to vector<8x128xf32>
      %346 = arith.addf %344, %345 : vector<8x128xf32>
      %347 = arith.mulf %340, %319 : vector<8x128xf32>
      %348 = arith.mulf %335, %341 : vector<8x128xf32>
      %349 = arith.addf %347, %348 : vector<8x128xf32>
      %350 = math.tanh %349 : vector<8x128xf32>
      %351 = arith.mulf %346, %350 : vector<8x128xf32>
      %cst_185 = arith.constant 0.000000e+00 : f32
      %352 = vector.broadcast %cst_185 : f32 to vector<8x128xf32>
      %353 = arith.maximumf %351, %352 : vector<8x128xf32>
      %c16_186 = arith.constant 16 : index
      %c0_187 = arith.constant 0 : index
      %354 = vector.load %arg6[%c16_186, %c0_187] : memref<64x256xf32, #tpu.memory_space<vmem>>, vector<8x128xf32>
      tpu.vector_store %arg6[%c16_186, %c0_187], %353 {strides = array<i32>} : memref<64x256xf32, #tpu.memory_space<vmem>>, vector<8x128xf32>,
      %c24_188 = arith.constant 24 : index
      %c0_189 = arith.constant 0 : index
      %355 = vector.load %arg7[%c24_188, %c0_189] : memref<64x512xf32, #tpu.memory_space<vmem>>, vector<8x512xf32>
      %c0_190 = arith.constant 0 : index
      %c0_191 = arith.constant 0 : index
      %c0_192 = arith.constant 0 : index
      %c0_193 = arith.constant 0 : index
      %356 = vector.load %arg3[%c0_190, %c0_191, %c0_192, %c0_193] : memref<1x2x128x512xf32, #tpu.memory_space<vmem>>, vector<1x1x128x512xf32>
      %357 = vector.shape_cast %356 : vector<1x1x128x512xf32> to vector<128x512xf32>
      %cst_194 = arith.constant dense<0.000000e+00> : vector<8x512xf32>
      %358 = tpu.matmul %351, %357, %cst_194 {dimension_numbers = #tpu.dot_dimension_numbers<[1], [0], [0], [1], [0, 0, 1, 1], [], []>} : vector<8x128xf32>, vector<128x512xf32>, vector<8x512xf32> -> vector<8x512xf32>
      %359 = arith.addf %355, %358 : vector<8x512xf32>
      %360 = math.tanh %359 : vector<8x512xf32>
      %361 = vector.extract_strided_slice %360 {offsets = [0, 0], sizes = [8, 128], strides = [1, 1]} : vector<8x512xf32> to vector<8x128xf32>
      %cst_195 = arith.constant 5.000000e-01 : f32
      %362 = vector.broadcast %cst_195 : f32 to vector<8x128xf32>
      %363 = arith.mulf %361, %362 : vector<8x128xf32>
      %cst_196 = arith.constant 5.000000e-01 : f32
      %364 = vector.broadcast %cst_196 : f32 to vector<8x128xf32>
      %365 = arith.addf %363, %364 : vector<8x128xf32>
      %366 = vector.extract_strided_slice %360 {offsets = [0, 128], sizes = [8, 128], strides = [1, 1]} : vector<8x512xf32> to vector<8x128xf32>
      %cst_197 = arith.constant 5.000000e-01 : f32
      %367 = vector.broadcast %cst_197 : f32 to vector<8x128xf32>
      %368 = arith.mulf %366, %367 : vector<8x128xf32>
      %cst_198 = arith.constant 5.000000e-01 : f32
      %369 = vector.broadcast %cst_198 : f32 to vector<8x128xf32>
      %370 = arith.addf %368, %369 : vector<8x128xf32>
      %371 = vector.extract_strided_slice %360 {offsets = [0, 256], sizes = [8, 128], strides = [1, 1]} : vector<8x512xf32> to vector<8x128xf32>
      %372 = vector.extract_strided_slice %360 {offsets = [0, 384], sizes = [8, 128], strides = [1, 1]} : vector<8x512xf32> to vector<8x128xf32>
      %cst_199 = arith.constant 5.000000e-01 : f32
      %373 = vector.broadcast %cst_199 : f32 to vector<8x128xf32>
      %374 = arith.mulf %372, %373 : vector<8x128xf32>
      %cst_200 = arith.constant 5.000000e-01 : f32
      %375 = vector.broadcast %cst_200 : f32 to vector<8x128xf32>
      %376 = arith.addf %374, %375 : vector<8x128xf32>
      %377 = arith.mulf %370, %349 : vector<8x128xf32>
      %378 = arith.mulf %365, %371 : vector<8x128xf32>
      %379 = arith.addf %377, %378 : vector<8x128xf32>
      %380 = math.tanh %379 : vector<8x128xf32>
      %381 = arith.mulf %376, %380 : vector<8x128xf32>
      %cst_201 = arith.constant 0.000000e+00 : f32
      %382 = vector.broadcast %cst_201 : f32 to vector<8x128xf32>
      %383 = arith.maximumf %381, %382 : vector<8x128xf32>
      %c24_202 = arith.constant 24 : index
      %c0_203 = arith.constant 0 : index
      %384 = vector.load %arg6[%c24_202, %c0_203] : memref<64x256xf32, #tpu.memory_space<vmem>>, vector<8x128xf32>
      tpu.vector_store %arg6[%c24_202, %c0_203], %383 {strides = array<i32>} : memref<64x256xf32, #tpu.memory_space<vmem>>, vector<8x128xf32>,
      %c32_204 = arith.constant 32 : index
      %c0_205 = arith.constant 0 : index
      %385 = vector.load %arg7[%c32_204, %c0_205] : memref<64x512xf32, #tpu.memory_space<vmem>>, vector<8x512xf32>
      %c0_206 = arith.constant 0 : index
      %c0_207 = arith.constant 0 : index
      %c0_208 = arith.constant 0 : index
      %c0_209 = arith.constant 0 : index
      %386 = vector.load %arg3[%c0_206, %c0_207, %c0_208, %c0_209] : memref<1x2x128x512xf32, #tpu.memory_space<vmem>>, vector<1x1x128x512xf32>
      %387 = vector.shape_cast %386 : vector<1x1x128x512xf32> to vector<128x512xf32>
      %cst_210 = arith.constant dense<0.000000e+00> : vector<8x512xf32>
      %388 = tpu.matmul %381, %387, %cst_210 {dimension_numbers = #tpu.dot_dimension_numbers<[1], [0], [0], [1], [0, 0, 1, 1], [], []>} : vector<8x128xf32>, vector<128x512xf32>, vector<8x512xf32> -> vector<8x512xf32>
      %389 = arith.addf %385, %388 : vector<8x512xf32>
      %390 = math.tanh %389 : vector<8x512xf32>
      %391 = vector.extract_strided_slice %390 {offsets = [0, 0], sizes = [8, 128], strides = [1, 1]} : vector<8x512xf32> to vector<8x128xf32>
      %cst_211 = arith.constant 5.000000e-01 : f32
      %392 = vector.broadcast %cst_211 : f32 to vector<8x128xf32>
      %393 = arith.mulf %391, %392 : vector<8x128xf32>
      %cst_212 = arith.constant 5.000000e-01 : f32
      %394 = vector.broadcast %cst_212 : f32 to vector<8x128xf32>
      %395 = arith.addf %393, %394 : vector<8x128xf32>
      %396 = vector.extract_strided_slice %390 {offsets = [0, 128], sizes = [8, 128], strides = [1, 1]} : vector<8x512xf32> to vector<8x128xf32>
      %cst_213 = arith.constant 5.000000e-01 : f32
      %397 = vector.broadcast %cst_213 : f32 to vector<8x128xf32>
      %398 = arith.mulf %396, %397 : vector<8x128xf32>
      %cst_214 = arith.constant 5.000000e-01 : f32
      %399 = vector.broadcast %cst_214 : f32 to vector<8x128xf32>
      %400 = arith.addf %398, %399 : vector<8x128xf32>
      %401 = vector.extract_strided_slice %390 {offsets = [0, 256], sizes = [8, 128], strides = [1, 1]} : vector<8x512xf32> to vector<8x128xf32>
      %402 = vector.extract_strided_slice %390 {offsets = [0, 384], sizes = [8, 128], strides = [1, 1]} : vector<8x512xf32> to vector<8x128xf32>
      %cst_215 = arith.constant 5.000000e-01 : f32
      %403 = vector.broadcast %cst_215 : f32 to vector<8x128xf32>
      %404 = arith.mulf %402, %403 : vector<8x128xf32>
      %cst_216 = arith.constant 5.000000e-01 : f32
      %405 = vector.broadcast %cst_216 : f32 to vector<8x128xf32>
      %406 = arith.addf %404, %405 : vector<8x128xf32>
      %407 = arith.mulf %400, %379 : vector<8x128xf32>
      %408 = arith.mulf %395, %401 : vector<8x128xf32>
      %409 = arith.addf %407, %408 : vector<8x128xf32>
      %410 = math.tanh %409 : vector<8x128xf32>
      %411 = arith.mulf %406, %410 : vector<8x128xf32>
      %cst_217 = arith.constant 0.000000e+00 : f32
      %412 = vector.broadcast %cst_217 : f32 to vector<8x128xf32>
      %413 = arith.maximumf %411, %412 : vector<8x128xf32>
      %c32_218 = arith.constant 32 : index
      %c0_219 = arith.constant 0 : index
      %414 = vector.load %arg6[%c32_218, %c0_219] : memref<64x256xf32, #tpu.memory_space<vmem>>, vector<8x128xf32>
      tpu.vector_store %arg6[%c32_218, %c0_219], %413 {strides = array<i32>} : memref<64x256xf32, #tpu.memory_space<vmem>>, vector<8x128xf32>,
      %c40_220 = arith.constant 40 : index
      %c0_221 = arith.constant 0 : index
      %415 = vector.load %arg7[%c40_220, %c0_221] : memref<64x512xf32, #tpu.memory_space<vmem>>, vector<8x512xf32>
      %c0_222 = arith.constant 0 : index
      %c0_223 = arith.constant 0 : index
      %c0_224 = arith.constant 0 : index
      %c0_225 = arith.constant 0 : index
      %416 = vector.load %arg3[%c0_222, %c0_223, %c0_224, %c0_225] : memref<1x2x128x512xf32, #tpu.memory_space<vmem>>, vector<1x1x128x512xf32>
      %417 = vector.shape_cast %416 : vector<1x1x128x512xf32> to vector<128x512xf32>
      %cst_226 = arith.constant dense<0.000000e+00> : vector<8x512xf32>
      %418 = tpu.matmul %411, %417, %cst_226 {dimension_numbers = #tpu.dot_dimension_numbers<[1], [0], [0], [1], [0, 0, 1, 1], [], []>} : vector<8x128xf32>, vector<128x512xf32>, vector<8x512xf32> -> vector<8x512xf32>
      %419 = arith.addf %415, %418 : vector<8x512xf32>
      %420 = math.tanh %419 : vector<8x512xf32>
      %421 = vector.extract_strided_slice %420 {offsets = [0, 0], sizes = [8, 128], strides = [1, 1]} : vector<8x512xf32> to vector<8x128xf32>
      %cst_227 = arith.constant 5.000000e-01 : f32
      %422 = vector.broadcast %cst_227 : f32 to vector<8x128xf32>
      %423 = arith.mulf %421, %422 : vector<8x128xf32>
      %cst_228 = arith.constant 5.000000e-01 : f32
      %424 = vector.broadcast %cst_228 : f32 to vector<8x128xf32>
      %425 = arith.addf %423, %424 : vector<8x128xf32>
      %426 = vector.extract_strided_slice %420 {offsets = [0, 128], sizes = [8, 128], strides = [1, 1]} : vector<8x512xf32> to vector<8x128xf32>
      %cst_229 = arith.constant 5.000000e-01 : f32
      %427 = vector.broadcast %cst_229 : f32 to vector<8x128xf32>
      %428 = arith.mulf %426, %427 : vector<8x128xf32>
      %cst_230 = arith.constant 5.000000e-01 : f32
      %429 = vector.broadcast %cst_230 : f32 to vector<8x128xf32>
      %430 = arith.addf %428, %429 : vector<8x128xf32>
      %431 = vector.extract_strided_slice %420 {offsets = [0, 256], sizes = [8, 128], strides = [1, 1]} : vector<8x512xf32> to vector<8x128xf32>
      %432 = vector.extract_strided_slice %420 {offsets = [0, 384], sizes = [8, 128], strides = [1, 1]} : vector<8x512xf32> to vector<8x128xf32>
      %cst_231 = arith.constant 5.000000e-01 : f32
      %433 = vector.broadcast %cst_231 : f32 to vector<8x128xf32>
      %434 = arith.mulf %432, %433 : vector<8x128xf32>
      %cst_232 = arith.constant 5.000000e-01 : f32
      %435 = vector.broadcast %cst_232 : f32 to vector<8x128xf32>
      %436 = arith.addf %434, %435 : vector<8x128xf32>
      %437 = arith.mulf %430, %409 : vector<8x128xf32>
      %438 = arith.mulf %425, %431 : vector<8x128xf32>
      %439 = arith.addf %437, %438 : vector<8x128xf32>
      %440 = math.tanh %439 : vector<8x128xf32>
      %441 = arith.mulf %436, %440 : vector<8x128xf32>
      %cst_233 = arith.constant 0.000000e+00 : f32
      %442 = vector.broadcast %cst_233 : f32 to vector<8x128xf32>
      %443 = arith.maximumf %441, %442 : vector<8x128xf32>
      %c40_234 = arith.constant 40 : index
      %c0_235 = arith.constant 0 : index
      %444 = vector.load %arg6[%c40_234, %c0_235] : memref<64x256xf32, #tpu.memory_space<vmem>>, vector<8x128xf32>
      tpu.vector_store %arg6[%c40_234, %c0_235], %443 {strides = array<i32>} : memref<64x256xf32, #tpu.memory_space<vmem>>, vector<8x128xf32>,
      %c48_236 = arith.constant 48 : index
      %c0_237 = arith.constant 0 : index
      %445 = vector.load %arg7[%c48_236, %c0_237] : memref<64x512xf32, #tpu.memory_space<vmem>>, vector<8x512xf32>
      %c0_238 = arith.constant 0 : index
      %c0_239 = arith.constant 0 : index
      %c0_240 = arith.constant 0 : index
      %c0_241 = arith.constant 0 : index
      %446 = vector.load %arg3[%c0_238, %c0_239, %c0_240, %c0_241] : memref<1x2x128x512xf32, #tpu.memory_space<vmem>>, vector<1x1x128x512xf32>
      %447 = vector.shape_cast %446 : vector<1x1x128x512xf32> to vector<128x512xf32>
      %cst_242 = arith.constant dense<0.000000e+00> : vector<8x512xf32>
      %448 = tpu.matmul %441, %447, %cst_242 {dimension_numbers = #tpu.dot_dimension_numbers<[1], [0], [0], [1], [0, 0, 1, 1], [], []>} : vector<8x128xf32>, vector<128x512xf32>, vector<8x512xf32> -> vector<8x512xf32>
      %449 = arith.addf %445, %448 : vector<8x512xf32>
      %450 = math.tanh %449 : vector<8x512xf32>
      %451 = vector.extract_strided_slice %450 {offsets = [0, 0], sizes = [8, 128], strides = [1, 1]} : vector<8x512xf32> to vector<8x128xf32>
      %cst_243 = arith.constant 5.000000e-01 : f32
      %452 = vector.broadcast %cst_243 : f32 to vector<8x128xf32>
      %453 = arith.mulf %451, %452 : vector<8x128xf32>
      %cst_244 = arith.constant 5.000000e-01 : f32
      %454 = vector.broadcast %cst_244 : f32 to vector<8x128xf32>
      %455 = arith.addf %453, %454 : vector<8x128xf32>
      %456 = vector.extract_strided_slice %450 {offsets = [0, 128], sizes = [8, 128], strides = [1, 1]} : vector<8x512xf32> to vector<8x128xf32>
      %cst_245 = arith.constant 5.000000e-01 : f32
      %457 = vector.broadcast %cst_245 : f32 to vector<8x128xf32>
      %458 = arith.mulf %456, %457 : vector<8x128xf32>
      %cst_246 = arith.constant 5.000000e-01 : f32
      %459 = vector.broadcast %cst_246 : f32 to vector<8x128xf32>
      %460 = arith.addf %458, %459 : vector<8x128xf32>
      %461 = vector.extract_strided_slice %450 {offsets = [0, 256], sizes = [8, 128], strides = [1, 1]} : vector<8x512xf32> to vector<8x128xf32>
      %462 = vector.extract_strided_slice %450 {offsets = [0, 384], sizes = [8, 128], strides = [1, 1]} : vector<8x512xf32> to vector<8x128xf32>
      %cst_247 = arith.constant 5.000000e-01 : f32
      %463 = vector.broadcast %cst_247 : f32 to vector<8x128xf32>
      %464 = arith.mulf %462, %463 : vector<8x128xf32>
      %cst_248 = arith.constant 5.000000e-01 : f32
      %465 = vector.broadcast %cst_248 : f32 to vector<8x128xf32>
      %466 = arith.addf %464, %465 : vector<8x128xf32>
      %467 = arith.mulf %460, %439 : vector<8x128xf32>
      %468 = arith.mulf %455, %461 : vector<8x128xf32>
      %469 = arith.addf %467, %468 : vector<8x128xf32>
      %470 = math.tanh %469 : vector<8x128xf32>
      %471 = arith.mulf %466, %470 : vector<8x128xf32>
      %cst_249 = arith.constant 0.000000e+00 : f32
      %472 = vector.broadcast %cst_249 : f32 to vector<8x128xf32>
      %473 = arith.maximumf %471, %472 : vector<8x128xf32>
      %c48_250 = arith.constant 48 : index
      %c0_251 = arith.constant 0 : index
      %474 = vector.load %arg6[%c48_250, %c0_251] : memref<64x256xf32, #tpu.memory_space<vmem>>, vector<8x128xf32>
      tpu.vector_store %arg6[%c48_250, %c0_251], %473 {strides = array<i32>} : memref<64x256xf32, #tpu.memory_space<vmem>>, vector<8x128xf32>,
      %c56_252 = arith.constant 56 : index
      %c0_253 = arith.constant 0 : index
      %475 = vector.load %arg7[%c56_252, %c0_253] : memref<64x512xf32, #tpu.memory_space<vmem>>, vector<8x512xf32>
      %c0_254 = arith.constant 0 : index
      %c0_255 = arith.constant 0 : index
      %c0_256 = arith.constant 0 : index
      %c0_257 = arith.constant 0 : index
      %476 = vector.load %arg3[%c0_254, %c0_255, %c0_256, %c0_257] : memref<1x2x128x512xf32, #tpu.memory_space<vmem>>, vector<1x1x128x512xf32>
      %477 = vector.shape_cast %476 : vector<1x1x128x512xf32> to vector<128x512xf32>
      %cst_258 = arith.constant dense<0.000000e+00> : vector<8x512xf32>
      %478 = tpu.matmul %471, %477, %cst_258 {dimension_numbers = #tpu.dot_dimension_numbers<[1], [0], [0], [1], [0, 0, 1, 1], [], []>} : vector<8x128xf32>, vector<128x512xf32>, vector<8x512xf32> -> vector<8x512xf32>
      %479 = arith.addf %475, %478 : vector<8x512xf32>
      %480 = math.tanh %479 : vector<8x512xf32>
      %481 = vector.extract_strided_slice %480 {offsets = [0, 0], sizes = [8, 128], strides = [1, 1]} : vector<8x512xf32> to vector<8x128xf32>
      %cst_259 = arith.constant 5.000000e-01 : f32
      %482 = vector.broadcast %cst_259 : f32 to vector<8x128xf32>
      %483 = arith.mulf %481, %482 : vector<8x128xf32>
      %cst_260 = arith.constant 5.000000e-01 : f32
      %484 = vector.broadcast %cst_260 : f32 to vector<8x128xf32>
      %485 = arith.addf %483, %484 : vector<8x128xf32>
      %486 = vector.extract_strided_slice %480 {offsets = [0, 128], sizes = [8, 128], strides = [1, 1]} : vector<8x512xf32> to vector<8x128xf32>
      %cst_261 = arith.constant 5.000000e-01 : f32
      %487 = vector.broadcast %cst_261 : f32 to vector<8x128xf32>
      %488 = arith.mulf %486, %487 : vector<8x128xf32>
      %cst_262 = arith.constant 5.000000e-01 : f32
      %489 = vector.broadcast %cst_262 : f32 to vector<8x128xf32>
      %490 = arith.addf %488, %489 : vector<8x128xf32>
      %491 = vector.extract_strided_slice %480 {offsets = [0, 256], sizes = [8, 128], strides = [1, 1]} : vector<8x512xf32> to vector<8x128xf32>
      %492 = vector.extract_strided_slice %480 {offsets = [0, 384], sizes = [8, 128], strides = [1, 1]} : vector<8x512xf32> to vector<8x128xf32>
      %cst_263 = arith.constant 5.000000e-01 : f32
      %493 = vector.broadcast %cst_263 : f32 to vector<8x128xf32>
      %494 = arith.mulf %492, %493 : vector<8x128xf32>
      %cst_264 = arith.constant 5.000000e-01 : f32
      %495 = vector.broadcast %cst_264 : f32 to vector<8x128xf32>
      %496 = arith.addf %494, %495 : vector<8x128xf32>
      %497 = arith.mulf %490, %469 : vector<8x128xf32>
      %498 = arith.mulf %485, %491 : vector<8x128xf32>
      %499 = arith.addf %497, %498 : vector<8x128xf32>
      %500 = math.tanh %499 : vector<8x128xf32>
      %501 = arith.mulf %496, %500 : vector<8x128xf32>
      %cst_265 = arith.constant 0.000000e+00 : f32
      %502 = vector.broadcast %cst_265 : f32 to vector<8x128xf32>
      %503 = arith.maximumf %501, %502 : vector<8x128xf32>
      %c56_266 = arith.constant 56 : index
      %c0_267 = arith.constant 0 : index
      %504 = vector.load %arg6[%c56_266, %c0_267] : memref<64x256xf32, #tpu.memory_space<vmem>>, vector<8x128xf32>
      tpu.vector_store %arg6[%c56_266, %c0_267], %503 {strides = array<i32>} : memref<64x256xf32, #tpu.memory_space<vmem>>, vector<8x128xf32>,
    } else {
    }
    %cst_14 = arith.constant 0.000000e+00 : f32
    %18 = vector.broadcast %cst_14 : f32 to vector<8x128xf32>
    %cst_15 = arith.constant 0.000000e+00 : f32
    %19 = vector.broadcast %cst_15 : f32 to vector<8x128xf32>
    %c56 = arith.constant 56 : index
    %c0_16 = arith.constant 0 : index
    %20 = vector.load %arg8[%c56, %c0_16] : memref<64x512xf32, #tpu.memory_space<vmem>>, vector<8x512xf32>
    %c0_17 = arith.constant 0 : index
    %c1_18 = arith.constant 1 : index
    %c0_19 = arith.constant 0 : index
    %c0_20 = arith.constant 0 : index
    %21 = vector.load %arg3[%c0_17, %c1_18, %c0_19, %c0_20] : memref<1x2x128x512xf32, #tpu.memory_space<vmem>>, vector<1x1x128x512xf32>
    %22 = vector.shape_cast %21 : vector<1x1x128x512xf32> to vector<128x512xf32>
    %cst_21 = arith.constant dense<0.000000e+00> : vector<8x512xf32>
    %23 = tpu.matmul %18, %22, %cst_21 {dimension_numbers = #tpu.dot_dimension_numbers<[1], [0], [0], [1], [0, 0, 1, 1], [], []>} : vector<8x128xf32>, vector<128x512xf32>, vector<8x512xf32> -> vector<8x512xf32>
    %24 = arith.addf %20, %23 : vector<8x512xf32>
    %25 = math.tanh %24 : vector<8x512xf32>
    %26 = vector.extract_strided_slice %25 {offsets = [0, 0], sizes = [8, 128], strides = [1, 1]} : vector<8x512xf32> to vector<8x128xf32>
    %cst_22 = arith.constant 5.000000e-01 : f32
    %27 = vector.broadcast %cst_22 : f32 to vector<8x128xf32>
    %28 = arith.mulf %26, %27 : vector<8x128xf32>
    %cst_23 = arith.constant 5.000000e-01 : f32
    %29 = vector.broadcast %cst_23 : f32 to vector<8x128xf32>
    %30 = arith.addf %28, %29 : vector<8x128xf32>
    %31 = vector.extract_strided_slice %25 {offsets = [0, 128], sizes = [8, 128], strides = [1, 1]} : vector<8x512xf32> to vector<8x128xf32>
    %cst_24 = arith.constant 5.000000e-01 : f32
    %32 = vector.broadcast %cst_24 : f32 to vector<8x128xf32>
    %33 = arith.mulf %31, %32 : vector<8x128xf32>
    %cst_25 = arith.constant 5.000000e-01 : f32
    %34 = vector.broadcast %cst_25 : f32 to vector<8x128xf32>
    %35 = arith.addf %33, %34 : vector<8x128xf32>
    %36 = vector.extract_strided_slice %25 {offsets = [0, 256], sizes = [8, 128], strides = [1, 1]} : vector<8x512xf32> to vector<8x128xf32>
    %37 = vector.extract_strided_slice %25 {offsets = [0, 384], sizes = [8, 128], strides = [1, 1]} : vector<8x512xf32> to vector<8x128xf32>
    %cst_26 = arith.constant 5.000000e-01 : f32
    %38 = vector.broadcast %cst_26 : f32 to vector<8x128xf32>
    %39 = arith.mulf %37, %38 : vector<8x128xf32>
    %cst_27 = arith.constant 5.000000e-01 : f32
    %40 = vector.broadcast %cst_27 : f32 to vector<8x128xf32>
    %41 = arith.addf %39, %40 : vector<8x128xf32>
    %42 = arith.mulf %35, %19 : vector<8x128xf32>
    %43 = arith.mulf %30, %36 : vector<8x128xf32>
    %44 = arith.addf %42, %43 : vector<8x128xf32>
    %45 = math.tanh %44 : vector<8x128xf32>
    %46 = arith.mulf %41, %45 : vector<8x128xf32>
    %cst_28 = arith.constant 0.000000e+00 : f32
    %47 = vector.broadcast %cst_28 : f32 to vector<8x128xf32>
    %48 = arith.maximumf %46, %47 : vector<8x128xf32>
    %c56_29 = arith.constant 56 : index
    %c128 = arith.constant 128 : index
    %49 = vector.load %arg6[%c56_29, %c128] : memref<64x256xf32, #tpu.memory_space<vmem>>, vector<8x128xf32>
    tpu.vector_store %arg6[%c56_29, %c128], %48 {strides = array<i32>} : memref<64x256xf32, #tpu.memory_space<vmem>>, vector<8x128xf32>,
    %c48 = arith.constant 48 : index
    %c0_30 = arith.constant 0 : index
    %50 = vector.load %arg8[%c48, %c0_30] : memref<64x512xf32, #tpu.memory_space<vmem>>, vector<8x512xf32>
    %c0_31 = arith.constant 0 : index
    %c1_32 = arith.constant 1 : index
    %c0_33 = arith.constant 0 : index
    %c0_34 = arith.constant 0 : index
    %51 = vector.load %arg3[%c0_31, %c1_32, %c0_33, %c0_34] : memref<1x2x128x512xf32, #tpu.memory_space<vmem>>, vector<1x1x128x512xf32>
    %52 = vector.shape_cast %51 : vector<1x1x128x512xf32> to vector<128x512xf32>
    %cst_35 = arith.constant dense<0.000000e+00> : vector<8x512xf32>
    %53 = tpu.matmul %46, %52, %cst_35 {dimension_numbers = #tpu.dot_dimension_numbers<[1], [0], [0], [1], [0, 0, 1, 1], [], []>} : vector<8x128xf32>, vector<128x512xf32>, vector<8x512xf32> -> vector<8x512xf32>
    %54 = arith.addf %50, %53 : vector<8x512xf32>
    %55 = math.tanh %54 : vector<8x512xf32>
    %56 = vector.extract_strided_slice %55 {offsets = [0, 0], sizes = [8, 128], strides = [1, 1]} : vector<8x512xf32> to vector<8x128xf32>
    %cst_36 = arith.constant 5.000000e-01 : f32
    %57 = vector.broadcast %cst_36 : f32 to vector<8x128xf32>
    %58 = arith.mulf %56, %57 : vector<8x128xf32>
    %cst_37 = arith.constant 5.000000e-01 : f32
    %59 = vector.broadcast %cst_37 : f32 to vector<8x128xf32>
    %60 = arith.addf %58, %59 : vector<8x128xf32>
    %61 = vector.extract_strided_slice %55 {offsets = [0, 128], sizes = [8, 128], strides = [1, 1]} : vector<8x512xf32> to vector<8x128xf32>
    %cst_38 = arith.constant 5.000000e-01 : f32
    %62 = vector.broadcast %cst_38 : f32 to vector<8x128xf32>
    %63 = arith.mulf %61, %62 : vector<8x128xf32>
    %cst_39 = arith.constant 5.000000e-01 : f32
    %64 = vector.broadcast %cst_39 : f32 to vector<8x128xf32>
    %65 = arith.addf %63, %64 : vector<8x128xf32>
    %66 = vector.extract_strided_slice %55 {offsets = [0, 256], sizes = [8, 128], strides = [1, 1]} : vector<8x512xf32> to vector<8x128xf32>
    %67 = vector.extract_strided_slice %55 {offsets = [0, 384], sizes = [8, 128], strides = [1, 1]} : vector<8x512xf32> to vector<8x128xf32>
    %cst_40 = arith.constant 5.000000e-01 : f32
    %68 = vector.broadcast %cst_40 : f32 to vector<8x128xf32>
    %69 = arith.mulf %67, %68 : vector<8x128xf32>
    %cst_41 = arith.constant 5.000000e-01 : f32
    %70 = vector.broadcast %cst_41 : f32 to vector<8x128xf32>
    %71 = arith.addf %69, %70 : vector<8x128xf32>
    %72 = arith.mulf %65, %44 : vector<8x128xf32>
    %73 = arith.mulf %60, %66 : vector<8x128xf32>
    %74 = arith.addf %72, %73 : vector<8x128xf32>
    %75 = math.tanh %74 : vector<8x128xf32>
    %76 = arith.mulf %71, %75 : vector<8x128xf32>
    %cst_42 = arith.constant 0.000000e+00 : f32
    %77 = vector.broadcast %cst_42 : f32 to vector<8x128xf32>
    %78 = arith.maximumf %76, %77 : vector<8x128xf32>
    %c48_43 = arith.constant 48 : index
    %c128_44 = arith.constant 128 : index
    %79 = vector.load %arg6[%c48_43, %c128_44] : memref<64x256xf32, #tpu.memory_space<vmem>>, vector<8x128xf32>
    tpu.vector_store %arg6[%c48_43, %c128_44], %78 {strides = array<i32>} : memref<64x256xf32, #tpu.memory_space<vmem>>, vector<8x128xf32>,
    %c40 = arith.constant 40 : index
    %c0_45 = arith.constant 0 : index
    %80 = vector.load %arg8[%c40, %c0_45] : memref<64x512xf32, #tpu.memory_space<vmem>>, vector<8x512xf32>
    %c0_46 = arith.constant 0 : index
    %c1_47 = arith.constant 1 : index
    %c0_48 = arith.constant 0 : index
    %c0_49 = arith.constant 0 : index
    %81 = vector.load %arg3[%c0_46, %c1_47, %c0_48, %c0_49] : memref<1x2x128x512xf32, #tpu.memory_space<vmem>>, vector<1x1x128x512xf32>
    %82 = vector.shape_cast %81 : vector<1x1x128x512xf32> to vector<128x512xf32>
    %cst_50 = arith.constant dense<0.000000e+00> : vector<8x512xf32>
    %83 = tpu.matmul %76, %82, %cst_50 {dimension_numbers = #tpu.dot_dimension_numbers<[1], [0], [0], [1], [0, 0, 1, 1], [], []>} : vector<8x128xf32>, vector<128x512xf32>, vector<8x512xf32> -> vector<8x512xf32>
    %84 = arith.addf %80, %83 : vector<8x512xf32>
    %85 = math.tanh %84 : vector<8x512xf32>
    %86 = vector.extract_strided_slice %85 {offsets = [0, 0], sizes = [8, 128], strides = [1, 1]} : vector<8x512xf32> to vector<8x128xf32>
    %cst_51 = arith.constant 5.000000e-01 : f32
    %87 = vector.broadcast %cst_51 : f32 to vector<8x128xf32>
    %88 = arith.mulf %86, %87 : vector<8x128xf32>
    %cst_52 = arith.constant 5.000000e-01 : f32
    %89 = vector.broadcast %cst_52 : f32 to vector<8x128xf32>
    %90 = arith.addf %88, %89 : vector<8x128xf32>
    %91 = vector.extract_strided_slice %85 {offsets = [0, 128], sizes = [8, 128], strides = [1, 1]} : vector<8x512xf32> to vector<8x128xf32>
    %cst_53 = arith.constant 5.000000e-01 : f32
    %92 = vector.broadcast %cst_53 : f32 to vector<8x128xf32>
    %93 = arith.mulf %91, %92 : vector<8x128xf32>
    %cst_54 = arith.constant 5.000000e-01 : f32
    %94 = vector.broadcast %cst_54 : f32 to vector<8x128xf32>
    %95 = arith.addf %93, %94 : vector<8x128xf32>
    %96 = vector.extract_strided_slice %85 {offsets = [0, 256], sizes = [8, 128], strides = [1, 1]} : vector<8x512xf32> to vector<8x128xf32>
    %97 = vector.extract_strided_slice %85 {offsets = [0, 384], sizes = [8, 128], strides = [1, 1]} : vector<8x512xf32> to vector<8x128xf32>
    %cst_55 = arith.constant 5.000000e-01 : f32
    %98 = vector.broadcast %cst_55 : f32 to vector<8x128xf32>
    %99 = arith.mulf %97, %98 : vector<8x128xf32>
    %cst_56 = arith.constant 5.000000e-01 : f32
    %100 = vector.broadcast %cst_56 : f32 to vector<8x128xf32>
    %101 = arith.addf %99, %100 : vector<8x128xf32>
    %102 = arith.mulf %95, %74 : vector<8x128xf32>
    %103 = arith.mulf %90, %96 : vector<8x128xf32>
    %104 = arith.addf %102, %103 : vector<8x128xf32>
    %105 = math.tanh %104 : vector<8x128xf32>
    %106 = arith.mulf %101, %105 : vector<8x128xf32>
    %cst_57 = arith.constant 0.000000e+00 : f32
    %107 = vector.broadcast %cst_57 : f32 to vector<8x128xf32>
    %108 = arith.maximumf %106, %107 : vector<8x128xf32>
    %c40_58 = arith.constant 40 : index
    %c128_59 = arith.constant 128 : index
    %109 = vector.load %arg6[%c40_58, %c128_59] : memref<64x256xf32, #tpu.memory_space<vmem>>, vector<8x128xf32>
    tpu.vector_store %arg6[%c40_58, %c128_59], %108 {strides = array<i32>} : memref<64x256xf32, #tpu.memory_space<vmem>>, vector<8x128xf32>,
    %c32 = arith.constant 32 : index
    %c0_60 = arith.constant 0 : index
    %110 = vector.load %arg8[%c32, %c0_60] : memref<64x512xf32, #tpu.memory_space<vmem>>, vector<8x512xf32>
    %c0_61 = arith.constant 0 : index
    %c1_62 = arith.constant 1 : index
    %c0_63 = arith.constant 0 : index
    %c0_64 = arith.constant 0 : index
    %111 = vector.load %arg3[%c0_61, %c1_62, %c0_63, %c0_64] : memref<1x2x128x512xf32, #tpu.memory_space<vmem>>, vector<1x1x128x512xf32>
    %112 = vector.shape_cast %111 : vector<1x1x128x512xf32> to vector<128x512xf32>
    %cst_65 = arith.constant dense<0.000000e+00> : vector<8x512xf32>
    %113 = tpu.matmul %106, %112, %cst_65 {dimension_numbers = #tpu.dot_dimension_numbers<[1], [0], [0], [1], [0, 0, 1, 1], [], []>} : vector<8x128xf32>, vector<128x512xf32>, vector<8x512xf32> -> vector<8x512xf32>
    %114 = arith.addf %110, %113 : vector<8x512xf32>
    %115 = math.tanh %114 : vector<8x512xf32>
    %116 = vector.extract_strided_slice %115 {offsets = [0, 0], sizes = [8, 128], strides = [1, 1]} : vector<8x512xf32> to vector<8x128xf32>
    %cst_66 = arith.constant 5.000000e-01 : f32
    %117 = vector.broadcast %cst_66 : f32 to vector<8x128xf32>
    %118 = arith.mulf %116, %117 : vector<8x128xf32>
    %cst_67 = arith.constant 5.000000e-01 : f32
    %119 = vector.broadcast %cst_67 : f32 to vector<8x128xf32>
    %120 = arith.addf %118, %119 : vector<8x128xf32>
    %121 = vector.extract_strided_slice %115 {offsets = [0, 128], sizes = [8, 128], strides = [1, 1]} : vector<8x512xf32> to vector<8x128xf32>
    %cst_68 = arith.constant 5.000000e-01 : f32
    %122 = vector.broadcast %cst_68 : f32 to vector<8x128xf32>
    %123 = arith.mulf %121, %122 : vector<8x128xf32>
    %cst_69 = arith.constant 5.000000e-01 : f32
    %124 = vector.broadcast %cst_69 : f32 to vector<8x128xf32>
    %125 = arith.addf %123, %124 : vector<8x128xf32>
    %126 = vector.extract_strided_slice %115 {offsets = [0, 256], sizes = [8, 128], strides = [1, 1]} : vector<8x512xf32> to vector<8x128xf32>
    %127 = vector.extract_strided_slice %115 {offsets = [0, 384], sizes = [8, 128], strides = [1, 1]} : vector<8x512xf32> to vector<8x128xf32>
    %cst_70 = arith.constant 5.000000e-01 : f32
    %128 = vector.broadcast %cst_70 : f32 to vector<8x128xf32>
    %129 = arith.mulf %127, %128 : vector<8x128xf32>
    %cst_71 = arith.constant 5.000000e-01 : f32
    %130 = vector.broadcast %cst_71 : f32 to vector<8x128xf32>
    %131 = arith.addf %129, %130 : vector<8x128xf32>
    %132 = arith.mulf %125, %104 : vector<8x128xf32>
    %133 = arith.mulf %120, %126 : vector<8x128xf32>
    %134 = arith.addf %132, %133 : vector<8x128xf32>
    %135 = math.tanh %134 : vector<8x128xf32>
    %136 = arith.mulf %131, %135 : vector<8x128xf32>
    %cst_72 = arith.constant 0.000000e+00 : f32
    %137 = vector.broadcast %cst_72 : f32 to vector<8x128xf32>
    %138 = arith.maximumf %136, %137 : vector<8x128xf32>
    %c32_73 = arith.constant 32 : index
    %c128_74 = arith.constant 128 : index
    %139 = vector.load %arg6[%c32_73, %c128_74] : memref<64x256xf32, #tpu.memory_space<vmem>>, vector<8x128xf32>
    tpu.vector_store %arg6[%c32_73, %c128_74], %138 {strides = array<i32>} : memref<64x256xf32, #tpu.memory_space<vmem>>, vector<8x128xf32>,
    %c24 = arith.constant 24 : index
    %c0_75 = arith.constant 0 : index
    %140 = vector.load %arg8[%c24, %c0_75] : memref<64x512xf32, #tpu.memory_space<vmem>>, vector<8x512xf32>
    %c0_76 = arith.constant 0 : index
    %c1_77 = arith.constant 1 : index
    %c0_78 = arith.constant 0 : index
    %c0_79 = arith.constant 0 : index
    %141 = vector.load %arg3[%c0_76, %c1_77, %c0_78, %c0_79] : memref<1x2x128x512xf32, #tpu.memory_space<vmem>>, vector<1x1x128x512xf32>
    %142 = vector.shape_cast %141 : vector<1x1x128x512xf32> to vector<128x512xf32>
    %cst_80 = arith.constant dense<0.000000e+00> : vector<8x512xf32>
    %143 = tpu.matmul %136, %142, %cst_80 {dimension_numbers = #tpu.dot_dimension_numbers<[1], [0], [0], [1], [0, 0, 1, 1], [], []>} : vector<8x128xf32>, vector<128x512xf32>, vector<8x512xf32> -> vector<8x512xf32>
    %144 = arith.addf %140, %143 : vector<8x512xf32>
    %145 = math.tanh %144 : vector<8x512xf32>
    %146 = vector.extract_strided_slice %145 {offsets = [0, 0], sizes = [8, 128], strides = [1, 1]} : vector<8x512xf32> to vector<8x128xf32>
    %cst_81 = arith.constant 5.000000e-01 : f32
    %147 = vector.broadcast %cst_81 : f32 to vector<8x128xf32>
    %148 = arith.mulf %146, %147 : vector<8x128xf32>
    %cst_82 = arith.constant 5.000000e-01 : f32
    %149 = vector.broadcast %cst_82 : f32 to vector<8x128xf32>
    %150 = arith.addf %148, %149 : vector<8x128xf32>
    %151 = vector.extract_strided_slice %145 {offsets = [0, 128], sizes = [8, 128], strides = [1, 1]} : vector<8x512xf32> to vector<8x128xf32>
    %cst_83 = arith.constant 5.000000e-01 : f32
    %152 = vector.broadcast %cst_83 : f32 to vector<8x128xf32>
    %153 = arith.mulf %151, %152 : vector<8x128xf32>
    %cst_84 = arith.constant 5.000000e-01 : f32
    %154 = vector.broadcast %cst_84 : f32 to vector<8x128xf32>
    %155 = arith.addf %153, %154 : vector<8x128xf32>
    %156 = vector.extract_strided_slice %145 {offsets = [0, 256], sizes = [8, 128], strides = [1, 1]} : vector<8x512xf32> to vector<8x128xf32>
    %157 = vector.extract_strided_slice %145 {offsets = [0, 384], sizes = [8, 128], strides = [1, 1]} : vector<8x512xf32> to vector<8x128xf32>
    %cst_85 = arith.constant 5.000000e-01 : f32
    %158 = vector.broadcast %cst_85 : f32 to vector<8x128xf32>
    %159 = arith.mulf %157, %158 : vector<8x128xf32>
    %cst_86 = arith.constant 5.000000e-01 : f32
    %160 = vector.broadcast %cst_86 : f32 to vector<8x128xf32>
    %161 = arith.addf %159, %160 : vector<8x128xf32>
    %162 = arith.mulf %155, %134 : vector<8x128xf32>
    %163 = arith.mulf %150, %156 : vector<8x128xf32>
    %164 = arith.addf %162, %163 : vector<8x128xf32>
    %165 = math.tanh %164 : vector<8x128xf32>
    %166 = arith.mulf %161, %165 : vector<8x128xf32>
    %cst_87 = arith.constant 0.000000e+00 : f32
    %167 = vector.broadcast %cst_87 : f32 to vector<8x128xf32>
    %168 = arith.maximumf %166, %167 : vector<8x128xf32>
    %c24_88 = arith.constant 24 : index
    %c128_89 = arith.constant 128 : index
    %169 = vector.load %arg6[%c24_88, %c128_89] : memref<64x256xf32, #tpu.memory_space<vmem>>, vector<8x128xf32>
    tpu.vector_store %arg6[%c24_88, %c128_89], %168 {strides = array<i32>} : memref<64x256xf32, #tpu.memory_space<vmem>>, vector<8x128xf32>,
    %c16 = arith.constant 16 : index
    %c0_90 = arith.constant 0 : index
    %170 = vector.load %arg8[%c16, %c0_90] : memref<64x512xf32, #tpu.memory_space<vmem>>, vector<8x512xf32>
    %c0_91 = arith.constant 0 : index
    %c1_92 = arith.constant 1 : index
    %c0_93 = arith.constant 0 : index
    %c0_94 = arith.constant 0 : index
    %171 = vector.load %arg3[%c0_91, %c1_92, %c0_93, %c0_94] : memref<1x2x128x512xf32, #tpu.memory_space<vmem>>, vector<1x1x128x512xf32>
    %172 = vector.shape_cast %171 : vector<1x1x128x512xf32> to vector<128x512xf32>
    %cst_95 = arith.constant dense<0.000000e+00> : vector<8x512xf32>
    %173 = tpu.matmul %166, %172, %cst_95 {dimension_numbers = #tpu.dot_dimension_numbers<[1], [0], [0], [1], [0, 0, 1, 1], [], []>} : vector<8x128xf32>, vector<128x512xf32>, vector<8x512xf32> -> vector<8x512xf32>
    %174 = arith.addf %170, %173 : vector<8x512xf32>
    %175 = math.tanh %174 : vector<8x512xf32>
    %176 = vector.extract_strided_slice %175 {offsets = [0, 0], sizes = [8, 128], strides = [1, 1]} : vector<8x512xf32> to vector<8x128xf32>
    %cst_96 = arith.constant 5.000000e-01 : f32
    %177 = vector.broadcast %cst_96 : f32 to vector<8x128xf32>
    %178 = arith.mulf %176, %177 : vector<8x128xf32>
    %cst_97 = arith.constant 5.000000e-01 : f32
    %179 = vector.broadcast %cst_97 : f32 to vector<8x128xf32>
    %180 = arith.addf %178, %179 : vector<8x128xf32>
    %181 = vector.extract_strided_slice %175 {offsets = [0, 128], sizes = [8, 128], strides = [1, 1]} : vector<8x512xf32> to vector<8x128xf32>
    %cst_98 = arith.constant 5.000000e-01 : f32
    %182 = vector.broadcast %cst_98 : f32 to vector<8x128xf32>
    %183 = arith.mulf %181, %182 : vector<8x128xf32>
    %cst_99 = arith.constant 5.000000e-01 : f32
    %184 = vector.broadcast %cst_99 : f32 to vector<8x128xf32>
    %185 = arith.addf %183, %184 : vector<8x128xf32>
    %186 = vector.extract_strided_slice %175 {offsets = [0, 256], sizes = [8, 128], strides = [1, 1]} : vector<8x512xf32> to vector<8x128xf32>
    %187 = vector.extract_strided_slice %175 {offsets = [0, 384], sizes = [8, 128], strides = [1, 1]} : vector<8x512xf32> to vector<8x128xf32>
    %cst_100 = arith.constant 5.000000e-01 : f32
    %188 = vector.broadcast %cst_100 : f32 to vector<8x128xf32>
    %189 = arith.mulf %187, %188 : vector<8x128xf32>
    %cst_101 = arith.constant 5.000000e-01 : f32
    %190 = vector.broadcast %cst_101 : f32 to vector<8x128xf32>
    %191 = arith.addf %189, %190 : vector<8x128xf32>
    %192 = arith.mulf %185, %164 : vector<8x128xf32>
    %193 = arith.mulf %180, %186 : vector<8x128xf32>
    %194 = arith.addf %192, %193 : vector<8x128xf32>
    %195 = math.tanh %194 : vector<8x128xf32>
    %196 = arith.mulf %191, %195 : vector<8x128xf32>
    %cst_102 = arith.constant 0.000000e+00 : f32
    %197 = vector.broadcast %cst_102 : f32 to vector<8x128xf32>
    %198 = arith.maximumf %196, %197 : vector<8x128xf32>
    %c16_103 = arith.constant 16 : index
    %c128_104 = arith.constant 128 : index
    %199 = vector.load %arg6[%c16_103, %c128_104] : memref<64x256xf32, #tpu.memory_space<vmem>>, vector<8x128xf32>
    tpu.vector_store %arg6[%c16_103, %c128_104], %198 {strides = array<i32>} : memref<64x256xf32, #tpu.memory_space<vmem>>, vector<8x128xf32>,
    %c8 = arith.constant 8 : index
    %c0_105 = arith.constant 0 : index
    %200 = vector.load %arg8[%c8, %c0_105] : memref<64x512xf32, #tpu.memory_space<vmem>>, vector<8x512xf32>
    %c0_106 = arith.constant 0 : index
    %c1_107 = arith.constant 1 : index
    %c0_108 = arith.constant 0 : index
    %c0_109 = arith.constant 0 : index
    %201 = vector.load %arg3[%c0_106, %c1_107, %c0_108, %c0_109] : memref<1x2x128x512xf32, #tpu.memory_space<vmem>>, vector<1x1x128x512xf32>
    %202 = vector.shape_cast %201 : vector<1x1x128x512xf32> to vector<128x512xf32>
    %cst_110 = arith.constant dense<0.000000e+00> : vector<8x512xf32>
    %203 = tpu.matmul %196, %202, %cst_110 {dimension_numbers = #tpu.dot_dimension_numbers<[1], [0], [0], [1], [0, 0, 1, 1], [], []>} : vector<8x128xf32>, vector<128x512xf32>, vector<8x512xf32> -> vector<8x512xf32>
    %204 = arith.addf %200, %203 : vector<8x512xf32>
    %205 = math.tanh %204 : vector<8x512xf32>
    %206 = vector.extract_strided_slice %205 {offsets = [0, 0], sizes = [8, 128], strides = [1, 1]} : vector<8x512xf32> to vector<8x128xf32>
    %cst_111 = arith.constant 5.000000e-01 : f32
    %207 = vector.broadcast %cst_111 : f32 to vector<8x128xf32>
    %208 = arith.mulf %206, %207 : vector<8x128xf32>
    %cst_112 = arith.constant 5.000000e-01 : f32
    %209 = vector.broadcast %cst_112 : f32 to vector<8x128xf32>
    %210 = arith.addf %208, %209 : vector<8x128xf32>
    %211 = vector.extract_strided_slice %205 {offsets = [0, 128], sizes = [8, 128], strides = [1, 1]} : vector<8x512xf32> to vector<8x128xf32>
    %cst_113 = arith.constant 5.000000e-01 : f32
    %212 = vector.broadcast %cst_113 : f32 to vector<8x128xf32>
    %213 = arith.mulf %211, %212 : vector<8x128xf32>
    %cst_114 = arith.constant 5.000000e-01 : f32
    %214 = vector.broadcast %cst_114 : f32 to vector<8x128xf32>
    %215 = arith.addf %213, %214 : vector<8x128xf32>
    %216 = vector.extract_strided_slice %205 {offsets = [0, 256], sizes = [8, 128], strides = [1, 1]} : vector<8x512xf32> to vector<8x128xf32>
    %217 = vector.extract_strided_slice %205 {offsets = [0, 384], sizes = [8, 128], strides = [1, 1]} : vector<8x512xf32> to vector<8x128xf32>
    %cst_115 = arith.constant 5.000000e-01 : f32
    %218 = vector.broadcast %cst_115 : f32 to vector<8x128xf32>
    %219 = arith.mulf %217, %218 : vector<8x128xf32>
    %cst_116 = arith.constant 5.000000e-01 : f32
    %220 = vector.broadcast %cst_116 : f32 to vector<8x128xf32>
    %221 = arith.addf %219, %220 : vector<8x128xf32>
    %222 = arith.mulf %215, %194 : vector<8x128xf32>
    %223 = arith.mulf %210, %216 : vector<8x128xf32>
    %224 = arith.addf %222, %223 : vector<8x128xf32>
    %225 = math.tanh %224 : vector<8x128xf32>
    %226 = arith.mulf %221, %225 : vector<8x128xf32>
    %cst_117 = arith.constant 0.000000e+00 : f32
    %227 = vector.broadcast %cst_117 : f32 to vector<8x128xf32>
    %228 = arith.maximumf %226, %227 : vector<8x128xf32>
    %c8_118 = arith.constant 8 : index
    %c128_119 = arith.constant 128 : index
    %229 = vector.load %arg6[%c8_118, %c128_119] : memref<64x256xf32, #tpu.memory_space<vmem>>, vector<8x128xf32>
    tpu.vector_store %arg6[%c8_118, %c128_119], %228 {strides = array<i32>} : memref<64x256xf32, #tpu.memory_space<vmem>>, vector<8x128xf32>,
    %c0_120 = arith.constant 0 : index
    %c0_121 = arith.constant 0 : index
    %230 = vector.load %arg8[%c0_120, %c0_121] : memref<64x512xf32, #tpu.memory_space<vmem>>, vector<8x512xf32>
    %c0_122 = arith.constant 0 : index
    %c1_123 = arith.constant 1 : index
    %c0_124 = arith.constant 0 : index
    %c0_125 = arith.constant 0 : index
    %231 = vector.load %arg3[%c0_122, %c1_123, %c0_124, %c0_125] : memref<1x2x128x512xf32, #tpu.memory_space<vmem>>, vector<1x1x128x512xf32>
    %232 = vector.shape_cast %231 : vector<1x1x128x512xf32> to vector<128x512xf32>
    %cst_126 = arith.constant dense<0.000000e+00> : vector<8x512xf32>
    %233 = tpu.matmul %226, %232, %cst_126 {dimension_numbers = #tpu.dot_dimension_numbers<[1], [0], [0], [1], [0, 0, 1, 1], [], []>} : vector<8x128xf32>, vector<128x512xf32>, vector<8x512xf32> -> vector<8x512xf32>
    %234 = arith.addf %230, %233 : vector<8x512xf32>
    %235 = math.tanh %234 : vector<8x512xf32>
    %236 = vector.extract_strided_slice %235 {offsets = [0, 0], sizes = [8, 128], strides = [1, 1]} : vector<8x512xf32> to vector<8x128xf32>
    %cst_127 = arith.constant 5.000000e-01 : f32
    %237 = vector.broadcast %cst_127 : f32 to vector<8x128xf32>
    %238 = arith.mulf %236, %237 : vector<8x128xf32>
    %cst_128 = arith.constant 5.000000e-01 : f32
    %239 = vector.broadcast %cst_128 : f32 to vector<8x128xf32>
    %240 = arith.addf %238, %239 : vector<8x128xf32>
    %241 = vector.extract_strided_slice %235 {offsets = [0, 128], sizes = [8, 128], strides = [1, 1]} : vector<8x512xf32> to vector<8x128xf32>
    %cst_129 = arith.constant 5.000000e-01 : f32
    %242 = vector.broadcast %cst_129 : f32 to vector<8x128xf32>
    %243 = arith.mulf %241, %242 : vector<8x128xf32>
    %cst_130 = arith.constant 5.000000e-01 : f32
    %244 = vector.broadcast %cst_130 : f32 to vector<8x128xf32>
    %245 = arith.addf %243, %244 : vector<8x128xf32>
    %246 = vector.extract_strided_slice %235 {offsets = [0, 256], sizes = [8, 128], strides = [1, 1]} : vector<8x512xf32> to vector<8x128xf32>
    %247 = vector.extract_strided_slice %235 {offsets = [0, 384], sizes = [8, 128], strides = [1, 1]} : vector<8x512xf32> to vector<8x128xf32>
    %cst_131 = arith.constant 5.000000e-01 : f32
    %248 = vector.broadcast %cst_131 : f32 to vector<8x128xf32>
    %249 = arith.mulf %247, %248 : vector<8x128xf32>
    %cst_132 = arith.constant 5.000000e-01 : f32
    %250 = vector.broadcast %cst_132 : f32 to vector<8x128xf32>
    %251 = arith.addf %249, %250 : vector<8x128xf32>
    %252 = arith.mulf %245, %224 : vector<8x128xf32>
    %253 = arith.mulf %240, %246 : vector<8x128xf32>
    %254 = arith.addf %252, %253 : vector<8x128xf32>
    %255 = math.tanh %254 : vector<8x128xf32>
    %256 = arith.mulf %251, %255 : vector<8x128xf32>
    %cst_133 = arith.constant 0.000000e+00 : f32
    %257 = vector.broadcast %cst_133 : f32 to vector<8x128xf32>
    %258 = arith.maximumf %256, %257 : vector<8x128xf32>
    %c0_134 = arith.constant 0 : index
    %c128_135 = arith.constant 128 : index
    %259 = vector.load %arg6[%c0_134, %c128_135] : memref<64x256xf32, #tpu.memory_space<vmem>>, vector<8x128xf32>
    tpu.vector_store %arg6[%c0_134, %c128_135], %258 {strides = array<i32>} : memref<64x256xf32, #tpu.memory_space<vmem>>, vector<8x128xf32>,
    %c2_i32_136 = arith.constant 2 : i32
    %260 = arith.cmpi eq, %arg0, %c2_i32_136 : i32
    %261 = arith.extui %260 : i1 to i32
    %c0_i32_137 = arith.constant 0 : i32
    %262 = arith.cmpi ne, %261, %c0_i32_137 : i32
    scf.if %262 {
      %c0_138 = arith.constant 0 : index
      %c0_139 = arith.constant 0 : index
      %263 = vector.load %arg5[%c0_138, %c0_139] : memref<8x128xf32, #tpu.memory_space<vmem>>, vector<8x128xf32>
      tpu.vector_store %arg5[%c0_138, %c0_139], %256 {strides = array<i32>} : memref<8x128xf32, #tpu.memory_space<vmem>>, vector<8x128xf32>,
    } else {
    }
    return
  }
  func.func @transform_0(%arg0: i32) -> (i32, i32) {
    %c0_i32 = arith.constant 0 : i32
    %c0_i32_0 = arith.constant 0 : i32
    %c0_i32_1 = arith.constant 0 : i32
    return %c0_i32, %c0_i32_0 : i32, i32
  }
  func.func @transform_1(%arg0: i32) -> (i32, i32, i32, i32) {
    %c0_i32 = arith.constant 0 : i32
    %c0_i32_0 = arith.constant 0 : i32
    %c0_i32_1 = arith.constant 0 : i32
    %c0_i32_2 = arith.constant 0 : i32
    return %arg0, %c0_i32, %c0_i32_0, %c0_i32_1 : i32, i32, i32, i32
  }
  func.func @transform_2(%arg0: i32) -> (i32, i32, i32, i32) {
    %c0_i32 = arith.constant 0 : i32
    %c0_i32_0 = arith.constant 0 : i32
    %c0_i32_1 = arith.constant 0 : i32
    %c0_i32_2 = arith.constant 0 : i32
    return %arg0, %c0_i32, %c0_i32_0, %c0_i32_1 : i32, i32, i32, i32
  }
  func.func @transform_3(%arg0: i32) -> (i32, i32, i32, i32) {
    %c0_i32 = arith.constant 0 : i32
    %c0_i32_0 = arith.constant 0 : i32
    %c0_i32_1 = arith.constant 0 : i32
    %c0_i32_2 = arith.constant 0 : i32
    return %arg0, %c0_i32, %c0_i32_0, %c0_i32_1 : i32, i32, i32, i32
  }
  func.func @transform_4(%arg0: i32) -> (i32, i32) {
    %c0_i32 = arith.constant 0 : i32
    %c0_i32_0 = arith.constant 0 : i32
    %c0_i32_1 = arith.constant 0 : i32
    return %c0_i32, %c0_i32_0 : i32, i32
  }
}

</mosaic_0001>

<llo_original>
// kernel: siamese_lstm_forward.1
$region0: #{siamese_lstm_forward.1}
  #allocation0 [shape = 'u32[]', space=smem, size = 0x4, offset = 0x4, fixed_abs, tag = 'smem constant byte address 0x4 - core index']
  #allocation1 [shape = 'u32[144,128]{1,0:T(1,128)}', space=vmem, size = 0x12000, scoped, tag = 'internal scratch']
  #allocation2 [shape = 'f32[64,256]{1,0:T(8,128)}', space=vmem, size = 0x10000, scoped, tag = 'scratch operand']
  #allocation3 [shape = 'f32[64,512]{1,0:T(8,128)}', space=vmem, size = 0x20000, scoped, tag = 'scratch operand']
  #allocation4 [shape = 'f32[64,512]{1,0:T(8,128)}', space=vmem, size = 0x20000, scoped, tag = 'scratch operand']
  %s0 = inlined_call_operand.vmem [shape: f32[64,256], index: 0, kind: input, shape index: {}]
  %s1 = inlined_call_operand.hbm [shape: f32[3,2,256,512], index: 1, kind: input, shape index: {}]
  %s2 = inlined_call_operand.hbm [shape: f32[3,2,128,512], index: 2, kind: input, shape index: {}]
  %s3 = inlined_call_operand.hbm [shape: f32[3,2,1,512], index: 3, kind: input, shape index: {}]
  %s4 = inlined_call_operand.vmem [shape: f32[8,128], index: 4, kind: output, shape index: {}]
  %s5 = sld [smem:[#allocation0]]
  $region77: #{siamese_lstm_forward.1} parent=0
    _
  %s7 = ssub.s32 1, %s5
  %s8 = scalar_select 0, %s7, %s5
  $region1: #{siamese_lstm_forward.1} parent=0
    #allocation5 [shape = 'u8[2097152]{0}', space=vmem, size = 0x200000, scoped, tag = 'input window, operand 1']
    #allocation6 [shape = 's32[2]{0}', space=sflag, size = 0x8, scoped, tag = 'scoped memory for siamese_lstm_forward.1']
    #allocation7 [shape = 'u8[1048576]{0}', space=vmem, size = 0x100000, scoped, tag = 'input window, operand 2']
    #allocation8 [shape = 's32[2]{0}', space=sflag, size = 0x8, scoped, tag = 'scoped memory for siamese_lstm_forward.1']
    #allocation9 [shape = 'u8[8192]{0}', space=vmem, size = 0x2000, scoped, tag = 'input window, operand 3']
    %9 = vsyncpa [#allocation6], 0
    %s10 = scalar_lea.sflag [#allocation6], 1
    %11 = vsyncpa %s10, 0
    %12 = vsyncpa [#allocation8], 0
    %s13 = scalar_lea.sflag [#allocation8], 1
    %14 = vsyncpa %s13, 0
    loop: start=0, step=1, limit=5
    $region2: #{siamese_lstm_forward.1} parent=1 // loop_pre_header
      _
    $region3: #{siamese_lstm_forward.1} parent=1 // loop_header
      %s16 = sphi 0, %s20
      %p17 = scmp.ge.s32.totalorder %s16, 5
      %s24 = sphi 0, %s24
      %s26 = sphi 0, %s24
      %s27 = sphi 0, %s26
      %s41 = sphi 0, %s27
      %s47 = sphi 0, %s49
      %s50 = sphi 0, %s47
      %s51 = sphi 0, %s50
      %s67 = sphi 0, %s51
      %s73 = sphi 0, %s75
      %s76 = sphi 0, %s73
      %s77 = sphi 0, %s76
      %s93 = sphi 0, %s77
      %s99 = sphi 0, %s101
      %s102 = sphi 0, %s99
      %s103 = sphi 0, %s102
      %s119 = sphi 0, %s103
      %s123 = sphi 0, %s123
      %s125 = sphi 0, %s123
      %s126 = sphi 0, %s125
      %s140 = sphi 0, %s126
    $region4: #{siamese_lstm_forward.1} parent=1 // loop_header_branch
      %19 = sbr.rel (%p17) target = $region8
    $region5: #{siamese_lstm_forward.1} parent=1 // loop_body
      %s21 = ssub.s32 %s16, 1
      %s22 = ssub.s32 %s16, 2
      %s23 = sadd.s32 %s16, 1
      %s25 = sadd.s32 %s24, 1
      %p28 = scmp.eq.s32.totalorder %s16, 2
      %p29 = scmp.ne.s32.totalorder %s24, %s26
      %p30 = scmp.eq.s32.totalorder %s16, 0
      %p31 = por %p29, %p30
      %p32 = scmp.ne.s32.totalorder %s24, %s26
      %p33 = scmp.eq.s32.totalorder %s21, 2
      %p34 = por %p32, %p33
      %p35 = scmp.ne.s32.totalorder %s26, %s27
      %p36 = scmp.eq.s32.totalorder %s21, 0
      %p37 = por %p35, %p36
      %p38 = scmp.ne.s32.totalorder %s26, %s27
      %p39 = scmp.eq.s32.totalorder %s22, 2
      %p40 = por %p38, %p39
      %p42 = scmp.ne.s32.totalorder %s27, %s41
      %p43 = scmp.eq.s32.totalorder %s22, 0
      %p44 = por %p42, %p43
      %s45 = ssub.s32 %s16, %s23
      %p46 = scmp.eq.s32.totalorder %s45, 0
      %s48 = sadd.s32 %s47, 1
      %s49 = scalar_select %p46, %s47, %s48
      %p52 = pneg %p46
      %p53 = scmp.eq.s32.totalorder %s16, 2
      %p54 = por %p52, %p53
      %p55 = scmp.ne.s32.totalorder %s47, %s50
      %p56 = scmp.eq.s32.totalorder %s16, 0
      %p57 = por %p55, %p56
      %p58 = scmp.ne.s32.totalorder %s47, %s50
      %p59 = scmp.eq.s32.totalorder %s21, 2
      %p60 = por %p58, %p59
      %p61 = scmp.ne.s32.totalorder %s50, %s51
      %p62 = scmp.eq.s32.totalorder %s21, 0
      %p63 = por %p61, %p62
      %p64 = scmp.ne.s32.totalorder %s50, %s51
      %p65 = scmp.eq.s32.totalorder %s22, 2
      %p66 = por %p64, %p65
      %p68 = scmp.ne.s32.totalorder %s51, %s67
      %p69 = scmp.eq.s32.totalorder %s22, 0
      %p70 = por %p68, %p69
      %s71 = ssub.s32 %s16, %s23
      %p72 = scmp.eq.s32.totalorder %s71, 0
      %s74 = sadd.s32 %s73, 1
      %s75 = scalar_select %p72, %s73, %s74
      %p78 = pneg %p72
      %p79 = scmp.eq.s32.totalorder %s16, 2
      %p80 = por %p78, %p79
      %p81 = scmp.ne.s32.totalorder %s73, %s76
      %p82 = scmp.eq.s32.totalorder %s16, 0
      %p83 = por %p81, %p82
      %p84 = scmp.ne.s32.totalorder %s73, %s76
      %p85 = scmp.eq.s32.totalorder %s21, 2
      %p86 = por %p84, %p85
      %p87 = scmp.ne.s32.totalorder %s76, %s77
      %p88 = scmp.eq.s32.totalorder %s21, 0
      %p89 = por %p87, %p88
      %p90 = scmp.ne.s32.totalorder %s76, %s77
      %p91 = scmp.eq.s32.totalorder %s22, 2
      %p92 = por %p90, %p91
      %p94 = scmp.ne.s32.totalorder %s77, %s93
      %p95 = scmp.eq.s32.totalorder %s22, 0
      %p96 = por %p94, %p95
      %s97 = ssub.s32 %s16, %s23
      %p98 = scmp.eq.s32.totalorder %s97, 0
      %s100 = sadd.s32 %s99, 1
      %s101 = scalar_select %p98, %s99, %s100
      %p104 = pneg %p98
      %p105 = scmp.eq.s32.totalorder %s16, 2
      %p106 = por %p104, %p105
      %p107 = scmp.ne.s32.totalorder %s99, %s102
      %p108 = scmp.eq.s32.totalorder %s16, 0
      %p109 = por %p107, %p108
      %p110 = scmp.ne.s32.totalorder %s99, %s102
      %p111 = scmp.eq.s32.totalorder %s21, 2
      %p112 = por %p110, %p111
      %p113 = scmp.ne.s32.totalorder %s102, %s103
      %p114 = scmp.eq.s32.totalorder %s21, 0
      %p115 = por %p113, %p114
      %p116 = scmp.ne.s32.totalorder %s102, %s103
      %p117 = scmp.eq.s32.totalorder %s22, 2
      %p118 = por %p116, %p117
      %p120 = scmp.ne.s32.totalorder %s103, %s119
      %p121 = scmp.eq.s32.totalorder %s22, 0
      %p122 = por %p120, %p121
      %s124 = sadd.s32 %s123, 1
      %p127 = scmp.eq.s32.totalorder %s16, 2
      %p128 = scmp.ne.s32.totalorder %s123, %s125
      %p129 = scmp.eq.s32.totalorder %s16, 0
      %p130 = por %p128, %p129
      %p131 = scmp.ne.s32.totalorder %s123, %s125
      %p132 = scmp.eq.s32.totalorder %s21, 2
      %p133 = por %p131, %p132
      %p134 = scmp.ne.s32.totalorder %s125, %s126
      %p135 = scmp.eq.s32.totalorder %s21, 0
      %p136 = por %p134, %p135
      %p137 = scmp.ne.s32.totalorder %s125, %s126
      %p138 = scmp.eq.s32.totalorder %s22, 2
      %p139 = por %p137, %p138
      %p141 = scmp.ne.s32.totalorder %s126, %s140
      %p142 = scmp.eq.s32.totalorder %s22, 0
      %p143 = por %p141, %p142
      %p144 = scmp.le.s32.totalorder 1, %s16
      %p145 = scmp.lt.s32.totalorder %s16, 4
      %p146 = pnand %p144, %p145
      %p147 = pneg %p146
      // Predicated region
      $region9: #{siamese_lstm_forward.1} parent=5 // pred_check
        _
      $region10: #{siamese_lstm_forward.1} parent=5 // pred_check_branch
        %149 = sbr.rel (%p146) target = $region12
      $region11: #{siamese_lstm_forward.1} parent=5 // pred_region
        %s150 = ssub.s32 %s16, 1
        // Predicated region
        $region13: #{siamese_lstm_forward.1} parent=11 // pred_check
          %p151 = pneg %p37
        $region14: #{siamese_lstm_forward.1} parent=11 // pred_check_branch
          %153 = sbr.rel (%p151) target = $region16
        $region15: #{siamese_lstm_forward.1} parent=11 // pred_region
          _
        $region16: #{siamese_lstm_forward.1} parent=11 // pred_fallthru
          _
      $region12: #{siamese_lstm_forward.1} parent=5 // pred_fallthru
        _
      %p154 = scmp.lt.s32.totalorder %s16, 3
      // Predicated region
      $region17: #{siamese_lstm_forward.1} parent=5 // pred_check
        %p155 = pneg %p154
      $region18: #{siamese_lstm_forward.1} parent=5 // pred_check_branch
        %157 = sbr.rel (%p155) target = $region20
      $region19: #{siamese_lstm_forward.1} parent=5 // pred_region
        // Predicated region
        $region21: #{siamese_lstm_forward.1} parent=19 // pred_check
          %p158 = pneg %p57
        $region22: #{siamese_lstm_forward.1} parent=19 // pred_check_branch
          %160 = sbr.rel (%p158) target = $region24
        $region23: #{siamese_lstm_forward.1} parent=19 // pred_region
          %s161 = sand.u32 %s47, 1
          %s162 = scalar_lea.sflag [#allocation6], %s161
          %s163 = sand.u32 %s47, 1
          %s164 = smul.addr %s163, 2048
          %s165 = scalar_lea.vmem [#allocation5], %s164
          %s167 = ssub.s32 32768, 32768
          %168 = vsyncadd %s162, %s167
          %s169 = smul.addr %s16, 256
          %s170 = smul.addr %s169, 128
          %s171 = scalar_lea.hbm %s1, %s170
          %s172 = sshll.u32 %s165, 4
          %s173 = int_to_ptr.vmem [resolvable:$true] %s172
          %178 = dma.hbm_to_vmem [thread:$0]  %s171, 32768, %s173, %s162, 512, 512, 32
        $region24: #{siamese_lstm_forward.1} parent=19 // pred_fallthru
          _
        // Predicated region
        $region25: #{siamese_lstm_forward.1} parent=19 // pred_check
          %p179 = pneg %p83
        $region26: #{siamese_lstm_forward.1} parent=19 // pred_check_branch
          %181 = sbr.rel (%p179) target = $region28
        $region27: #{siamese_lstm_forward.1} parent=19 // pred_region
          %s182 = sand.u32 %s16, 1
          %s183 = scalar_lea.sflag [#allocation8], %s182
          %s184 = sand.u32 %s73, 1
          %s185 = smul.addr %s184, 1024
          %s186 = scalar_lea.vmem [#allocation7], %s185
          %s188 = ssub.s32 16384, 16384
          %189 = vsyncadd %s183, %s188
          %s190 = smul.addr %s16, 128
          %s191 = smul.addr %s190, 128
          %s192 = scalar_lea.hbm %s2, %s191
          %s193 = sshll.u32 %s186, 4
          %s194 = int_to_ptr.vmem [resolvable:$true] %s193
          %199 = dma.hbm_to_vmem [thread:$0]  %s192, 16384, %s194, %s183, 512, 512, 32
        $region28: #{siamese_lstm_forward.1} parent=19 // pred_fallthru
          _
        // Predicated region
        $region29: #{siamese_lstm_forward.1} parent=19 // pred_check
          %p200 = pneg %p109
        $region30: #{siamese_lstm_forward.1} parent=19 // pred_check_branch
          %202 = sbr.rel (%p200) target = $region32
        $region31: #{siamese_lstm_forward.1} parent=19 // pred_region
          %s203 = sand.u32 %s16, 1
          %s204 = scalar_lea.sflag [#allocation8], %s203
          %s205 = sand.u32 %s99, 1
          %s206 = smul.addr %s205, 8
          %s207 = scalar_lea.vmem [#allocation9], %s206
          %s209 = ssub.s32 128, 128
          %210 = vsyncadd %s204, %s209
          %s211 = smul.addr %s16, 8
          %s212 = smul.addr %s211, 16
          %s213 = scalar_lea.hbm %s3, %s212
          %s214 = sshll.u32 %s207, 4
          %s215 = int_to_ptr.vmem [resolvable:$true] %s214
          %220 = dma.hbm_to_vmem [thread:$0]  %s213, 128, %s215, %s204, 64, 64, 4
        $region32: #{siamese_lstm_forward.1} parent=19 // pred_fallthru
          _
      $region20: #{siamese_lstm_forward.1} parent=5 // pred_fallthru
        _
      %p221 = scmp.le.s32.totalorder 1, %s16
      %p222 = scmp.lt.s32.totalorder %s16, 4
      %p223 = pnand %p221, %p222
      %p224 = pneg %p223
      // Predicated region
      $region33: #{siamese_lstm_forward.1} parent=5 // pred_check
        _
      $region34: #{siamese_lstm_forward.1} parent=5 // pred_check_branch
        %226 = sbr.rel (%p223) target = $region36
      $region35: #{siamese_lstm_forward.1} parent=5 // pred_region
        %s227 = ssub.s32 %s16, 1
        %s228 = sand.u32 %s50, 1
        %s229 = scalar_lea.sflag [#allocation6], %s228
        %s230 = sand.u32 %s50, 1
        %s231 = smul.addr %s230, 2048
        %s232 = scalar_lea.vmem [#allocation5], %s231
        // Predicated region
        $region37: #{siamese_lstm_forward.1} parent=35 // pred_check
          %p233 = pneg %p63
        $region38: #{siamese_lstm_forward.1} parent=35 // pred_check_branch
          %235 = sbr.rel (%p233) target = $region40
        $region39: #{siamese_lstm_forward.1} parent=35 // pred_region
          %236 = dma.done %s229, 32768
        $region40: #{siamese_lstm_forward.1} parent=35 // pred_fallthru
          _
        %s237 = sand.u32 %s21, 1
        %s238 = scalar_lea.sflag [#allocation8], %s237
        %s239 = sand.u32 %s76, 1
        %s240 = smul.addr %s239, 1024
        %s241 = scalar_lea.vmem [#allocation7], %s240
        // Predicated region
        $region41: #{siamese_lstm_forward.1} parent=35 // pred_check
          %p242 = pneg %p89
        $region42: #{siamese_lstm_forward.1} parent=35 // pred_check_branch
          %244 = sbr.rel (%p242) target = $region44
        $region43: #{siamese_lstm_forward.1} parent=35 // pred_region
          %245 = dma.done %s238, 16384
        $region44: #{siamese_lstm_forward.1} parent=35 // pred_fallthru
          _
        %s246 = sand.u32 %s21, 1
        %s247 = scalar_lea.sflag [#allocation8], %s246
        %s248 = sand.u32 %s102, 1
        %s249 = smul.addr %s248, 8
        %s250 = scalar_lea.vmem [#allocation9], %s249
        // Predicated region
        $region45: #{siamese_lstm_forward.1} parent=35 // pred_check
          %p251 = pneg %p115
        $region46: #{siamese_lstm_forward.1} parent=35 // pred_check_branch
          %253 = sbr.rel (%p251) target = $region48
        $region47: #{siamese_lstm_forward.1} parent=35 // pred_region
          %254 = dma.done %s247, 128
        $region48: #{siamese_lstm_forward.1} parent=35 // pred_fallthru
          _
        %p255 = pneg %p37
        %p256 = pneg %p34
        %s257 = sand.u32 %s50, 1
        %s258 = scalar_lea.sflag [#allocation6], %s257
        %s259 = sand.u32 %s50, 1
        %s260 = smul.addr %s259, 2048
        %s261 = scalar_lea.vmem [#allocation5], %s260
        %p262 = pneg %p63
        %p263 = pneg %p60
        %s264 = sand.u32 %s21, 1
        %s265 = scalar_lea.sflag [#allocation8], %s264
        %s266 = sand.u32 %s76, 1
        %s267 = smul.addr %s266, 1024
        %s268 = scalar_lea.vmem [#allocation7], %s267
        %p269 = pneg %p89
        %p270 = pneg %p86
        %s271 = sand.u32 %s21, 1
        %s272 = scalar_lea.sflag [#allocation8], %s271
        %s273 = sand.u32 %s102, 1
        %s274 = smul.addr %s273, 8
        %s275 = scalar_lea.vmem [#allocation9], %s274
        %p276 = pneg %p115
        %p277 = pneg %p112
        %p278 = pneg %p136
        %p279 = pneg %p133
        %p280 = scmp.eq.s32.totalorder %s21, 0
        // Predicated region
        $region49: #{siamese_lstm_forward.1} parent=35 // pred_check
          %p281 = pneg %p280
        $region50: #{siamese_lstm_forward.1} parent=35 // pred_check_branch
          %283 = sbr.rel (%p281) target = $region52
        $region51: #{siamese_lstm_forward.1} parent=35 // pred_region
          %v284 = vld [vmem:[%s0] sm:$0xff]
          %v285 = vld [vmem:[%s0 + $0x8] sm:$0xff]
          %v286 = vld [vmem:[%s0 + $0x10] sm:$0xff]
          %v287 = vld [vmem:[%s0 + $0x18] sm:$0xff]
          %v288 = vld [vmem:[%s0 + $0x20] sm:$0xff]
          %v289 = vld [vmem:[%s0 + $0x28] sm:$0xff]
          %v290 = vld [vmem:[%s0 + $0x30] sm:$0xff]
          %v291 = vld [vmem:[%s0 + $0x38] sm:$0xff]
          %v292 = vld [vmem:[%s0 + $0x40] sm:$0xff]
          %v293 = vld [vmem:[%s0 + $0x48] sm:$0xff]
          %v294 = vld [vmem:[%s0 + $0x50] sm:$0xff]
          %v295 = vld [vmem:[%s0 + $0x58] sm:$0xff]
          %v296 = vld [vmem:[%s0 + $0x60] sm:$0xff]
          %v297 = vld [vmem:[%s0 + $0x68] sm:$0xff]
          %v298 = vld [vmem:[%s0 + $0x70] sm:$0xff]
          %v299 = vld [vmem:[%s0 + $0x78] sm:$0xff]
          %300 = vst [vmem:[#allocation2] sm:$0xff] %v284
          %301 = vst [vmem:[#allocation2 + $0x8] sm:$0xff] %v285
          %302 = vst [vmem:[#allocation2 + $0x10] sm:$0xff] %v286
          %303 = vst [vmem:[#allocation2 + $0x18] sm:$0xff] %v287
          %304 = vst [vmem:[#allocation2 + $0x20] sm:$0xff] %v288
          %305 = vst [vmem:[#allocation2 + $0x28] sm:$0xff] %v289
          %306 = vst [vmem:[#allocation2 + $0x30] sm:$0xff] %v290
          %307 = vst [vmem:[#allocation2 + $0x38] sm:$0xff] %v291
          %308 = vst [vmem:[#allocation2 + $0x40] sm:$0xff] %v292
          %309 = vst [vmem:[#allocation2 + $0x48] sm:$0xff] %v293
          %310 = vst [vmem:[#allocation2 + $0x50] sm:$0xff] %v294
          %311 = vst [vmem:[#allocation2 + $0x58] sm:$0xff] %v295
          %312 = vst [vmem:[#allocation2 + $0x60] sm:$0xff] %v296
          %313 = vst [vmem:[#allocation2 + $0x68] sm:$0xff] %v297
          %314 = vst [vmem:[#allocation2 + $0x70] sm:$0xff] %v298
          %315 = vst [vmem:[#allocation2 + $0x78] sm:$0xff] %v299
        $region52: #{siamese_lstm_forward.1} parent=35 // pred_fallthru
          _
        %p316 = scmp.lt.s32.totalorder %s21, 2
        // Predicated region
        $region53: #{siamese_lstm_forward.1} parent=35 // pred_check
          %p317 = pneg %p316
        $region54: #{siamese_lstm_forward.1} parent=35 // pred_check_branch
          %319 = sbr.rel (%p317) target = $region56
        $region55: #{siamese_lstm_forward.1} parent=35 // pred_region
          %v320 = vld [vmem:[#allocation2] sm:$0xff]
          %v321 = vld [vmem:[#allocation2 + $0x8] sm:$0xff]
          %v322 = vld [vmem:[#allocation2 + $0x10] sm:$0xff]
          %v323 = vld [vmem:[#allocation2 + $0x18] sm:$0xff]
          %v324 = vld [vmem:[#allocation2 + $0x20] sm:$0xff]
          %v325 = vld [vmem:[#allocation2 + $0x28] sm:$0xff]
          %v326 = vld [vmem:[#allocation2 + $0x30] sm:$0xff]
          %v327 = vld [vmem:[#allocation2 + $0x38] sm:$0xff]
          %v328 = vld [vmem:[#allocation2 + $0x40] sm:$0xff]
          %v329 = vld [vmem:[#allocation2 + $0x48] sm:$0xff]
          %v330 = vld [vmem:[#allocation2 + $0x50] sm:$0xff]
          %v331 = vld [vmem:[#allocation2 + $0x58] sm:$0xff]
          %v332 = vld [vmem:[#allocation2 + $0x60] sm:$0xff]
          %v333 = vld [vmem:[#allocation2 + $0x68] sm:$0xff]
          %v334 = vld [vmem:[#allocation2 + $0x70] sm:$0xff]
          %v335 = vld [vmem:[#allocation2 + $0x78] sm:$0xff]
          %v336 = vld [vmem:[%s232] sm:$0xff]
          %v337 = vld [vmem:[%s232 + $0x8] sm:$0xff]
          %v338 = vld [vmem:[%s232 + $0x10] sm:$0xff]
          %v339 = vld [vmem:[%s232 + $0x18] sm:$0xff]
          %v340 = vld [vmem:[%s232 + $0x20] sm:$0xff]
          %v341 = vld [vmem:[%s232 + $0x28] sm:$0xff]
          %v342 = vld [vmem:[%s232 + $0x30] sm:$0xff]
          %v343 = vld [vmem:[%s232 + $0x38] sm:$0xff]
          %v344 = vld [vmem:[%s232 + $0x40] sm:$0xff]
          %v345 = vld [vmem:[%s232 + $0x48] sm:$0xff]
          %v346 = vld [vmem:[%s232 + $0x50] sm:$0xff]
          %v347 = vld [vmem:[%s232 + $0x58] sm:$0xff]
          %v348 = vld [vmem:[%s232 + $0x60] sm:$0xff]
          %v349 = vld [vmem:[%s232 + $0x68] sm:$0xff]
          %v350 = vld [vmem:[%s232 + $0x70] sm:$0xff]
          %v351 = vld [vmem:[%s232 + $0x78] sm:$0xff]
          %v352 = vld [vmem:[%s232 + $0x80] sm:$0xff]
          %v353 = vld [vmem:[%s232 + $0x88] sm:$0xff]
          %v354 = vld [vmem:[%s232 + $0x90] sm:$0xff]
          %v355 = vld [vmem:[%s232 + $0x98] sm:$0xff]
          %v356 = vld [vmem:[%s232 + $0xa0] sm:$0xff]
          %v357 = vld [vmem:[%s232 + $0xa8] sm:$0xff]
          %v358 = vld [vmem:[%s232 + $0xb0] sm:$0xff]
          %v359 = vld [vmem:[%s232 + $0xb8] sm:$0xff]
          %v360 = vld [vmem:[%s232 + $0xc0] sm:$0xff]
          %v361 = vld [vmem:[%s232 + $0xc8] sm:$0xff]
          %v362 = vld [vmem:[%s232 + $0xd0] sm:$0xff]
          %v363 = vld [vmem:[%s232 + $0xd8] sm:$0xff]
          %v364 = vld [vmem:[%s232 + $0xe0] sm:$0xff]
          %v365 = vld [vmem:[%s232 + $0xe8] sm:$0xff]
          %v366 = vld [vmem:[%s232 + $0xf0] sm:$0xff]
          %v367 = vld [vmem:[%s232 + $0xf8] sm:$0xff]
          %v368 = vld [vmem:[%s232 + $0x100] sm:$0xff]
          %v369 = vld [vmem:[%s232 + $0x108] sm:$0xff]
          %v370 = vld [vmem:[%s232 + $0x110] sm:$0xff]
          %v371 = vld [vmem:[%s232 + $0x118] sm:$0xff]
          %v372 = vld [vmem:[%s232 + $0x120] sm:$0xff]
          %v373 = vld [vmem:[%s232 + $0x128] sm:$0xff]
          %v374 = vld [vmem:[%s232 + $0x130] sm:$0xff]
          %v375 = vld [vmem:[%s232 + $0x138] sm:$0xff]
          %v376 = vld [vmem:[%s232 + $0x140] sm:$0xff]
          %v377 = vld [vmem:[%s232 + $0x148] sm:$0xff]
          %v378 = vld [vmem:[%s232 + $0x150] sm:$0xff]
          %v379 = vld [vmem:[%s232 + $0x158] sm:$0xff]
          %v380 = vld [vmem:[%s232 + $0x160] sm:$0xff]
          %v381 = vld [vmem:[%s232 + $0x168] sm:$0xff]
          %v382 = vld [vmem:[%s232 + $0x170] sm:$0xff]
          %v383 = vld [vmem:[%s232 + $0x178] sm:$0xff]
          %v384 = vld [vmem:[%s232 + $0x180] sm:$0xff]
          %v385 = vld [vmem:[%s232 + $0x188] sm:$0xff]
          %v386 = vld [vmem:[%s232 + $0x190] sm:$0xff]
          %v387 = vld [vmem:[%s232 + $0x198] sm:$0xff]
          %v388 = vld [vmem:[%s232 + $0x1a0] sm:$0xff]
          %v389 = vld [vmem:[%s232 + $0x1a8] sm:$0xff]
          %v390 = vld [vmem:[%s232 + $0x1b0] sm:$0xff]
          %v391 = vld [vmem:[%s232 + $0x1b8] sm:$0xff]
          %v392 = vld [vmem:[%s232 + $0x1c0] sm:$0xff]
          %v393 = vld [vmem:[%s232 + $0x1c8] sm:$0xff]
          %v394 = vld [vmem:[%s232 + $0x1d0] sm:$0xff]
          %v395 = vld [vmem:[%s232 + $0x1d8] sm:$0xff]
          %v396 = vld [vmem:[%s232 + $0x1e0] sm:$0xff]
          %v397 = vld [vmem:[%s232 + $0x1e8] sm:$0xff]
          %v398 = vld [vmem:[%s232 + $0x1f0] sm:$0xff]
          %v399 = vld [vmem:[%s232 + $0x1f8] sm:$0xff]
          %v400 = vld [vmem:[%s232 + $0x200] sm:$0xff]
          %v401 = vld [vmem:[%s232 + $0x208] sm:$0xff]
          %v402 = vld [vmem:[%s232 + $0x210] sm:$0xff]
          %v403 = vld [vmem:[%s232 + $0x218] sm:$0xff]
          %v404 = vld [vmem:[%s232 + $0x220] sm:$0xff]
          %v405 = vld [vmem:[%s232 + $0x228] sm:$0xff]
          %v406 = vld [vmem:[%s232 + $0x230] sm:$0xff]
          %v407 = vld [vmem:[%s232 + $0x238] sm:$0xff]
          %v408 = vld [vmem:[%s232 + $0x240] sm:$0xff]
          %v409 = vld [vmem:[%s232 + $0x248] sm:$0xff]
          %v410 = vld [vmem:[%s232 + $0x250] sm:$0xff]
          %v411 = vld [vmem:[%s232 + $0x258] sm:$0xff]
          %v412 = vld [vmem:[%s232 + $0x260] sm:$0xff]
          %v413 = vld [vmem:[%s232 + $0x268] sm:$0xff]
          %v414 = vld [vmem:[%s232 + $0x270] sm:$0xff]
          %v415 = vld [vmem:[%s232 + $0x278] sm:$0xff]
          %v416 = vld [vmem:[%s232 + $0x280] sm:$0xff]
          %v417 = vld [vmem:[%s232 + $0x288] sm:$0xff]
          %v418 = vld [vmem:[%s232 + $0x290] sm:$0xff]
          %v419 = vld [vmem:[%s232 + $0x298] sm:$0xff]
          %v420 = vld [vmem:[%s232 + $0x2a0] sm:$0xff]
          %v421 = vld [vmem:[%s232 + $0x2a8] sm:$0xff]
          %v422 = vld [vmem:[%s232 + $0x2b0] sm:$0xff]
          %v423 = vld [vmem:[%s232 + $0x2b8] sm:$0xff]
          %v424 = vld [vmem:[%s232 + $0x2c0] sm:$0xff]
          %v425 = vld [vmem:[%s232 + $0x2c8] sm:$0xff]
          %v426 = vld [vmem:[%s232 + $0x2d0] sm:$0xff]
          %v427 = vld [vmem:[%s232 + $0x2d8] sm:$0xff]
          %v428 = vld [vmem:[%s232 + $0x2e0] sm:$0xff]
          %v429 = vld [vmem:[%s232 + $0x2e8] sm:$0xff]
          %v430 = vld [vmem:[%s232 + $0x2f0] sm:$0xff]
          %v431 = vld [vmem:[%s232 + $0x2f8] sm:$0xff]
          %v432 = vld [vmem:[%s232 + $0x300] sm:$0xff]
          %v433 = vld [vmem:[%s232 + $0x308] sm:$0xff]
          %v434 = vld [vmem:[%s232 + $0x310] sm:$0xff]
          %v435 = vld [vmem:[%s232 + $0x318] sm:$0xff]
          %v436 = vld [vmem:[%s232 + $0x320] sm:$0xff]
          %v437 = vld [vmem:[%s232 + $0x328] sm:$0xff]
          %v438 = vld [vmem:[%s232 + $0x330] sm:$0xff]
          %v439 = vld [vmem:[%s232 + $0x338] sm:$0xff]
          %v440 = vld [vmem:[%s232 + $0x340] sm:$0xff]
          %v441 = vld [vmem:[%s232 + $0x348] sm:$0xff]
          %v442 = vld [vmem:[%s232 + $0x350] sm:$0xff]
          %v443 = vld [vmem:[%s232 + $0x358] sm:$0xff]
          %v444 = vld [vmem:[%s232 + $0x360] sm:$0xff]
          %v445 = vld [vmem:[%s232 + $0x368] sm:$0xff]
          %v446 = vld [vmem:[%s232 + $0x370] sm:$0xff]
          %v447 = vld [vmem:[%s232 + $0x378] sm:$0xff]
          %v448 = vld [vmem:[%s232 + $0x380] sm:$0xff]
          %v449 = vld [vmem:[%s232 + $0x388] sm:$0xff]
          %v450 = vld [vmem:[%s232 + $0x390] sm:$0xff]
          %v451 = vld [vmem:[%s232 + $0x398] sm:$0xff]
          %v452 = vld [vmem:[%s232 + $0x3a0] sm:$0xff]
          %v453 = vld [vmem:[%s232 + $0x3a8] sm:$0xff]
          %v454 = vld [vmem:[%s232 + $0x3b0] sm:$0xff]
          %v455 = vld [vmem:[%s232 + $0x3b8] sm:$0xff]
          %v456 = vld [vmem:[%s232 + $0x3c0] sm:$0xff]
          %v457 = vld [vmem:[%s232 + $0x3c8] sm:$0xff]
          %v458 = vld [vmem:[%s232 + $0x3d0] sm:$0xff]
          %v459 = vld [vmem:[%s232 + $0x3d8] sm:$0xff]
          %v460 = vld [vmem:[%s232 + $0x3e0] sm:$0xff]
          %v461 = vld [vmem:[%s232 + $0x3e8] sm:$0xff]
          %v462 = vld [vmem:[%s232 + $0x3f0] sm:$0xff]
          %v463 = vld [vmem:[%s232 + $0x3f8] sm:$0xff]
          %v464 = vld [vmem:[%s250] sm:$0xf]
          %v466 = vlaneseq
          %v467 = vshrl.u32 %v466, 7
          %v468 = vsub.s32 0, %v467
          %v469 = vrot.slane %v464, %v468
          %v470 = vlaneseq
          %v471 = vshrl.u32 %v470, 7
          %v472 = vsub.s32 1, %v471
          %v473 = vrot.slane %v464, %v472
          %v474 = vlaneseq
          %v475 = vshrl.u32 %v474, 7
          %v476 = vsub.s32 2, %v475
          %v477 = vrot.slane %v464, %v476
          %v478 = vlaneseq
          %v479 = vshrl.u32 %v478, 7
          %v480 = vsub.s32 3, %v479
          %v481 = vrot.slane %v464, %v480
          %486 = vmatprep.subr.mxu0 %v397
          %487 = vmatpush1.msra.mxu0 %v396
          %488 = vmatprep.subr.mxu0 %v393
          %489 = vmatpush1.msra.mxu0 %v392
          %490 = vmatprep.subr.mxu0 %v389
          %491 = vmatpush1.msra.mxu0 %v388
          %492 = vmatprep.subr.mxu0 %v385
          %493 = vmatpush1.msra.mxu0 %v384
          %494 = vmatprep.subr.mxu0 %v381
          %495 = vmatpush1.msra.mxu0 %v380
          %496 = vmatprep.subr.mxu0 %v377
          %497 = vmatpush1.msra.mxu0 %v376
          %498 = vmatprep.subr.mxu0 %v373
          %499 = vmatpush1.msra.mxu0 %v372
          %500 = vmatprep.subr.mxu0 %v369
          %501 = vmatpush1.msra.mxu0 %v368
          %502 = vmatprep.subr.mxu0 %v365
          %503 = vmatpush1.msra.mxu0 %v364
          %504 = vmatprep.subr.mxu0 %v361
          %505 = vmatpush1.msra.mxu0 %v360
          %506 = vmatprep.subr.mxu0 %v357
          %507 = vmatpush1.msra.mxu0 %v356
          %508 = vmatprep.subr.mxu0 %v353
          %509 = vmatpush1.msra.mxu0 %v352
          %510 = vmatprep.subr.mxu0 %v349
          %511 = vmatpush1.msra.mxu0 %v348
          %512 = vmatprep.subr.mxu0 %v345
          %513 = vmatpush1.msra.mxu0 %v344
          %514 = vmatprep.subr.mxu0 %v341
          %515 = vmatpush1.msra.mxu0 %v340
          %516 = vmatprep.subr.mxu0 %v337
          %517 = vmatpush1.msra.mxu0 %v336
          %518 = vmatprep.subr.mxu0 %v461
          %519 = vmatpush2.msra.mxu0 %v460
          %520 = vmatprep.subr.mxu0 %v457
          %521 = vmatpush2.msra.mxu0 %v456
          %522 = vmatprep.subr.mxu0 %v453
          %523 = vmatpush2.msra.mxu0 %v452
          %524 = vmatprep.subr.mxu0 %v449
          %525 = vmatpush2.msra.mxu0 %v448
          %526 = vmatprep.subr.mxu0 %v445
          %527 = vmatpush2.msra.mxu0 %v444
          %528 = vmatprep.subr.mxu0 %v441
          %529 = vmatpush2.msra.mxu0 %v440
          %530 = vmatprep.subr.mxu0 %v437
          %531 = vmatpush2.msra.mxu0 %v436
          %532 = vmatprep.subr.mxu0 %v433
          %533 = vmatpush2.msra.mxu0 %v432
          %534 = vmatprep.subr.mxu0 %v429
          %535 = vmatpush2.msra.mxu0 %v428
          %536 = vmatprep.subr.mxu0 %v425
          %537 = vmatpush2.msra.mxu0 %v424
          %538 = vmatprep.subr.mxu0 %v421
          %539 = vmatpush2.msra.mxu0 %v420
          %540 = vmatprep.subr.mxu0 %v417
          %541 = vmatpush2.msra.mxu0 %v416
          %542 = vmatprep.subr.mxu0 %v413
          %543 = vmatpush2.msra.mxu0 %v412
          %544 = vmatprep.subr.mxu0 %v409
          %545 = vmatpush2.msra.mxu0 %v408
          %546 = vmatprep.subr.mxu0 %v405
          %547 = vmatpush2.msra.mxu0 %v404
          %548 = vmatprep.subr.mxu0 %v401
          %549 = vmatpush2.msra.mxu0 %v400
          %550 = vmatprep.mubr.f32.mxu0 %v321
          %551 = vmatmul.mubr.f32.gmra.mxu0 %v320
          %v552 = vpop.f32.mrf.mxu0
          %v553 = vadd.f32 %v469, %v552
          %v554 = vpop.f32.mrf.mxu0
          %v555 = vadd.f32 %v473, %v554
          %556 = vmatprep.mubr.f32.mxu0 %v323
          %557 = vmatmul.mubr.f32.gmra.mxu0 %v322
          %v558 = vpop.f32.mrf.mxu0
          %v559 = vadd.f32 %v469, %v558
          %v560 = vpop.f32.mrf.mxu0
          %v561 = vadd.f32 %v473, %v560
          %562 = vmatprep.mubr.f32.mxu0 %v325
          %563 = vmatmul.mubr.f32.gmra.mxu0 %v324
          %v564 = vpop.f32.mrf.mxu0
          %v565 = vadd.f32 %v469, %v564
          %v566 = vpop.f32.mrf.mxu0
          %v567 = vadd.f32 %v473, %v566
          %568 = vmatprep.mubr.f32.mxu0 %v327
          %569 = vmatmul.mubr.f32.gmra.mxu0 %v326
          %v570 = vpop.f32.mrf.mxu0
          %v571 = vadd.f32 %v469, %v570
          %v572 = vpop.f32.mrf.mxu0
          %v573 = vadd.f32 %v473, %v572
          %574 = vmatprep.mubr.f32.mxu0 %v329
          %575 = vmatmul.mubr.f32.gmra.mxu0 %v328
          %v576 = vpop.f32.mrf.mxu0
          %v577 = vadd.f32 %v469, %v576
          %v578 = vpop.f32.mrf.mxu0
          %v579 = vadd.f32 %v473, %v578
          %580 = vmatprep.mubr.f32.mxu0 %v331
          %581 = vmatmul.mubr.f32.gmra.mxu0 %v330
          %v582 = vpop.f32.mrf.mxu0
          %v583 = vadd.f32 %v469, %v582
          %v584 = vpop.f32.mrf.mxu0
          %v585 = vadd.f32 %v473, %v584
          %586 = vmatprep.mubr.f32.mxu0 %v333
          %587 = vmatmul.mubr.f32.gmra.mxu0 %v332
          %v588 = vpop.f32.mrf.mxu0
          %v589 = vadd.f32 %v469, %v588
          %v590 = vpop.f32.mrf.mxu0
          %v591 = vadd.f32 %v473, %v590
          %592 = vmatprep.mubr.f32.mxu0 %v335
          %593 = vmatmul.mubr.f32.gmra.mxu0 %v334
          %v594 = vpop.f32.mrf.mxu0
          %v595 = vadd.f32 %v469, %v594
          %v596 = vpop.f32.mrf.mxu0
          %v597 = vadd.f32 %v473, %v596
          %598 = vdwg.mxu0
          %599 = vmatprep.subr.mxu0 %v399
          %600 = vmatpush1.msra.mxu0 %v398
          %601 = vmatprep.subr.mxu0 %v395
          %602 = vmatpush1.msra.mxu0 %v394
          %603 = vmatprep.subr.mxu0 %v391
          %604 = vmatpush1.msra.mxu0 %v390
          %605 = vmatprep.subr.mxu0 %v387
          %606 = vmatpush1.msra.mxu0 %v386
          %607 = vmatprep.subr.mxu0 %v383
          %608 = vmatpush1.msra.mxu0 %v382
          %609 = vmatprep.subr.mxu0 %v379
          %610 = vmatpush1.msra.mxu0 %v378
          %611 = vmatprep.subr.mxu0 %v375
          %612 = vmatpush1.msra.mxu0 %v374
          %613 = vmatprep.subr.mxu0 %v371
          %614 = vmatpush1.msra.mxu0 %v370
          %615 = vmatprep.subr.mxu0 %v367
          %616 = vmatpush1.msra.mxu0 %v366
          %617 = vmatprep.subr.mxu0 %v363
          %618 = vmatpush1.msra.mxu0 %v362
          %619 = vmatprep.subr.mxu0 %v359
          %620 = vmatpush1.msra.mxu0 %v358
          %621 = vmatprep.subr.mxu0 %v355
          %622 = vmatpush1.msra.mxu0 %v354
          %623 = vmatprep.subr.mxu0 %v351
          %624 = vmatpush1.msra.mxu0 %v350
          %625 = vmatprep.subr.mxu0 %v347
          %626 = vmatpush1.msra.mxu0 %v346
          %627 = vmatprep.subr.mxu0 %v343
          %628 = vmatpush1.msra.mxu0 %v342
          %629 = vmatprep.subr.mxu0 %v339
          %630 = vmatpush1.msra.mxu0 %v338
          %631 = vmatprep.subr.mxu0 %v463
          %632 = vmatpush2.msra.mxu0 %v462
          %633 = vmatprep.subr.mxu0 %v459
          %634 = vmatpush2.msra.mxu0 %v458
          %635 = vmatprep.subr.mxu0 %v455
          %636 = vmatpush2.msra.mxu0 %v454
          %637 = vmatprep.subr.mxu0 %v451
          %638 = vmatpush2.msra.mxu0 %v450
          %639 = vmatprep.subr.mxu0 %v447
          %640 = vmatpush2.msra.mxu0 %v446
          %641 = vmatprep.subr.mxu0 %v443
          %642 = vmatpush2.msra.mxu0 %v442
          %643 = vmatprep.subr.mxu0 %v439
          %644 = vmatpush2.msra.mxu0 %v438
          %645 = vmatprep.subr.mxu0 %v435
          %646 = vmatpush2.msra.mxu0 %v434
          %647 = vmatprep.subr.mxu0 %v431
          %648 = vmatpush2.msra.mxu0 %v430
          %649 = vmatprep.subr.mxu0 %v427
          %650 = vmatpush2.msra.mxu0 %v426
          %651 = vmatprep.subr.mxu0 %v423
          %652 = vmatpush2.msra.mxu0 %v422
          %653 = vmatprep.subr.mxu0 %v419
          %654 = vmatpush2.msra.mxu0 %v418
          %655 = vmatprep.subr.mxu0 %v415
          %656 = vmatpush2.msra.mxu0 %v414
          %657 = vmatprep.subr.mxu0 %v411
          %658 = vmatpush2.msra.mxu0 %v410
          %659 = vmatprep.subr.mxu0 %v407
          %660 = vmatpush2.msra.mxu0 %v406
          %661 = vmatprep.subr.mxu0 %v403
          %662 = vmatpush2.msra.mxu0 %v402
          %663 = vmatprep.mubr.f32.mxu0 %v321
          %664 = vmatmul.mubr.f32.gmra.mxu0 %v320
          %v665 = vpop.f32.mrf.mxu0
          %v666 = vadd.f32 %v477, %v665
          %v667 = vpop.f32.mrf.mxu0
          %v668 = vadd.f32 %v481, %v667
          %669 = vmatprep.mubr.f32.mxu0 %v323
          %670 = vmatmul.mubr.f32.gmra.mxu0 %v322
          %v671 = vpop.f32.mrf.mxu0
          %v672 = vadd.f32 %v477, %v671
          %v673 = vpop.f32.mrf.mxu0
          %v674 = vadd.f32 %v481, %v673
          %675 = vmatprep.mubr.f32.mxu0 %v325
          %676 = vmatmul.mubr.f32.gmra.mxu0 %v324
          %v677 = vpop.f32.mrf.mxu0
          %v678 = vadd.f32 %v477, %v677
          %v679 = vpop.f32.mrf.mxu0
          %v680 = vadd.f32 %v481, %v679
          %681 = vmatprep.mubr.f32.mxu0 %v327
          %682 = vmatmul.mubr.f32.gmra.mxu0 %v326
          %v683 = vpop.f32.mrf.mxu0
          %v684 = vadd.f32 %v477, %v683
          %v685 = vpop.f32.mrf.mxu0
          %v686 = vadd.f32 %v481, %v685
          %687 = vmatprep.mubr.f32.mxu0 %v329
          %688 = vmatmul.mubr.f32.gmra.mxu0 %v328
          %v689 = vpop.f32.mrf.mxu0
          %v690 = vadd.f32 %v477, %v689
          %v691 = vpop.f32.mrf.mxu0
          %v692 = vadd.f32 %v481, %v691
          %693 = vmatprep.mubr.f32.mxu0 %v331
          %694 = vmatmul.mubr.f32.gmra.mxu0 %v330
          %v695 = vpop.f32.mrf.mxu0
          %v696 = vadd.f32 %v477, %v695
          %v697 = vpop.f32.mrf.mxu0
          %v698 = vadd.f32 %v481, %v697
          %699 = vmatprep.mubr.f32.mxu0 %v333
          %700 = vmatmul.mubr.f32.gmra.mxu0 %v332
          %v701 = vpop.f32.mrf.mxu0
          %v702 = vadd.f32 %v477, %v701
          %v703 = vpop.f32.mrf.mxu0
          %v704 = vadd.f32 %v481, %v703
          %705 = vmatprep.mubr.f32.mxu0 %v335
          %706 = vmatmul.mubr.f32.gmra.mxu0 %v334
          %v707 = vpop.f32.mrf.mxu0
          %v708 = vadd.f32 %v477, %v707
          %v709 = vpop.f32.mrf.mxu0
          %v710 = vadd.f32 %v481, %v709
          %711 = vdwg.mxu0
          %712 = vst [vmem:[#allocation3] sm:$0xff] %v553
          %713 = vst [vmem:[#allocation3 + $0x8] sm:$0xff] %v555
          %714 = vst [vmem:[#allocation3 + $0x10] sm:$0xff] %v666
          %715 = vst [vmem:[#allocation3 + $0x18] sm:$0xff] %v668
          %716 = vst [vmem:[#allocation3 + $0x20] sm:$0xff] %v559
          %717 = vst [vmem:[#allocation3 + $0x28] sm:$0xff] %v561
          %718 = vst [vmem:[#allocation3 + $0x30] sm:$0xff] %v672
          %719 = vst [vmem:[#allocation3 + $0x38] sm:$0xff] %v674
          %720 = vst [vmem:[#allocation3 + $0x40] sm:$0xff] %v565
          %721 = vst [vmem:[#allocation3 + $0x48] sm:$0xff] %v567
          %722 = vst [vmem:[#allocation3 + $0x50] sm:$0xff] %v678
          %723 = vst [vmem:[#allocation3 + $0x58] sm:$0xff] %v680
          %724 = vst [vmem:[#allocation3 + $0x60] sm:$0xff] %v571
          %725 = vst [vmem:[#allocation3 + $0x68] sm:$0xff] %v573
          %726 = vst [vmem:[#allocation3 + $0x70] sm:$0xff] %v684
          %727 = vst [vmem:[#allocation3 + $0x78] sm:$0xff] %v686
          %728 = vst [vmem:[#allocation3 + $0x80] sm:$0xff] %v577
          %729 = vst [vmem:[#allocation3 + $0x88] sm:$0xff] %v579
          %730 = vst [vmem:[#allocation3 + $0x90] sm:$0xff] %v690
          %731 = vst [vmem:[#allocation3 + $0x98] sm:$0xff] %v692
          %732 = vst [vmem:[#allocation3 + $0xa0] sm:$0xff] %v583
          %733 = vst [vmem:[#allocation3 + $0xa8] sm:$0xff] %v585
          %734 = vst [vmem:[#allocation3 + $0xb0] sm:$0xff] %v696
          %735 = vst [vmem:[#allocation3 + $0xb8] sm:$0xff] %v698
          %736 = vst [vmem:[#allocation3 + $0xc0] sm:$0xff] %v589
          %737 = vst [vmem:[#allocation3 + $0xc8] sm:$0xff] %v591
          %738 = vst [vmem:[#allocation3 + $0xd0] sm:$0xff] %v702
          %739 = vst [vmem:[#allocation3 + $0xd8] sm:$0xff] %v704
          %740 = vst [vmem:[#allocation3 + $0xe0] sm:$0xff] %v595
          %741 = vst [vmem:[#allocation3 + $0xe8] sm:$0xff] %v597
          %742 = vst [vmem:[#allocation3 + $0xf0] sm:$0xff] %v708
          %743 = vst [vmem:[#allocation3 + $0xf8] sm:$0xff] %v710
        $region56: #{siamese_lstm_forward.1} parent=35 // pred_fallthru
          _
        %v744 = vld [vmem:[#allocation2] sm:$0xff]
        %v745 = vld [vmem:[#allocation2 + $0x8] sm:$0xff]
        %v746 = vld [vmem:[#allocation2 + $0x10] sm:$0xff]
        %v747 = vld [vmem:[#allocation2 + $0x18] sm:$0xff]
        %v748 = vld [vmem:[#allocation2 + $0x20] sm:$0xff]
        %v749 = vld [vmem:[#allocation2 + $0x28] sm:$0xff]
        %v750 = vld [vmem:[#allocation2 + $0x30] sm:$0xff]
        %v751 = vld [vmem:[#allocation2 + $0x38] sm:$0xff]
        %v752 = vld [vmem:[#allocation2 + $0x40] sm:$0xff]
        %v753 = vld [vmem:[#allocation2 + $0x48] sm:$0xff]
        %v754 = vld [vmem:[#allocation2 + $0x50] sm:$0xff]
        %v755 = vld [vmem:[#allocation2 + $0x58] sm:$0xff]
        %v756 = vld [vmem:[#allocation2 + $0x60] sm:$0xff]
        %v757 = vld [vmem:[#allocation2 + $0x68] sm:$0xff]
        %v758 = vld [vmem:[#allocation2 + $0x70] sm:$0xff]
        %v759 = vld [vmem:[#allocation2 + $0x78] sm:$0xff]
        %s760 = scalar_lea.vmem %s232, 1024 [#allocation5]
        %v761 = vld [vmem:[%s760] sm:$0xff]
        %v762 = vld [vmem:[%s760 + $0x8] sm:$0xff]
        %v763 = vld [vmem:[%s760 + $0x10] sm:$0xff]
        %v764 = vld [vmem:[%s760 + $0x18] sm:$0xff]
        %v765 = vld [vmem:[%s760 + $0x20] sm:$0xff]
        %v766 = vld [vmem:[%s760 + $0x28] sm:$0xff]
        %v767 = vld [vmem:[%s760 + $0x30] sm:$0xff]
        %v768 = vld [vmem:[%s760 + $0x38] sm:$0xff]
        %v769 = vld [vmem:[%s760 + $0x40] sm:$0xff]
        %v770 = vld [vmem:[%s760 + $0x48] sm:$0xff]
        %v771 = vld [vmem:[%s760 + $0x50] sm:$0xff]
        %v772 = vld [vmem:[%s760 + $0x58] sm:$0xff]
        %v773 = vld [vmem:[%s760 + $0x60] sm:$0xff]
        %v774 = vld [vmem:[%s760 + $0x68] sm:$0xff]
        %v775 = vld [vmem:[%s760 + $0x70] sm:$0xff]
        %v776 = vld [vmem:[%s760 + $0x78] sm:$0xff]
        %v777 = vld [vmem:[%s760 + $0x80] sm:$0xff]
        %v778 = vld [vmem:[%s760 + $0x88] sm:$0xff]
        %v779 = vld [vmem:[%s760 + $0x90] sm:$0xff]
        %v780 = vld [vmem:[%s760 + $0x98] sm:$0xff]
        %v781 = vld [vmem:[%s760 + $0xa0] sm:$0xff]
        %v782 = vld [vmem:[%s760 + $0xa8] sm:$0xff]
        %v783 = vld [vmem:[%s760 + $0xb0] sm:$0xff]
        %v784 = vld [vmem:[%s760 + $0xb8] sm:$0xff]
        %v785 = vld [vmem:[%s760 + $0xc0] sm:$0xff]
        %v786 = vld [vmem:[%s760 + $0xc8] sm:$0xff]
        %v787 = vld [vmem:[%s760 + $0xd0] sm:$0xff]
        %v788 = vld [vmem:[%s760 + $0xd8] sm:$0xff]
        %v789 = vld [vmem:[%s760 + $0xe0] sm:$0xff]
        %v790 = vld [vmem:[%s760 + $0xe8] sm:$0xff]
        %v791 = vld [vmem:[%s760 + $0xf0] sm:$0xff]
        %v792 = vld [vmem:[%s760 + $0xf8] sm:$0xff]
        %v793 = vld [vmem:[%s760 + $0x100] sm:$0xff]
        %v794 = vld [vmem:[%s760 + $0x108] sm:$0xff]
        %v795 = vld [vmem:[%s760 + $0x110] sm:$0xff]
        %v796 = vld [vmem:[%s760 + $0x118] sm:$0xff]
        %v797 = vld [vmem:[%s760 + $0x120] sm:$0xff]
        %v798 = vld [vmem:[%s760 + $0x128] sm:$0xff]
        %v799 = vld [vmem:[%s760 + $0x130] sm:$0xff]
        %v800 = vld [vmem:[%s760 + $0x138] sm:$0xff]
        %v801 = vld [vmem:[%s760 + $0x140] sm:$0xff]
        %v802 = vld [vmem:[%s760 + $0x148] sm:$0xff]
        %v803 = vld [vmem:[%s760 + $0x150] sm:$0xff]
        %v804 = vld [vmem:[%s760 + $0x158] sm:$0xff]
        %v805 = vld [vmem:[%s760 + $0x160] sm:$0xff]
        %v806 = vld [vmem:[%s760 + $0x168] sm:$0xff]
        %v807 = vld [vmem:[%s760 + $0x170] sm:$0xff]
        %v808 = vld [vmem:[%s760 + $0x178] sm:$0xff]
        %v809 = vld [vmem:[%s760 + $0x180] sm:$0xff]
        %v810 = vld [vmem:[%s760 + $0x188] sm:$0xff]
        %v811 = vld [vmem:[%s760 + $0x190] sm:$0xff]
        %v812 = vld [vmem:[%s760 + $0x198] sm:$0xff]
        %v813 = vld [vmem:[%s760 + $0x1a0] sm:$0xff]
        %v814 = vld [vmem:[%s760 + $0x1a8] sm:$0xff]
        %v815 = vld [vmem:[%s760 + $0x1b0] sm:$0xff]
        %v816 = vld [vmem:[%s760 + $0x1b8] sm:$0xff]
        %v817 = vld [vmem:[%s760 + $0x1c0] sm:$0xff]
        %v818 = vld [vmem:[%s760 + $0x1c8] sm:$0xff]
        %v819 = vld [vmem:[%s760 + $0x1d0] sm:$0xff]
        %v820 = vld [vmem:[%s760 + $0x1d8] sm:$0xff]
        %v821 = vld [vmem:[%s760 + $0x1e0] sm:$0xff]
        %v822 = vld [vmem:[%s760 + $0x1e8] sm:$0xff]
        %v823 = vld [vmem:[%s760 + $0x1f0] sm:$0xff]
        %v824 = vld [vmem:[%s760 + $0x1f8] sm:$0xff]
        %v825 = vld [vmem:[%s760 + $0x200] sm:$0xff]
        %v826 = vld [vmem:[%s760 + $0x208] sm:$0xff]
        %v827 = vld [vmem:[%s760 + $0x210] sm:$0xff]
        %v828 = vld [vmem:[%s760 + $0x218] sm:$0xff]
        %v829 = vld [vmem:[%s760 + $0x220] sm:$0xff]
        %v830 = vld [vmem:[%s760 + $0x228] sm:$0xff]
        %v831 = vld [vmem:[%s760 + $0x230] sm:$0xff]
        %v832 = vld [vmem:[%s760 + $0x238] sm:$0xff]
        %v833 = vld [vmem:[%s760 + $0x240] sm:$0xff]
        %v834 = vld [vmem:[%s760 + $0x248] sm:$0xff]
        %v835 = vld [vmem:[%s760 + $0x250] sm:$0xff]
        %v836 = vld [vmem:[%s760 + $0x258] sm:$0xff]
        %v837 = vld [vmem:[%s760 + $0x260] sm:$0xff]
        %v838 = vld [vmem:[%s760 + $0x268] sm:$0xff]
        %v839 = vld [vmem:[%s760 + $0x270] sm:$0xff]
        %v840 = vld [vmem:[%s760 + $0x278] sm:$0xff]
        %v841 = vld [vmem:[%s760 + $0x280] sm:$0xff]
        %v842 = vld [vmem:[%s760 + $0x288] sm:$0xff]
        %v843 = vld [vmem:[%s760 + $0x290] sm:$0xff]
        %v844 = vld [vmem:[%s760 + $0x298] sm:$0xff]
        %v845 = vld [vmem:[%s760 + $0x2a0] sm:$0xff]
        %v846 = vld [vmem:[%s760 + $0x2a8] sm:$0xff]
        %v847 = vld [vmem:[%s760 + $0x2b0] sm:$0xff]
        %v848 = vld [vmem:[%s760 + $0x2b8] sm:$0xff]
        %v849 = vld [vmem:[%s760 + $0x2c0] sm:$0xff]
        %v850 = vld [vmem:[%s760 + $0x2c8] sm:$0xff]
        %v851 = vld [vmem:[%s760 + $0x2d0] sm:$0xff]
        %v852 = vld [vmem:[%s760 + $0x2d8] sm:$0xff]
        %v853 = vld [vmem:[%s760 + $0x2e0] sm:$0xff]
        %v854 = vld [vmem:[%s760 + $0x2e8] sm:$0xff]
        %v855 = vld [vmem:[%s760 + $0x2f0] sm:$0xff]
        %v856 = vld [vmem:[%s760 + $0x2f8] sm:$0xff]
        %v857 = vld [vmem:[%s760 + $0x300] sm:$0xff]
        %v858 = vld [vmem:[%s760 + $0x308] sm:$0xff]
        %v859 = vld [vmem:[%s760 + $0x310] sm:$0xff]
        %v860 = vld [vmem:[%s760 + $0x318] sm:$0xff]
        %v861 = vld [vmem:[%s760 + $0x320] sm:$0xff]
        %v862 = vld [vmem:[%s760 + $0x328] sm:$0xff]
        %v863 = vld [vmem:[%s760 + $0x330] sm:$0xff]
        %v864 = vld [vmem:[%s760 + $0x338] sm:$0xff]
        %v865 = vld [vmem:[%s760 + $0x340] sm:$0xff]
        %v866 = vld [vmem:[%s760 + $0x348] sm:$0xff]
        %v867 = vld [vmem:[%s760 + $0x350] sm:$0xff]
        %v868 = vld [vmem:[%s760 + $0x358] sm:$0xff]
        %v869 = vld [vmem:[%s760 + $0x360] sm:$0xff]
        %v870 = vld [vmem:[%s760 + $0x368] sm:$0xff]
        %v871 = vld [vmem:[%s760 + $0x370] sm:$0xff]
        %v872 = vld [vmem:[%s760 + $0x378] sm:$0xff]
        %v873 = vld [vmem:[%s760 + $0x380] sm:$0xff]
        %v874 = vld [vmem:[%s760 + $0x388] sm:$0xff]
        %v875 = vld [vmem:[%s760 + $0x390] sm:$0xff]
        %v876 = vld [vmem:[%s760 + $0x398] sm:$0xff]
        %v877 = vld [vmem:[%s760 + $0x3a0] sm:$0xff]
        %v878 = vld [vmem:[%s760 + $0x3a8] sm:$0xff]
        %v879 = vld [vmem:[%s760 + $0x3b0] sm:$0xff]
        %v880 = vld [vmem:[%s760 + $0x3b8] sm:$0xff]
        %v881 = vld [vmem:[%s760 + $0x3c0] sm:$0xff]
        %v882 = vld [vmem:[%s760 + $0x3c8] sm:$0xff]
        %v883 = vld [vmem:[%s760 + $0x3d0] sm:$0xff]
        %v884 = vld [vmem:[%s760 + $0x3d8] sm:$0xff]
        %v885 = vld [vmem:[%s760 + $0x3e0] sm:$0xff]
        %v886 = vld [vmem:[%s760 + $0x3e8] sm:$0xff]
        %v887 = vld [vmem:[%s760 + $0x3f0] sm:$0xff]
        %v888 = vld [vmem:[%s760 + $0x3f8] sm:$0xff]
        %s889 = scalar_lea.vmem %s250, 4 [#allocation9]
        %v890 = vld [vmem:[%s889] sm:$0xf]
        %v892 = vlaneseq
        %v893 = vshrl.u32 %v892, 7
        %v894 = vsub.s32 0, %v893
        %v895 = vrot.slane %v890, %v894
        %v896 = vlaneseq
        %v897 = vshrl.u32 %v896, 7
        %v898 = vsub.s32 1, %v897
        %v899 = vrot.slane %v890, %v898
        %v900 = vlaneseq
        %v901 = vshrl.u32 %v900, 7
        %v902 = vsub.s32 2, %v901
        %v903 = vrot.slane %v890, %v902
        %v904 = vlaneseq
        %v905 = vshrl.u32 %v904, 7
        %v906 = vsub.s32 3, %v905
        %v907 = vrot.slane %v890, %v906
        %912 = vmatprep.subr.mxu0 %v822
        %913 = vmatpush1.msra.mxu0 %v821
        %914 = vmatprep.subr.mxu0 %v818
        %915 = vmatpush1.msra.mxu0 %v817
        %916 = vmatprep.subr.mxu0 %v814
        %917 = vmatpush1.msra.mxu0 %v813
        %918 = vmatprep.subr.mxu0 %v810
        %919 = vmatpush1.msra.mxu0 %v809
        %920 = vmatprep.subr.mxu0 %v806
        %921 = vmatpush1.msra.mxu0 %v805
        %922 = vmatprep.subr.mxu0 %v802
        %923 = vmatpush1.msra.mxu0 %v801
        %924 = vmatprep.subr.mxu0 %v798
        %925 = vmatpush1.msra.mxu0 %v797
        %926 = vmatprep.subr.mxu0 %v794
        %927 = vmatpush1.msra.mxu0 %v793
        %928 = vmatprep.subr.mxu0 %v790
        %929 = vmatpush1.msra.mxu0 %v789
        %930 = vmatprep.subr.mxu0 %v786
        %931 = vmatpush1.msra.mxu0 %v785
        %932 = vmatprep.subr.mxu0 %v782
        %933 = vmatpush1.msra.mxu0 %v781
        %934 = vmatprep.subr.mxu0 %v778
        %935 = vmatpush1.msra.mxu0 %v777
        %936 = vmatprep.subr.mxu0 %v774
        %937 = vmatpush1.msra.mxu0 %v773
        %938 = vmatprep.subr.mxu0 %v770
        %939 = vmatpush1.msra.mxu0 %v769
        %940 = vmatprep.subr.mxu0 %v766
        %941 = vmatpush1.msra.mxu0 %v765
        %942 = vmatprep.subr.mxu0 %v762
        %943 = vmatpush1.msra.mxu0 %v761
        %944 = vmatprep.subr.mxu0 %v886
        %945 = vmatpush2.msra.mxu0 %v885
        %946 = vmatprep.subr.mxu0 %v882
        %947 = vmatpush2.msra.mxu0 %v881
        %948 = vmatprep.subr.mxu0 %v878
        %949 = vmatpush2.msra.mxu0 %v877
        %950 = vmatprep.subr.mxu0 %v874
        %951 = vmatpush2.msra.mxu0 %v873
        %952 = vmatprep.subr.mxu0 %v870
        %953 = vmatpush2.msra.mxu0 %v869
        %954 = vmatprep.subr.mxu0 %v866
        %955 = vmatpush2.msra.mxu0 %v865
        %956 = vmatprep.subr.mxu0 %v862
        %957 = vmatpush2.msra.mxu0 %v861
        %958 = vmatprep.subr.mxu0 %v858
        %959 = vmatpush2.msra.mxu0 %v857
        %960 = vmatprep.subr.mxu0 %v854
        %961 = vmatpush2.msra.mxu0 %v853
        %962 = vmatprep.subr.mxu0 %v850
        %963 = vmatpush2.msra.mxu0 %v849
        %964 = vmatprep.subr.mxu0 %v846
        %965 = vmatpush2.msra.mxu0 %v845
        %966 = vmatprep.subr.mxu0 %v842
        %967 = vmatpush2.msra.mxu0 %v841
        %968 = vmatprep.subr.mxu0 %v838
        %969 = vmatpush2.msra.mxu0 %v837
        %970 = vmatprep.subr.mxu0 %v834
        %971 = vmatpush2.msra.mxu0 %v833
        %972 = vmatprep.subr.mxu0 %v830
        %973 = vmatpush2.msra.mxu0 %v829
        %974 = vmatprep.subr.mxu0 %v826
        %975 = vmatpush2.msra.mxu0 %v825
        %976 = vmatprep.mubr.f32.mxu0 %v745
        %977 = vmatmul.mubr.f32.gmra.mxu0 %v744
        %v978 = vpop.f32.mrf.mxu0
        %v979 = vadd.f32 %v895, %v978
        %v980 = vpop.f32.mrf.mxu0
        %v981 = vadd.f32 %v899, %v980
        %982 = vmatprep.mubr.f32.mxu0 %v747
        %983 = vmatmul.mubr.f32.gmra.mxu0 %v746
        %v984 = vpop.f32.mrf.mxu0
        %v985 = vadd.f32 %v895, %v984
        %v986 = vpop.f32.mrf.mxu0
        %v987 = vadd.f32 %v899, %v986
        %988 = vmatprep.mubr.f32.mxu0 %v749
        %989 = vmatmul.mubr.f32.gmra.mxu0 %v748
        %v990 = vpop.f32.mrf.mxu0
        %v991 = vadd.f32 %v895, %v990
        %v992 = vpop.f32.mrf.mxu0
        %v993 = vadd.f32 %v899, %v992
        %994 = vmatprep.mubr.f32.mxu0 %v751
        %995 = vmatmul.mubr.f32.gmra.mxu0 %v750
        %v996 = vpop.f32.mrf.mxu0
        %v997 = vadd.f32 %v895, %v996
        %v998 = vpop.f32.mrf.mxu0
        %v999 = vadd.f32 %v899, %v998
        %1000 = vmatprep.mubr.f32.mxu0 %v753
        %1001 = vmatmul.mubr.f32.gmra.mxu0 %v752
        %v1002 = vpop.f32.mrf.mxu0
        %v1003 = vadd.f32 %v895, %v1002
        %v1004 = vpop.f32.mrf.mxu0
        %v1005 = vadd.f32 %v899, %v1004
        %1006 = vmatprep.mubr.f32.mxu0 %v755
        %1007 = vmatmul.mubr.f32.gmra.mxu0 %v754
        %v1008 = vpop.f32.mrf.mxu0
        %v1009 = vadd.f32 %v895, %v1008
        %v1010 = vpop.f32.mrf.mxu0
        %v1011 = vadd.f32 %v899, %v1010
        %1012 = vmatprep.mubr.f32.mxu0 %v757
        %1013 = vmatmul.mubr.f32.gmra.mxu0 %v756
        %v1014 = vpop.f32.mrf.mxu0
        %v1015 = vadd.f32 %v895, %v1014
        %v1016 = vpop.f32.mrf.mxu0
        %v1017 = vadd.f32 %v899, %v1016
        %1018 = vmatprep.mubr.f32.mxu0 %v759
        %1019 = vmatmul.mubr.f32.gmra.mxu0 %v758
        %v1020 = vpop.f32.mrf.mxu0
        %v1021 = vadd.f32 %v895, %v1020
        %v1022 = vpop.f32.mrf.mxu0
        %v1023 = vadd.f32 %v899, %v1022
        %1024 = vdwg.mxu0
        %1025 = vmatprep.subr.mxu0 %v824
        %1026 = vmatpush1.msra.mxu0 %v823
        %1027 = vmatprep.subr.mxu0 %v820
        %1028 = vmatpush1.msra.mxu0 %v819
        %1029 = vmatprep.subr.mxu0 %v816
        %1030 = vmatpush1.msra.mxu0 %v815
        %1031 = vmatprep.subr.mxu0 %v812
        %1032 = vmatpush1.msra.mxu0 %v811
        %1033 = vmatprep.subr.mxu0 %v808
        %1034 = vmatpush1.msra.mxu0 %v807
        %1035 = vmatprep.subr.mxu0 %v804
        %1036 = vmatpush1.msra.mxu0 %v803
        %1037 = vmatprep.subr.mxu0 %v800
        %1038 = vmatpush1.msra.mxu0 %v799
        %1039 = vmatprep.subr.mxu0 %v796
        %1040 = vmatpush1.msra.mxu0 %v795
        %1041 = vmatprep.subr.mxu0 %v792
        %1042 = vmatpush1.msra.mxu0 %v791
        %1043 = vmatprep.subr.mxu0 %v788
        %1044 = vmatpush1.msra.mxu0 %v787
        %1045 = vmatprep.subr.mxu0 %v784
        %1046 = vmatpush1.msra.mxu0 %v783
        %1047 = vmatprep.subr.mxu0 %v780
        %1048 = vmatpush1.msra.mxu0 %v779
        %1049 = vmatprep.subr.mxu0 %v776
        %1050 = vmatpush1.msra.mxu0 %v775
        %1051 = vmatprep.subr.mxu0 %v772
        %1052 = vmatpush1.msra.mxu0 %v771
        %1053 = vmatprep.subr.mxu0 %v768
        %1054 = vmatpush1.msra.mxu0 %v767
        %1055 = vmatprep.subr.mxu0 %v764
        %1056 = vmatpush1.msra.mxu0 %v763
        %1057 = vmatprep.subr.mxu0 %v888
        %1058 = vmatpush2.msra.mxu0 %v887
        %1059 = vmatprep.subr.mxu0 %v884
        %1060 = vmatpush2.msra.mxu0 %v883
        %1061 = vmatprep.subr.mxu0 %v880
        %1062 = vmatpush2.msra.mxu0 %v879
        %1063 = vmatprep.subr.mxu0 %v876
        %1064 = vmatpush2.msra.mxu0 %v875
        %1065 = vmatprep.subr.mxu0 %v872
        %1066 = vmatpush2.msra.mxu0 %v871
        %1067 = vmatprep.subr.mxu0 %v868
        %1068 = vmatpush2.msra.mxu0 %v867
        %1069 = vmatprep.subr.mxu0 %v864
        %1070 = vmatpush2.msra.mxu0 %v863
        %1071 = vmatprep.subr.mxu0 %v860
        %1072 = vmatpush2.msra.mxu0 %v859
        %1073 = vmatprep.subr.mxu0 %v856
        %1074 = vmatpush2.msra.mxu0 %v855
        %1075 = vmatprep.subr.mxu0 %v852
        %1076 = vmatpush2.msra.mxu0 %v851
        %1077 = vmatprep.subr.mxu0 %v848
        %1078 = vmatpush2.msra.mxu0 %v847
        %1079 = vmatprep.subr.mxu0 %v844
        %1080 = vmatpush2.msra.mxu0 %v843
        %1081 = vmatprep.subr.mxu0 %v840
        %1082 = vmatpush2.msra.mxu0 %v839
        %1083 = vmatprep.subr.mxu0 %v836
        %1084 = vmatpush2.msra.mxu0 %v835
        %1085 = vmatprep.subr.mxu0 %v832
        %1086 = vmatpush2.msra.mxu0 %v831
        %1087 = vmatprep.subr.mxu0 %v828
        %1088 = vmatpush2.msra.mxu0 %v827
        %1089 = vmatprep.mubr.f32.mxu0 %v745
        %1090 = vmatmul.mubr.f32.gmra.mxu0 %v744
        %v1091 = vpop.f32.mrf.mxu0
        %v1092 = vadd.f32 %v903, %v1091
        %v1093 = vpop.f32.mrf.mxu0
        %v1094 = vadd.f32 %v907, %v1093
        %1095 = vmatprep.mubr.f32.mxu0 %v747
        %1096 = vmatmul.mubr.f32.gmra.mxu0 %v746
        %v1097 = vpop.f32.mrf.mxu0
        %v1098 = vadd.f32 %v903, %v1097
        %v1099 = vpop.f32.mrf.mxu0
        %v1100 = vadd.f32 %v907, %v1099
        %1101 = vmatprep.mubr.f32.mxu0 %v749
        %1102 = vmatmul.mubr.f32.gmra.mxu0 %v748
        %v1103 = vpop.f32.mrf.mxu0
        %v1104 = vadd.f32 %v903, %v1103
        %v1105 = vpop.f32.mrf.mxu0
        %v1106 = vadd.f32 %v907, %v1105
        %1107 = vmatprep.mubr.f32.mxu0 %v751
        %1108 = vmatmul.mubr.f32.gmra.mxu0 %v750
        %v1109 = vpop.f32.mrf.mxu0
        %v1110 = vadd.f32 %v903, %v1109
        %v1111 = vpop.f32.mrf.mxu0
        %v1112 = vadd.f32 %v907, %v1111
        %1113 = vmatprep.mubr.f32.mxu0 %v753
        %1114 = vmatmul.mubr.f32.gmra.mxu0 %v752
        %v1115 = vpop.f32.mrf.mxu0
        %v1116 = vadd.f32 %v903, %v1115
        %v1117 = vpop.f32.mrf.mxu0
        %v1118 = vadd.f32 %v907, %v1117
        %1119 = vmatprep.mubr.f32.mxu0 %v755
        %1120 = vmatmul.mubr.f32.gmra.mxu0 %v754
        %v1121 = vpop.f32.mrf.mxu0
        %v1122 = vadd.f32 %v903, %v1121
        %v1123 = vpop.f32.mrf.mxu0
        %v1124 = vadd.f32 %v907, %v1123
        %1125 = vmatprep.mubr.f32.mxu0 %v757
        %1126 = vmatmul.mubr.f32.gmra.mxu0 %v756
        %v1127 = vpop.f32.mrf.mxu0
        %v1128 = vadd.f32 %v903, %v1127
        %v1129 = vpop.f32.mrf.mxu0
        %v1130 = vadd.f32 %v907, %v1129
        %1131 = vmatprep.mubr.f32.mxu0 %v759
        %1132 = vmatmul.mubr.f32.gmra.mxu0 %v758
        %v1133 = vpop.f32.mrf.mxu0
        %v1134 = vadd.f32 %v903, %v1133
        %v1135 = vpop.f32.mrf.mxu0
        %v1136 = vadd.f32 %v907, %v1135
        %1137 = vdwg.mxu0
        %1138 = vst [vmem:[#allocation4] sm:$0xff] %v979
        %1139 = vst [vmem:[#allocation4 + $0x8] sm:$0xff] %v981
        %1140 = vst [vmem:[#allocation4 + $0x10] sm:$0xff] %v1092
        %1141 = vst [vmem:[#allocation4 + $0x18] sm:$0xff] %v1094
        %1142 = vst [vmem:[#allocation4 + $0x20] sm:$0xff] %v985
        %1143 = vst [vmem:[#allocation4 + $0x28] sm:$0xff] %v987
        %1144 = vst [vmem:[#allocation4 + $0x30] sm:$0xff] %v1098
        %1145 = vst [vmem:[#allocation4 + $0x38] sm:$0xff] %v1100
        %1146 = vst [vmem:[#allocation4 + $0x40] sm:$0xff] %v991
        %1147 = vst [vmem:[#allocation4 + $0x48] sm:$0xff] %v993
        %1148 = vst [vmem:[#allocation4 + $0x50] sm:$0xff] %v1104
        %1149 = vst [vmem:[#allocation4 + $0x58] sm:$0xff] %v1106
        %1150 = vst [vmem:[#allocation4 + $0x60] sm:$0xff] %v997
        %1151 = vst [vmem:[#allocation4 + $0x68] sm:$0xff] %v999
        %1152 = vst [vmem:[#allocation4 + $0x70] sm:$0xff] %v1110
        %1153 = vst [vmem:[#allocation4 + $0x78] sm:$0xff] %v1112
        %1154 = vst [vmem:[#allocation4 + $0x80] sm:$0xff] %v1003
        %1155 = vst [vmem:[#allocation4 + $0x88] sm:$0xff] %v1005
        %1156 = vst [vmem:[#allocation4 + $0x90] sm:$0xff] %v1116
        %1157 = vst [vmem:[#allocation4 + $0x98] sm:$0xff] %v1118
        %1158 = vst [vmem:[#allocation4 + $0xa0] sm:$0xff] %v1009
        %1159 = vst [vmem:[#allocation4 + $0xa8] sm:$0xff] %v1011
        %1160 = vst [vmem:[#allocation4 + $0xb0] sm:$0xff] %v1122
        %1161 = vst [vmem:[#allocation4 + $0xb8] sm:$0xff] %v1124
        %1162 = vst [vmem:[#allocation4 + $0xc0] sm:$0xff] %v1015
        %1163 = vst [vmem:[#allocation4 + $0xc8] sm:$0xff] %v1017
        %1164 = vst [vmem:[#allocation4 + $0xd0] sm:$0xff] %v1128
        %1165 = vst [vmem:[#allocation4 + $0xd8] sm:$0xff] %v1130
        %1166 = vst [vmem:[#allocation4 + $0xe0] sm:$0xff] %v1021
        %1167 = vst [vmem:[#allocation4 + $0xe8] sm:$0xff] %v1023
        %1168 = vst [vmem:[#allocation4 + $0xf0] sm:$0xff] %v1134
        %1169 = vst [vmem:[#allocation4 + $0xf8] sm:$0xff] %v1136
        // Predicated region
        $region57: #{siamese_lstm_forward.1} parent=35 // pred_check
          %p1170 = pneg %p316
        $region58: #{siamese_lstm_forward.1} parent=35 // pred_check_branch
          %1172 = sbr.rel (%p1170) target = $region60
        $region59: #{siamese_lstm_forward.1} parent=35 // pred_region
          %v1173 = vld [vmem:[#allocation3] sm:$0xff]
          %v1174 = vld [vmem:[#allocation3 + $0x8] sm:$0xff]
          %v1175 = vld [vmem:[#allocation3 + $0x10] sm:$0xff]
          %v1176 = vld [vmem:[#allocation3 + $0x18] sm:$0xff]
          %v1177 = vld [vmem:[%s241] sm:$0xff]
          %v1178 = vld [vmem:[%s241 + $0x8] sm:$0xff]
          %v1179 = vld [vmem:[%s241 + $0x10] sm:$0xff]
          %v1180 = vld [vmem:[%s241 + $0x18] sm:$0xff]
          %v1181 = vld [vmem:[%s241 + $0x20] sm:$0xff]
          %v1182 = vld [vmem:[%s241 + $0x28] sm:$0xff]
          %v1183 = vld [vmem:[%s241 + $0x30] sm:$0xff]
          %v1184 = vld [vmem:[%s241 + $0x38] sm:$0xff]
          %v1185 = vld [vmem:[%s241 + $0x40] sm:$0xff]
          %v1186 = vld [vmem:[%s241 + $0x48] sm:$0xff]
          %v1187 = vld [vmem:[%s241 + $0x50] sm:$0xff]
          %v1188 = vld [vmem:[%s241 + $0x58] sm:$0xff]
          %v1189 = vld [vmem:[%s241 + $0x60] sm:$0xff]
          %v1190 = vld [vmem:[%s241 + $0x68] sm:$0xff]
          %v1191 = vld [vmem:[%s241 + $0x70] sm:$0xff]
          %v1192 = vld [vmem:[%s241 + $0x78] sm:$0xff]
          %v1193 = vld [vmem:[%s241 + $0x80] sm:$0xff]
          %v1194 = vld [vmem:[%s241 + $0x88] sm:$0xff]
          %v1195 = vld [vmem:[%s241 + $0x90] sm:$0xff]
          %v1196 = vld [vmem:[%s241 + $0x98] sm:$0xff]
          %v1197 = vld [vmem:[%s241 + $0xa0] sm:$0xff]
          %v1198 = vld [vmem:[%s241 + $0xa8] sm:$0xff]
          %v1199 = vld [vmem:[%s241 + $0xb0] sm:$0xff]
          %v1200 = vld [vmem:[%s241 + $0xb8] sm:$0xff]
          %v1201 = vld [vmem:[%s241 + $0xc0] sm:$0xff]
          %v1202 = vld [vmem:[%s241 + $0xc8] sm:$0xff]
          %v1203 = vld [vmem:[%s241 + $0xd0] sm:$0xff]
          %v1204 = vld [vmem:[%s241 + $0xd8] sm:$0xff]
          %v1205 = vld [vmem:[%s241 + $0xe0] sm:$0xff]
          %v1206 = vld [vmem:[%s241 + $0xe8] sm:$0xff]
          %v1207 = vld [vmem:[%s241 + $0xf0] sm:$0xff]
          %v1208 = vld [vmem:[%s241 + $0xf8] sm:$0xff]
          %v1209 = vld [vmem:[%s241 + $0x100] sm:$0xff]
          %v1210 = vld [vmem:[%s241 + $0x108] sm:$0xff]
          %v1211 = vld [vmem:[%s241 + $0x110] sm:$0xff]
          %v1212 = vld [vmem:[%s241 + $0x118] sm:$0xff]
          %v1213 = vld [vmem:[%s241 + $0x120] sm:$0xff]
          %v1214 = vld [vmem:[%s241 + $0x128] sm:$0xff]
          %v1215 = vld [vmem:[%s241 + $0x130] sm:$0xff]
          %v1216 = vld [vmem:[%s241 + $0x138] sm:$0xff]
          %v1217 = vld [vmem:[%s241 + $0x140] sm:$0xff]
          %v1218 = vld [vmem:[%s241 + $0x148] sm:$0xff]
          %v1219 = vld [vmem:[%s241 + $0x150] sm:$0xff]
          %v1220 = vld [vmem:[%s241 + $0x158] sm:$0xff]
          %v1221 = vld [vmem:[%s241 + $0x160] sm:$0xff]
          %v1222 = vld [vmem:[%s241 + $0x168] sm:$0xff]
          %v1223 = vld [vmem:[%s241 + $0x170] sm:$0xff]
          %v1224 = vld [vmem:[%s241 + $0x178] sm:$0xff]
          %v1225 = vld [vmem:[%s241 + $0x180] sm:$0xff]
          %v1226 = vld [vmem:[%s241 + $0x188] sm:$0xff]
          %v1227 = vld [vmem:[%s241 + $0x190] sm:$0xff]
          %v1228 = vld [vmem:[%s241 + $0x198] sm:$0xff]
          %v1229 = vld [vmem:[%s241 + $0x1a0] sm:$0xff]
          %v1230 = vld [vmem:[%s241 + $0x1a8] sm:$0xff]
          %v1231 = vld [vmem:[%s241 + $0x1b0] sm:$0xff]
          %v1232 = vld [vmem:[%s241 + $0x1b8] sm:$0xff]
          %v1233 = vld [vmem:[%s241 + $0x1c0] sm:$0xff]
          %v1234 = vld [vmem:[%s241 + $0x1c8] sm:$0xff]
          %v1235 = vld [vmem:[%s241 + $0x1d0] sm:$0xff]
          %v1236 = vld [vmem:[%s241 + $0x1d8] sm:$0xff]
          %v1237 = vld [vmem:[%s241 + $0x1e0] sm:$0xff]
          %v1238 = vld [vmem:[%s241 + $0x1e8] sm:$0xff]
          %v1239 = vld [vmem:[%s241 + $0x1f0] sm:$0xff]
          %v1240 = vld [vmem:[%s241 + $0x1f8] sm:$0xff]
          %1241 = vmatprep.subr.mxu0 %v1238
          %1242 = vmatpush1.msra.mxu0 %v1237
          %1243 = vmatprep.subr.mxu0 %v1234
          %1244 = vmatpush1.msra.mxu0 %v1233
          %1245 = vmatprep.subr.mxu0 %v1230
          %1246 = vmatpush1.msra.mxu0 %v1229
          %1247 = vmatprep.subr.mxu0 %v1226
          %1248 = vmatpush1.msra.mxu0 %v1225
          %1249 = vmatprep.subr.mxu0 %v1222
          %1250 = vmatpush1.msra.mxu0 %v1221
          %1251 = vmatprep.subr.mxu0 %v1218
          %1252 = vmatpush1.msra.mxu0 %v1217
          %1253 = vmatprep.subr.mxu0 %v1214
          %1254 = vmatpush1.msra.mxu0 %v1213
          %1255 = vmatprep.subr.mxu0 %v1210
          %1256 = vmatpush1.msra.mxu0 %v1209
          %1257 = vmatprep.subr.mxu0 %v1206
          %1258 = vmatpush1.msra.mxu0 %v1205
          %1259 = vmatprep.subr.mxu0 %v1202
          %1260 = vmatpush1.msra.mxu0 %v1201
          %1261 = vmatprep.subr.mxu0 %v1198
          %1262 = vmatpush1.msra.mxu0 %v1197
          %1263 = vmatprep.subr.mxu0 %v1194
          %1264 = vmatpush1.msra.mxu0 %v1193
          %1265 = vmatprep.subr.mxu0 %v1190
          %1266 = vmatpush1.msra.mxu0 %v1189
          %1267 = vmatprep.subr.mxu0 %v1186
          %1268 = vmatpush1.msra.mxu0 %v1185
          %1269 = vmatprep.subr.mxu0 %v1182
          %1270 = vmatpush1.msra.mxu0 %v1181
          %1271 = vmatprep.subr.mxu0 %v1178
          %1272 = vmatpush1.msra.mxu0 %v1177
          %1273 = vmatprep.subr.mxu0 0.0
          %1274 = vmatpush2.msra.mxu0 0.0
          %1275 = vmatprep.subr.mxu0 0.0
          %1276 = vmatpush2.msra.mxu0 0.0
          %1277 = vmatprep.subr.mxu0 0.0
          %1278 = vmatpush2.msra.mxu0 0.0
          %1279 = vmatprep.subr.mxu0 0.0
          %1280 = vmatpush2.msra.mxu0 0.0
          %1281 = vmatprep.subr.mxu0 0.0
          %1282 = vmatpush2.msra.mxu0 0.0
          %1283 = vmatprep.subr.mxu0 0.0
          %1284 = vmatpush2.msra.mxu0 0.0
          %1285 = vmatprep.subr.mxu0 0.0
          %1286 = vmatpush2.msra.mxu0 0.0
          %1287 = vmatprep.subr.mxu0 0.0
          %1288 = vmatpush2.msra.mxu0 0.0
          %1289 = vmatprep.subr.mxu0 0.0
          %1290 = vmatpush2.msra.mxu0 0.0
          %1291 = vmatprep.subr.mxu0 0.0
          %1292 = vmatpush2.msra.mxu0 0.0
          %1293 = vmatprep.subr.mxu0 0.0
          %1294 = vmatpush2.msra.mxu0 0.0
          %1295 = vmatprep.subr.mxu0 0.0
          %1296 = vmatpush2.msra.mxu0 0.0
          %1297 = vmatprep.subr.mxu0 0.0
          %1298 = vmatpush2.msra.mxu0 0.0
          %1299 = vmatprep.subr.mxu0 0.0
          %1300 = vmatpush2.msra.mxu0 0.0
          %1301 = vmatprep.subr.mxu0 0.0
          %1302 = vmatpush2.msra.mxu0 0.0
          %1303 = vmatprep.subr.mxu0 0.0
          %1304 = vmatpush2.msra.mxu0 0.0
          %1305 = vmatprep.mubr.f32.mxu0 0.0
          %1306 = vmatmul.mubr.f32.gmra.mxu0 0.0
          %v1307 = vpop.f32.mrf.mxu0
          %v1308 = vadd.f32 0.0, %v1307
          %v1309 = vpop.f32.mrf.mxu0
          %v1310 = vadd.f32 0.0, %v1309
          %1311 = vdwg.mxu0
          %1312 = vmatprep.subr.mxu0 %v1240
          %1313 = vmatpush1.msra.mxu0 %v1239
          %1314 = vmatprep.subr.mxu0 %v1236
          %1315 = vmatpush1.msra.mxu0 %v1235
          %1316 = vmatprep.subr.mxu0 %v1232
          %1317 = vmatpush1.msra.mxu0 %v1231
          %1318 = vmatprep.subr.mxu0 %v1228
          %1319 = vmatpush1.msra.mxu0 %v1227
          %1320 = vmatprep.subr.mxu0 %v1224
          %1321 = vmatpush1.msra.mxu0 %v1223
          %1322 = vmatprep.subr.mxu0 %v1220
          %1323 = vmatpush1.msra.mxu0 %v1219
          %1324 = vmatprep.subr.mxu0 %v1216
          %1325 = vmatpush1.msra.mxu0 %v1215
          %1326 = vmatprep.subr.mxu0 %v1212
          %1327 = vmatpush1.msra.mxu0 %v1211
          %1328 = vmatprep.subr.mxu0 %v1208
          %1329 = vmatpush1.msra.mxu0 %v1207
          %1330 = vmatprep.subr.mxu0 %v1204
          %1331 = vmatpush1.msra.mxu0 %v1203
          %1332 = vmatprep.subr.mxu0 %v1200
          %1333 = vmatpush1.msra.mxu0 %v1199
          %1334 = vmatprep.subr.mxu0 %v1196
          %1335 = vmatpush1.msra.mxu0 %v1195
          %1336 = vmatprep.subr.mxu0 %v1192
          %1337 = vmatpush1.msra.mxu0 %v1191
          %1338 = vmatprep.subr.mxu0 %v1188
          %1339 = vmatpush1.msra.mxu0 %v1187
          %1340 = vmatprep.subr.mxu0 %v1184
          %1341 = vmatpush1.msra.mxu0 %v1183
          %1342 = vmatprep.subr.mxu0 %v1180
          %1343 = vmatpush1.msra.mxu0 %v1179
          %1344 = vmatprep.subr.mxu0 0.0
          %1345 = vmatpush2.msra.mxu0 0.0
          %1346 = vmatprep.subr.mxu0 0.0
          %1347 = vmatpush2.msra.mxu0 0.0
          %1348 = vmatprep.subr.mxu0 0.0
          %1349 = vmatpush2.msra.mxu0 0.0
          %1350 = vmatprep.subr.mxu0 0.0
          %1351 = vmatpush2.msra.mxu0 0.0
          %1352 = vmatprep.subr.mxu0 0.0
          %1353 = vmatpush2.msra.mxu0 0.0
          %1354 = vmatprep.subr.mxu0 0.0
          %1355 = vmatpush2.msra.mxu0 0.0
          %1356 = vmatprep.subr.mxu0 0.0
          %1357 = vmatpush2.msra.mxu0 0.0
          %1358 = vmatprep.subr.mxu0 0.0
          %1359 = vmatpush2.msra.mxu0 0.0
          %1360 = vmatprep.subr.mxu0 0.0
          %1361 = vmatpush2.msra.mxu0 0.0
          %1362 = vmatprep.subr.mxu0 0.0
          %1363 = vmatpush2.msra.mxu0 0.0
          %1364 = vmatprep.subr.mxu0 0.0
          %1365 = vmatpush2.msra.mxu0 0.0
          %1366 = vmatprep.subr.mxu0 0.0
          %1367 = vmatpush2.msra.mxu0 0.0
          %1368 = vmatprep.subr.mxu0 0.0
          %1369 = vmatpush2.msra.mxu0 0.0
          %1370 = vmatprep.subr.mxu0 0.0
          %1371 = vmatpush2.msra.mxu0 0.0
          %1372 = vmatprep.subr.mxu0 0.0
          %1373 = vmatpush2.msra.mxu0 0.0
          %1374 = vmatprep.subr.mxu0 0.0
          %1375 = vmatpush2.msra.mxu0 0.0
          %1376 = vmatprep.mubr.f32.mxu0 0.0
          %1377 = vmatmul.mubr.f32.gmra.mxu0 0.0
          %v1378 = vpop.f32.mrf.mxu0
          %v1379 = vadd.f32 0.0, %v1378
          %v1380 = vpop.f32.mrf.mxu0
          %v1381 = vadd.f32 0.0, %v1380
          %1382 = vdwg.mxu0
          %v1383 = vadd.f32 %v1173, %v1308
          %v1384 = vadd.f32 %v1174, %v1310
          %v1385 = vadd.f32 %v1175, %v1379
          %v1386 = vadd.f32 %v1176, %v1381
          %v1387 = vtanh.pop %v1383
          %v1388 = vtanh.pop %v1384
          %v1389 = vtanh.pop %v1385
          %v1390 = vtanh.pop %v1386
          %v1391 = vmul.f32 %v1387, 0.5
          %v1392 = vadd.f32 %v1391, 0.5
          %v1393 = vmul.f32 %v1388, 0.5
          %v1394 = vadd.f32 %v1393, 0.5
          %v1395 = vmul.f32 %v1390, 0.5
          %v1396 = vadd.f32 %v1395, 0.5
          %v1397 = vmul.f32 %v1394, 0.0
          %v1398 = vmul.f32 %v1392, %v1389
          %v1399 = vadd.f32 %v1397, %v1398
          %v1400 = vtanh.pop %v1399
          %v1401 = vmul.f32 %v1396, %v1400
          %v1402 = vmax.f32 %v1401, 0.0
          %1403 = vst [vmem:[#allocation2] sm:$0xff] %v1402
          %v1404 = vld [vmem:[#allocation3 + $0x20] sm:$0xff]
          %v1405 = vld [vmem:[#allocation3 + $0x28] sm:$0xff]
          %v1406 = vld [vmem:[#allocation3 + $0x30] sm:$0xff]
          %v1407 = vld [vmem:[#allocation3 + $0x38] sm:$0xff]
          %v1408 = vld [vmem:[%s241] sm:$0xff]
          %v1409 = vld [vmem:[%s241 + $0x8] sm:$0xff]
          %v1410 = vld [vmem:[%s241 + $0x10] sm:$0xff]
          %v1411 = vld [vmem:[%s241 + $0x18] sm:$0xff]
          %v1412 = vld [vmem:[%s241 + $0x20] sm:$0xff]
          %v1413 = vld [vmem:[%s241 + $0x28] sm:$0xff]
          %v1414 = vld [vmem:[%s241 + $0x30] sm:$0xff]
          %v1415 = vld [vmem:[%s241 + $0x38] sm:$0xff]
          %v1416 = vld [vmem:[%s241 + $0x40] sm:$0xff]
          %v1417 = vld [vmem:[%s241 + $0x48] sm:$0xff]
          %v1418 = vld [vmem:[%s241 + $0x50] sm:$0xff]
          %v1419 = vld [vmem:[%s241 + $0x58] sm:$0xff]
          %v1420 = vld [vmem:[%s241 + $0x60] sm:$0xff]
          %v1421 = vld [vmem:[%s241 + $0x68] sm:$0xff]
          %v1422 = vld [vmem:[%s241 + $0x70] sm:$0xff]
          %v1423 = vld [vmem:[%s241 + $0x78] sm:$0xff]
          %v1424 = vld [vmem:[%s241 + $0x80] sm:$0xff]
          %v1425 = vld [vmem:[%s241 + $0x88] sm:$0xff]
          %v1426 = vld [vmem:[%s241 + $0x90] sm:$0xff]
          %v1427 = vld [vmem:[%s241 + $0x98] sm:$0xff]
          %v1428 = vld [vmem:[%s241 + $0xa0] sm:$0xff]
          %v1429 = vld [vmem:[%s241 + $0xa8] sm:$0xff]
          %v1430 = vld [vmem:[%s241 + $0xb0] sm:$0xff]
          %v1431 = vld [vmem:[%s241 + $0xb8] sm:$0xff]
          %v1432 = vld [vmem:[%s241 + $0xc0] sm:$0xff]
          %v1433 = vld [vmem:[%s241 + $0xc8] sm:$0xff]
          %v1434 = vld [vmem:[%s241 + $0xd0] sm:$0xff]
          %v1435 = vld [vmem:[%s241 + $0xd8] sm:$0xff]
          %v1436 = vld [vmem:[%s241 + $0xe0] sm:$0xff]
          %v1437 = vld [vmem:[%s241 + $0xe8] sm:$0xff]
          %v1438 = vld [vmem:[%s241 + $0xf0] sm:$0xff]
          %v1439 = vld [vmem:[%s241 + $0xf8] sm:$0xff]
          %v1440 = vld [vmem:[%s241 + $0x100] sm:$0xff]
          %v1441 = vld [vmem:[%s241 + $0x108] sm:$0xff]
          %v1442 = vld [vmem:[%s241 + $0x110] sm:$0xff]
          %v1443 = vld [vmem:[%s241 + $0x118] sm:$0xff]
          %v1444 = vld [vmem:[%s241 + $0x120] sm:$0xff]
          %v1445 = vld [vmem:[%s241 + $0x128] sm:$0xff]
          %v1446 = vld [vmem:[%s241 + $0x130] sm:$0xff]
          %v1447 = vld [vmem:[%s241 + $0x138] sm:$0xff]
          %v1448 = vld [vmem:[%s241 + $0x140] sm:$0xff]
          %v1449 = vld [vmem:[%s241 + $0x148] sm:$0xff]
          %v1450 = vld [vmem:[%s241 + $0x150] sm:$0xff]
          %v1451 = vld [vmem:[%s241 + $0x158] sm:$0xff]
          %v1452 = vld [vmem:[%s241 + $0x160] sm:$0xff]
          %v1453 = vld [vmem:[%s241 + $0x168] sm:$0xff]
          %v1454 = vld [vmem:[%s241 + $0x170] sm:$0xff]
          %v1455 = vld [vmem:[%s241 + $0x178] sm:$0xff]
          %v1456 = vld [vmem:[%s241 + $0x180] sm:$0xff]
          %v1457 = vld [vmem:[%s241 + $0x188] sm:$0xff]
          %v1458 = vld [vmem:[%s241 + $0x190] sm:$0xff]
          %v1459 = vld [vmem:[%s241 + $0x198] sm:$0xff]
          %v1460 = vld [vmem:[%s241 + $0x1a0] sm:$0xff]
          %v1461 = vld [vmem:[%s241 + $0x1a8] sm:$0xff]
          %v1462 = vld [vmem:[%s241 + $0x1b0] sm:$0xff]
          %v1463 = vld [vmem:[%s241 + $0x1b8] sm:$0xff]
          %v1464 = vld [vmem:[%s241 + $0x1c0] sm:$0xff]
          %v1465 = vld [vmem:[%s241 + $0x1c8] sm:$0xff]
          %v1466 = vld [vmem:[%s241 + $0x1d0] sm:$0xff]
          %v1467 = vld [vmem:[%s241 + $0x1d8] sm:$0xff]
          %v1468 = vld [vmem:[%s241 + $0x1e0] sm:$0xff]
          %v1469 = vld [vmem:[%s241 + $0x1e8] sm:$0xff]
          %v1470 = vld [vmem:[%s241 + $0x1f0] sm:$0xff]
          %v1471 = vld [vmem:[%s241 + $0x1f8] sm:$0xff]
          %1472 = vmatprep.subr.mxu0 %v1469
          %1473 = vmatpush1.msra.mxu0 %v1468
          %1474 = vmatprep.subr.mxu0 %v1465
          %1475 = vmatpush1.msra.mxu0 %v1464
          %1476 = vmatprep.subr.mxu0 %v1461
          %1477 = vmatpush1.msra.mxu0 %v1460
          %1478 = vmatprep.subr.mxu0 %v1457
          %1479 = vmatpush1.msra.mxu0 %v1456
          %1480 = vmatprep.subr.mxu0 %v1453
          %1481 = vmatpush1.msra.mxu0 %v1452
          %1482 = vmatprep.subr.mxu0 %v1449
          %1483 = vmatpush1.msra.mxu0 %v1448
          %1484 = vmatprep.subr.mxu0 %v1445
          %1485 = vmatpush1.msra.mxu0 %v1444
          %1486 = vmatprep.subr.mxu0 %v1441
          %1487 = vmatpush1.msra.mxu0 %v1440
          %1488 = vmatprep.subr.mxu0 %v1437
          %1489 = vmatpush1.msra.mxu0 %v1436
          %1490 = vmatprep.subr.mxu0 %v1433
          %1491 = vmatpush1.msra.mxu0 %v1432
          %1492 = vmatprep.subr.mxu0 %v1429
          %1493 = vmatpush1.msra.mxu0 %v1428
          %1494 = vmatprep.subr.mxu0 %v1425
          %1495 = vmatpush1.msra.mxu0 %v1424
          %1496 = vmatprep.subr.mxu0 %v1421
          %1497 = vmatpush1.msra.mxu0 %v1420
          %1498 = vmatprep.subr.mxu0 %v1417
          %1499 = vmatpush1.msra.mxu0 %v1416
          %1500 = vmatprep.subr.mxu0 %v1413
          %1501 = vmatpush1.msra.mxu0 %v1412
          %1502 = vmatprep.subr.mxu0 %v1409
          %1503 = vmatpush1.msra.mxu0 %v1408
          %1504 = vmatprep.subr.mxu0 0.0
          %1505 = vmatpush2.msra.mxu0 0.0
          %1506 = vmatprep.subr.mxu0 0.0
          %1507 = vmatpush2.msra.mxu0 0.0
          %1508 = vmatprep.subr.mxu0 0.0
          %1509 = vmatpush2.msra.mxu0 0.0
          %1510 = vmatprep.subr.mxu0 0.0
          %1511 = vmatpush2.msra.mxu0 0.0
          %1512 = vmatprep.subr.mxu0 0.0
          %1513 = vmatpush2.msra.mxu0 0.0
          %1514 = vmatprep.subr.mxu0 0.0
          %1515 = vmatpush2.msra.mxu0 0.0
          %1516 = vmatprep.subr.mxu0 0.0
          %1517 = vmatpush2.msra.mxu0 0.0
          %1518 = vmatprep.subr.mxu0 0.0
          %1519 = vmatpush2.msra.mxu0 0.0
          %1520 = vmatprep.subr.mxu0 0.0
          %1521 = vmatpush2.msra.mxu0 0.0
          %1522 = vmatprep.subr.mxu0 0.0
          %1523 = vmatpush2.msra.mxu0 0.0
          %1524 = vmatprep.subr.mxu0 0.0
          %1525 = vmatpush2.msra.mxu0 0.0
          %1526 = vmatprep.subr.mxu0 0.0
          %1527 = vmatpush2.msra.mxu0 0.0
          %1528 = vmatprep.subr.mxu0 0.0
          %1529 = vmatpush2.msra.mxu0 0.0
          %1530 = vmatprep.subr.mxu0 0.0
          %1531 = vmatpush2.msra.mxu0 0.0
          %1532 = vmatprep.subr.mxu0 0.0
          %1533 = vmatpush2.msra.mxu0 0.0
          %1534 = vmatprep.subr.mxu0 0.0
          %1535 = vmatpush2.msra.mxu0 0.0
          %1536 = vmatprep.mubr.f32.mxu0 0.0
          %1537 = vmatmul.mubr.f32.gmra.mxu0 %v1401
          %v1538 = vpop.f32.mrf.mxu0
          %v1539 = vadd.f32 0.0, %v1538
          %v1540 = vpop.f32.mrf.mxu0
          %v1541 = vadd.f32 0.0, %v1540
          %1542 = vdwg.mxu0
          %1543 = vmatprep.subr.mxu0 %v1471
          %1544 = vmatpush1.msra.mxu0 %v1470
          %1545 = vmatprep.subr.mxu0 %v1467
          %1546 = vmatpush1.msra.mxu0 %v1466
          %1547 = vmatprep.subr.mxu0 %v1463
          %1548 = vmatpush1.msra.mxu0 %v1462
          %1549 = vmatprep.subr.mxu0 %v1459
          %1550 = vmatpush1.msra.mxu0 %v1458
          %1551 = vmatprep.subr.mxu0 %v1455
          %1552 = vmatpush1.msra.mxu0 %v1454
          %1553 = vmatprep.subr.mxu0 %v1451
          %1554 = vmatpush1.msra.mxu0 %v1450
          %1555 = vmatprep.subr.mxu0 %v1447
          %1556 = vmatpush1.msra.mxu0 %v1446
          %1557 = vmatprep.subr.mxu0 %v1443
          %1558 = vmatpush1.msra.mxu0 %v1442
          %1559 = vmatprep.subr.mxu0 %v1439
          %1560 = vmatpush1.msra.mxu0 %v1438
          %1561 = vmatprep.subr.mxu0 %v1435
          %1562 = vmatpush1.msra.mxu0 %v1434
          %1563 = vmatprep.subr.mxu0 %v1431
          %1564 = vmatpush1.msra.mxu0 %v1430
          %1565 = vmatprep.subr.mxu0 %v1427
          %1566 = vmatpush1.msra.mxu0 %v1426
          %1567 = vmatprep.subr.mxu0 %v1423
          %1568 = vmatpush1.msra.mxu0 %v1422
          %1569 = vmatprep.subr.mxu0 %v1419
          %1570 = vmatpush1.msra.mxu0 %v1418
          %1571 = vmatprep.subr.mxu0 %v1415
          %1572 = vmatpush1.msra.mxu0 %v1414
          %1573 = vmatprep.subr.mxu0 %v1411
          %1574 = vmatpush1.msra.mxu0 %v1410
          %1575 = vmatprep.subr.mxu0 0.0
          %1576 = vmatpush2.msra.mxu0 0.0
          %1577 = vmatprep.subr.mxu0 0.0
          %1578 = vmatpush2.msra.mxu0 0.0
          %1579 = vmatprep.subr.mxu0 0.0
          %1580 = vmatpush2.msra.mxu0 0.0
          %1581 = vmatprep.subr.mxu0 0.0
          %1582 = vmatpush2.msra.mxu0 0.0
          %1583 = vmatprep.subr.mxu0 0.0
          %1584 = vmatpush2.msra.mxu0 0.0
          %1585 = vmatprep.subr.mxu0 0.0
          %1586 = vmatpush2.msra.mxu0 0.0
          %1587 = vmatprep.subr.mxu0 0.0
          %1588 = vmatpush2.msra.mxu0 0.0
          %1589 = vmatprep.subr.mxu0 0.0
          %1590 = vmatpush2.msra.mxu0 0.0
          %1591 = vmatprep.subr.mxu0 0.0
          %1592 = vmatpush2.msra.mxu0 0.0
          %1593 = vmatprep.subr.mxu0 0.0
          %1594 = vmatpush2.msra.mxu0 0.0
          %1595 = vmatprep.subr.mxu0 0.0
          %1596 = vmatpush2.msra.mxu0 0.0
          %1597 = vmatprep.subr.mxu0 0.0
          %1598 = vmatpush2.msra.mxu0 0.0
          %1599 = vmatprep.subr.mxu0 0.0
          %1600 = vmatpush2.msra.mxu0 0.0
          %1601 = vmatprep.subr.mxu0 0.0
          %1602 = vmatpush2.msra.mxu0 0.0
          %1603 = vmatprep.subr.mxu0 0.0
          %1604 = vmatpush2.msra.mxu0 0.0
          %1605 = vmatprep.subr.mxu0 0.0
          %1606 = vmatpush2.msra.mxu0 0.0
          %1607 = vmatprep.mubr.f32.mxu0 0.0
          %1608 = vmatmul.mubr.f32.gmra.mxu0 %v1401
          %v1609 = vpop.f32.mrf.mxu0
          %v1610 = vadd.f32 0.0, %v1609
          %v1611 = vpop.f32.mrf.mxu0
          %v1612 = vadd.f32 0.0, %v1611
          %1613 = vdwg.mxu0
          %v1614 = vadd.f32 %v1404, %v1539
          %v1615 = vadd.f32 %v1405, %v1541
          %v1616 = vadd.f32 %v1406, %v1610
          %v1617 = vadd.f32 %v1407, %v1612
          %v1618 = vtanh.pop %v1614
          %v1619 = vtanh.pop %v1615
          %v1620 = vtanh.pop %v1616
          %v1621 = vtanh.pop %v1617
          %v1622 = vmul.f32 %v1618, 0.5
          %v1623 = vadd.f32 %v1622, 0.5
          %v1624 = vmul.f32 %v1619, 0.5
          %v1625 = vadd.f32 %v1624, 0.5
          %v1626 = vmul.f32 %v1621, 0.5
          %v1627 = vadd.f32 %v1626, 0.5
          %v1628 = vmul.f32 %v1625, %v1399
          %v1629 = vmul.f32 %v1623, %v1620
          %v1630 = vadd.f32 %v1628, %v1629
          %v1631 = vtanh.pop %v1630
          %v1632 = vmul.f32 %v1627, %v1631
          %v1633 = vmax.f32 %v1632, 0.0
          %1634 = vst [vmem:[#allocation2 + $0x10] sm:$0xff] %v1633
          %v1635 = vld [vmem:[#allocation3 + $0x40] sm:$0xff]
          %v1636 = vld [vmem:[#allocation3 + $0x48] sm:$0xff]
          %v1637 = vld [vmem:[#allocation3 + $0x50] sm:$0xff]
          %v1638 = vld [vmem:[#allocation3 + $0x58] sm:$0xff]
          %v1639 = vld [vmem:[%s241] sm:$0xff]
          %v1640 = vld [vmem:[%s241 + $0x8] sm:$0xff]
          %v1641 = vld [vmem:[%s241 + $0x10] sm:$0xff]
          %v1642 = vld [vmem:[%s241 + $0x18] sm:$0xff]
          %v1643 = vld [vmem:[%s241 + $0x20] sm:$0xff]
          %v1644 = vld [vmem:[%s241 + $0x28] sm:$0xff]
          %v1645 = vld [vmem:[%s241 + $0x30] sm:$0xff]
          %v1646 = vld [vmem:[%s241 + $0x38] sm:$0xff]
          %v1647 = vld [vmem:[%s241 + $0x40] sm:$0xff]
          %v1648 = vld [vmem:[%s241 + $0x48] sm:$0xff]
          %v1649 = vld [vmem:[%s241 + $0x50] sm:$0xff]
          %v1650 = vld [vmem:[%s241 + $0x58] sm:$0xff]
          %v1651 = vld [vmem:[%s241 + $0x60] sm:$0xff]
          %v1652 = vld [vmem:[%s241 + $0x68] sm:$0xff]
          %v1653 = vld [vmem:[%s241 + $0x70] sm:$0xff]
          %v1654 = vld [vmem:[%s241 + $0x78] sm:$0xff]
          %v1655 = vld [vmem:[%s241 + $0x80] sm:$0xff]
          %v1656 = vld [vmem:[%s241 + $0x88] sm:$0xff]
          %v1657 = vld [vmem:[%s241 + $0x90] sm:$0xff]
          %v1658 = vld [vmem:[%s241 + $0x98] sm:$0xff]
          %v1659 = vld [vmem:[%s241 + $0xa0] sm:$0xff]
          %v1660 = vld [vmem:[%s241 + $0xa8] sm:$0xff]
          %v1661 = vld [vmem:[%s241 + $0xb0] sm:$0xff]
          %v1662 = vld [vmem:[%s241 + $0xb8] sm:$0xff]
          %v1663 = vld [vmem:[%s241 + $0xc0] sm:$0xff]
          %v1664 = vld [vmem:[%s241 + $0xc8] sm:$0xff]
          %v1665 = vld [vmem:[%s241 + $0xd0] sm:$0xff]
          %v1666 = vld [vmem:[%s241 + $0xd8] sm:$0xff]
          %v1667 = vld [vmem:[%s241 + $0xe0] sm:$0xff]
          %v1668 = vld [vmem:[%s241 + $0xe8] sm:$0xff]
          %v1669 = vld [vmem:[%s241 + $0xf0] sm:$0xff]
          %v1670 = vld [vmem:[%s241 + $0xf8] sm:$0xff]
          %v1671 = vld [vmem:[%s241 + $0x100] sm:$0xff]
          %v1672 = vld [vmem:[%s241 + $0x108] sm:$0xff]
          %v1673 = vld [vmem:[%s241 + $0x110] sm:$0xff]
          %v1674 = vld [vmem:[%s241 + $0x118] sm:$0xff]
          %v1675 = vld [vmem:[%s241 + $0x120] sm:$0xff]
          %v1676 = vld [vmem:[%s241 + $0x128] sm:$0xff]
          %v1677 = vld [vmem:[%s241 + $0x130] sm:$0xff]
          %v1678 = vld [vmem:[%s241 + $0x138] sm:$0xff]
          %v1679 = vld [vmem:[%s241 + $0x140] sm:$0xff]
          %v1680 = vld [vmem:[%s241 + $0x148] sm:$0xff]
          %v1681 = vld [vmem:[%s241 + $0x150] sm:$0xff]
          %v1682 = vld [vmem:[%s241 + $0x158] sm:$0xff]
          %v1683 = vld [vmem:[%s241 + $0x160] sm:$0xff]
          %v1684 = vld [vmem:[%s241 + $0x168] sm:$0xff]
          %v1685 = vld [vmem:[%s241 + $0x170] sm:$0xff]
          %v1686 = vld [vmem:[%s241 + $0x178] sm:$0xff]
          %v1687 = vld [vmem:[%s241 + $0x180] sm:$0xff]
          %v1688 = vld [vmem:[%s241 + $0x188] sm:$0xff]
          %v1689 = vld [vmem:[%s241 + $0x190] sm:$0xff]
          %v1690 = vld [vmem:[%s241 + $0x198] sm:$0xff]
          %v1691 = vld [vmem:[%s241 + $0x1a0] sm:$0xff]
          %v1692 = vld [vmem:[%s241 + $0x1a8] sm:$0xff]
          %v1693 = vld [vmem:[%s241 + $0x1b0] sm:$0xff]
          %v1694 = vld [vmem:[%s241 + $0x1b8] sm:$0xff]
          %v1695 = vld [vmem:[%s241 + $0x1c0] sm:$0xff]
          %v1696 = vld [vmem:[%s241 + $0x1c8] sm:$0xff]
          %v1697 = vld [vmem:[%s241 + $0x1d0] sm:$0xff]
          %v1698 = vld [vmem:[%s241 + $0x1d8] sm:$0xff]
          %v1699 = vld [vmem:[%s241 + $0x1e0] sm:$0xff]
          %v1700 = vld [vmem:[%s241 + $0x1e8] sm:$0xff]
          %v1701 = vld [vmem:[%s241 + $0x1f0] sm:$0xff]
          %v1702 = vld [vmem:[%s241 + $0x1f8] sm:$0xff]
          %1703 = vmatprep.subr.mxu0 %v1700
          %1704 = vmatpush1.msra.mxu0 %v1699
          %1705 = vmatprep.subr.mxu0 %v1696
          %1706 = vmatpush1.msra.mxu0 %v1695
          %1707 = vmatprep.subr.mxu0 %v1692
          %1708 = vmatpush1.msra.mxu0 %v1691
          %1709 = vmatprep.subr.mxu0 %v1688
          %1710 = vmatpush1.msra.mxu0 %v1687
          %1711 = vmatprep.subr.mxu0 %v1684
          %1712 = vmatpush1.msra.mxu0 %v1683
          %1713 = vmatprep.subr.mxu0 %v1680
          %1714 = vmatpush1.msra.mxu0 %v1679
          %1715 = vmatprep.subr.mxu0 %v1676
          %1716 = vmatpush1.msra.mxu0 %v1675
          %1717 = vmatprep.subr.mxu0 %v1672
          %1718 = vmatpush1.msra.mxu0 %v1671
          %1719 = vmatprep.subr.mxu0 %v1668
          %1720 = vmatpush1.msra.mxu0 %v1667
          %1721 = vmatprep.subr.mxu0 %v1664
          %1722 = vmatpush1.msra.mxu0 %v1663
          %1723 = vmatprep.subr.mxu0 %v1660
          %1724 = vmatpush1.msra.mxu0 %v1659
          %1725 = vmatprep.subr.mxu0 %v1656
          %1726 = vmatpush1.msra.mxu0 %v1655
          %1727 = vmatprep.subr.mxu0 %v1652
          %1728 = vmatpush1.msra.mxu0 %v1651
          %1729 = vmatprep.subr.mxu0 %v1648
          %1730 = vmatpush1.msra.mxu0 %v1647
          %1731 = vmatprep.subr.mxu0 %v1644
          %1732 = vmatpush1.msra.mxu0 %v1643
          %1733 = vmatprep.subr.mxu0 %v1640
          %1734 = vmatpush1.msra.mxu0 %v1639
          %1735 = vmatprep.subr.mxu0 0.0
          %1736 = vmatpush2.msra.mxu0 0.0
          %1737 = vmatprep.subr.mxu0 0.0
          %1738 = vmatpush2.msra.mxu0 0.0
          %1739 = vmatprep.subr.mxu0 0.0
          %1740 = vmatpush2.msra.mxu0 0.0
          %1741 = vmatprep.subr.mxu0 0.0
          %1742 = vmatpush2.msra.mxu0 0.0
          %1743 = vmatprep.subr.mxu0 0.0
          %1744 = vmatpush2.msra.mxu0 0.0
          %1745 = vmatprep.subr.mxu0 0.0
          %1746 = vmatpush2.msra.mxu0 0.0
          %1747 = vmatprep.subr.mxu0 0.0
          %1748 = vmatpush2.msra.mxu0 0.0
          %1749 = vmatprep.subr.mxu0 0.0
          %1750 = vmatpush2.msra.mxu0 0.0
          %1751 = vmatprep.subr.mxu0 0.0
          %1752 = vmatpush2.msra.mxu0 0.0
          %1753 = vmatprep.subr.mxu0 0.0
          %1754 = vmatpush2.msra.mxu0 0.0
          %1755 = vmatprep.subr.mxu0 0.0
          %1756 = vmatpush2.msra.mxu0 0.0
          %1757 = vmatprep.subr.mxu0 0.0
          %1758 = vmatpush2.msra.mxu0 0.0
          %1759 = vmatprep.subr.mxu0 0.0
          %1760 = vmatpush2.msra.mxu0 0.0
          %1761 = vmatprep.subr.mxu0 0.0
          %1762 = vmatpush2.msra.mxu0 0.0
          %1763 = vmatprep.subr.mxu0 0.0
          %1764 = vmatpush2.msra.mxu0 0.0
          %1765 = vmatprep.subr.mxu0 0.0
          %1766 = vmatpush2.msra.mxu0 0.0
          %1767 = vmatprep.mubr.f32.mxu0 0.0
          %1768 = vmatmul.mubr.f32.gmra.mxu0 %v1632
          %v1769 = vpop.f32.mrf.mxu0
          %v1770 = vadd.f32 0.0, %v1769
          %v1771 = vpop.f32.mrf.mxu0
          %v1772 = vadd.f32 0.0, %v1771
          %1773 = vdwg.mxu0
          %1774 = vmatprep.subr.mxu0 %v1702
          %1775 = vmatpush1.msra.mxu0 %v1701
          %1776 = vmatprep.subr.mxu0 %v1698
          %1777 = vmatpush1.msra.mxu0 %v1697
          %1778 = vmatprep.subr.mxu0 %v1694
          %1779 = vmatpush1.msra.mxu0 %v1693
          %1780 = vmatprep.subr.mxu0 %v1690
          %1781 = vmatpush1.msra.mxu0 %v1689
          %1782 = vmatprep.subr.mxu0 %v1686
          %1783 = vmatpush1.msra.mxu0 %v1685
          %1784 = vmatprep.subr.mxu0 %v1682
          %1785 = vmatpush1.msra.mxu0 %v1681
          %1786 = vmatprep.subr.mxu0 %v1678
          %1787 = vmatpush1.msra.mxu0 %v1677
          %1788 = vmatprep.subr.mxu0 %v1674
          %1789 = vmatpush1.msra.mxu0 %v1673
          %1790 = vmatprep.subr.mxu0 %v1670
          %1791 = vmatpush1.msra.mxu0 %v1669
          %1792 = vmatprep.subr.mxu0 %v1666
          %1793 = vmatpush1.msra.mxu0 %v1665
          %1794 = vmatprep.subr.mxu0 %v1662
          %1795 = vmatpush1.msra.mxu0 %v1661
          %1796 = vmatprep.subr.mxu0 %v1658
          %1797 = vmatpush1.msra.mxu0 %v1657
          %1798 = vmatprep.subr.mxu0 %v1654
          %1799 = vmatpush1.msra.mxu0 %v1653
          %1800 = vmatprep.subr.mxu0 %v1650
          %1801 = vmatpush1.msra.mxu0 %v1649
          %1802 = vmatprep.subr.mxu0 %v1646
          %1803 = vmatpush1.msra.mxu0 %v1645
          %1804 = vmatprep.subr.mxu0 %v1642
          %1805 = vmatpush1.msra.mxu0 %v1641
          %1806 = vmatprep.subr.mxu0 0.0
          %1807 = vmatpush2.msra.mxu0 0.0
          %1808 = vmatprep.subr.mxu0 0.0
          %1809 = vmatpush2.msra.mxu0 0.0
          %1810 = vmatprep.subr.mxu0 0.0
          %1811 = vmatpush2.msra.mxu0 0.0
          %1812 = vmatprep.subr.mxu0 0.0
          %1813 = vmatpush2.msra.mxu0 0.0
          %1814 = vmatprep.subr.mxu0 0.0
          %1815 = vmatpush2.msra.mxu0 0.0
          %1816 = vmatprep.subr.mxu0 0.0
          %1817 = vmatpush2.msra.mxu0 0.0
          %1818 = vmatprep.subr.mxu0 0.0
          %1819 = vmatpush2.msra.mxu0 0.0
          %1820 = vmatprep.subr.mxu0 0.0
          %1821 = vmatpush2.msra.mxu0 0.0
          %1822 = vmatprep.subr.mxu0 0.0
          %1823 = vmatpush2.msra.mxu0 0.0
          %1824 = vmatprep.subr.mxu0 0.0
          %1825 = vmatpush2.msra.mxu0 0.0
          %1826 = vmatprep.subr.mxu0 0.0
          %1827 = vmatpush2.msra.mxu0 0.0
          %1828 = vmatprep.subr.mxu0 0.0
          %1829 = vmatpush2.msra.mxu0 0.0
          %1830 = vmatprep.subr.mxu0 0.0
          %1831 = vmatpush2.msra.mxu0 0.0
          %1832 = vmatprep.subr.mxu0 0.0
          %1833 = vmatpush2.msra.mxu0 0.0
          %1834 = vmatprep.subr.mxu0 0.0
          %1835 = vmatpush2.msra.mxu0 0.0
          %1836 = vmatprep.subr.mxu0 0.0
          %1837 = vmatpush2.msra.mxu0 0.0
          %1838 = vmatprep.mubr.f32.mxu0 0.0
          %1839 = vmatmul.mubr.f32.gmra.mxu0 %v1632
          %v1840 = vpop.f32.mrf.mxu0
          %v1841 = vadd.f32 0.0, %v1840
          %v1842 = vpop.f32.mrf.mxu0
          %v1843 = vadd.f32 0.0, %v1842
          %1844 = vdwg.mxu0
          %v1845 = vadd.f32 %v1635, %v1770
          %v1846 = vadd.f32 %v1636, %v1772
          %v1847 = vadd.f32 %v1637, %v1841
          %v1848 = vadd.f32 %v1638, %v1843
          %v1849 = vtanh.pop %v1845
          %v1850 = vtanh.pop %v1846
          %v1851 = vtanh.pop %v1847
          %v1852 = vtanh.pop %v1848
          %v1853 = vmul.f32 %v1849, 0.5
          %v1854 = vadd.f32 %v1853, 0.5
          %v1855 = vmul.f32 %v1850, 0.5
          %v1856 = vadd.f32 %v1855, 0.5
          %v1857 = vmul.f32 %v1852, 0.5
          %v1858 = vadd.f32 %v1857, 0.5
          %v1859 = vmul.f32 %v1856, %v1630
          %v1860 = vmul.f32 %v1854, %v1851
          %v1861 = vadd.f32 %v1859, %v1860
          %v1862 = vtanh.pop %v1861
          %v1863 = vmul.f32 %v1858, %v1862
          %v1864 = vmax.f32 %v1863, 0.0
          %1865 = vst [vmem:[#allocation2 + $0x20] sm:$0xff] %v1864
          %v1866 = vld [vmem:[#allocation3 + $0x60] sm:$0xff]
          %v1867 = vld [vmem:[#allocation3 + $0x68] sm:$0xff]
          %v1868 = vld [vmem:[#allocation3 + $0x70] sm:$0xff]
          %v1869 = vld [vmem:[#allocation3 + $0x78] sm:$0xff]
          %v1870 = vld [vmem:[%s241] sm:$0xff]
          %v1871 = vld [vmem:[%s241 + $0x8] sm:$0xff]
          %v1872 = vld [vmem:[%s241 + $0x10] sm:$0xff]
          %v1873 = vld [vmem:[%s241 + $0x18] sm:$0xff]
          %v1874 = vld [vmem:[%s241 + $0x20] sm:$0xff]
          %v1875 = vld [vmem:[%s241 + $0x28] sm:$0xff]
          %v1876 = vld [vmem:[%s241 + $0x30] sm:$0xff]
          %v1877 = vld [vmem:[%s241 + $0x38] sm:$0xff]
          %v1878 = vld [vmem:[%s241 + $0x40] sm:$0xff]
          %v1879 = vld [vmem:[%s241 + $0x48] sm:$0xff]
          %v1880 = vld [vmem:[%s241 + $0x50] sm:$0xff]
          %v1881 = vld [vmem:[%s241 + $0x58] sm:$0xff]
          %v1882 = vld [vmem:[%s241 + $0x60] sm:$0xff]
          %v1883 = vld [vmem:[%s241 + $0x68] sm:$0xff]
          %v1884 = vld [vmem:[%s241 + $0x70] sm:$0xff]
          %v1885 = vld [vmem:[%s241 + $0x78] sm:$0xff]
          %v1886 = vld [vmem:[%s241 + $0x80] sm:$0xff]
          %v1887 = vld [vmem:[%s241 + $0x88] sm:$0xff]
          %v1888 = vld [vmem:[%s241 + $0x90] sm:$0xff]
          %v1889 = vld [vmem:[%s241 + $0x98] sm:$0xff]
          %v1890 = vld [vmem:[%s241 + $0xa0] sm:$0xff]
          %v1891 = vld [vmem:[%s241 + $0xa8] sm:$0xff]
          %v1892 = vld [vmem:[%s241 + $0xb0] sm:$0xff]
          %v1893 = vld [vmem:[%s241 + $0xb8] sm:$0xff]
          %v1894 = vld [vmem:[%s241 + $0xc0] sm:$0xff]
          %v1895 = vld [vmem:[%s241 + $0xc8] sm:$0xff]
          %v1896 = vld [vmem:[%s241 + $0xd0] sm:$0xff]
          %v1897 = vld [vmem:[%s241 + $0xd8] sm:$0xff]
          %v1898 = vld [vmem:[%s241 + $0xe0] sm:$0xff]
          %v1899 = vld [vmem:[%s241 + $0xe8] sm:$0xff]
          %v1900 = vld [vmem:[%s241 + $0xf0] sm:$0xff]
          %v1901 = vld [vmem:[%s241 + $0xf8] sm:$0xff]
          %v1902 = vld [vmem:[%s241 + $0x100] sm:$0xff]
          %v1903 = vld [vmem:[%s241 + $0x108] sm:$0xff]
          %v1904 = vld [vmem:[%s241 + $0x110] sm:$0xff]
          %v1905 = vld [vmem:[%s241 + $0x118] sm:$0xff]
          %v1906 = vld [vmem:[%s241 + $0x120] sm:$0xff]
          %v1907 = vld [vmem:[%s241 + $0x128] sm:$0xff]
          %v1908 = vld [vmem:[%s241 + $0x130] sm:$0xff]
          %v1909 = vld [vmem:[%s241 + $0x138] sm:$0xff]
          %v1910 = vld [vmem:[%s241 + $0x140] sm:$0xff]
          %v1911 = vld [vmem:[%s241 + $0x148] sm:$0xff]
          %v1912 = vld [vmem:[%s241 + $0x150] sm:$0xff]
          %v1913 = vld [vmem:[%s241 + $0x158] sm:$0xff]
          %v1914 = vld [vmem:[%s241 + $0x160] sm:$0xff]
          %v1915 = vld [vmem:[%s241 + $0x168] sm:$0xff]
          %v1916 = vld [vmem:[%s241 + $0x170] sm:$0xff]
          %v1917 = vld [vmem:[%s241 + $0x178] sm:$0xff]
          %v1918 = vld [vmem:[%s241 + $0x180] sm:$0xff]
          %v1919 = vld [vmem:[%s241 + $0x188] sm:$0xff]
          %v1920 = vld [vmem:[%s241 + $0x190] sm:$0xff]
          %v1921 = vld [vmem:[%s241 + $0x198] sm:$0xff]
          %v1922 = vld [vmem:[%s241 + $0x1a0] sm:$0xff]
          %v1923 = vld [vmem:[%s241 + $0x1a8] sm:$0xff]
          %v1924 = vld [vmem:[%s241 + $0x1b0] sm:$0xff]
          %v1925 = vld [vmem:[%s241 + $0x1b8] sm:$0xff]
          %v1926 = vld [vmem:[%s241 + $0x1c0] sm:$0xff]
          %v1927 = vld [vmem:[%s241 + $0x1c8] sm:$0xff]
          %v1928 = vld [vmem:[%s241 + $0x1d0] sm:$0xff]
          %v1929 = vld [vmem:[%s241 + $0x1d8] sm:$0xff]
          %v1930 = vld [vmem:[%s241 + $0x1e0] sm:$0xff]
          %v1931 = vld [vmem:[%s241 + $0x1e8] sm:$0xff]
          %v1932 = vld [vmem:[%s241 + $0x1f0] sm:$0xff]
          %v1933 = vld [vmem:[%s241 + $0x1f8] sm:$0xff]
          %1934 = vmatprep.subr.mxu0 %v1931
          %1935 = vmatpush1.msra.mxu0 %v1930
          %1936 = vmatprep.subr.mxu0 %v1927
          %1937 = vmatpush1.msra.mxu0 %v1926
          %1938 = vmatprep.subr.mxu0 %v1923
          %1939 = vmatpush1.msra.mxu0 %v1922
          %1940 = vmatprep.subr.mxu0 %v1919
          %1941 = vmatpush1.msra.mxu0 %v1918
          %1942 = vmatprep.subr.mxu0 %v1915
          %1943 = vmatpush1.msra.mxu0 %v1914
          %1944 = vmatprep.subr.mxu0 %v1911
          %1945 = vmatpush1.msra.mxu0 %v1910
          %1946 = vmatprep.subr.mxu0 %v1907
          %1947 = vmatpush1.msra.mxu0 %v1906
          %1948 = vmatprep.subr.mxu0 %v1903
          %1949 = vmatpush1.msra.mxu0 %v1902
          %1950 = vmatprep.subr.mxu0 %v1899
          %1951 = vmatpush1.msra.mxu0 %v1898
          %1952 = vmatprep.subr.mxu0 %v1895
          %1953 = vmatpush1.msra.mxu0 %v1894
          %1954 = vmatprep.subr.mxu0 %v1891
          %1955 = vmatpush1.msra.mxu0 %v1890
          %1956 = vmatprep.subr.mxu0 %v1887
          %1957 = vmatpush1.msra.mxu0 %v1886
          %1958 = vmatprep.subr.mxu0 %v1883
          %1959 = vmatpush1.msra.mxu0 %v1882
          %1960 = vmatprep.subr.mxu0 %v1879
          %1961 = vmatpush1.msra.mxu0 %v1878
          %1962 = vmatprep.subr.mxu0 %v1875
          %1963 = vmatpush1.msra.mxu0 %v1874
          %1964 = vmatprep.subr.mxu0 %v1871
          %1965 = vmatpush1.msra.mxu0 %v1870
          %1966 = vmatprep.subr.mxu0 0.0
          %1967 = vmatpush2.msra.mxu0 0.0
          %1968 = vmatprep.subr.mxu0 0.0
          %1969 = vmatpush2.msra.mxu0 0.0
          %1970 = vmatprep.subr.mxu0 0.0
          %1971 = vmatpush2.msra.mxu0 0.0
          %1972 = vmatprep.subr.mxu0 0.0
          %1973 = vmatpush2.msra.mxu0 0.0
          %1974 = vmatprep.subr.mxu0 0.0
          %1975 = vmatpush2.msra.mxu0 0.0
          %1976 = vmatprep.subr.mxu0 0.0
          %1977 = vmatpush2.msra.mxu0 0.0
          %1978 = vmatprep.subr.mxu0 0.0
          %1979 = vmatpush2.msra.mxu0 0.0
          %1980 = vmatprep.subr.mxu0 0.0
          %1981 = vmatpush2.msra.mxu0 0.0
          %1982 = vmatprep.subr.mxu0 0.0
          %1983 = vmatpush2.msra.mxu0 0.0
          %1984 = vmatprep.subr.mxu0 0.0
          %1985 = vmatpush2.msra.mxu0 0.0
          %1986 = vmatprep.subr.mxu0 0.0
          %1987 = vmatpush2.msra.mxu0 0.0
          %1988 = vmatprep.subr.mxu0 0.0
          %1989 = vmatpush2.msra.mxu0 0.0
          %1990 = vmatprep.subr.mxu0 0.0
          %1991 = vmatpush2.msra.mxu0 0.0
          %1992 = vmatprep.subr.mxu0 0.0
          %1993 = vmatpush2.msra.mxu0 0.0
          %1994 = vmatprep.subr.mxu0 0.0
          %1995 = vmatpush2.msra.mxu0 0.0
          %1996 = vmatprep.subr.mxu0 0.0
          %1997 = vmatpush2.msra.mxu0 0.0
          %1998 = vmatprep.mubr.f32.mxu0 0.0
          %1999 = vmatmul.mubr.f32.gmra.mxu0 %v1863
          %v2000 = vpop.f32.mrf.mxu0
          %v2001 = vadd.f32 0.0, %v2000
          %v2002 = vpop.f32.mrf.mxu0
          %v2003 = vadd.f32 0.0, %v2002
          %2004 = vdwg.mxu0
          %2005 = vmatprep.subr.mxu0 %v1933
          %2006 = vmatpush1.msra.mxu0 %v1932
          %2007 = vmatprep.subr.mxu0 %v1929
          %2008 = vmatpush1.msra.mxu0 %v1928
          %2009 = vmatprep.subr.mxu0 %v1925
          %2010 = vmatpush1.msra.mxu0 %v1924
          %2011 = vmatprep.subr.mxu0 %v1921
          %2012 = vmatpush1.msra.mxu0 %v1920
          %2013 = vmatprep.subr.mxu0 %v1917
          %2014 = vmatpush1.msra.mxu0 %v1916
          %2015 = vmatprep.subr.mxu0 %v1913
          %2016 = vmatpush1.msra.mxu0 %v1912
          %2017 = vmatprep.subr.mxu0 %v1909
          %2018 = vmatpush1.msra.mxu0 %v1908
          %2019 = vmatprep.subr.mxu0 %v1905
          %2020 = vmatpush1.msra.mxu0 %v1904
          %2021 = vmatprep.subr.mxu0 %v1901
          %2022 = vmatpush1.msra.mxu0 %v1900
          %2023 = vmatprep.subr.mxu0 %v1897
          %2024 = vmatpush1.msra.mxu0 %v1896
          %2025 = vmatprep.subr.mxu0 %v1893
          %2026 = vmatpush1.msra.mxu0 %v1892
          %2027 = vmatprep.subr.mxu0 %v1889
          %2028 = vmatpush1.msra.mxu0 %v1888
          %2029 = vmatprep.subr.mxu0 %v1885
          %2030 = vmatpush1.msra.mxu0 %v1884
          %2031 = vmatprep.subr.mxu0 %v1881
          %2032 = vmatpush1.msra.mxu0 %v1880
          %2033 = vmatprep.subr.mxu0 %v1877
          %2034 = vmatpush1.msra.mxu0 %v1876
          %2035 = vmatprep.subr.mxu0 %v1873
          %2036 = vmatpush1.msra.mxu0 %v1872
          %2037 = vmatprep.subr.mxu0 0.0
          %2038 = vmatpush2.msra.mxu0 0.0
          %2039 = vmatprep.subr.mxu0 0.0
          %2040 = vmatpush2.msra.mxu0 0.0
          %2041 = vmatprep.subr.mxu0 0.0
          %2042 = vmatpush2.msra.mxu0 0.0
          %2043 = vmatprep.subr.mxu0 0.0
          %2044 = vmatpush2.msra.mxu0 0.0
          %2045 = vmatprep.subr.mxu0 0.0
          %2046 = vmatpush2.msra.mxu0 0.0
          %2047 = vmatprep.subr.mxu0 0.0
          %2048 = vmatpush2.msra.mxu0 0.0
          %2049 = vmatprep.subr.mxu0 0.0
          %2050 = vmatpush2.msra.mxu0 0.0
          %2051 = vmatprep.subr.mxu0 0.0
          %2052 = vmatpush2.msra.mxu0 0.0
          %2053 = vmatprep.subr.mxu0 0.0
          %2054 = vmatpush2.msra.mxu0 0.0
          %2055 = vmatprep.subr.mxu0 0.0
          %2056 = vmatpush2.msra.mxu0 0.0
          %2057 = vmatprep.subr.mxu0 0.0
          %2058 = vmatpush2.msra.mxu0 0.0
          %2059 = vmatprep.subr.mxu0 0.0
          %2060 = vmatpush2.msra.mxu0 0.0
          %2061 = vmatprep.subr.mxu0 0.0
          %2062 = vmatpush2.msra.mxu0 0.0
          %2063 = vmatprep.subr.mxu0 0.0
          %2064 = vmatpush2.msra.mxu0 0.0
          %2065 = vmatprep.subr.mxu0 0.0
          %2066 = vmatpush2.msra.mxu0 0.0
          %2067 = vmatprep.subr.mxu0 0.0
          %2068 = vmatpush2.msra.mxu0 0.0
          %2069 = vmatprep.mubr.f32.mxu0 0.0
          %2070 = vmatmul.mubr.f32.gmra.mxu0 %v1863
          %v2071 = vpop.f32.mrf.mxu0
          %v2072 = vadd.f32 0.0, %v2071
          %v2073 = vpop.f32.mrf.mxu0
          %v2074 = vadd.f32 0.0, %v2073
          %2075 = vdwg.mxu0
          %v2076 = vadd.f32 %v1866, %v2001
          %v2077 = vadd.f32 %v1867, %v2003
          %v2078 = vadd.f32 %v1868, %v2072
          %v2079 = vadd.f32 %v1869, %v2074
          %v2080 = vtanh.pop %v2076
          %v2081 = vtanh.pop %v2077
          %v2082 = vtanh.pop %v2078
          %v2083 = vtanh.pop %v2079
          %v2084 = vmul.f32 %v2080, 0.5
          %v2085 = vadd.f32 %v2084, 0.5
          %v2086 = vmul.f32 %v2081, 0.5
          %v2087 = vadd.f32 %v2086, 0.5
          %v2088 = vmul.f32 %v2083, 0.5
          %v2089 = vadd.f32 %v2088, 0.5
          %v2090 = vmul.f32 %v2087, %v1861
          %v2091 = vmul.f32 %v2085, %v2082
          %v2092 = vadd.f32 %v2090, %v2091
          %v2093 = vtanh.pop %v2092
          %v2094 = vmul.f32 %v2089, %v2093
          %v2095 = vmax.f32 %v2094, 0.0
          %2096 = vst [vmem:[#allocation2 + $0x30] sm:$0xff] %v2095
          %v2097 = vld [vmem:[#allocation3 + $0x80] sm:$0xff]
          %v2098 = vld [vmem:[#allocation3 + $0x88] sm:$0xff]
          %v2099 = vld [vmem:[#allocation3 + $0x90] sm:$0xff]
          %v2100 = vld [vmem:[#allocation3 + $0x98] sm:$0xff]
          %v2101 = vld [vmem:[%s241] sm:$0xff]
          %v2102 = vld [vmem:[%s241 + $0x8] sm:$0xff]
          %v2103 = vld [vmem:[%s241 + $0x10] sm:$0xff]
          %v2104 = vld [vmem:[%s241 + $0x18] sm:$0xff]
          %v2105 = vld [vmem:[%s241 + $0x20] sm:$0xff]
          %v2106 = vld [vmem:[%s241 + $0x28] sm:$0xff]
          %v2107 = vld [vmem:[%s241 + $0x30] sm:$0xff]
          %v2108 = vld [vmem:[%s241 + $0x38] sm:$0xff]
          %v2109 = vld [vmem:[%s241 + $0x40] sm:$0xff]
          %v2110 = vld [vmem:[%s241 + $0x48] sm:$0xff]
          %v2111 = vld [vmem:[%s241 + $0x50] sm:$0xff]
          %v2112 = vld [vmem:[%s241 + $0x58] sm:$0xff]
          %v2113 = vld [vmem:[%s241 + $0x60] sm:$0xff]
          %v2114 = vld [vmem:[%s241 + $0x68] sm:$0xff]
          %v2115 = vld [vmem:[%s241 + $0x70] sm:$0xff]
          %v2116 = vld [vmem:[%s241 + $0x78] sm:$0xff]
          %v2117 = vld [vmem:[%s241 + $0x80] sm:$0xff]
          %v2118 = vld [vmem:[%s241 + $0x88] sm:$0xff]
          %v2119 = vld [vmem:[%s241 + $0x90] sm:$0xff]
          %v2120 = vld [vmem:[%s241 + $0x98] sm:$0xff]
          %v2121 = vld [vmem:[%s241 + $0xa0] sm:$0xff]
          %v2122 = vld [vmem:[%s241 + $0xa8] sm:$0xff]
          %v2123 = vld [vmem:[%s241 + $0xb0] sm:$0xff]
          %v2124 = vld [vmem:[%s241 + $0xb8] sm:$0xff]
          %v2125 = vld [vmem:[%s241 + $0xc0] sm:$0xff]
          %v2126 = vld [vmem:[%s241 + $0xc8] sm:$0xff]
          %v2127 = vld [vmem:[%s241 + $0xd0] sm:$0xff]
          %v2128 = vld [vmem:[%s241 + $0xd8] sm:$0xff]
          %v2129 = vld [vmem:[%s241 + $0xe0] sm:$0xff]
          %v2130 = vld [vmem:[%s241 + $0xe8] sm:$0xff]
          %v2131 = vld [vmem:[%s241 + $0xf0] sm:$0xff]
          %v2132 = vld [vmem:[%s241 + $0xf8] sm:$0xff]
          %v2133 = vld [vmem:[%s241 + $0x100] sm:$0xff]
          %v2134 = vld [vmem:[%s241 + $0x108] sm:$0xff]
          %v2135 = vld [vmem:[%s241 + $0x110] sm:$0xff]
          %v2136 = vld [vmem:[%s241 + $0x118] sm:$0xff]
          %v2137 = vld [vmem:[%s241 + $0x120] sm:$0xff]
          %v2138 = vld [vmem:[%s241 + $0x128] sm:$0xff]
          %v2139 = vld [vmem:[%s241 + $0x130] sm:$0xff]
          %v2140 = vld [vmem:[%s241 + $0x138] sm:$0xff]
          %v2141 = vld [vmem:[%s241 + $0x140] sm:$0xff]
          %v2142 = vld [vmem:[%s241 + $0x148] sm:$0xff]
          %v2143 = vld [vmem:[%s241 + $0x150] sm:$0xff]
          %v2144 = vld [vmem:[%s241 + $0x158] sm:$0xff]
          %v2145 = vld [vmem:[%s241 + $0x160] sm:$0xff]
          %v2146 = vld [vmem:[%s241 + $0x168] sm:$0xff]
          %v2147 = vld [vmem:[%s241 + $0x170] sm:$0xff]
          %v2148 = vld [vmem:[%s241 + $0x178] sm:$0xff]
          %v2149 = vld [vmem:[%s241 + $0x180] sm:$0xff]
          %v2150 = vld [vmem:[%s241 + $0x188] sm:$0xff]
          %v2151 = vld [vmem:[%s241 + $0x190] sm:$0xff]
          %v2152 = vld [vmem:[%s241 + $0x198] sm:$0xff]
          %v2153 = vld [vmem:[%s241 + $0x1a0] sm:$0xff]
          %v2154 = vld [vmem:[%s241 + $0x1a8] sm:$0xff]
          %v2155 = vld [vmem:[%s241 + $0x1b0] sm:$0xff]
          %v2156 = vld [vmem:[%s241 + $0x1b8] sm:$0xff]
          %v2157 = vld [vmem:[%s241 + $0x1c0] sm:$0xff]
          %v2158 = vld [vmem:[%s241 + $0x1c8] sm:$0xff]
          %v2159 = vld [vmem:[%s241 + $0x1d0] sm:$0xff]
          %v2160 = vld [vmem:[%s241 + $0x1d8] sm:$0xff]
          %v2161 = vld [vmem:[%s241 + $0x1e0] sm:$0xff]
          %v2162 = vld [vmem:[%s241 + $0x1e8] sm:$0xff]
          %v2163 = vld [vmem:[%s241 + $0x1f0] sm:$0xff]
          %v2164 = vld [vmem:[%s241 + $0x1f8] sm:$0xff]
          %2165 = vmatprep.subr.mxu0 %v2162
          %2166 = vmatpush1.msra.mxu0 %v2161
          %2167 = vmatprep.subr.mxu0 %v2158
          %2168 = vmatpush1.msra.mxu0 %v2157
          %2169 = vmatprep.subr.mxu0 %v2154
          %2170 = vmatpush1.msra.mxu0 %v2153
          %2171 = vmatprep.subr.mxu0 %v2150
          %2172 = vmatpush1.msra.mxu0 %v2149
          %2173 = vmatprep.subr.mxu0 %v2146
          %2174 = vmatpush1.msra.mxu0 %v2145
          %2175 = vmatprep.subr.mxu0 %v2142
          %2176 = vmatpush1.msra.mxu0 %v2141
          %2177 = vmatprep.subr.mxu0 %v2138
          %2178 = vmatpush1.msra.mxu0 %v2137
          %2179 = vmatprep.subr.mxu0 %v2134
          %2180 = vmatpush1.msra.mxu0 %v2133
          %2181 = vmatprep.subr.mxu0 %v2130
          %2182 = vmatpush1.msra.mxu0 %v2129
          %2183 = vmatprep.subr.mxu0 %v2126
          %2184 = vmatpush1.msra.mxu0 %v2125
          %2185 = vmatprep.subr.mxu0 %v2122
          %2186 = vmatpush1.msra.mxu0 %v2121
          %2187 = vmatprep.subr.mxu0 %v2118
          %2188 = vmatpush1.msra.mxu0 %v2117
          %2189 = vmatprep.subr.mxu0 %v2114
          %2190 = vmatpush1.msra.mxu0 %v2113
          %2191 = vmatprep.subr.mxu0 %v2110
          %2192 = vmatpush1.msra.mxu0 %v2109
          %2193 = vmatprep.subr.mxu0 %v2106
          %2194 = vmatpush1.msra.mxu0 %v2105
          %2195 = vmatprep.subr.mxu0 %v2102
          %2196 = vmatpush1.msra.mxu0 %v2101
          %2197 = vmatprep.subr.mxu0 0.0
          %2198 = vmatpush2.msra.mxu0 0.0
          %2199 = vmatprep.subr.mxu0 0.0
          %2200 = vmatpush2.msra.mxu0 0.0
          %2201 = vmatprep.subr.mxu0 0.0
          %2202 = vmatpush2.msra.mxu0 0.0
          %2203 = vmatprep.subr.mxu0 0.0
          %2204 = vmatpush2.msra.mxu0 0.0
          %2205 = vmatprep.subr.mxu0 0.0
          %2206 = vmatpush2.msra.mxu0 0.0
          %2207 = vmatprep.subr.mxu0 0.0
          %2208 = vmatpush2.msra.mxu0 0.0
          %2209 = vmatprep.subr.mxu0 0.0
          %2210 = vmatpush2.msra.mxu0 0.0
          %2211 = vmatprep.subr.mxu0 0.0
          %2212 = vmatpush2.msra.mxu0 0.0
          %2213 = vmatprep.subr.mxu0 0.0
          %2214 = vmatpush2.msra.mxu0 0.0
          %2215 = vmatprep.subr.mxu0 0.0
          %2216 = vmatpush2.msra.mxu0 0.0
          %2217 = vmatprep.subr.mxu0 0.0
          %2218 = vmatpush2.msra.mxu0 0.0
          %2219 = vmatprep.subr.mxu0 0.0
          %2220 = vmatpush2.msra.mxu0 0.0
          %2221 = vmatprep.subr.mxu0 0.0
          %2222 = vmatpush2.msra.mxu0 0.0
          %2223 = vmatprep.subr.mxu0 0.0
          %2224 = vmatpush2.msra.mxu0 0.0
          %2225 = vmatprep.subr.mxu0 0.0
          %2226 = vmatpush2.msra.mxu0 0.0
          %2227 = vmatprep.subr.mxu0 0.0
          %2228 = vmatpush2.msra.mxu0 0.0
          %2229 = vmatprep.mubr.f32.mxu0 0.0
          %2230 = vmatmul.mubr.f32.gmra.mxu0 %v2094
          %v2231 = vpop.f32.mrf.mxu0
          %v2232 = vadd.f32 0.0, %v2231
          %v2233 = vpop.f32.mrf.mxu0
          %v2234 = vadd.f32 0.0, %v2233
          %2235 = vdwg.mxu0
          %2236 = vmatprep.subr.mxu0 %v2164
          %2237 = vmatpush1.msra.mxu0 %v2163
          %2238 = vmatprep.subr.mxu0 %v2160
          %2239 = vmatpush1.msra.mxu0 %v2159
          %2240 = vmatprep.subr.mxu0 %v2156
          %2241 = vmatpush1.msra.mxu0 %v2155
          %2242 = vmatprep.subr.mxu0 %v2152
          %2243 = vmatpush1.msra.mxu0 %v2151
          %2244 = vmatprep.subr.mxu0 %v2148
          %2245 = vmatpush1.msra.mxu0 %v2147
          %2246 = vmatprep.subr.mxu0 %v2144
          %2247 = vmatpush1.msra.mxu0 %v2143
          %2248 = vmatprep.subr.mxu0 %v2140
          %2249 = vmatpush1.msra.mxu0 %v2139
          %2250 = vmatprep.subr.mxu0 %v2136
          %2251 = vmatpush1.msra.mxu0 %v2135
          %2252 = vmatprep.subr.mxu0 %v2132
          %2253 = vmatpush1.msra.mxu0 %v2131
          %2254 = vmatprep.subr.mxu0 %v2128
          %2255 = vmatpush1.msra.mxu0 %v2127
          %2256 = vmatprep.subr.mxu0 %v2124
          %2257 = vmatpush1.msra.mxu0 %v2123
          %2258 = vmatprep.subr.mxu0 %v2120
          %2259 = vmatpush1.msra.mxu0 %v2119
          %2260 = vmatprep.subr.mxu0 %v2116
          %2261 = vmatpush1.msra.mxu0 %v2115
          %2262 = vmatprep.subr.mxu0 %v2112
          %2263 = vmatpush1.msra.mxu0 %v2111
          %2264 = vmatprep.subr.mxu0 %v2108
          %2265 = vmatpush1.msra.mxu0 %v2107
          %2266 = vmatprep.subr.mxu0 %v2104
          %2267 = vmatpush1.msra.mxu0 %v2103
          %2268 = vmatprep.subr.mxu0 0.0
          %2269 = vmatpush2.msra.mxu0 0.0
          %2270 = vmatprep.subr.mxu0 0.0
          %2271 = vmatpush2.msra.mxu0 0.0
          %2272 = vmatprep.subr.mxu0 0.0
          %2273 = vmatpush2.msra.mxu0 0.0
          %2274 = vmatprep.subr.mxu0 0.0
          %2275 = vmatpush2.msra.mxu0 0.0
          %2276 = vmatprep.subr.mxu0 0.0
          %2277 = vmatpush2.msra.mxu0 0.0
          %2278 = vmatprep.subr.mxu0 0.0
          %2279 = vmatpush2.msra.mxu0 0.0
          %2280 = vmatprep.subr.mxu0 0.0
          %2281 = vmatpush2.msra.mxu0 0.0
          %2282 = vmatprep.subr.mxu0 0.0
          %2283 = vmatpush2.msra.mxu0 0.0
          %2284 = vmatprep.subr.mxu0 0.0
          %2285 = vmatpush2.msra.mxu0 0.0
          %2286 = vmatprep.subr.mxu0 0.0
          %2287 = vmatpush2.msra.mxu0 0.0
          %2288 = vmatprep.subr.mxu0 0.0
          %2289 = vmatpush2.msra.mxu0 0.0
          %2290 = vmatprep.subr.mxu0 0.0
          %2291 = vmatpush2.msra.mxu0 0.0
          %2292 = vmatprep.subr.mxu0 0.0
          %2293 = vmatpush2.msra.mxu0 0.0
          %2294 = vmatprep.subr.mxu0 0.0
          %2295 = vmatpush2.msra.mxu0 0.0
          %2296 = vmatprep.subr.mxu0 0.0
          %2297 = vmatpush2.msra.mxu0 0.0
          %2298 = vmatprep.subr.mxu0 0.0
          %2299 = vmatpush2.msra.mxu0 0.0
          %2300 = vmatprep.mubr.f32.mxu0 0.0
          %2301 = vmatmul.mubr.f32.gmra.mxu0 %v2094
          %v2302 = vpop.f32.mrf.mxu0
          %v2303 = vadd.f32 0.0, %v2302
          %v2304 = vpop.f32.mrf.mxu0
          %v2305 = vadd.f32 0.0, %v2304
          %2306 = vdwg.mxu0
          %v2307 = vadd.f32 %v2097, %v2232
          %v2308 = vadd.f32 %v2098, %v2234
          %v2309 = vadd.f32 %v2099, %v2303
          %v2310 = vadd.f32 %v2100, %v2305
          %v2311 = vtanh.pop %v2307
          %v2312 = vtanh.pop %v2308
          %v2313 = vtanh.pop %v2309
          %v2314 = vtanh.pop %v2310
          %v2315 = vmul.f32 %v2311, 0.5
          %v2316 = vadd.f32 %v2315, 0.5
          %v2317 = vmul.f32 %v2312, 0.5
          %v2318 = vadd.f32 %v2317, 0.5
          %v2319 = vmul.f32 %v2314, 0.5
          %v2320 = vadd.f32 %v2319, 0.5
          %v2321 = vmul.f32 %v2318, %v2092
          %v2322 = vmul.f32 %v2316, %v2313
          %v2323 = vadd.f32 %v2321, %v2322
          %v2324 = vtanh.pop %v2323
          %v2325 = vmul.f32 %v2320, %v2324
          %v2326 = vmax.f32 %v2325, 0.0
          %2327 = vst [vmem:[#allocation2 + $0x40] sm:$0xff] %v2326
          %v2328 = vld [vmem:[#allocation3 + $0xa0] sm:$0xff]
          %v2329 = vld [vmem:[#allocation3 + $0xa8] sm:$0xff]
          %v2330 = vld [vmem:[#allocation3 + $0xb0] sm:$0xff]
          %v2331 = vld [vmem:[#allocation3 + $0xb8] sm:$0xff]
          %v2332 = vld [vmem:[%s241] sm:$0xff]
          %v2333 = vld [vmem:[%s241 + $0x8] sm:$0xff]
          %v2334 = vld [vmem:[%s241 + $0x10] sm:$0xff]
          %v2335 = vld [vmem:[%s241 + $0x18] sm:$0xff]
          %v2336 = vld [vmem:[%s241 + $0x20] sm:$0xff]
          %v2337 = vld [vmem:[%s241 + $0x28] sm:$0xff]
          %v2338 = vld [vmem:[%s241 + $0x30] sm:$0xff]
          %v2339 = vld [vmem:[%s241 + $0x38] sm:$0xff]
          %v2340 = vld [vmem:[%s241 + $0x40] sm:$0xff]
          %v2341 = vld [vmem:[%s241 + $0x48] sm:$0xff]
          %v2342 = vld [vmem:[%s241 + $0x50] sm:$0xff]
          %v2343 = vld [vmem:[%s241 + $0x58] sm:$0xff]
          %v2344 = vld [vmem:[%s241 + $0x60] sm:$0xff]
          %v2345 = vld [vmem:[%s241 + $0x68] sm:$0xff]
          %v2346 = vld [vmem:[%s241 + $0x70] sm:$0xff]
          %v2347 = vld [vmem:[%s241 + $0x78] sm:$0xff]
          %v2348 = vld [vmem:[%s241 + $0x80] sm:$0xff]
          %v2349 = vld [vmem:[%s241 + $0x88] sm:$0xff]
          %v2350 = vld [vmem:[%s241 + $0x90] sm:$0xff]
          %v2351 = vld [vmem:[%s241 + $0x98] sm:$0xff]
          %v2352 = vld [vmem:[%s241 + $0xa0] sm:$0xff]
          %v2353 = vld [vmem:[%s241 + $0xa8] sm:$0xff]
          %v2354 = vld [vmem:[%s241 + $0xb0] sm:$0xff]
          %v2355 = vld [vmem:[%s241 + $0xb8] sm:$0xff]
          %v2356 = vld [vmem:[%s241 + $0xc0] sm:$0xff]
          %v2357 = vld [vmem:[%s241 + $0xc8] sm:$0xff]
          %v2358 = vld [vmem:[%s241 + $0xd0] sm:$0xff]
          %v2359 = vld [vmem:[%s241 + $0xd8] sm:$0xff]
          %v2360 = vld [vmem:[%s241 + $0xe0] sm:$0xff]
          %v2361 = vld [vmem:[%s241 + $0xe8] sm:$0xff]
          %v2362 = vld [vmem:[%s241 + $0xf0] sm:$0xff]
          %v2363 = vld [vmem:[%s241 + $0xf8] sm:$0xff]
          %v2364 = vld [vmem:[%s241 + $0x100] sm:$0xff]
          %v2365 = vld [vmem:[%s241 + $0x108] sm:$0xff]
          %v2366 = vld [vmem:[%s241 + $0x110] sm:$0xff]
          %v2367 = vld [vmem:[%s241 + $0x118] sm:$0xff]
          %v2368 = vld [vmem:[%s241 + $0x120] sm:$0xff]
          %v2369 = vld [vmem:[%s241 + $0x128] sm:$0xff]
          %v2370 = vld [vmem:[%s241 + $0x130] sm:$0xff]
          %v2371 = vld [vmem:[%s241 + $0x138] sm:$0xff]
          %v2372 = vld [vmem:[%s241 + $0x140] sm:$0xff]
          %v2373 = vld [vmem:[%s241 + $0x148] sm:$0xff]
          %v2374 = vld [vmem:[%s241 + $0x150] sm:$0xff]
          %v2375 = vld [vmem:[%s241 + $0x158] sm:$0xff]
          %v2376 = vld [vmem:[%s241 + $0x160] sm:$0xff]
          %v2377 = vld [vmem:[%s241 + $0x168] sm:$0xff]
          %v2378 = vld [vmem:[%s241 + $0x170] sm:$0xff]
          %v2379 = vld [vmem:[%s241 + $0x178] sm:$0xff]
          %v2380 = vld [vmem:[%s241 + $0x180] sm:$0xff]
          %v2381 = vld [vmem:[%s241 + $0x188] sm:$0xff]
          %v2382 = vld [vmem:[%s241 + $0x190] sm:$0xff]
          %v2383 = vld [vmem:[%s241 + $0x198] sm:$0xff]
          %v2384 = vld [vmem:[%s241 + $0x1a0] sm:$0xff]
          %v2385 = vld [vmem:[%s241 + $0x1a8] sm:$0xff]
          %v2386 = vld [vmem:[%s241 + $0x1b0] sm:$0xff]
          %v2387 = vld [vmem:[%s241 + $0x1b8] sm:$0xff]
          %v2388 = vld [vmem:[%s241 + $0x1c0] sm:$0xff]
          %v2389 = vld [vmem:[%s241 + $0x1c8] sm:$0xff]
          %v2390 = vld [vmem:[%s241 + $0x1d0] sm:$0xff]
          %v2391 = vld [vmem:[%s241 + $0x1d8] sm:$0xff]
          %v2392 = vld [vmem:[%s241 + $0x1e0] sm:$0xff]
          %v2393 = vld [vmem:[%s241 + $0x1e8] sm:$0xff]
          %v2394 = vld [vmem:[%s241 + $0x1f0] sm:$0xff]
          %v2395 = vld [vmem:[%s241 + $0x1f8] sm:$0xff]
          %2396 = vmatprep.subr.mxu0 %v2393
          %2397 = vmatpush1.msra.mxu0 %v2392
          %2398 = vmatprep.subr.mxu0 %v2389
          %2399 = vmatpush1.msra.mxu0 %v2388
          %2400 = vmatprep.subr.mxu0 %v2385
          %2401 = vmatpush1.msra.mxu0 %v2384
          %2402 = vmatprep.subr.mxu0 %v2381
          %2403 = vmatpush1.msra.mxu0 %v2380
          %2404 = vmatprep.subr.mxu0 %v2377
          %2405 = vmatpush1.msra.mxu0 %v2376
          %2406 = vmatprep.subr.mxu0 %v2373
          %2407 = vmatpush1.msra.mxu0 %v2372
          %2408 = vmatprep.subr.mxu0 %v2369
          %2409 = vmatpush1.msra.mxu0 %v2368
          %2410 = vmatprep.subr.mxu0 %v2365
          %2411 = vmatpush1.msra.mxu0 %v2364
          %2412 = vmatprep.subr.mxu0 %v2361
          %2413 = vmatpush1.msra.mxu0 %v2360
          %2414 = vmatprep.subr.mxu0 %v2357
          %2415 = vmatpush1.msra.mxu0 %v2356
          %2416 = vmatprep.subr.mxu0 %v2353
          %2417 = vmatpush1.msra.mxu0 %v2352
          %2418 = vmatprep.subr.mxu0 %v2349
          %2419 = vmatpush1.msra.mxu0 %v2348
          %2420 = vmatprep.subr.mxu0 %v2345
          %2421 = vmatpush1.msra.mxu0 %v2344
          %2422 = vmatprep.subr.mxu0 %v2341
          %2423 = vmatpush1.msra.mxu0 %v2340
          %2424 = vmatprep.subr.mxu0 %v2337
          %2425 = vmatpush1.msra.mxu0 %v2336
          %2426 = vmatprep.subr.mxu0 %v2333
          %2427 = vmatpush1.msra.mxu0 %v2332
          %2428 = vmatprep.subr.mxu0 0.0
          %2429 = vmatpush2.msra.mxu0 0.0
          %2430 = vmatprep.subr.mxu0 0.0
          %2431 = vmatpush2.msra.mxu0 0.0
          %2432 = vmatprep.subr.mxu0 0.0
          %2433 = vmatpush2.msra.mxu0 0.0
          %2434 = vmatprep.subr.mxu0 0.0
          %2435 = vmatpush2.msra.mxu0 0.0
          %2436 = vmatprep.subr.mxu0 0.0
          %2437 = vmatpush2.msra.mxu0 0.0
          %2438 = vmatprep.subr.mxu0 0.0
          %2439 = vmatpush2.msra.mxu0 0.0
          %2440 = vmatprep.subr.mxu0 0.0
          %2441 = vmatpush2.msra.mxu0 0.0
          %2442 = vmatprep.subr.mxu0 0.0
          %2443 = vmatpush2.msra.mxu0 0.0
          %2444 = vmatprep.subr.mxu0 0.0
          %2445 = vmatpush2.msra.mxu0 0.0
          %2446 = vmatprep.subr.mxu0 0.0
          %2447 = vmatpush2.msra.mxu0 0.0
          %2448 = vmatprep.subr.mxu0 0.0
          %2449 = vmatpush2.msra.mxu0 0.0
          %2450 = vmatprep.subr.mxu0 0.0
          %2451 = vmatpush2.msra.mxu0 0.0
          %2452 = vmatprep.subr.mxu0 0.0
          %2453 = vmatpush2.msra.mxu0 0.0
          %2454 = vmatprep.subr.mxu0 0.0
          %2455 = vmatpush2.msra.mxu0 0.0
          %2456 = vmatprep.subr.mxu0 0.0
          %2457 = vmatpush2.msra.mxu0 0.0
          %2458 = vmatprep.subr.mxu0 0.0
          %2459 = vmatpush2.msra.mxu0 0.0
          %2460 = vmatprep.mubr.f32.mxu0 0.0
          %2461 = vmatmul.mubr.f32.gmra.mxu0 %v2325
          %v2462 = vpop.f32.mrf.mxu0
          %v2463 = vadd.f32 0.0, %v2462
          %v2464 = vpop.f32.mrf.mxu0
          %v2465 = vadd.f32 0.0, %v2464
          %2466 = vdwg.mxu0
          %2467 = vmatprep.subr.mxu0 %v2395
          %2468 = vmatpush1.msra.mxu0 %v2394
          %2469 = vmatprep.subr.mxu0 %v2391
          %2470 = vmatpush1.msra.mxu0 %v2390
          %2471 = vmatprep.subr.mxu0 %v2387
          %2472 = vmatpush1.msra.mxu0 %v2386
          %2473 = vmatprep.subr.mxu0 %v2383
          %2474 = vmatpush1.msra.mxu0 %v2382
          %2475 = vmatprep.subr.mxu0 %v2379
          %2476 = vmatpush1.msra.mxu0 %v2378
          %2477 = vmatprep.subr.mxu0 %v2375
          %2478 = vmatpush1.msra.mxu0 %v2374
          %2479 = vmatprep.subr.mxu0 %v2371
          %2480 = vmatpush1.msra.mxu0 %v2370
          %2481 = vmatprep.subr.mxu0 %v2367
          %2482 = vmatpush1.msra.mxu0 %v2366
          %2483 = vmatprep.subr.mxu0 %v2363
          %2484 = vmatpush1.msra.mxu0 %v2362
          %2485 = vmatprep.subr.mxu0 %v2359
          %2486 = vmatpush1.msra.mxu0 %v2358
          %2487 = vmatprep.subr.mxu0 %v2355
          %2488 = vmatpush1.msra.mxu0 %v2354
          %2489 = vmatprep.subr.mxu0 %v2351
          %2490 = vmatpush1.msra.mxu0 %v2350
          %2491 = vmatprep.subr.mxu0 %v2347
          %2492 = vmatpush1.msra.mxu0 %v2346
          %2493 = vmatprep.subr.mxu0 %v2343
          %2494 = vmatpush1.msra.mxu0 %v2342
          %2495 = vmatprep.subr.mxu0 %v2339
          %2496 = vmatpush1.msra.mxu0 %v2338
          %2497 = vmatprep.subr.mxu0 %v2335
          %2498 = vmatpush1.msra.mxu0 %v2334
          %2499 = vmatprep.subr.mxu0 0.0
          %2500 = vmatpush2.msra.mxu0 0.0
          %2501 = vmatprep.subr.mxu0 0.0
          %2502 = vmatpush2.msra.mxu0 0.0
          %2503 = vmatprep.subr.mxu0 0.0
          %2504 = vmatpush2.msra.mxu0 0.0
          %2505 = vmatprep.subr.mxu0 0.0
          %2506 = vmatpush2.msra.mxu0 0.0
          %2507 = vmatprep.subr.mxu0 0.0
          %2508 = vmatpush2.msra.mxu0 0.0
          %2509 = vmatprep.subr.mxu0 0.0
          %2510 = vmatpush2.msra.mxu0 0.0
          %2511 = vmatprep.subr.mxu0 0.0
          %2512 = vmatpush2.msra.mxu0 0.0
          %2513 = vmatprep.subr.mxu0 0.0
          %2514 = vmatpush2.msra.mxu0 0.0
          %2515 = vmatprep.subr.mxu0 0.0
          %2516 = vmatpush2.msra.mxu0 0.0
          %2517 = vmatprep.subr.mxu0 0.0
          %2518 = vmatpush2.msra.mxu0 0.0
          %2519 = vmatprep.subr.mxu0 0.0
          %2520 = vmatpush2.msra.mxu0 0.0
          %2521 = vmatprep.subr.mxu0 0.0
          %2522 = vmatpush2.msra.mxu0 0.0
          %2523 = vmatprep.subr.mxu0 0.0
          %2524 = vmatpush2.msra.mxu0 0.0
          %2525 = vmatprep.subr.mxu0 0.0
          %2526 = vmatpush2.msra.mxu0 0.0
          %2527 = vmatprep.subr.mxu0 0.0
          %2528 = vmatpush2.msra.mxu0 0.0
          %2529 = vmatprep.subr.mxu0 0.0
          %2530 = vmatpush2.msra.mxu0 0.0
          %2531 = vmatprep.mubr.f32.mxu0 0.0
          %2532 = vmatmul.mubr.f32.gmra.mxu0 %v2325
          %v2533 = vpop.f32.mrf.mxu0
          %v2534 = vadd.f32 0.0, %v2533
          %v2535 = vpop.f32.mrf.mxu0
          %v2536 = vadd.f32 0.0, %v2535
          %2537 = vdwg.mxu0
          %v2538 = vadd.f32 %v2328, %v2463
          %v2539 = vadd.f32 %v2329, %v2465
          %v2540 = vadd.f32 %v2330, %v2534
          %v2541 = vadd.f32 %v2331, %v2536
          %v2542 = vtanh.pop %v2538
          %v2543 = vtanh.pop %v2539
          %v2544 = vtanh.pop %v2540
          %v2545 = vtanh.pop %v2541
          %v2546 = vmul.f32 %v2542, 0.5
          %v2547 = vadd.f32 %v2546, 0.5
          %v2548 = vmul.f32 %v2543, 0.5
          %v2549 = vadd.f32 %v2548, 0.5
          %v2550 = vmul.f32 %v2545, 0.5
          %v2551 = vadd.f32 %v2550, 0.5
          %v2552 = vmul.f32 %v2549, %v2323
          %v2553 = vmul.f32 %v2547, %v2544
          %v2554 = vadd.f32 %v2552, %v2553
          %v2555 = vtanh.pop %v2554
          %v2556 = vmul.f32 %v2551, %v2555
          %v2557 = vmax.f32 %v2556, 0.0
          %2558 = vst [vmem:[#allocation2 + $0x50] sm:$0xff] %v2557
          %v2559 = vld [vmem:[#allocation3 + $0xc0] sm:$0xff]
          %v2560 = vld [vmem:[#allocation3 + $0xc8] sm:$0xff]
          %v2561 = vld [vmem:[#allocation3 + $0xd0] sm:$0xff]
          %v2562 = vld [vmem:[#allocation3 + $0xd8] sm:$0xff]
          %v2563 = vld [vmem:[%s241] sm:$0xff]
          %v2564 = vld [vmem:[%s241 + $0x8] sm:$0xff]
          %v2565 = vld [vmem:[%s241 + $0x10] sm:$0xff]
          %v2566 = vld [vmem:[%s241 + $0x18] sm:$0xff]
          %v2567 = vld [vmem:[%s241 + $0x20] sm:$0xff]
          %v2568 = vld [vmem:[%s241 + $0x28] sm:$0xff]
          %v2569 = vld [vmem:[%s241 + $0x30] sm:$0xff]
          %v2570 = vld [vmem:[%s241 + $0x38] sm:$0xff]
          %v2571 = vld [vmem:[%s241 + $0x40] sm:$0xff]
          %v2572 = vld [vmem:[%s241 + $0x48] sm:$0xff]
          %v2573 = vld [vmem:[%s241 + $0x50] sm:$0xff]
          %v2574 = vld [vmem:[%s241 + $0x58] sm:$0xff]
          %v2575 = vld [vmem:[%s241 + $0x60] sm:$0xff]
          %v2576 = vld [vmem:[%s241 + $0x68] sm:$0xff]
          %v2577 = vld [vmem:[%s241 + $0x70] sm:$0xff]
          %v2578 = vld [vmem:[%s241 + $0x78] sm:$0xff]
          %v2579 = vld [vmem:[%s241 + $0x80] sm:$0xff]
          %v2580 = vld [vmem:[%s241 + $0x88] sm:$0xff]
          %v2581 = vld [vmem:[%s241 + $0x90] sm:$0xff]
          %v2582 = vld [vmem:[%s241 + $0x98] sm:$0xff]
          %v2583 = vld [vmem:[%s241 + $0xa0] sm:$0xff]
          %v2584 = vld [vmem:[%s241 + $0xa8] sm:$0xff]
          %v2585 = vld [vmem:[%s241 + $0xb0] sm:$0xff]
          %v2586 = vld [vmem:[%s241 + $0xb8] sm:$0xff]
          %v2587 = vld [vmem:[%s241 + $0xc0] sm:$0xff]
          %v2588 = vld [vmem:[%s241 + $0xc8] sm:$0xff]
          %v2589 = vld [vmem:[%s241 + $0xd0] sm:$0xff]
          %v2590 = vld [vmem:[%s241 + $0xd8] sm:$0xff]
          %v2591 = vld [vmem:[%s241 + $0xe0] sm:$0xff]
          %v2592 = vld [vmem:[%s241 + $0xe8] sm:$0xff]
          %v2593 = vld [vmem:[%s241 + $0xf0] sm:$0xff]
          %v2594 = vld [vmem:[%s241 + $0xf8] sm:$0xff]
          %v2595 = vld [vmem:[%s241 + $0x100] sm:$0xff]
          %v2596 = vld [vmem:[%s241 + $0x108] sm:$0xff]
          %v2597 = vld [vmem:[%s241 + $0x110] sm:$0xff]
          %v2598 = vld [vmem:[%s241 + $0x118] sm:$0xff]
          %v2599 = vld [vmem:[%s241 + $0x120] sm:$0xff]
          %v2600 = vld [vmem:[%s241 + $0x128] sm:$0xff]
          %v2601 = vld [vmem:[%s241 + $0x130] sm:$0xff]
          %v2602 = vld [vmem:[%s241 + $0x138] sm:$0xff]
          %v2603 = vld [vmem:[%s241 + $0x140] sm:$0xff]
          %v2604 = vld [vmem:[%s241 + $0x148] sm:$0xff]
          %v2605 = vld [vmem:[%s241 + $0x150] sm:$0xff]
          %v2606 = vld [vmem:[%s241 + $0x158] sm:$0xff]
          %v2607 = vld [vmem:[%s241 + $0x160] sm:$0xff]
          %v2608 = vld [vmem:[%s241 + $0x168] sm:$0xff]
          %v2609 = vld [vmem:[%s241 + $0x170] sm:$0xff]
          %v2610 = vld [vmem:[%s241 + $0x178] sm:$0xff]
          %v2611 = vld [vmem:[%s241 + $0x180] sm:$0xff]
          %v2612 = vld [vmem:[%s241 + $0x188] sm:$0xff]
          %v2613 = vld [vmem:[%s241 + $0x190] sm:$0xff]
          %v2614 = vld [vmem:[%s241 + $0x198] sm:$0xff]
          %v2615 = vld [vmem:[%s241 + $0x1a0] sm:$0xff]
          %v2616 = vld [vmem:[%s241 + $0x1a8] sm:$0xff]
          %v2617 = vld [vmem:[%s241 + $0x1b0] sm:$0xff]
          %v2618 = vld [vmem:[%s241 + $0x1b8] sm:$0xff]
          %v2619 = vld [vmem:[%s241 + $0x1c0] sm:$0xff]
          %v2620 = vld [vmem:[%s241 + $0x1c8] sm:$0xff]
          %v2621 = vld [vmem:[%s241 + $0x1d0] sm:$0xff]
          %v2622 = vld [vmem:[%s241 + $0x1d8] sm:$0xff]
          %v2623 = vld [vmem:[%s241 + $0x1e0] sm:$0xff]
          %v2624 = vld [vmem:[%s241 + $0x1e8] sm:$0xff]
          %v2625 = vld [vmem:[%s241 + $0x1f0] sm:$0xff]
          %v2626 = vld [vmem:[%s241 + $0x1f8] sm:$0xff]
          %2627 = vmatprep.subr.mxu0 %v2624
          %2628 = vmatpush1.msra.mxu0 %v2623
          %2629 = vmatprep.subr.mxu0 %v2620
          %2630 = vmatpush1.msra.mxu0 %v2619
          %2631 = vmatprep.subr.mxu0 %v2616
          %2632 = vmatpush1.msra.mxu0 %v2615
          %2633 = vmatprep.subr.mxu0 %v2612
          %2634 = vmatpush1.msra.mxu0 %v2611
          %2635 = vmatprep.subr.mxu0 %v2608
          %2636 = vmatpush1.msra.mxu0 %v2607
          %2637 = vmatprep.subr.mxu0 %v2604
          %2638 = vmatpush1.msra.mxu0 %v2603
          %2639 = vmatprep.subr.mxu0 %v2600
          %2640 = vmatpush1.msra.mxu0 %v2599
          %2641 = vmatprep.subr.mxu0 %v2596
          %2642 = vmatpush1.msra.mxu0 %v2595
          %2643 = vmatprep.subr.mxu0 %v2592
          %2644 = vmatpush1.msra.mxu0 %v2591
          %2645 = vmatprep.subr.mxu0 %v2588
          %2646 = vmatpush1.msra.mxu0 %v2587
          %2647 = vmatprep.subr.mxu0 %v2584
          %2648 = vmatpush1.msra.mxu0 %v2583
          %2649 = vmatprep.subr.mxu0 %v2580
          %2650 = vmatpush1.msra.mxu0 %v2579
          %2651 = vmatprep.subr.mxu0 %v2576
          %2652 = vmatpush1.msra.mxu0 %v2575
          %2653 = vmatprep.subr.mxu0 %v2572
          %2654 = vmatpush1.msra.mxu0 %v2571
          %2655 = vmatprep.subr.mxu0 %v2568
          %2656 = vmatpush1.msra.mxu0 %v2567
          %2657 = vmatprep.subr.mxu0 %v2564
          %2658 = vmatpush1.msra.mxu0 %v2563
          %2659 = vmatprep.subr.mxu0 0.0
          %2660 = vmatpush2.msra.mxu0 0.0
          %2661 = vmatprep.subr.mxu0 0.0
          %2662 = vmatpush2.msra.mxu0 0.0
          %2663 = vmatprep.subr.mxu0 0.0
          %2664 = vmatpush2.msra.mxu0 0.0
          %2665 = vmatprep.subr.mxu0 0.0
          %2666 = vmatpush2.msra.mxu0 0.0
          %2667 = vmatprep.subr.mxu0 0.0
          %2668 = vmatpush2.msra.mxu0 0.0
          %2669 = vmatprep.subr.mxu0 0.0
          %2670 = vmatpush2.msra.mxu0 0.0
          %2671 = vmatprep.subr.mxu0 0.0
          %2672 = vmatpush2.msra.mxu0 0.0
          %2673 = vmatprep.subr.mxu0 0.0
          %2674 = vmatpush2.msra.mxu0 0.0
          %2675 = vmatprep.subr.mxu0 0.0
          %2676 = vmatpush2.msra.mxu0 0.0
          %2677 = vmatprep.subr.mxu0 0.0
          %2678 = vmatpush2.msra.mxu0 0.0
          %2679 = vmatprep.subr.mxu0 0.0
          %2680 = vmatpush2.msra.mxu0 0.0
          %2681 = vmatprep.subr.mxu0 0.0
          %2682 = vmatpush2.msra.mxu0 0.0
          %2683 = vmatprep.subr.mxu0 0.0
          %2684 = vmatpush2.msra.mxu0 0.0
          %2685 = vmatprep.subr.mxu0 0.0
          %2686 = vmatpush2.msra.mxu0 0.0
          %2687 = vmatprep.subr.mxu0 0.0
          %2688 = vmatpush2.msra.mxu0 0.0
          %2689 = vmatprep.subr.mxu0 0.0
          %2690 = vmatpush2.msra.mxu0 0.0
          %2691 = vmatprep.mubr.f32.mxu0 0.0
          %2692 = vmatmul.mubr.f32.gmra.mxu0 %v2556
          %v2693 = vpop.f32.mrf.mxu0
          %v2694 = vadd.f32 0.0, %v2693
          %v2695 = vpop.f32.mrf.mxu0
          %v2696 = vadd.f32 0.0, %v2695
          %2697 = vdwg.mxu0
          %2698 = vmatprep.subr.mxu0 %v2626
          %2699 = vmatpush1.msra.mxu0 %v2625
          %2700 = vmatprep.subr.mxu0 %v2622
          %2701 = vmatpush1.msra.mxu0 %v2621
          %2702 = vmatprep.subr.mxu0 %v2618
          %2703 = vmatpush1.msra.mxu0 %v2617
          %2704 = vmatprep.subr.mxu0 %v2614
          %2705 = vmatpush1.msra.mxu0 %v2613
          %2706 = vmatprep.subr.mxu0 %v2610
          %2707 = vmatpush1.msra.mxu0 %v2609
          %2708 = vmatprep.subr.mxu0 %v2606
          %2709 = vmatpush1.msra.mxu0 %v2605
          %2710 = vmatprep.subr.mxu0 %v2602
          %2711 = vmatpush1.msra.mxu0 %v2601
          %2712 = vmatprep.subr.mxu0 %v2598
          %2713 = vmatpush1.msra.mxu0 %v2597
          %2714 = vmatprep.subr.mxu0 %v2594
          %2715 = vmatpush1.msra.mxu0 %v2593
          %2716 = vmatprep.subr.mxu0 %v2590
          %2717 = vmatpush1.msra.mxu0 %v2589
          %2718 = vmatprep.subr.mxu0 %v2586
          %2719 = vmatpush1.msra.mxu0 %v2585
          %2720 = vmatprep.subr.mxu0 %v2582
          %2721 = vmatpush1.msra.mxu0 %v2581
          %2722 = vmatprep.subr.mxu0 %v2578
          %2723 = vmatpush1.msra.mxu0 %v2577
          %2724 = vmatprep.subr.mxu0 %v2574
          %2725 = vmatpush1.msra.mxu0 %v2573
          %2726 = vmatprep.subr.mxu0 %v2570
          %2727 = vmatpush1.msra.mxu0 %v2569
          %2728 = vmatprep.subr.mxu0 %v2566
          %2729 = vmatpush1.msra.mxu0 %v2565
          %2730 = vmatprep.subr.mxu0 0.0
          %2731 = vmatpush2.msra.mxu0 0.0
          %2732 = vmatprep.subr.mxu0 0.0
          %2733 = vmatpush2.msra.mxu0 0.0
          %2734 = vmatprep.subr.mxu0 0.0
          %2735 = vmatpush2.msra.mxu0 0.0
          %2736 = vmatprep.subr.mxu0 0.0
          %2737 = vmatpush2.msra.mxu0 0.0
          %2738 = vmatprep.subr.mxu0 0.0
          %2739 = vmatpush2.msra.mxu0 0.0
          %2740 = vmatprep.subr.mxu0 0.0
          %2741 = vmatpush2.msra.mxu0 0.0
          %2742 = vmatprep.subr.mxu0 0.0
          %2743 = vmatpush2.msra.mxu0 0.0
          %2744 = vmatprep.subr.mxu0 0.0
          %2745 = vmatpush2.msra.mxu0 0.0
          %2746 = vmatprep.subr.mxu0 0.0
          %2747 = vmatpush2.msra.mxu0 0.0
          %2748 = vmatprep.subr.mxu0 0.0
          %2749 = vmatpush2.msra.mxu0 0.0
          %2750 = vmatprep.subr.mxu0 0.0
          %2751 = vmatpush2.msra.mxu0 0.0
          %2752 = vmatprep.subr.mxu0 0.0
          %2753 = vmatpush2.msra.mxu0 0.0
          %2754 = vmatprep.subr.mxu0 0.0
          %2755 = vmatpush2.msra.mxu0 0.0
          %2756 = vmatprep.subr.mxu0 0.0
          %2757 = vmatpush2.msra.mxu0 0.0
          %2758 = vmatprep.subr.mxu0 0.0
          %2759 = vmatpush2.msra.mxu0 0.0
          %2760 = vmatprep.subr.mxu0 0.0
          %2761 = vmatpush2.msra.mxu0 0.0
          %2762 = vmatprep.mubr.f32.mxu0 0.0
          %2763 = vmatmul.mubr.f32.gmra.mxu0 %v2556
          %v2764 = vpop.f32.mrf.mxu0
          %v2765 = vadd.f32 0.0, %v2764
          %v2766 = vpop.f32.mrf.mxu0
          %v2767 = vadd.f32 0.0, %v2766
          %2768 = vdwg.mxu0
          %v2769 = vadd.f32 %v2559, %v2694
          %v2770 = vadd.f32 %v2560, %v2696
          %v2771 = vadd.f32 %v2561, %v2765
          %v2772 = vadd.f32 %v2562, %v2767
          %v2773 = vtanh.pop %v2769
          %v2774 = vtanh.pop %v2770
          %v2775 = vtanh.pop %v2771
          %v2776 = vtanh.pop %v2772
          %v2777 = vmul.f32 %v2773, 0.5
          %v2778 = vadd.f32 %v2777, 0.5
          %v2779 = vmul.f32 %v2774, 0.5
          %v2780 = vadd.f32 %v2779, 0.5
          %v2781 = vmul.f32 %v2776, 0.5
          %v2782 = vadd.f32 %v2781, 0.5
          %v2783 = vmul.f32 %v2780, %v2554
          %v2784 = vmul.f32 %v2778, %v2775
          %v2785 = vadd.f32 %v2783, %v2784
          %v2786 = vtanh.pop %v2785
          %v2787 = vmul.f32 %v2782, %v2786
          %v2788 = vmax.f32 %v2787, 0.0
          %2789 = vst [vmem:[#allocation2 + $0x60] sm:$0xff] %v2788
          %v2790 = vld [vmem:[#allocation3 + $0xe0] sm:$0xff]
          %v2791 = vld [vmem:[#allocation3 + $0xe8] sm:$0xff]
          %v2792 = vld [vmem:[#allocation3 + $0xf0] sm:$0xff]
          %v2793 = vld [vmem:[#allocation3 + $0xf8] sm:$0xff]
          %v2794 = vld [vmem:[%s241] sm:$0xff]
          %v2795 = vld [vmem:[%s241 + $0x8] sm:$0xff]
          %v2796 = vld [vmem:[%s241 + $0x10] sm:$0xff]
          %v2797 = vld [vmem:[%s241 + $0x18] sm:$0xff]
          %v2798 = vld [vmem:[%s241 + $0x20] sm:$0xff]
          %v2799 = vld [vmem:[%s241 + $0x28] sm:$0xff]
          %v2800 = vld [vmem:[%s241 + $0x30] sm:$0xff]
          %v2801 = vld [vmem:[%s241 + $0x38] sm:$0xff]
          %v2802 = vld [vmem:[%s241 + $0x40] sm:$0xff]
          %v2803 = vld [vmem:[%s241 + $0x48] sm:$0xff]
          %v2804 = vld [vmem:[%s241 + $0x50] sm:$0xff]
          %v2805 = vld [vmem:[%s241 + $0x58] sm:$0xff]
          %v2806 = vld [vmem:[%s241 + $0x60] sm:$0xff]
          %v2807 = vld [vmem:[%s241 + $0x68] sm:$0xff]
          %v2808 = vld [vmem:[%s241 + $0x70] sm:$0xff]
          %v2809 = vld [vmem:[%s241 + $0x78] sm:$0xff]
          %v2810 = vld [vmem:[%s241 + $0x80] sm:$0xff]
          %v2811 = vld [vmem:[%s241 + $0x88] sm:$0xff]
          %v2812 = vld [vmem:[%s241 + $0x90] sm:$0xff]
          %v2813 = vld [vmem:[%s241 + $0x98] sm:$0xff]
          %v2814 = vld [vmem:[%s241 + $0xa0] sm:$0xff]
          %v2815 = vld [vmem:[%s241 + $0xa8] sm:$0xff]
          %v2816 = vld [vmem:[%s241 + $0xb0] sm:$0xff]
          %v2817 = vld [vmem:[%s241 + $0xb8] sm:$0xff]
          %v2818 = vld [vmem:[%s241 + $0xc0] sm:$0xff]
          %v2819 = vld [vmem:[%s241 + $0xc8] sm:$0xff]
          %v2820 = vld [vmem:[%s241 + $0xd0] sm:$0xff]
          %v2821 = vld [vmem:[%s241 + $0xd8] sm:$0xff]
          %v2822 = vld [vmem:[%s241 + $0xe0] sm:$0xff]
          %v2823 = vld [vmem:[%s241 + $0xe8] sm:$0xff]
          %v2824 = vld [vmem:[%s241 + $0xf0] sm:$0xff]
          %v2825 = vld [vmem:[%s241 + $0xf8] sm:$0xff]
          %v2826 = vld [vmem:[%s241 + $0x100] sm:$0xff]
          %v2827 = vld [vmem:[%s241 + $0x108] sm:$0xff]
          %v2828 = vld [vmem:[%s241 + $0x110] sm:$0xff]
          %v2829 = vld [vmem:[%s241 + $0x118] sm:$0xff]
          %v2830 = vld [vmem:[%s241 + $0x120] sm:$0xff]
          %v2831 = vld [vmem:[%s241 + $0x128] sm:$0xff]
          %v2832 = vld [vmem:[%s241 + $0x130] sm:$0xff]
          %v2833 = vld [vmem:[%s241 + $0x138] sm:$0xff]
          %v2834 = vld [vmem:[%s241 + $0x140] sm:$0xff]
          %v2835 = vld [vmem:[%s241 + $0x148] sm:$0xff]
          %v2836 = vld [vmem:[%s241 + $0x150] sm:$0xff]
          %v2837 = vld [vmem:[%s241 + $0x158] sm:$0xff]
          %v2838 = vld [vmem:[%s241 + $0x160] sm:$0xff]
          %v2839 = vld [vmem:[%s241 + $0x168] sm:$0xff]
          %v2840 = vld [vmem:[%s241 + $0x170] sm:$0xff]
          %v2841 = vld [vmem:[%s241 + $0x178] sm:$0xff]
          %v2842 = vld [vmem:[%s241 + $0x180] sm:$0xff]
          %v2843 = vld [vmem:[%s241 + $0x188] sm:$0xff]
          %v2844 = vld [vmem:[%s241 + $0x190] sm:$0xff]
          %v2845 = vld [vmem:[%s241 + $0x198] sm:$0xff]
          %v2846 = vld [vmem:[%s241 + $0x1a0] sm:$0xff]
          %v2847 = vld [vmem:[%s241 + $0x1a8] sm:$0xff]
          %v2848 = vld [vmem:[%s241 + $0x1b0] sm:$0xff]
          %v2849 = vld [vmem:[%s241 + $0x1b8] sm:$0xff]
          %v2850 = vld [vmem:[%s241 + $0x1c0] sm:$0xff]
          %v2851 = vld [vmem:[%s241 + $0x1c8] sm:$0xff]
          %v2852 = vld [vmem:[%s241 + $0x1d0] sm:$0xff]
          %v2853 = vld [vmem:[%s241 + $0x1d8] sm:$0xff]
          %v2854 = vld [vmem:[%s241 + $0x1e0] sm:$0xff]
          %v2855 = vld [vmem:[%s241 + $0x1e8] sm:$0xff]
          %v2856 = vld [vmem:[%s241 + $0x1f0] sm:$0xff]
          %v2857 = vld [vmem:[%s241 + $0x1f8] sm:$0xff]
          %2858 = vmatprep.subr.mxu0 %v2855
          %2859 = vmatpush1.msra.mxu0 %v2854
          %2860 = vmatprep.subr.mxu0 %v2851
          %2861 = vmatpush1.msra.mxu0 %v2850
          %2862 = vmatprep.subr.mxu0 %v2847
          %2863 = vmatpush1.msra.mxu0 %v2846
          %2864 = vmatprep.subr.mxu0 %v2843
          %2865 = vmatpush1.msra.mxu0 %v2842
          %2866 = vmatprep.subr.mxu0 %v2839
          %2867 = vmatpush1.msra.mxu0 %v2838
          %2868 = vmatprep.subr.mxu0 %v2835
          %2869 = vmatpush1.msra.mxu0 %v2834
          %2870 = vmatprep.subr.mxu0 %v2831
          %2871 = vmatpush1.msra.mxu0 %v2830
          %2872 = vmatprep.subr.mxu0 %v2827
          %2873 = vmatpush1.msra.mxu0 %v2826
          %2874 = vmatprep.subr.mxu0 %v2823
          %2875 = vmatpush1.msra.mxu0 %v2822
          %2876 = vmatprep.subr.mxu0 %v2819
          %2877 = vmatpush1.msra.mxu0 %v2818
          %2878 = vmatprep.subr.mxu0 %v2815
          %2879 = vmatpush1.msra.mxu0 %v2814
          %2880 = vmatprep.subr.mxu0 %v2811
          %2881 = vmatpush1.msra.mxu0 %v2810
          %2882 = vmatprep.subr.mxu0 %v2807
          %2883 = vmatpush1.msra.mxu0 %v2806
          %2884 = vmatprep.subr.mxu0 %v2803
          %2885 = vmatpush1.msra.mxu0 %v2802
          %2886 = vmatprep.subr.mxu0 %v2799
          %2887 = vmatpush1.msra.mxu0 %v2798
          %2888 = vmatprep.subr.mxu0 %v2795
          %2889 = vmatpush1.msra.mxu0 %v2794
          %2890 = vmatprep.subr.mxu0 0.0
          %2891 = vmatpush2.msra.mxu0 0.0
          %2892 = vmatprep.subr.mxu0 0.0
          %2893 = vmatpush2.msra.mxu0 0.0
          %2894 = vmatprep.subr.mxu0 0.0
          %2895 = vmatpush2.msra.mxu0 0.0
          %2896 = vmatprep.subr.mxu0 0.0
          %2897 = vmatpush2.msra.mxu0 0.0
          %2898 = vmatprep.subr.mxu0 0.0
          %2899 = vmatpush2.msra.mxu0 0.0
          %2900 = vmatprep.subr.mxu0 0.0
          %2901 = vmatpush2.msra.mxu0 0.0
          %2902 = vmatprep.subr.mxu0 0.0
          %2903 = vmatpush2.msra.mxu0 0.0
          %2904 = vmatprep.subr.mxu0 0.0
          %2905 = vmatpush2.msra.mxu0 0.0
          %2906 = vmatprep.subr.mxu0 0.0
          %2907 = vmatpush2.msra.mxu0 0.0
          %2908 = vmatprep.subr.mxu0 0.0
          %2909 = vmatpush2.msra.mxu0 0.0
          %2910 = vmatprep.subr.mxu0 0.0
          %2911 = vmatpush2.msra.mxu0 0.0
          %2912 = vmatprep.subr.mxu0 0.0
          %2913 = vmatpush2.msra.mxu0 0.0
          %2914 = vmatprep.subr.mxu0 0.0
          %2915 = vmatpush2.msra.mxu0 0.0
          %2916 = vmatprep.subr.mxu0 0.0
          %2917 = vmatpush2.msra.mxu0 0.0
          %2918 = vmatprep.subr.mxu0 0.0
          %2919 = vmatpush2.msra.mxu0 0.0
          %2920 = vmatprep.subr.mxu0 0.0
          %2921 = vmatpush2.msra.mxu0 0.0
          %2922 = vmatprep.mubr.f32.mxu0 0.0
          %2923 = vmatmul.mubr.f32.gmra.mxu0 %v2787
          %v2924 = vpop.f32.mrf.mxu0
          %v2925 = vadd.f32 0.0, %v2924
          %v2926 = vpop.f32.mrf.mxu0
          %v2927 = vadd.f32 0.0, %v2926
          %2928 = vdwg.mxu0
          %2929 = vmatprep.subr.mxu0 %v2857
          %2930 = vmatpush1.msra.mxu0 %v2856
          %2931 = vmatprep.subr.mxu0 %v2853
          %2932 = vmatpush1.msra.mxu0 %v2852
          %2933 = vmatprep.subr.mxu0 %v2849
          %2934 = vmatpush1.msra.mxu0 %v2848
          %2935 = vmatprep.subr.mxu0 %v2845
          %2936 = vmatpush1.msra.mxu0 %v2844
          %2937 = vmatprep.subr.mxu0 %v2841
          %2938 = vmatpush1.msra.mxu0 %v2840
          %2939 = vmatprep.subr.mxu0 %v2837
          %2940 = vmatpush1.msra.mxu0 %v2836
          %2941 = vmatprep.subr.mxu0 %v2833
          %2942 = vmatpush1.msra.mxu0 %v2832
          %2943 = vmatprep.subr.mxu0 %v2829
          %2944 = vmatpush1.msra.mxu0 %v2828
          %2945 = vmatprep.subr.mxu0 %v2825
          %2946 = vmatpush1.msra.mxu0 %v2824
          %2947 = vmatprep.subr.mxu0 %v2821
          %2948 = vmatpush1.msra.mxu0 %v2820
          %2949 = vmatprep.subr.mxu0 %v2817
          %2950 = vmatpush1.msra.mxu0 %v2816
          %2951 = vmatprep.subr.mxu0 %v2813
          %2952 = vmatpush1.msra.mxu0 %v2812
          %2953 = vmatprep.subr.mxu0 %v2809
          %2954 = vmatpush1.msra.mxu0 %v2808
          %2955 = vmatprep.subr.mxu0 %v2805
          %2956 = vmatpush1.msra.mxu0 %v2804
          %2957 = vmatprep.subr.mxu0 %v2801
          %2958 = vmatpush1.msra.mxu0 %v2800
          %2959 = vmatprep.subr.mxu0 %v2797
          %2960 = vmatpush1.msra.mxu0 %v2796
          %2961 = vmatprep.subr.mxu0 0.0
          %2962 = vmatpush2.msra.mxu0 0.0
          %2963 = vmatprep.subr.mxu0 0.0
          %2964 = vmatpush2.msra.mxu0 0.0
          %2965 = vmatprep.subr.mxu0 0.0
          %2966 = vmatpush2.msra.mxu0 0.0
          %2967 = vmatprep.subr.mxu0 0.0
          %2968 = vmatpush2.msra.mxu0 0.0
          %2969 = vmatprep.subr.mxu0 0.0
          %2970 = vmatpush2.msra.mxu0 0.0
          %2971 = vmatprep.subr.mxu0 0.0
          %2972 = vmatpush2.msra.mxu0 0.0
          %2973 = vmatprep.subr.mxu0 0.0
          %2974 = vmatpush2.msra.mxu0 0.0
          %2975 = vmatprep.subr.mxu0 0.0
          %2976 = vmatpush2.msra.mxu0 0.0
          %2977 = vmatprep.subr.mxu0 0.0
          %2978 = vmatpush2.msra.mxu0 0.0
          %2979 = vmatprep.subr.mxu0 0.0
          %2980 = vmatpush2.msra.mxu0 0.0
          %2981 = vmatprep.subr.mxu0 0.0
          %2982 = vmatpush2.msra.mxu0 0.0
          %2983 = vmatprep.subr.mxu0 0.0
          %2984 = vmatpush2.msra.mxu0 0.0
          %2985 = vmatprep.subr.mxu0 0.0
          %2986 = vmatpush2.msra.mxu0 0.0
          %2987 = vmatprep.subr.mxu0 0.0
          %2988 = vmatpush2.msra.mxu0 0.0
          %2989 = vmatprep.subr.mxu0 0.0
          %2990 = vmatpush2.msra.mxu0 0.0
          %2991 = vmatprep.subr.mxu0 0.0
          %2992 = vmatpush2.msra.mxu0 0.0
          %2993 = vmatprep.mubr.f32.mxu0 0.0
          %2994 = vmatmul.mubr.f32.gmra.mxu0 %v2787
          %v2995 = vpop.f32.mrf.mxu0
          %v2996 = vadd.f32 0.0, %v2995
          %v2997 = vpop.f32.mrf.mxu0
          %v2998 = vadd.f32 0.0, %v2997
          %2999 = vdwg.mxu0
          %v3000 = vadd.f32 %v2790, %v2925
          %v3001 = vadd.f32 %v2791, %v2927
          %v3002 = vadd.f32 %v2792, %v2996
          %v3003 = vadd.f32 %v2793, %v2998
          %v3004 = vtanh.pop %v3000
          %v3005 = vtanh.pop %v3001
          %v3006 = vtanh.pop %v3002
          %v3007 = vtanh.pop %v3003
          %v3008 = vmul.f32 %v3004, 0.5
          %v3009 = vadd.f32 %v3008, 0.5
          %v3010 = vmul.f32 %v3005, 0.5
          %v3011 = vadd.f32 %v3010, 0.5
          %v3012 = vmul.f32 %v3007, 0.5
          %v3013 = vadd.f32 %v3012, 0.5
          %v3014 = vmul.f32 %v3011, %v2785
          %v3015 = vmul.f32 %v3009, %v3006
          %v3016 = vadd.f32 %v3014, %v3015
          %v3017 = vtanh.pop %v3016
          %v3018 = vmul.f32 %v3013, %v3017
          %v3019 = vmax.f32 %v3018, 0.0
          %3020 = vst [vmem:[#allocation2 + $0x70] sm:$0xff] %v3019
        $region60: #{siamese_lstm_forward.1} parent=35 // pred_fallthru
          _
        %v3021 = vld [vmem:[#allocation4 + $0xe0] sm:$0xff]
        %v3022 = vld [vmem:[#allocation4 + $0xe8] sm:$0xff]
        %v3023 = vld [vmem:[#allocation4 + $0xf0] sm:$0xff]
        %v3024 = vld [vmem:[#allocation4 + $0xf8] sm:$0xff]
        %s3025 = scalar_lea.vmem %s241, 512 [#allocation7]
        %v3026 = vld [vmem:[%s3025] sm:$0xff]
        %v3027 = vld [vmem:[%s3025 + $0x8] sm:$0xff]
        %v3028 = vld [vmem:[%s3025 + $0x10] sm:$0xff]
        %v3029 = vld [vmem:[%s3025 + $0x18] sm:$0xff]
        %v3030 = vld [vmem:[%s3025 + $0x20] sm:$0xff]
        %v3031 = vld [vmem:[%s3025 + $0x28] sm:$0xff]
        %v3032 = vld [vmem:[%s3025 + $0x30] sm:$0xff]
        %v3033 = vld [vmem:[%s3025 + $0x38] sm:$0xff]
        %v3034 = vld [vmem:[%s3025 + $0x40] sm:$0xff]
        %v3035 = vld [vmem:[%s3025 + $0x48] sm:$0xff]
        %v3036 = vld [vmem:[%s3025 + $0x50] sm:$0xff]
        %v3037 = vld [vmem:[%s3025 + $0x58] sm:$0xff]
        %v3038 = vld [vmem:[%s3025 + $0x60] sm:$0xff]
        %v3039 = vld [vmem:[%s3025 + $0x68] sm:$0xff]
        %v3040 = vld [vmem:[%s3025 + $0x70] sm:$0xff]
        %v3041 = vld [vmem:[%s3025 + $0x78] sm:$0xff]
        %v3042 = vld [vmem:[%s3025 + $0x80] sm:$0xff]
        %v3043 = vld [vmem:[%s3025 + $0x88] sm:$0xff]
        %v3044 = vld [vmem:[%s3025 + $0x90] sm:$0xff]
        %v3045 = vld [vmem:[%s3025 + $0x98] sm:$0xff]
        %v3046 = vld [vmem:[%s3025 + $0xa0] sm:$0xff]
        %v3047 = vld [vmem:[%s3025 + $0xa8] sm:$0xff]
        %v3048 = vld [vmem:[%s3025 + $0xb0] sm:$0xff]
        %v3049 = vld [vmem:[%s3025 + $0xb8] sm:$0xff]
        %v3050 = vld [vmem:[%s3025 + $0xc0] sm:$0xff]
        %v3051 = vld [vmem:[%s3025 + $0xc8] sm:$0xff]
        %v3052 = vld [vmem:[%s3025 + $0xd0] sm:$0xff]
        %v3053 = vld [vmem:[%s3025 + $0xd8] sm:$0xff]
        %v3054 = vld [vmem:[%s3025 + $0xe0] sm:$0xff]
        %v3055 = vld [vmem:[%s3025 + $0xe8] sm:$0xff]
        %v3056 = vld [vmem:[%s3025 + $0xf0] sm:$0xff]
        %v3057 = vld [vmem:[%s3025 + $0xf8] sm:$0xff]
        %v3058 = vld [vmem:[%s3025 + $0x100] sm:$0xff]
        %v3059 = vld [vmem:[%s3025 + $0x108] sm:$0xff]
        %v3060 = vld [vmem:[%s3025 + $0x110] sm:$0xff]
        %v3061 = vld [vmem:[%s3025 + $0x118] sm:$0xff]
        %v3062 = vld [vmem:[%s3025 + $0x120] sm:$0xff]
        %v3063 = vld [vmem:[%s3025 + $0x128] sm:$0xff]
        %v3064 = vld [vmem:[%s3025 + $0x130] sm:$0xff]
        %v3065 = vld [vmem:[%s3025 + $0x138] sm:$0xff]
        %v3066 = vld [vmem:[%s3025 + $0x140] sm:$0xff]
        %v3067 = vld [vmem:[%s3025 + $0x148] sm:$0xff]
        %v3068 = vld [vmem:[%s3025 + $0x150] sm:$0xff]
        %v3069 = vld [vmem:[%s3025 + $0x158] sm:$0xff]
        %v3070 = vld [vmem:[%s3025 + $0x160] sm:$0xff]
        %v3071 = vld [vmem:[%s3025 + $0x168] sm:$0xff]
        %v3072 = vld [vmem:[%s3025 + $0x170] sm:$0xff]
        %v3073 = vld [vmem:[%s3025 + $0x178] sm:$0xff]
        %v3074 = vld [vmem:[%s3025 + $0x180] sm:$0xff]
        %v3075 = vld [vmem:[%s3025 + $0x188] sm:$0xff]
        %v3076 = vld [vmem:[%s3025 + $0x190] sm:$0xff]
        %v3077 = vld [vmem:[%s3025 + $0x198] sm:$0xff]
        %v3078 = vld [vmem:[%s3025 + $0x1a0] sm:$0xff]
        %v3079 = vld [vmem:[%s3025 + $0x1a8] sm:$0xff]
        %v3080 = vld [vmem:[%s3025 + $0x1b0] sm:$0xff]
        %v3081 = vld [vmem:[%s3025 + $0x1b8] sm:$0xff]
        %v3082 = vld [vmem:[%s3025 + $0x1c0] sm:$0xff]
        %v3083 = vld [vmem:[%s3025 + $0x1c8] sm:$0xff]
        %v3084 = vld [vmem:[%s3025 + $0x1d0] sm:$0xff]
        %v3085 = vld [vmem:[%s3025 + $0x1d8] sm:$0xff]
        %v3086 = vld [vmem:[%s3025 + $0x1e0] sm:$0xff]
        %v3087 = vld [vmem:[%s3025 + $0x1e8] sm:$0xff]
        %v3088 = vld [vmem:[%s3025 + $0x1f0] sm:$0xff]
        %v3089 = vld [vmem:[%s3025 + $0x1f8] sm:$0xff]
        %3090 = vmatprep.subr.mxu0 %v3087
        %3091 = vmatpush1.msra.mxu0 %v3086
        %3092 = vmatprep.subr.mxu0 %v3083
        %3093 = vmatpush1.msra.mxu0 %v3082
        %3094 = vmatprep.subr.mxu0 %v3079
        %3095 = vmatpush1.msra.mxu0 %v3078
        %3096 = vmatprep.subr.mxu0 %v3075
        %3097 = vmatpush1.msra.mxu0 %v3074
        %3098 = vmatprep.subr.mxu0 %v3071
        %3099 = vmatpush1.msra.mxu0 %v3070
        %3100 = vmatprep.subr.mxu0 %v3067
        %3101 = vmatpush1.msra.mxu0 %v3066
        %3102 = vmatprep.subr.mxu0 %v3063
        %3103 = vmatpush1.msra.mxu0 %v3062
        %3104 = vmatprep.subr.mxu0 %v3059
        %3105 = vmatpush1.msra.mxu0 %v3058
        %3106 = vmatprep.subr.mxu0 %v3055
        %3107 = vmatpush1.msra.mxu0 %v3054
        %3108 = vmatprep.subr.mxu0 %v3051
        %3109 = vmatpush1.msra.mxu0 %v3050
        %3110 = vmatprep.subr.mxu0 %v3047
        %3111 = vmatpush1.msra.mxu0 %v3046
        %3112 = vmatprep.subr.mxu0 %v3043
        %3113 = vmatpush1.msra.mxu0 %v3042
        %3114 = vmatprep.subr.mxu0 %v3039
        %3115 = vmatpush1.msra.mxu0 %v3038
        %3116 = vmatprep.subr.mxu0 %v3035
        %3117 = vmatpush1.msra.mxu0 %v3034
        %3118 = vmatprep.subr.mxu0 %v3031
        %3119 = vmatpush1.msra.mxu0 %v3030
        %3120 = vmatprep.subr.mxu0 %v3027
        %3121 = vmatpush1.msra.mxu0 %v3026
        %3122 = vmatprep.subr.mxu0 0.0
        %3123 = vmatpush2.msra.mxu0 0.0
        %3124 = vmatprep.subr.mxu0 0.0
        %3125 = vmatpush2.msra.mxu0 0.0
        %3126 = vmatprep.subr.mxu0 0.0
        %3127 = vmatpush2.msra.mxu0 0.0
        %3128 = vmatprep.subr.mxu0 0.0
        %3129 = vmatpush2.msra.mxu0 0.0
        %3130 = vmatprep.subr.mxu0 0.0
        %3131 = vmatpush2.msra.mxu0 0.0
        %3132 = vmatprep.subr.mxu0 0.0
        %3133 = vmatpush2.msra.mxu0 0.0
        %3134 = vmatprep.subr.mxu0 0.0
        %3135 = vmatpush2.msra.mxu0 0.0
        %3136 = vmatprep.subr.mxu0 0.0
        %3137 = vmatpush2.msra.mxu0 0.0
        %3138 = vmatprep.subr.mxu0 0.0
        %3139 = vmatpush2.msra.mxu0 0.0
        %3140 = vmatprep.subr.mxu0 0.0
        %3141 = vmatpush2.msra.mxu0 0.0
        %3142 = vmatprep.subr.mxu0 0.0
        %3143 = vmatpush2.msra.mxu0 0.0
        %3144 = vmatprep.subr.mxu0 0.0
        %3145 = vmatpush2.msra.mxu0 0.0
        %3146 = vmatprep.subr.mxu0 0.0
        %3147 = vmatpush2.msra.mxu0 0.0
        %3148 = vmatprep.subr.mxu0 0.0
        %3149 = vmatpush2.msra.mxu0 0.0
        %3150 = vmatprep.subr.mxu0 0.0
        %3151 = vmatpush2.msra.mxu0 0.0
        %3152 = vmatprep.subr.mxu0 0.0
        %3153 = vmatpush2.msra.mxu0 0.0
        %3154 = vmatprep.mubr.f32.mxu0 0.0
        %3155 = vmatmul.mubr.f32.gmra.mxu0 0.0
        %v3156 = vpop.f32.mrf.mxu0
        %v3157 = vadd.f32 0.0, %v3156
        %v3158 = vpop.f32.mrf.mxu0
        %v3159 = vadd.f32 0.0, %v3158
        %3160 = vdwg.mxu0
        %3161 = vmatprep.subr.mxu0 %v3089
        %3162 = vmatpush1.msra.mxu0 %v3088
        %3163 = vmatprep.subr.mxu0 %v3085
        %3164 = vmatpush1.msra.mxu0 %v3084
        %3165 = vmatprep.subr.mxu0 %v3081
        %3166 = vmatpush1.msra.mxu0 %v3080
        %3167 = vmatprep.subr.mxu0 %v3077
        %3168 = vmatpush1.msra.mxu0 %v3076
        %3169 = vmatprep.subr.mxu0 %v3073
        %3170 = vmatpush1.msra.mxu0 %v3072
        %3171 = vmatprep.subr.mxu0 %v3069
        %3172 = vmatpush1.msra.mxu0 %v3068
        %3173 = vmatprep.subr.mxu0 %v3065
        %3174 = vmatpush1.msra.mxu0 %v3064
        %3175 = vmatprep.subr.mxu0 %v3061
        %3176 = vmatpush1.msra.mxu0 %v3060
        %3177 = vmatprep.subr.mxu0 %v3057
        %3178 = vmatpush1.msra.mxu0 %v3056
        %3179 = vmatprep.subr.mxu0 %v3053
        %3180 = vmatpush1.msra.mxu0 %v3052
        %3181 = vmatprep.subr.mxu0 %v3049
        %3182 = vmatpush1.msra.mxu0 %v3048
        %3183 = vmatprep.subr.mxu0 %v3045
        %3184 = vmatpush1.msra.mxu0 %v3044
        %3185 = vmatprep.subr.mxu0 %v3041
        %3186 = vmatpush1.msra.mxu0 %v3040
        %3187 = vmatprep.subr.mxu0 %v3037
        %3188 = vmatpush1.msra.mxu0 %v3036
        %3189 = vmatprep.subr.mxu0 %v3033
        %3190 = vmatpush1.msra.mxu0 %v3032
        %3191 = vmatprep.subr.mxu0 %v3029
        %3192 = vmatpush1.msra.mxu0 %v3028
        %3193 = vmatprep.subr.mxu0 0.0
        %3194 = vmatpush2.msra.mxu0 0.0
        %3195 = vmatprep.subr.mxu0 0.0
        %3196 = vmatpush2.msra.mxu0 0.0
        %3197 = vmatprep.subr.mxu0 0.0
        %3198 = vmatpush2.msra.mxu0 0.0
        %3199 = vmatprep.subr.mxu0 0.0
        %3200 = vmatpush2.msra.mxu0 0.0
        %3201 = vmatprep.subr.mxu0 0.0
        %3202 = vmatpush2.msra.mxu0 0.0
        %3203 = vmatprep.subr.mxu0 0.0
        %3204 = vmatpush2.msra.mxu0 0.0
        %3205 = vmatprep.subr.mxu0 0.0
        %3206 = vmatpush2.msra.mxu0 0.0
        %3207 = vmatprep.subr.mxu0 0.0
        %3208 = vmatpush2.msra.mxu0 0.0
        %3209 = vmatprep.subr.mxu0 0.0
        %3210 = vmatpush2.msra.mxu0 0.0
        %3211 = vmatprep.subr.mxu0 0.0
        %3212 = vmatpush2.msra.mxu0 0.0
        %3213 = vmatprep.subr.mxu0 0.0
        %3214 = vmatpush2.msra.mxu0 0.0
        %3215 = vmatprep.subr.mxu0 0.0
        %3216 = vmatpush2.msra.mxu0 0.0
        %3217 = vmatprep.subr.mxu0 0.0
        %3218 = vmatpush2.msra.mxu0 0.0
        %3219 = vmatprep.subr.mxu0 0.0
        %3220 = vmatpush2.msra.mxu0 0.0
        %3221 = vmatprep.subr.mxu0 0.0
        %3222 = vmatpush2.msra.mxu0 0.0
        %3223 = vmatprep.subr.mxu0 0.0
        %3224 = vmatpush2.msra.mxu0 0.0
        %3225 = vmatprep.mubr.f32.mxu0 0.0
        %3226 = vmatmul.mubr.f32.gmra.mxu0 0.0
        %v3227 = vpop.f32.mrf.mxu0
        %v3228 = vadd.f32 0.0, %v3227
        %v3229 = vpop.f32.mrf.mxu0
        %v3230 = vadd.f32 0.0, %v3229
        %3231 = vdwg.mxu0
        %v3232 = vadd.f32 %v3021, %v3157
        %v3233 = vadd.f32 %v3022, %v3159
        %v3234 = vadd.f32 %v3023, %v3228
        %v3235 = vadd.f32 %v3024, %v3230
        %v3236 = vtanh.pop %v3232
        %v3237 = vtanh.pop %v3233
        %v3238 = vtanh.pop %v3234
        %v3239 = vtanh.pop %v3235
        %v3240 = vmul.f32 %v3236, 0.5
        %v3241 = vadd.f32 %v3240, 0.5
        %v3242 = vmul.f32 %v3237, 0.5
        %v3243 = vadd.f32 %v3242, 0.5
        %v3244 = vmul.f32 %v3239, 0.5
        %v3245 = vadd.f32 %v3244, 0.5
        %v3246 = vmul.f32 %v3243, 0.0
        %v3247 = vmul.f32 %v3241, %v3238
        %v3248 = vadd.f32 %v3246, %v3247
        %v3249 = vtanh.pop %v3248
        %v3250 = vmul.f32 %v3245, %v3249
        %v3251 = vmax.f32 %v3250, 0.0
        %3252 = vst [vmem:[#allocation2 + $0x78] sm:$0xff] %v3251
        %v3253 = vld [vmem:[#allocation4 + $0xc0] sm:$0xff]
        %v3254 = vld [vmem:[#allocation4 + $0xc8] sm:$0xff]
        %v3255 = vld [vmem:[#allocation4 + $0xd0] sm:$0xff]
        %v3256 = vld [vmem:[#allocation4 + $0xd8] sm:$0xff]
        %v3257 = vld [vmem:[%s3025] sm:$0xff]
        %v3258 = vld [vmem:[%s3025 + $0x8] sm:$0xff]
        %v3259 = vld [vmem:[%s3025 + $0x10] sm:$0xff]
        %v3260 = vld [vmem:[%s3025 + $0x18] sm:$0xff]
        %v3261 = vld [vmem:[%s3025 + $0x20] sm:$0xff]
        %v3262 = vld [vmem:[%s3025 + $0x28] sm:$0xff]
        %v3263 = vld [vmem:[%s3025 + $0x30] sm:$0xff]
        %v3264 = vld [vmem:[%s3025 + $0x38] sm:$0xff]
        %v3265 = vld [vmem:[%s3025 + $0x40] sm:$0xff]
        %v3266 = vld [vmem:[%s3025 + $0x48] sm:$0xff]
        %v3267 = vld [vmem:[%s3025 + $0x50] sm:$0xff]
        %v3268 = vld [vmem:[%s3025 + $0x58] sm:$0xff]
        %v3269 = vld [vmem:[%s3025 + $0x60] sm:$0xff]
        %v3270 = vld [vmem:[%s3025 + $0x68] sm:$0xff]
        %v3271 = vld [vmem:[%s3025 + $0x70] sm:$0xff]
        %v3272 = vld [vmem:[%s3025 + $0x78] sm:$0xff]
        %v3273 = vld [vmem:[%s3025 + $0x80] sm:$0xff]
        %v3274 = vld [vmem:[%s3025 + $0x88] sm:$0xff]
        %v3275 = vld [vmem:[%s3025 + $0x90] sm:$0xff]
        %v3276 = vld [vmem:[%s3025 + $0x98] sm:$0xff]
        %v3277 = vld [vmem:[%s3025 + $0xa0] sm:$0xff]
        %v3278 = vld [vmem:[%s3025 + $0xa8] sm:$0xff]
        %v3279 = vld [vmem:[%s3025 + $0xb0] sm:$0xff]
        %v3280 = vld [vmem:[%s3025 + $0xb8] sm:$0xff]
        %v3281 = vld [vmem:[%s3025 + $0xc0] sm:$0xff]
        %v3282 = vld [vmem:[%s3025 + $0xc8] sm:$0xff]
        %v3283 = vld [vmem:[%s3025 + $0xd0] sm:$0xff]
        %v3284 = vld [vmem:[%s3025 + $0xd8] sm:$0xff]
        %v3285 = vld [vmem:[%s3025 + $0xe0] sm:$0xff]
        %v3286 = vld [vmem:[%s3025 + $0xe8] sm:$0xff]
        %v3287 = vld [vmem:[%s3025 + $0xf0] sm:$0xff]
        %v3288 = vld [vmem:[%s3025 + $0xf8] sm:$0xff]
        %v3289 = vld [vmem:[%s3025 + $0x100] sm:$0xff]
        %v3290 = vld [vmem:[%s3025 + $0x108] sm:$0xff]
        %v3291 = vld [vmem:[%s3025 + $0x110] sm:$0xff]
        %v3292 = vld [vmem:[%s3025 + $0x118] sm:$0xff]
        %v3293 = vld [vmem:[%s3025 + $0x120] sm:$0xff]
        %v3294 = vld [vmem:[%s3025 + $0x128] sm:$0xff]
        %v3295 = vld [vmem:[%s3025 + $0x130] sm:$0xff]
        %v3296 = vld [vmem:[%s3025 + $0x138] sm:$0xff]
        %v3297 = vld [vmem:[%s3025 + $0x140] sm:$0xff]
        %v3298 = vld [vmem:[%s3025 + $0x148] sm:$0xff]
        %v3299 = vld [vmem:[%s3025 + $0x150] sm:$0xff]
        %v3300 = vld [vmem:[%s3025 + $0x158] sm:$0xff]
        %v3301 = vld [vmem:[%s3025 + $0x160] sm:$0xff]
        %v3302 = vld [vmem:[%s3025 + $0x168] sm:$0xff]
        %v3303 = vld [vmem:[%s3025 + $0x170] sm:$0xff]
        %v3304 = vld [vmem:[%s3025 + $0x178] sm:$0xff]
        %v3305 = vld [vmem:[%s3025 + $0x180] sm:$0xff]
        %v3306 = vld [vmem:[%s3025 + $0x188] sm:$0xff]
        %v3307 = vld [vmem:[%s3025 + $0x190] sm:$0xff]
        %v3308 = vld [vmem:[%s3025 + $0x198] sm:$0xff]
        %v3309 = vld [vmem:[%s3025 + $0x1a0] sm:$0xff]
        %v3310 = vld [vmem:[%s3025 + $0x1a8] sm:$0xff]
        %v3311 = vld [vmem:[%s3025 + $0x1b0] sm:$0xff]
        %v3312 = vld [vmem:[%s3025 + $0x1b8] sm:$0xff]
        %v3313 = vld [vmem:[%s3025 + $0x1c0] sm:$0xff]
        %v3314 = vld [vmem:[%s3025 + $0x1c8] sm:$0xff]
        %v3315 = vld [vmem:[%s3025 + $0x1d0] sm:$0xff]
        %v3316 = vld [vmem:[%s3025 + $0x1d8] sm:$0xff]
        %v3317 = vld [vmem:[%s3025 + $0x1e0] sm:$0xff]
        %v3318 = vld [vmem:[%s3025 + $0x1e8] sm:$0xff]
        %v3319 = vld [vmem:[%s3025 + $0x1f0] sm:$0xff]
        %v3320 = vld [vmem:[%s3025 + $0x1f8] sm:$0xff]
        %3321 = vmatprep.subr.mxu0 %v3318
        %3322 = vmatpush1.msra.mxu0 %v3317
        %3323 = vmatprep.subr.mxu0 %v3314
        %3324 = vmatpush1.msra.mxu0 %v3313
        %3325 = vmatprep.subr.mxu0 %v3310
        %3326 = vmatpush1.msra.mxu0 %v3309
        %3327 = vmatprep.subr.mxu0 %v3306
        %3328 = vmatpush1.msra.mxu0 %v3305
        %3329 = vmatprep.subr.mxu0 %v3302
        %3330 = vmatpush1.msra.mxu0 %v3301
        %3331 = vmatprep.subr.mxu0 %v3298
        %3332 = vmatpush1.msra.mxu0 %v3297
        %3333 = vmatprep.subr.mxu0 %v3294
        %3334 = vmatpush1.msra.mxu0 %v3293
        %3335 = vmatprep.subr.mxu0 %v3290
        %3336 = vmatpush1.msra.mxu0 %v3289
        %3337 = vmatprep.subr.mxu0 %v3286
        %3338 = vmatpush1.msra.mxu0 %v3285
        %3339 = vmatprep.subr.mxu0 %v3282
        %3340 = vmatpush1.msra.mxu0 %v3281
        %3341 = vmatprep.subr.mxu0 %v3278
        %3342 = vmatpush1.msra.mxu0 %v3277
        %3343 = vmatprep.subr.mxu0 %v3274
        %3344 = vmatpush1.msra.mxu0 %v3273
        %3345 = vmatprep.subr.mxu0 %v3270
        %3346 = vmatpush1.msra.mxu0 %v3269
        %3347 = vmatprep.subr.mxu0 %v3266
        %3348 = vmatpush1.msra.mxu0 %v3265
        %3349 = vmatprep.subr.mxu0 %v3262
        %3350 = vmatpush1.msra.mxu0 %v3261
        %3351 = vmatprep.subr.mxu0 %v3258
        %3352 = vmatpush1.msra.mxu0 %v3257
        %3353 = vmatprep.subr.mxu0 0.0
        %3354 = vmatpush2.msra.mxu0 0.0
        %3355 = vmatprep.subr.mxu0 0.0
        %3356 = vmatpush2.msra.mxu0 0.0
        %3357 = vmatprep.subr.mxu0 0.0
        %3358 = vmatpush2.msra.mxu0 0.0
        %3359 = vmatprep.subr.mxu0 0.0
        %3360 = vmatpush2.msra.mxu0 0.0
        %3361 = vmatprep.subr.mxu0 0.0
        %3362 = vmatpush2.msra.mxu0 0.0
        %3363 = vmatprep.subr.mxu0 0.0
        %3364 = vmatpush2.msra.mxu0 0.0
        %3365 = vmatprep.subr.mxu0 0.0
        %3366 = vmatpush2.msra.mxu0 0.0
        %3367 = vmatprep.subr.mxu0 0.0
        %3368 = vmatpush2.msra.mxu0 0.0
        %3369 = vmatprep.subr.mxu0 0.0
        %3370 = vmatpush2.msra.mxu0 0.0
        %3371 = vmatprep.subr.mxu0 0.0
        %3372 = vmatpush2.msra.mxu0 0.0
        %3373 = vmatprep.subr.mxu0 0.0
        %3374 = vmatpush2.msra.mxu0 0.0
        %3375 = vmatprep.subr.mxu0 0.0
        %3376 = vmatpush2.msra.mxu0 0.0
        %3377 = vmatprep.subr.mxu0 0.0
        %3378 = vmatpush2.msra.mxu0 0.0
        %3379 = vmatprep.subr.mxu0 0.0
        %3380 = vmatpush2.msra.mxu0 0.0
        %3381 = vmatprep.subr.mxu0 0.0
        %3382 = vmatpush2.msra.mxu0 0.0
        %3383 = vmatprep.subr.mxu0 0.0
        %3384 = vmatpush2.msra.mxu0 0.0
        %3385 = vmatprep.mubr.f32.mxu0 0.0
        %3386 = vmatmul.mubr.f32.gmra.mxu0 %v3250
        %v3387 = vpop.f32.mrf.mxu0
        %v3388 = vadd.f32 0.0, %v3387
        %v3389 = vpop.f32.mrf.mxu0
        %v3390 = vadd.f32 0.0, %v3389
        %3391 = vdwg.mxu0
        %3392 = vmatprep.subr.mxu0 %v3320
        %3393 = vmatpush1.msra.mxu0 %v3319
        %3394 = vmatprep.subr.mxu0 %v3316
        %3395 = vmatpush1.msra.mxu0 %v3315
        %3396 = vmatprep.subr.mxu0 %v3312
        %3397 = vmatpush1.msra.mxu0 %v3311
        %3398 = vmatprep.subr.mxu0 %v3308
        %3399 = vmatpush1.msra.mxu0 %v3307
        %3400 = vmatprep.subr.mxu0 %v3304
        %3401 = vmatpush1.msra.mxu0 %v3303
        %3402 = vmatprep.subr.mxu0 %v3300
        %3403 = vmatpush1.msra.mxu0 %v3299
        %3404 = vmatprep.subr.mxu0 %v3296
        %3405 = vmatpush1.msra.mxu0 %v3295
        %3406 = vmatprep.subr.mxu0 %v3292
        %3407 = vmatpush1.msra.mxu0 %v3291
        %3408 = vmatprep.subr.mxu0 %v3288
        %3409 = vmatpush1.msra.mxu0 %v3287
        %3410 = vmatprep.subr.mxu0 %v3284
        %3411 = vmatpush1.msra.mxu0 %v3283
        %3412 = vmatprep.subr.mxu0 %v3280
        %3413 = vmatpush1.msra.mxu0 %v3279
        %3414 = vmatprep.subr.mxu0 %v3276
        %3415 = vmatpush1.msra.mxu0 %v3275
        %3416 = vmatprep.subr.mxu0 %v3272
        %3417 = vmatpush1.msra.mxu0 %v3271
        %3418 = vmatprep.subr.mxu0 %v3268
        %3419 = vmatpush1.msra.mxu0 %v3267
        %3420 = vmatprep.subr.mxu0 %v3264
        %3421 = vmatpush1.msra.mxu0 %v3263
        %3422 = vmatprep.subr.mxu0 %v3260
        %3423 = vmatpush1.msra.mxu0 %v3259
        %3424 = vmatprep.subr.mxu0 0.0
        %3425 = vmatpush2.msra.mxu0 0.0
        %3426 = vmatprep.subr.mxu0 0.0
        %3427 = vmatpush2.msra.mxu0 0.0
        %3428 = vmatprep.subr.mxu0 0.0
        %3429 = vmatpush2.msra.mxu0 0.0
        %3430 = vmatprep.subr.mxu0 0.0
        %3431 = vmatpush2.msra.mxu0 0.0
        %3432 = vmatprep.subr.mxu0 0.0
        %3433 = vmatpush2.msra.mxu0 0.0
        %3434 = vmatprep.subr.mxu0 0.0
        %3435 = vmatpush2.msra.mxu0 0.0
        %3436 = vmatprep.subr.mxu0 0.0
        %3437 = vmatpush2.msra.mxu0 0.0
        %3438 = vmatprep.subr.mxu0 0.0
        %3439 = vmatpush2.msra.mxu0 0.0
        %3440 = vmatprep.subr.mxu0 0.0
        %3441 = vmatpush2.msra.mxu0 0.0
        %3442 = vmatprep.subr.mxu0 0.0
        %3443 = vmatpush2.msra.mxu0 0.0
        %3444 = vmatprep.subr.mxu0 0.0
        %3445 = vmatpush2.msra.mxu0 0.0
        %3446 = vmatprep.subr.mxu0 0.0
        %3447 = vmatpush2.msra.mxu0 0.0
        %3448 = vmatprep.subr.mxu0 0.0
        %3449 = vmatpush2.msra.mxu0 0.0
        %3450 = vmatprep.subr.mxu0 0.0
        %3451 = vmatpush2.msra.mxu0 0.0
        %3452 = vmatprep.subr.mxu0 0.0
        %3453 = vmatpush2.msra.mxu0 0.0
        %3454 = vmatprep.subr.mxu0 0.0
        %3455 = vmatpush2.msra.mxu0 0.0
        %3456 = vmatprep.mubr.f32.mxu0 0.0
        %3457 = vmatmul.mubr.f32.gmra.mxu0 %v3250
        %v3458 = vpop.f32.mrf.mxu0
        %v3459 = vadd.f32 0.0, %v3458
        %v3460 = vpop.f32.mrf.mxu0
        %v3461 = vadd.f32 0.0, %v3460
        %3462 = vdwg.mxu0
        %v3463 = vadd.f32 %v3253, %v3388
        %v3464 = vadd.f32 %v3254, %v3390
        %v3465 = vadd.f32 %v3255, %v3459
        %v3466 = vadd.f32 %v3256, %v3461
        %v3467 = vtanh.pop %v3463
        %v3468 = vtanh.pop %v3464
        %v3469 = vtanh.pop %v3465
        %v3470 = vtanh.pop %v3466
        %v3471 = vmul.f32 %v3467, 0.5
        %v3472 = vadd.f32 %v3471, 0.5
        %v3473 = vmul.f32 %v3468, 0.5
        %v3474 = vadd.f32 %v3473, 0.5
        %v3475 = vmul.f32 %v3470, 0.5
        %v3476 = vadd.f32 %v3475, 0.5
        %v3477 = vmul.f32 %v3474, %v3248
        %v3478 = vmul.f32 %v3472, %v3469
        %v3479 = vadd.f32 %v3477, %v3478
        %v3480 = vtanh.pop %v3479
        %v3481 = vmul.f32 %v3476, %v3480
        %v3482 = vmax.f32 %v3481, 0.0
        %3483 = vst [vmem:[#allocation2 + $0x68] sm:$0xff] %v3482
        %v3484 = vld [vmem:[#allocation4 + $0xa0] sm:$0xff]
        %v3485 = vld [vmem:[#allocation4 + $0xa8] sm:$0xff]
        %v3486 = vld [vmem:[#allocation4 + $0xb0] sm:$0xff]
        %v3487 = vld [vmem:[#allocation4 + $0xb8] sm:$0xff]
        %v3488 = vld [vmem:[%s3025] sm:$0xff]
        %v3489 = vld [vmem:[%s3025 + $0x8] sm:$0xff]
        %v3490 = vld [vmem:[%s3025 + $0x10] sm:$0xff]
        %v3491 = vld [vmem:[%s3025 + $0x18] sm:$0xff]
        %v3492 = vld [vmem:[%s3025 + $0x20] sm:$0xff]
        %v3493 = vld [vmem:[%s3025 + $0x28] sm:$0xff]
        %v3494 = vld [vmem:[%s3025 + $0x30] sm:$0xff]
        %v3495 = vld [vmem:[%s3025 + $0x38] sm:$0xff]
        %v3496 = vld [vmem:[%s3025 + $0x40] sm:$0xff]
        %v3497 = vld [vmem:[%s3025 + $0x48] sm:$0xff]
        %v3498 = vld [vmem:[%s3025 + $0x50] sm:$0xff]
        %v3499 = vld [vmem:[%s3025 + $0x58] sm:$0xff]
        %v3500 = vld [vmem:[%s3025 + $0x60] sm:$0xff]
        %v3501 = vld [vmem:[%s3025 + $0x68] sm:$0xff]
        %v3502 = vld [vmem:[%s3025 + $0x70] sm:$0xff]
        %v3503 = vld [vmem:[%s3025 + $0x78] sm:$0xff]
        %v3504 = vld [vmem:[%s3025 + $0x80] sm:$0xff]
        %v3505 = vld [vmem:[%s3025 + $0x88] sm:$0xff]
        %v3506 = vld [vmem:[%s3025 + $0x90] sm:$0xff]
        %v3507 = vld [vmem:[%s3025 + $0x98] sm:$0xff]
        %v3508 = vld [vmem:[%s3025 + $0xa0] sm:$0xff]
        %v3509 = vld [vmem:[%s3025 + $0xa8] sm:$0xff]
        %v3510 = vld [vmem:[%s3025 + $0xb0] sm:$0xff]
        %v3511 = vld [vmem:[%s3025 + $0xb8] sm:$0xff]
        %v3512 = vld [vmem:[%s3025 + $0xc0] sm:$0xff]
        %v3513 = vld [vmem:[%s3025 + $0xc8] sm:$0xff]
        %v3514 = vld [vmem:[%s3025 + $0xd0] sm:$0xff]
        %v3515 = vld [vmem:[%s3025 + $0xd8] sm:$0xff]
        %v3516 = vld [vmem:[%s3025 + $0xe0] sm:$0xff]
        %v3517 = vld [vmem:[%s3025 + $0xe8] sm:$0xff]
        %v3518 = vld [vmem:[%s3025 + $0xf0] sm:$0xff]
        %v3519 = vld [vmem:[%s3025 + $0xf8] sm:$0xff]
        %v3520 = vld [vmem:[%s3025 + $0x100] sm:$0xff]
        %v3521 = vld [vmem:[%s3025 + $0x108] sm:$0xff]
        %v3522 = vld [vmem:[%s3025 + $0x110] sm:$0xff]
        %v3523 = vld [vmem:[%s3025 + $0x118] sm:$0xff]
        %v3524 = vld [vmem:[%s3025 + $0x120] sm:$0xff]
        %v3525 = vld [vmem:[%s3025 + $0x128] sm:$0xff]
        %v3526 = vld [vmem:[%s3025 + $0x130] sm:$0xff]
        %v3527 = vld [vmem:[%s3025 + $0x138] sm:$0xff]
        %v3528 = vld [vmem:[%s3025 + $0x140] sm:$0xff]
        %v3529 = vld [vmem:[%s3025 + $0x148] sm:$0xff]
        %v3530 = vld [vmem:[%s3025 + $0x150] sm:$0xff]
        %v3531 = vld [vmem:[%s3025 + $0x158] sm:$0xff]
        %v3532 = vld [vmem:[%s3025 + $0x160] sm:$0xff]
        %v3533 = vld [vmem:[%s3025 + $0x168] sm:$0xff]
        %v3534 = vld [vmem:[%s3025 + $0x170] sm:$0xff]
        %v3535 = vld [vmem:[%s3025 + $0x178] sm:$0xff]
        %v3536 = vld [vmem:[%s3025 + $0x180] sm:$0xff]
        %v3537 = vld [vmem:[%s3025 + $0x188] sm:$0xff]
        %v3538 = vld [vmem:[%s3025 + $0x190] sm:$0xff]
        %v3539 = vld [vmem:[%s3025 + $0x198] sm:$0xff]
        %v3540 = vld [vmem:[%s3025 + $0x1a0] sm:$0xff]
        %v3541 = vld [vmem:[%s3025 + $0x1a8] sm:$0xff]
        %v3542 = vld [vmem:[%s3025 + $0x1b0] sm:$0xff]
        %v3543 = vld [vmem:[%s3025 + $0x1b8] sm:$0xff]
        %v3544 = vld [vmem:[%s3025 + $0x1c0] sm:$0xff]
        %v3545 = vld [vmem:[%s3025 + $0x1c8] sm:$0xff]
        %v3546 = vld [vmem:[%s3025 + $0x1d0] sm:$0xff]
        %v3547 = vld [vmem:[%s3025 + $0x1d8] sm:$0xff]
        %v3548 = vld [vmem:[%s3025 + $0x1e0] sm:$0xff]
        %v3549 = vld [vmem:[%s3025 + $0x1e8] sm:$0xff]
        %v3550 = vld [vmem:[%s3025 + $0x1f0] sm:$0xff]
        %v3551 = vld [vmem:[%s3025 + $0x1f8] sm:$0xff]
        %3552 = vmatprep.subr.mxu0 %v3549
        %3553 = vmatpush1.msra.mxu0 %v3548
        %3554 = vmatprep.subr.mxu0 %v3545
        %3555 = vmatpush1.msra.mxu0 %v3544
        %3556 = vmatprep.subr.mxu0 %v3541
        %3557 = vmatpush1.msra.mxu0 %v3540
        %3558 = vmatprep.subr.mxu0 %v3537
        %3559 = vmatpush1.msra.mxu0 %v3536
        %3560 = vmatprep.subr.mxu0 %v3533
        %3561 = vmatpush1.msra.mxu0 %v3532
        %3562 = vmatprep.subr.mxu0 %v3529
        %3563 = vmatpush1.msra.mxu0 %v3528
        %3564 = vmatprep.subr.mxu0 %v3525
        %3565 = vmatpush1.msra.mxu0 %v3524
        %3566 = vmatprep.subr.mxu0 %v3521
        %3567 = vmatpush1.msra.mxu0 %v3520
        %3568 = vmatprep.subr.mxu0 %v3517
        %3569 = vmatpush1.msra.mxu0 %v3516
        %3570 = vmatprep.subr.mxu0 %v3513
        %3571 = vmatpush1.msra.mxu0 %v3512
        %3572 = vmatprep.subr.mxu0 %v3509
        %3573 = vmatpush1.msra.mxu0 %v3508
        %3574 = vmatprep.subr.mxu0 %v3505
        %3575 = vmatpush1.msra.mxu0 %v3504
        %3576 = vmatprep.subr.mxu0 %v3501
        %3577 = vmatpush1.msra.mxu0 %v3500
        %3578 = vmatprep.subr.mxu0 %v3497
        %3579 = vmatpush1.msra.mxu0 %v3496
        %3580 = vmatprep.subr.mxu0 %v3493
        %3581 = vmatpush1.msra.mxu0 %v3492
        %3582 = vmatprep.subr.mxu0 %v3489
        %3583 = vmatpush1.msra.mxu0 %v3488
        %3584 = vmatprep.subr.mxu0 0.0
        %3585 = vmatpush2.msra.mxu0 0.0
        %3586 = vmatprep.subr.mxu0 0.0
        %3587 = vmatpush2.msra.mxu0 0.0
        %3588 = vmatprep.subr.mxu0 0.0
        %3589 = vmatpush2.msra.mxu0 0.0
        %3590 = vmatprep.subr.mxu0 0.0
        %3591 = vmatpush2.msra.mxu0 0.0
        %3592 = vmatprep.subr.mxu0 0.0
        %3593 = vmatpush2.msra.mxu0 0.0
        %3594 = vmatprep.subr.mxu0 0.0
        %3595 = vmatpush2.msra.mxu0 0.0
        %3596 = vmatprep.subr.mxu0 0.0
        %3597 = vmatpush2.msra.mxu0 0.0
        %3598 = vmatprep.subr.mxu0 0.0
        %3599 = vmatpush2.msra.mxu0 0.0
        %3600 = vmatprep.subr.mxu0 0.0
        %3601 = vmatpush2.msra.mxu0 0.0
        %3602 = vmatprep.subr.mxu0 0.0
        %3603 = vmatpush2.msra.mxu0 0.0
        %3604 = vmatprep.subr.mxu0 0.0
        %3605 = vmatpush2.msra.mxu0 0.0
        %3606 = vmatprep.subr.mxu0 0.0
        %3607 = vmatpush2.msra.mxu0 0.0
        %3608 = vmatprep.subr.mxu0 0.0
        %3609 = vmatpush2.msra.mxu0 0.0
        %3610 = vmatprep.subr.mxu0 0.0
        %3611 = vmatpush2.msra.mxu0 0.0
        %3612 = vmatprep.subr.mxu0 0.0
        %3613 = vmatpush2.msra.mxu0 0.0
        %3614 = vmatprep.subr.mxu0 0.0
        %3615 = vmatpush2.msra.mxu0 0.0
        %3616 = vmatprep.mubr.f32.mxu0 0.0
        %3617 = vmatmul.mubr.f32.gmra.mxu0 %v3481
        %v3618 = vpop.f32.mrf.mxu0
        %v3619 = vadd.f32 0.0, %v3618
        %v3620 = vpop.f32.mrf.mxu0
        %v3621 = vadd.f32 0.0, %v3620
        %3622 = vdwg.mxu0
        %3623 = vmatprep.subr.mxu0 %v3551
        %3624 = vmatpush1.msra.mxu0 %v3550
        %3625 = vmatprep.subr.mxu0 %v3547
        %3626 = vmatpush1.msra.mxu0 %v3546
        %3627 = vmatprep.subr.mxu0 %v3543
        %3628 = vmatpush1.msra.mxu0 %v3542
        %3629 = vmatprep.subr.mxu0 %v3539
        %3630 = vmatpush1.msra.mxu0 %v3538
        %3631 = vmatprep.subr.mxu0 %v3535
        %3632 = vmatpush1.msra.mxu0 %v3534
        %3633 = vmatprep.subr.mxu0 %v3531
        %3634 = vmatpush1.msra.mxu0 %v3530
        %3635 = vmatprep.subr.mxu0 %v3527
        %3636 = vmatpush1.msra.mxu0 %v3526
        %3637 = vmatprep.subr.mxu0 %v3523
        %3638 = vmatpush1.msra.mxu0 %v3522
        %3639 = vmatprep.subr.mxu0 %v3519
        %3640 = vmatpush1.msra.mxu0 %v3518
        %3641 = vmatprep.subr.mxu0 %v3515
        %3642 = vmatpush1.msra.mxu0 %v3514
        %3643 = vmatprep.subr.mxu0 %v3511
        %3644 = vmatpush1.msra.mxu0 %v3510
        %3645 = vmatprep.subr.mxu0 %v3507
        %3646 = vmatpush1.msra.mxu0 %v3506
        %3647 = vmatprep.subr.mxu0 %v3503
        %3648 = vmatpush1.msra.mxu0 %v3502
        %3649 = vmatprep.subr.mxu0 %v3499
        %3650 = vmatpush1.msra.mxu0 %v3498
        %3651 = vmatprep.subr.mxu0 %v3495
        %3652 = vmatpush1.msra.mxu0 %v3494
        %3653 = vmatprep.subr.mxu0 %v3491
        %3654 = vmatpush1.msra.mxu0 %v3490
        %3655 = vmatprep.subr.mxu0 0.0
        %3656 = vmatpush2.msra.mxu0 0.0
        %3657 = vmatprep.subr.mxu0 0.0
        %3658 = vmatpush2.msra.mxu0 0.0
        %3659 = vmatprep.subr.mxu0 0.0
        %3660 = vmatpush2.msra.mxu0 0.0
        %3661 = vmatprep.subr.mxu0 0.0
        %3662 = vmatpush2.msra.mxu0 0.0
        %3663 = vmatprep.subr.mxu0 0.0
        %3664 = vmatpush2.msra.mxu0 0.0
        %3665 = vmatprep.subr.mxu0 0.0
        %3666 = vmatpush2.msra.mxu0 0.0
        %3667 = vmatprep.subr.mxu0 0.0
        %3668 = vmatpush2.msra.mxu0 0.0
        %3669 = vmatprep.subr.mxu0 0.0
        %3670 = vmatpush2.msra.mxu0 0.0
        %3671 = vmatprep.subr.mxu0 0.0
        %3672 = vmatpush2.msra.mxu0 0.0
        %3673 = vmatprep.subr.mxu0 0.0
        %3674 = vmatpush2.msra.mxu0 0.0
        %3675 = vmatprep.subr.mxu0 0.0
        %3676 = vmatpush2.msra.mxu0 0.0
        %3677 = vmatprep.subr.mxu0 0.0
        %3678 = vmatpush2.msra.mxu0 0.0
        %3679 = vmatprep.subr.mxu0 0.0
        %3680 = vmatpush2.msra.mxu0 0.0
        %3681 = vmatprep.subr.mxu0 0.0
        %3682 = vmatpush2.msra.mxu0 0.0
        %3683 = vmatprep.subr.mxu0 0.0
        %3684 = vmatpush2.msra.mxu0 0.0
        %3685 = vmatprep.subr.mxu0 0.0
        %3686 = vmatpush2.msra.mxu0 0.0
        %3687 = vmatprep.mubr.f32.mxu0 0.0
        %3688 = vmatmul.mubr.f32.gmra.mxu0 %v3481
        %v3689 = vpop.f32.mrf.mxu0
        %v3690 = vadd.f32 0.0, %v3689
        %v3691 = vpop.f32.mrf.mxu0
        %v3692 = vadd.f32 0.0, %v3691
        %3693 = vdwg.mxu0
        %v3694 = vadd.f32 %v3484, %v3619
        %v3695 = vadd.f32 %v3485, %v3621
        %v3696 = vadd.f32 %v3486, %v3690
        %v3697 = vadd.f32 %v3487, %v3692
        %v3698 = vtanh.pop %v3694
        %v3699 = vtanh.pop %v3695
        %v3700 = vtanh.pop %v3696
        %v3701 = vtanh.pop %v3697
        %v3702 = vmul.f32 %v3698, 0.5
        %v3703 = vadd.f32 %v3702, 0.5
        %v3704 = vmul.f32 %v3699, 0.5
        %v3705 = vadd.f32 %v3704, 0.5
        %v3706 = vmul.f32 %v3701, 0.5
        %v3707 = vadd.f32 %v3706, 0.5
        %v3708 = vmul.f32 %v3705, %v3479
        %v3709 = vmul.f32 %v3703, %v3700
        %v3710 = vadd.f32 %v3708, %v3709
        %v3711 = vtanh.pop %v3710
        %v3712 = vmul.f32 %v3707, %v3711
        %v3713 = vmax.f32 %v3712, 0.0
        %3714 = vst [vmem:[#allocation2 + $0x58] sm:$0xff] %v3713
        %v3715 = vld [vmem:[#allocation4 + $0x80] sm:$0xff]
        %v3716 = vld [vmem:[#allocation4 + $0x88] sm:$0xff]
        %v3717 = vld [vmem:[#allocation4 + $0x90] sm:$0xff]
        %v3718 = vld [vmem:[#allocation4 + $0x98] sm:$0xff]
        %v3719 = vld [vmem:[%s3025] sm:$0xff]
        %v3720 = vld [vmem:[%s3025 + $0x8] sm:$0xff]
        %v3721 = vld [vmem:[%s3025 + $0x10] sm:$0xff]
        %v3722 = vld [vmem:[%s3025 + $0x18] sm:$0xff]
        %v3723 = vld [vmem:[%s3025 + $0x20] sm:$0xff]
        %v3724 = vld [vmem:[%s3025 + $0x28] sm:$0xff]
        %v3725 = vld [vmem:[%s3025 + $0x30] sm:$0xff]
        %v3726 = vld [vmem:[%s3025 + $0x38] sm:$0xff]
        %v3727 = vld [vmem:[%s3025 + $0x40] sm:$0xff]
        %v3728 = vld [vmem:[%s3025 + $0x48] sm:$0xff]
        %v3729 = vld [vmem:[%s3025 + $0x50] sm:$0xff]
        %v3730 = vld [vmem:[%s3025 + $0x58] sm:$0xff]
        %v3731 = vld [vmem:[%s3025 + $0x60] sm:$0xff]
        %v3732 = vld [vmem:[%s3025 + $0x68] sm:$0xff]
        %v3733 = vld [vmem:[%s3025 + $0x70] sm:$0xff]
        %v3734 = vld [vmem:[%s3025 + $0x78] sm:$0xff]
        %v3735 = vld [vmem:[%s3025 + $0x80] sm:$0xff]
        %v3736 = vld [vmem:[%s3025 + $0x88] sm:$0xff]
        %v3737 = vld [vmem:[%s3025 + $0x90] sm:$0xff]
        %v3738 = vld [vmem:[%s3025 + $0x98] sm:$0xff]
        %v3739 = vld [vmem:[%s3025 + $0xa0] sm:$0xff]
        %v3740 = vld [vmem:[%s3025 + $0xa8] sm:$0xff]
        %v3741 = vld [vmem:[%s3025 + $0xb0] sm:$0xff]
        %v3742 = vld [vmem:[%s3025 + $0xb8] sm:$0xff]
        %v3743 = vld [vmem:[%s3025 + $0xc0] sm:$0xff]
        %v3744 = vld [vmem:[%s3025 + $0xc8] sm:$0xff]
        %v3745 = vld [vmem:[%s3025 + $0xd0] sm:$0xff]
        %v3746 = vld [vmem:[%s3025 + $0xd8] sm:$0xff]
        %v3747 = vld [vmem:[%s3025 + $0xe0] sm:$0xff]
        %v3748 = vld [vmem:[%s3025 + $0xe8] sm:$0xff]
        %v3749 = vld [vmem:[%s3025 + $0xf0] sm:$0xff]
        %v3750 = vld [vmem:[%s3025 + $0xf8] sm:$0xff]
        %v3751 = vld [vmem:[%s3025 + $0x100] sm:$0xff]
        %v3752 = vld [vmem:[%s3025 + $0x108] sm:$0xff]
        %v3753 = vld [vmem:[%s3025 + $0x110] sm:$0xff]
        %v3754 = vld [vmem:[%s3025 + $0x118] sm:$0xff]
        %v3755 = vld [vmem:[%s3025 + $0x120] sm:$0xff]
        %v3756 = vld [vmem:[%s3025 + $0x128] sm:$0xff]
        %v3757 = vld [vmem:[%s3025 + $0x130] sm:$0xff]
        %v3758 = vld [vmem:[%s3025 + $0x138] sm:$0xff]
        %v3759 = vld [vmem:[%s3025 + $0x140] sm:$0xff]
        %v3760 = vld [vmem:[%s3025 + $0x148] sm:$0xff]
        %v3761 = vld [vmem:[%s3025 + $0x150] sm:$0xff]
        %v3762 = vld [vmem:[%s3025 + $0x158] sm:$0xff]
        %v3763 = vld [vmem:[%s3025 + $0x160] sm:$0xff]
        %v3764 = vld [vmem:[%s3025 + $0x168] sm:$0xff]
        %v3765 = vld [vmem:[%s3025 + $0x170] sm:$0xff]
        %v3766 = vld [vmem:[%s3025 + $0x178] sm:$0xff]
        %v3767 = vld [vmem:[%s3025 + $0x180] sm:$0xff]
        %v3768 = vld [vmem:[%s3025 + $0x188] sm:$0xff]
        %v3769 = vld [vmem:[%s3025 + $0x190] sm:$0xff]
        %v3770 = vld [vmem:[%s3025 + $0x198] sm:$0xff]
        %v3771 = vld [vmem:[%s3025 + $0x1a0] sm:$0xff]
        %v3772 = vld [vmem:[%s3025 + $0x1a8] sm:$0xff]
        %v3773 = vld [vmem:[%s3025 + $0x1b0] sm:$0xff]
        %v3774 = vld [vmem:[%s3025 + $0x1b8] sm:$0xff]
        %v3775 = vld [vmem:[%s3025 + $0x1c0] sm:$0xff]
        %v3776 = vld [vmem:[%s3025 + $0x1c8] sm:$0xff]
        %v3777 = vld [vmem:[%s3025 + $0x1d0] sm:$0xff]
        %v3778 = vld [vmem:[%s3025 + $0x1d8] sm:$0xff]
        %v3779 = vld [vmem:[%s3025 + $0x1e0] sm:$0xff]
        %v3780 = vld [vmem:[%s3025 + $0x1e8] sm:$0xff]
        %v3781 = vld [vmem:[%s3025 + $0x1f0] sm:$0xff]
        %v3782 = vld [vmem:[%s3025 + $0x1f8] sm:$0xff]
        %3783 = vmatprep.subr.mxu0 %v3780
        %3784 = vmatpush1.msra.mxu0 %v3779
        %3785 = vmatprep.subr.mxu0 %v3776
        %3786 = vmatpush1.msra.mxu0 %v3775
        %3787 = vmatprep.subr.mxu0 %v3772
        %3788 = vmatpush1.msra.mxu0 %v3771
        %3789 = vmatprep.subr.mxu0 %v3768
        %3790 = vmatpush1.msra.mxu0 %v3767
        %3791 = vmatprep.subr.mxu0 %v3764
        %3792 = vmatpush1.msra.mxu0 %v3763
        %3793 = vmatprep.subr.mxu0 %v3760
        %3794 = vmatpush1.msra.mxu0 %v3759
        %3795 = vmatprep.subr.mxu0 %v3756
        %3796 = vmatpush1.msra.mxu0 %v3755
        %3797 = vmatprep.subr.mxu0 %v3752
        %3798 = vmatpush1.msra.mxu0 %v3751
        %3799 = vmatprep.subr.mxu0 %v3748
        %3800 = vmatpush1.msra.mxu0 %v3747
        %3801 = vmatprep.subr.mxu0 %v3744
        %3802 = vmatpush1.msra.mxu0 %v3743
        %3803 = vmatprep.subr.mxu0 %v3740
        %3804 = vmatpush1.msra.mxu0 %v3739
        %3805 = vmatprep.subr.mxu0 %v3736
        %3806 = vmatpush1.msra.mxu0 %v3735
        %3807 = vmatprep.subr.mxu0 %v3732
        %3808 = vmatpush1.msra.mxu0 %v3731
        %3809 = vmatprep.subr.mxu0 %v3728
        %3810 = vmatpush1.msra.mxu0 %v3727
        %3811 = vmatprep.subr.mxu0 %v3724
        %3812 = vmatpush1.msra.mxu0 %v3723
        %3813 = vmatprep.subr.mxu0 %v3720
        %3814 = vmatpush1.msra.mxu0 %v3719
        %3815 = vmatprep.subr.mxu0 0.0
        %3816 = vmatpush2.msra.mxu0 0.0
        %3817 = vmatprep.subr.mxu0 0.0
        %3818 = vmatpush2.msra.mxu0 0.0
        %3819 = vmatprep.subr.mxu0 0.0
        %3820 = vmatpush2.msra.mxu0 0.0
        %3821 = vmatprep.subr.mxu0 0.0
        %3822 = vmatpush2.msra.mxu0 0.0
        %3823 = vmatprep.subr.mxu0 0.0
        %3824 = vmatpush2.msra.mxu0 0.0
        %3825 = vmatprep.subr.mxu0 0.0
        %3826 = vmatpush2.msra.mxu0 0.0
        %3827 = vmatprep.subr.mxu0 0.0
        %3828 = vmatpush2.msra.mxu0 0.0
        %3829 = vmatprep.subr.mxu0 0.0
        %3830 = vmatpush2.msra.mxu0 0.0
        %3831 = vmatprep.subr.mxu0 0.0
        %3832 = vmatpush2.msra.mxu0 0.0
        %3833 = vmatprep.subr.mxu0 0.0
        %3834 = vmatpush2.msra.mxu0 0.0
        %3835 = vmatprep.subr.mxu0 0.0
        %3836 = vmatpush2.msra.mxu0 0.0
        %3837 = vmatprep.subr.mxu0 0.0
        %3838 = vmatpush2.msra.mxu0 0.0
        %3839 = vmatprep.subr.mxu0 0.0
        %3840 = vmatpush2.msra.mxu0 0.0
        %3841 = vmatprep.subr.mxu0 0.0
        %3842 = vmatpush2.msra.mxu0 0.0
        %3843 = vmatprep.subr.mxu0 0.0
        %3844 = vmatpush2.msra.mxu0 0.0
        %3845 = vmatprep.subr.mxu0 0.0
        %3846 = vmatpush2.msra.mxu0 0.0
        %3847 = vmatprep.mubr.f32.mxu0 0.0
        %3848 = vmatmul.mubr.f32.gmra.mxu0 %v3712
        %v3849 = vpop.f32.mrf.mxu0
        %v3850 = vadd.f32 0.0, %v3849
        %v3851 = vpop.f32.mrf.mxu0
        %v3852 = vadd.f32 0.0, %v3851
        %3853 = vdwg.mxu0
        %3854 = vmatprep.subr.mxu0 %v3782
        %3855 = vmatpush1.msra.mxu0 %v3781
        %3856 = vmatprep.subr.mxu0 %v3778
        %3857 = vmatpush1.msra.mxu0 %v3777
        %3858 = vmatprep.subr.mxu0 %v3774
        %3859 = vmatpush1.msra.mxu0 %v3773
        %3860 = vmatprep.subr.mxu0 %v3770
        %3861 = vmatpush1.msra.mxu0 %v3769
        %3862 = vmatprep.subr.mxu0 %v3766
        %3863 = vmatpush1.msra.mxu0 %v3765
        %3864 = vmatprep.subr.mxu0 %v3762
        %3865 = vmatpush1.msra.mxu0 %v3761
        %3866 = vmatprep.subr.mxu0 %v3758
        %3867 = vmatpush1.msra.mxu0 %v3757
        %3868 = vmatprep.subr.mxu0 %v3754
        %3869 = vmatpush1.msra.mxu0 %v3753
        %3870 = vmatprep.subr.mxu0 %v3750
        %3871 = vmatpush1.msra.mxu0 %v3749
        %3872 = vmatprep.subr.mxu0 %v3746
        %3873 = vmatpush1.msra.mxu0 %v3745
        %3874 = vmatprep.subr.mxu0 %v3742
        %3875 = vmatpush1.msra.mxu0 %v3741
        %3876 = vmatprep.subr.mxu0 %v3738
        %3877 = vmatpush1.msra.mxu0 %v3737
        %3878 = vmatprep.subr.mxu0 %v3734
        %3879 = vmatpush1.msra.mxu0 %v3733
        %3880 = vmatprep.subr.mxu0 %v3730
        %3881 = vmatpush1.msra.mxu0 %v3729
        %3882 = vmatprep.subr.mxu0 %v3726
        %3883 = vmatpush1.msra.mxu0 %v3725
        %3884 = vmatprep.subr.mxu0 %v3722
        %3885 = vmatpush1.msra.mxu0 %v3721
        %3886 = vmatprep.subr.mxu0 0.0
        %3887 = vmatpush2.msra.mxu0 0.0
        %3888 = vmatprep.subr.mxu0 0.0
        %3889 = vmatpush2.msra.mxu0 0.0
        %3890 = vmatprep.subr.mxu0 0.0
        %3891 = vmatpush2.msra.mxu0 0.0
        %3892 = vmatprep.subr.mxu0 0.0
        %3893 = vmatpush2.msra.mxu0 0.0
        %3894 = vmatprep.subr.mxu0 0.0
        %3895 = vmatpush2.msra.mxu0 0.0
        %3896 = vmatprep.subr.mxu0 0.0
        %3897 = vmatpush2.msra.mxu0 0.0
        %3898 = vmatprep.subr.mxu0 0.0
        %3899 = vmatpush2.msra.mxu0 0.0
        %3900 = vmatprep.subr.mxu0 0.0
        %3901 = vmatpush2.msra.mxu0 0.0
        %3902 = vmatprep.subr.mxu0 0.0
        %3903 = vmatpush2.msra.mxu0 0.0
        %3904 = vmatprep.subr.mxu0 0.0
        %3905 = vmatpush2.msra.mxu0 0.0
        %3906 = vmatprep.subr.mxu0 0.0
        %3907 = vmatpush2.msra.mxu0 0.0
        %3908 = vmatprep.subr.mxu0 0.0
        %3909 = vmatpush2.msra.mxu0 0.0
        %3910 = vmatprep.subr.mxu0 0.0
        %3911 = vmatpush2.msra.mxu0 0.0
        %3912 = vmatprep.subr.mxu0 0.0
        %3913 = vmatpush2.msra.mxu0 0.0
        %3914 = vmatprep.subr.mxu0 0.0
        %3915 = vmatpush2.msra.mxu0 0.0
        %3916 = vmatprep.subr.mxu0 0.0
        %3917 = vmatpush2.msra.mxu0 0.0
        %3918 = vmatprep.mubr.f32.mxu0 0.0
        %3919 = vmatmul.mubr.f32.gmra.mxu0 %v3712
        %v3920 = vpop.f32.mrf.mxu0
        %v3921 = vadd.f32 0.0, %v3920
        %v3922 = vpop.f32.mrf.mxu0
        %v3923 = vadd.f32 0.0, %v3922
        %3924 = vdwg.mxu0
        %v3925 = vadd.f32 %v3715, %v3850
        %v3926 = vadd.f32 %v3716, %v3852
        %v3927 = vadd.f32 %v3717, %v3921
        %v3928 = vadd.f32 %v3718, %v3923
        %v3929 = vtanh.pop %v3925
        %v3930 = vtanh.pop %v3926
        %v3931 = vtanh.pop %v3927
        %v3932 = vtanh.pop %v3928
        %v3933 = vmul.f32 %v3929, 0.5
        %v3934 = vadd.f32 %v3933, 0.5
        %v3935 = vmul.f32 %v3930, 0.5
        %v3936 = vadd.f32 %v3935, 0.5
        %v3937 = vmul.f32 %v3932, 0.5
        %v3938 = vadd.f32 %v3937, 0.5
        %v3939 = vmul.f32 %v3936, %v3710
        %v3940 = vmul.f32 %v3934, %v3931
        %v3941 = vadd.f32 %v3939, %v3940
        %v3942 = vtanh.pop %v3941
        %v3943 = vmul.f32 %v3938, %v3942
        %v3944 = vmax.f32 %v3943, 0.0
        %3945 = vst [vmem:[#allocation2 + $0x48] sm:$0xff] %v3944
        %v3946 = vld [vmem:[#allocation4 + $0x60] sm:$0xff]
        %v3947 = vld [vmem:[#allocation4 + $0x68] sm:$0xff]
        %v3948 = vld [vmem:[#allocation4 + $0x70] sm:$0xff]
        %v3949 = vld [vmem:[#allocation4 + $0x78] sm:$0xff]
        %v3950 = vld [vmem:[%s3025] sm:$0xff]
        %v3951 = vld [vmem:[%s3025 + $0x8] sm:$0xff]
        %v3952 = vld [vmem:[%s3025 + $0x10] sm:$0xff]
        %v3953 = vld [vmem:[%s3025 + $0x18] sm:$0xff]
        %v3954 = vld [vmem:[%s3025 + $0x20] sm:$0xff]
        %v3955 = vld [vmem:[%s3025 + $0x28] sm:$0xff]
        %v3956 = vld [vmem:[%s3025 + $0x30] sm:$0xff]
        %v3957 = vld [vmem:[%s3025 + $0x38] sm:$0xff]
        %v3958 = vld [vmem:[%s3025 + $0x40] sm:$0xff]
        %v3959 = vld [vmem:[%s3025 + $0x48] sm:$0xff]
        %v3960 = vld [vmem:[%s3025 + $0x50] sm:$0xff]
        %v3961 = vld [vmem:[%s3025 + $0x58] sm:$0xff]
        %v3962 = vld [vmem:[%s3025 + $0x60] sm:$0xff]
        %v3963 = vld [vmem:[%s3025 + $0x68] sm:$0xff]
        %v3964 = vld [vmem:[%s3025 + $0x70] sm:$0xff]
        %v3965 = vld [vmem:[%s3025 + $0x78] sm:$0xff]
        %v3966 = vld [vmem:[%s3025 + $0x80] sm:$0xff]
        %v3967 = vld [vmem:[%s3025 + $0x88] sm:$0xff]
        %v3968 = vld [vmem:[%s3025 + $0x90] sm:$0xff]
        %v3969 = vld [vmem:[%s3025 + $0x98] sm:$0xff]
        %v3970 = vld [vmem:[%s3025 + $0xa0] sm:$0xff]
        %v3971 = vld [vmem:[%s3025 + $0xa8] sm:$0xff]
        %v3972 = vld [vmem:[%s3025 + $0xb0] sm:$0xff]
        %v3973 = vld [vmem:[%s3025 + $0xb8] sm:$0xff]
        %v3974 = vld [vmem:[%s3025 + $0xc0] sm:$0xff]
        %v3975 = vld [vmem:[%s3025 + $0xc8] sm:$0xff]
        %v3976 = vld [vmem:[%s3025 + $0xd0] sm:$0xff]
        %v3977 = vld [vmem:[%s3025 + $0xd8] sm:$0xff]
        %v3978 = vld [vmem:[%s3025 + $0xe0] sm:$0xff]
        %v3979 = vld [vmem:[%s3025 + $0xe8] sm:$0xff]
        %v3980 = vld [vmem:[%s3025 + $0xf0] sm:$0xff]
        %v3981 = vld [vmem:[%s3025 + $0xf8] sm:$0xff]
        %v3982 = vld [vmem:[%s3025 + $0x100] sm:$0xff]
        %v3983 = vld [vmem:[%s3025 + $0x108] sm:$0xff]
        %v3984 = vld [vmem:[%s3025 + $0x110] sm:$0xff]
        %v3985 = vld [vmem:[%s3025 + $0x118] sm:$0xff]
        %v3986 = vld [vmem:[%s3025 + $0x120] sm:$0xff]
        %v3987 = vld [vmem:[%s3025 + $0x128] sm:$0xff]
        %v3988 = vld [vmem:[%s3025 + $0x130] sm:$0xff]
        %v3989 = vld [vmem:[%s3025 + $0x138] sm:$0xff]
        %v3990 = vld [vmem:[%s3025 + $0x140] sm:$0xff]
        %v3991 = vld [vmem:[%s3025 + $0x148] sm:$0xff]
        %v3992 = vld [vmem:[%s3025 + $0x150] sm:$0xff]
        %v3993 = vld [vmem:[%s3025 + $0x158] sm:$0xff]
        %v3994 = vld [vmem:[%s3025 + $0x160] sm:$0xff]
        %v3995 = vld [vmem:[%s3025 + $0x168] sm:$0xff]
        %v3996 = vld [vmem:[%s3025 + $0x170] sm:$0xff]
        %v3997 = vld [vmem:[%s3025 + $0x178] sm:$0xff]
        %v3998 = vld [vmem:[%s3025 + $0x180] sm:$0xff]
        %v3999 = vld [vmem:[%s3025 + $0x188] sm:$0xff]
        %v4000 = vld [vmem:[%s3025 + $0x190] sm:$0xff]
        %v4001 = vld [vmem:[%s3025 + $0x198] sm:$0xff]
        %v4002 = vld [vmem:[%s3025 + $0x1a0] sm:$0xff]
        %v4003 = vld [vmem:[%s3025 + $0x1a8] sm:$0xff]
        %v4004 = vld [vmem:[%s3025 + $0x1b0] sm:$0xff]
        %v4005 = vld [vmem:[%s3025 + $0x1b8] sm:$0xff]
        %v4006 = vld [vmem:[%s3025 + $0x1c0] sm:$0xff]
        %v4007 = vld [vmem:[%s3025 + $0x1c8] sm:$0xff]
        %v4008 = vld [vmem:[%s3025 + $0x1d0] sm:$0xff]
        %v4009 = vld [vmem:[%s3025 + $0x1d8] sm:$0xff]
        %v4010 = vld [vmem:[%s3025 + $0x1e0] sm:$0xff]
        %v4011 = vld [vmem:[%s3025 + $0x1e8] sm:$0xff]
        %v4012 = vld [vmem:[%s3025 + $0x1f0] sm:$0xff]
        %v4013 = vld [vmem:[%s3025 + $0x1f8] sm:$0xff]
        %4014 = vmatprep.subr.mxu0 %v4011
        %4015 = vmatpush1.msra.mxu0 %v4010
        %4016 = vmatprep.subr.mxu0 %v4007
        %4017 = vmatpush1.msra.mxu0 %v4006
        %4018 = vmatprep.subr.mxu0 %v4003
        %4019 = vmatpush1.msra.mxu0 %v4002
        %4020 = vmatprep.subr.mxu0 %v3999
        %4021 = vmatpush1.msra.mxu0 %v3998
        %4022 = vmatprep.subr.mxu0 %v3995
        %4023 = vmatpush1.msra.mxu0 %v3994
        %4024 = vmatprep.subr.mxu0 %v3991
        %4025 = vmatpush1.msra.mxu0 %v3990
        %4026 = vmatprep.subr.mxu0 %v3987
        %4027 = vmatpush1.msra.mxu0 %v3986
        %4028 = vmatprep.subr.mxu0 %v3983
        %4029 = vmatpush1.msra.mxu0 %v3982
        %4030 = vmatprep.subr.mxu0 %v3979
        %4031 = vmatpush1.msra.mxu0 %v3978
        %4032 = vmatprep.subr.mxu0 %v3975
        %4033 = vmatpush1.msra.mxu0 %v3974
        %4034 = vmatprep.subr.mxu0 %v3971
        %4035 = vmatpush1.msra.mxu0 %v3970
        %4036 = vmatprep.subr.mxu0 %v3967
        %4037 = vmatpush1.msra.mxu0 %v3966
        %4038 = vmatprep.subr.mxu0 %v3963
        %4039 = vmatpush1.msra.mxu0 %v3962
        %4040 = vmatprep.subr.mxu0 %v3959
        %4041 = vmatpush1.msra.mxu0 %v3958
        %4042 = vmatprep.subr.mxu0 %v3955
        %4043 = vmatpush1.msra.mxu0 %v3954
        %4044 = vmatprep.subr.mxu0 %v3951
        %4045 = vmatpush1.msra.mxu0 %v3950
        %4046 = vmatprep.subr.mxu0 0.0
        %4047 = vmatpush2.msra.mxu0 0.0
        %4048 = vmatprep.subr.mxu0 0.0
        %4049 = vmatpush2.msra.mxu0 0.0
        %4050 = vmatprep.subr.mxu0 0.0
        %4051 = vmatpush2.msra.mxu0 0.0
        %4052 = vmatprep.subr.mxu0 0.0
        %4053 = vmatpush2.msra.mxu0 0.0
        %4054 = vmatprep.subr.mxu0 0.0
        %4055 = vmatpush2.msra.mxu0 0.0
        %4056 = vmatprep.subr.mxu0 0.0
        %4057 = vmatpush2.msra.mxu0 0.0
        %4058 = vmatprep.subr.mxu0 0.0
        %4059 = vmatpush2.msra.mxu0 0.0
        %4060 = vmatprep.subr.mxu0 0.0
        %4061 = vmatpush2.msra.mxu0 0.0
        %4062 = vmatprep.subr.mxu0 0.0
        %4063 = vmatpush2.msra.mxu0 0.0
        %4064 = vmatprep.subr.mxu0 0.0
        %4065 = vmatpush2.msra.mxu0 0.0
        %4066 = vmatprep.subr.mxu0 0.0
        %4067 = vmatpush2.msra.mxu0 0.0
        %4068 = vmatprep.subr.mxu0 0.0
        %4069 = vmatpush2.msra.mxu0 0.0
        %4070 = vmatprep.subr.mxu0 0.0
        %4071 = vmatpush2.msra.mxu0 0.0
        %4072 = vmatprep.subr.mxu0 0.0
        %4073 = vmatpush2.msra.mxu0 0.0
        %4074 = vmatprep.subr.mxu0 0.0
        %4075 = vmatpush2.msra.mxu0 0.0
        %4076 = vmatprep.subr.mxu0 0.0
        %4077 = vmatpush2.msra.mxu0 0.0
        %4078 = vmatprep.mubr.f32.mxu0 0.0
        %4079 = vmatmul.mubr.f32.gmra.mxu0 %v3943
        %v4080 = vpop.f32.mrf.mxu0
        %v4081 = vadd.f32 0.0, %v4080
        %v4082 = vpop.f32.mrf.mxu0
        %v4083 = vadd.f32 0.0, %v4082
        %4084 = vdwg.mxu0
        %4085 = vmatprep.subr.mxu0 %v4013
        %4086 = vmatpush1.msra.mxu0 %v4012
        %4087 = vmatprep.subr.mxu0 %v4009
        %4088 = vmatpush1.msra.mxu0 %v4008
        %4089 = vmatprep.subr.mxu0 %v4005
        %4090 = vmatpush1.msra.mxu0 %v4004
        %4091 = vmatprep.subr.mxu0 %v4001
        %4092 = vmatpush1.msra.mxu0 %v4000
        %4093 = vmatprep.subr.mxu0 %v3997
        %4094 = vmatpush1.msra.mxu0 %v3996
        %4095 = vmatprep.subr.mxu0 %v3993
        %4096 = vmatpush1.msra.mxu0 %v3992
        %4097 = vmatprep.subr.mxu0 %v3989
        %4098 = vmatpush1.msra.mxu0 %v3988
        %4099 = vmatprep.subr.mxu0 %v3985
        %4100 = vmatpush1.msra.mxu0 %v3984
        %4101 = vmatprep.subr.mxu0 %v3981
        %4102 = vmatpush1.msra.mxu0 %v3980
        %4103 = vmatprep.subr.mxu0 %v3977
        %4104 = vmatpush1.msra.mxu0 %v3976
        %4105 = vmatprep.subr.mxu0 %v3973
        %4106 = vmatpush1.msra.mxu0 %v3972
        %4107 = vmatprep.subr.mxu0 %v3969
        %4108 = vmatpush1.msra.mxu0 %v3968
        %4109 = vmatprep.subr.mxu0 %v3965
        %4110 = vmatpush1.msra.mxu0 %v3964
        %4111 = vmatprep.subr.mxu0 %v3961
        %4112 = vmatpush1.msra.mxu0 %v3960
        %4113 = vmatprep.subr.mxu0 %v3957
        %4114 = vmatpush1.msra.mxu0 %v3956
        %4115 = vmatprep.subr.mxu0 %v3953
        %4116 = vmatpush1.msra.mxu0 %v3952
        %4117 = vmatprep.subr.mxu0 0.0
        %4118 = vmatpush2.msra.mxu0 0.0
        %4119 = vmatprep.subr.mxu0 0.0
        %4120 = vmatpush2.msra.mxu0 0.0
        %4121 = vmatprep.subr.mxu0 0.0
        %4122 = vmatpush2.msra.mxu0 0.0
        %4123 = vmatprep.subr.mxu0 0.0
        %4124 = vmatpush2.msra.mxu0 0.0
        %4125 = vmatprep.subr.mxu0 0.0
        %4126 = vmatpush2.msra.mxu0 0.0
        %4127 = vmatprep.subr.mxu0 0.0
        %4128 = vmatpush2.msra.mxu0 0.0
        %4129 = vmatprep.subr.mxu0 0.0
        %4130 = vmatpush2.msra.mxu0 0.0
        %4131 = vmatprep.subr.mxu0 0.0
        %4132 = vmatpush2.msra.mxu0 0.0
        %4133 = vmatprep.subr.mxu0 0.0
        %4134 = vmatpush2.msra.mxu0 0.0
        %4135 = vmatprep.subr.mxu0 0.0
        %4136 = vmatpush2.msra.mxu0 0.0
        %4137 = vmatprep.subr.mxu0 0.0
        %4138 = vmatpush2.msra.mxu0 0.0
        %4139 = vmatprep.subr.mxu0 0.0
        %4140 = vmatpush2.msra.mxu0 0.0
        %4141 = vmatprep.subr.mxu0 0.0
        %4142 = vmatpush2.msra.mxu0 0.0
        %4143 = vmatprep.subr.mxu0 0.0
        %4144 = vmatpush2.msra.mxu0 0.0
        %4145 = vmatprep.subr.mxu0 0.0
        %4146 = vmatpush2.msra.mxu0 0.0
        %4147 = vmatprep.subr.mxu0 0.0
        %4148 = vmatpush2.msra.mxu0 0.0
        %4149 = vmatprep.mubr.f32.mxu0 0.0
        %4150 = vmatmul.mubr.f32.gmra.mxu0 %v3943
        %v4151 = vpop.f32.mrf.mxu0
        %v4152 = vadd.f32 0.0, %v4151
        %v4153 = vpop.f32.mrf.mxu0
        %v4154 = vadd.f32 0.0, %v4153
        %4155 = vdwg.mxu0
        %v4156 = vadd.f32 %v3946, %v4081
        %v4157 = vadd.f32 %v3947, %v4083
        %v4158 = vadd.f32 %v3948, %v4152
        %v4159 = vadd.f32 %v3949, %v4154
        %v4160 = vtanh.pop %v4156
        %v4161 = vtanh.pop %v4157
        %v4162 = vtanh.pop %v4158
        %v4163 = vtanh.pop %v4159
        %v4164 = vmul.f32 %v4160, 0.5
        %v4165 = vadd.f32 %v4164, 0.5
        %v4166 = vmul.f32 %v4161, 0.5
        %v4167 = vadd.f32 %v4166, 0.5
        %v4168 = vmul.f32 %v4163, 0.5
        %v4169 = vadd.f32 %v4168, 0.5
        %v4170 = vmul.f32 %v4167, %v3941
        %v4171 = vmul.f32 %v4165, %v4162
        %v4172 = vadd.f32 %v4170, %v4171
        %v4173 = vtanh.pop %v4172
        %v4174 = vmul.f32 %v4169, %v4173
        %v4175 = vmax.f32 %v4174, 0.0
        %4176 = vst [vmem:[#allocation2 + $0x38] sm:$0xff] %v4175
        %v4177 = vld [vmem:[#allocation4 + $0x40] sm:$0xff]
        %v4178 = vld [vmem:[#allocation4 + $0x48] sm:$0xff]
        %v4179 = vld [vmem:[#allocation4 + $0x50] sm:$0xff]
        %v4180 = vld [vmem:[#allocation4 + $0x58] sm:$0xff]
        %v4181 = vld [vmem:[%s3025] sm:$0xff]
        %v4182 = vld [vmem:[%s3025 + $0x8] sm:$0xff]
        %v4183 = vld [vmem:[%s3025 + $0x10] sm:$0xff]
        %v4184 = vld [vmem:[%s3025 + $0x18] sm:$0xff]
        %v4185 = vld [vmem:[%s3025 + $0x20] sm:$0xff]
        %v4186 = vld [vmem:[%s3025 + $0x28] sm:$0xff]
        %v4187 = vld [vmem:[%s3025 + $0x30] sm:$0xff]
        %v4188 = vld [vmem:[%s3025 + $0x38] sm:$0xff]
        %v4189 = vld [vmem:[%s3025 + $0x40] sm:$0xff]
        %v4190 = vld [vmem:[%s3025 + $0x48] sm:$0xff]
        %v4191 = vld [vmem:[%s3025 + $0x50] sm:$0xff]
        %v4192 = vld [vmem:[%s3025 + $0x58] sm:$0xff]
        %v4193 = vld [vmem:[%s3025 + $0x60] sm:$0xff]
        %v4194 = vld [vmem:[%s3025 + $0x68] sm:$0xff]
        %v4195 = vld [vmem:[%s3025 + $0x70] sm:$0xff]
        %v4196 = vld [vmem:[%s3025 + $0x78] sm:$0xff]
        %v4197 = vld [vmem:[%s3025 + $0x80] sm:$0xff]
        %v4198 = vld [vmem:[%s3025 + $0x88] sm:$0xff]
        %v4199 = vld [vmem:[%s3025 + $0x90] sm:$0xff]
        %v4200 = vld [vmem:[%s3025 + $0x98] sm:$0xff]
        %v4201 = vld [vmem:[%s3025 + $0xa0] sm:$0xff]
        %v4202 = vld [vmem:[%s3025 + $0xa8] sm:$0xff]
        %v4203 = vld [vmem:[%s3025 + $0xb0] sm:$0xff]
        %v4204 = vld [vmem:[%s3025 + $0xb8] sm:$0xff]
        %v4205 = vld [vmem:[%s3025 + $0xc0] sm:$0xff]
        %v4206 = vld [vmem:[%s3025 + $0xc8] sm:$0xff]
        %v4207 = vld [vmem:[%s3025 + $0xd0] sm:$0xff]
        %v4208 = vld [vmem:[%s3025 + $0xd8] sm:$0xff]
        %v4209 = vld [vmem:[%s3025 + $0xe0] sm:$0xff]
        %v4210 = vld [vmem:[%s3025 + $0xe8] sm:$0xff]
        %v4211 = vld [vmem:[%s3025 + $0xf0] sm:$0xff]
        %v4212 = vld [vmem:[%s3025 + $0xf8] sm:$0xff]
        %v4213 = vld [vmem:[%s3025 + $0x100] sm:$0xff]
        %v4214 = vld [vmem:[%s3025 + $0x108] sm:$0xff]
        %v4215 = vld [vmem:[%s3025 + $0x110] sm:$0xff]
        %v4216 = vld [vmem:[%s3025 + $0x118] sm:$0xff]
        %v4217 = vld [vmem:[%s3025 + $0x120] sm:$0xff]
        %v4218 = vld [vmem:[%s3025 + $0x128] sm:$0xff]
        %v4219 = vld [vmem:[%s3025 + $0x130] sm:$0xff]
        %v4220 = vld [vmem:[%s3025 + $0x138] sm:$0xff]
        %v4221 = vld [vmem:[%s3025 + $0x140] sm:$0xff]
        %v4222 = vld [vmem:[%s3025 + $0x148] sm:$0xff]
        %v4223 = vld [vmem:[%s3025 + $0x150] sm:$0xff]
        %v4224 = vld [vmem:[%s3025 + $0x158] sm:$0xff]
        %v4225 = vld [vmem:[%s3025 + $0x160] sm:$0xff]
        %v4226 = vld [vmem:[%s3025 + $0x168] sm:$0xff]
        %v4227 = vld [vmem:[%s3025 + $0x170] sm:$0xff]
        %v4228 = vld [vmem:[%s3025 + $0x178] sm:$0xff]
        %v4229 = vld [vmem:[%s3025 + $0x180] sm:$0xff]
        %v4230 = vld [vmem:[%s3025 + $0x188] sm:$0xff]
        %v4231 = vld [vmem:[%s3025 + $0x190] sm:$0xff]
        %v4232 = vld [vmem:[%s3025 + $0x198] sm:$0xff]
        %v4233 = vld [vmem:[%s3025 + $0x1a0] sm:$0xff]
        %v4234 = vld [vmem:[%s3025 + $0x1a8] sm:$0xff]
        %v4235 = vld [vmem:[%s3025 + $0x1b0] sm:$0xff]
        %v4236 = vld [vmem:[%s3025 + $0x1b8] sm:$0xff]
        %v4237 = vld [vmem:[%s3025 + $0x1c0] sm:$0xff]
        %v4238 = vld [vmem:[%s3025 + $0x1c8] sm:$0xff]
        %v4239 = vld [vmem:[%s3025 + $0x1d0] sm:$0xff]
        %v4240 = vld [vmem:[%s3025 + $0x1d8] sm:$0xff]
        %v4241 = vld [vmem:[%s3025 + $0x1e0] sm:$0xff]
        %v4242 = vld [vmem:[%s3025 + $0x1e8] sm:$0xff]
        %v4243 = vld [vmem:[%s3025 + $0x1f0] sm:$0xff]
        %v4244 = vld [vmem:[%s3025 + $0x1f8] sm:$0xff]
        %4245 = vmatprep.subr.mxu0 %v4242
        %4246 = vmatpush1.msra.mxu0 %v4241
        %4247 = vmatprep.subr.mxu0 %v4238
        %4248 = vmatpush1.msra.mxu0 %v4237
        %4249 = vmatprep.subr.mxu0 %v4234
        %4250 = vmatpush1.msra.mxu0 %v4233
        %4251 = vmatprep.subr.mxu0 %v4230
        %4252 = vmatpush1.msra.mxu0 %v4229
        %4253 = vmatprep.subr.mxu0 %v4226
        %4254 = vmatpush1.msra.mxu0 %v4225
        %4255 = vmatprep.subr.mxu0 %v4222
        %4256 = vmatpush1.msra.mxu0 %v4221
        %4257 = vmatprep.subr.mxu0 %v4218
        %4258 = vmatpush1.msra.mxu0 %v4217
        %4259 = vmatprep.subr.mxu0 %v4214
        %4260 = vmatpush1.msra.mxu0 %v4213
        %4261 = vmatprep.subr.mxu0 %v4210
        %4262 = vmatpush1.msra.mxu0 %v4209
        %4263 = vmatprep.subr.mxu0 %v4206
        %4264 = vmatpush1.msra.mxu0 %v4205
        %4265 = vmatprep.subr.mxu0 %v4202
        %4266 = vmatpush1.msra.mxu0 %v4201
        %4267 = vmatprep.subr.mxu0 %v4198
        %4268 = vmatpush1.msra.mxu0 %v4197
        %4269 = vmatprep.subr.mxu0 %v4194
        %4270 = vmatpush1.msra.mxu0 %v4193
        %4271 = vmatprep.subr.mxu0 %v4190
        %4272 = vmatpush1.msra.mxu0 %v4189
        %4273 = vmatprep.subr.mxu0 %v4186
        %4274 = vmatpush1.msra.mxu0 %v4185
        %4275 = vmatprep.subr.mxu0 %v4182
        %4276 = vmatpush1.msra.mxu0 %v4181
        %4277 = vmatprep.subr.mxu0 0.0
        %4278 = vmatpush2.msra.mxu0 0.0
        %4279 = vmatprep.subr.mxu0 0.0
        %4280 = vmatpush2.msra.mxu0 0.0
        %4281 = vmatprep.subr.mxu0 0.0
        %4282 = vmatpush2.msra.mxu0 0.0
        %4283 = vmatprep.subr.mxu0 0.0
        %4284 = vmatpush2.msra.mxu0 0.0
        %4285 = vmatprep.subr.mxu0 0.0
        %4286 = vmatpush2.msra.mxu0 0.0
        %4287 = vmatprep.subr.mxu0 0.0
        %4288 = vmatpush2.msra.mxu0 0.0
        %4289 = vmatprep.subr.mxu0 0.0
        %4290 = vmatpush2.msra.mxu0 0.0
        %4291 = vmatprep.subr.mxu0 0.0
        %4292 = vmatpush2.msra.mxu0 0.0
        %4293 = vmatprep.subr.mxu0 0.0
        %4294 = vmatpush2.msra.mxu0 0.0
        %4295 = vmatprep.subr.mxu0 0.0
        %4296 = vmatpush2.msra.mxu0 0.0
        %4297 = vmatprep.subr.mxu0 0.0
        %4298 = vmatpush2.msra.mxu0 0.0
        %4299 = vmatprep.subr.mxu0 0.0
        %4300 = vmatpush2.msra.mxu0 0.0
        %4301 = vmatprep.subr.mxu0 0.0
        %4302 = vmatpush2.msra.mxu0 0.0
        %4303 = vmatprep.subr.mxu0 0.0
        %4304 = vmatpush2.msra.mxu0 0.0
        %4305 = vmatprep.subr.mxu0 0.0
        %4306 = vmatpush2.msra.mxu0 0.0
        %4307 = vmatprep.subr.mxu0 0.0
        %4308 = vmatpush2.msra.mxu0 0.0
        %4309 = vmatprep.mubr.f32.mxu0 0.0
        %4310 = vmatmul.mubr.f32.gmra.mxu0 %v4174
        %v4311 = vpop.f32.mrf.mxu0
        %v4312 = vadd.f32 0.0, %v4311
        %v4313 = vpop.f32.mrf.mxu0
        %v4314 = vadd.f32 0.0, %v4313
        %4315 = vdwg.mxu0
        %4316 = vmatprep.subr.mxu0 %v4244
        %4317 = vmatpush1.msra.mxu0 %v4243
        %4318 = vmatprep.subr.mxu0 %v4240
        %4319 = vmatpush1.msra.mxu0 %v4239
        %4320 = vmatprep.subr.mxu0 %v4236
        %4321 = vmatpush1.msra.mxu0 %v4235
        %4322 = vmatprep.subr.mxu0 %v4232
        %4323 = vmatpush1.msra.mxu0 %v4231
        %4324 = vmatprep.subr.mxu0 %v4228
        %4325 = vmatpush1.msra.mxu0 %v4227
        %4326 = vmatprep.subr.mxu0 %v4224
        %4327 = vmatpush1.msra.mxu0 %v4223
        %4328 = vmatprep.subr.mxu0 %v4220
        %4329 = vmatpush1.msra.mxu0 %v4219
        %4330 = vmatprep.subr.mxu0 %v4216
        %4331 = vmatpush1.msra.mxu0 %v4215
        %4332 = vmatprep.subr.mxu0 %v4212
        %4333 = vmatpush1.msra.mxu0 %v4211
        %4334 = vmatprep.subr.mxu0 %v4208
        %4335 = vmatpush1.msra.mxu0 %v4207
        %4336 = vmatprep.subr.mxu0 %v4204
        %4337 = vmatpush1.msra.mxu0 %v4203
        %4338 = vmatprep.subr.mxu0 %v4200
        %4339 = vmatpush1.msra.mxu0 %v4199
        %4340 = vmatprep.subr.mxu0 %v4196
        %4341 = vmatpush1.msra.mxu0 %v4195
        %4342 = vmatprep.subr.mxu0 %v4192
        %4343 = vmatpush1.msra.mxu0 %v4191
        %4344 = vmatprep.subr.mxu0 %v4188
        %4345 = vmatpush1.msra.mxu0 %v4187
        %4346 = vmatprep.subr.mxu0 %v4184
        %4347 = vmatpush1.msra.mxu0 %v4183
        %4348 = vmatprep.subr.mxu0 0.0
        %4349 = vmatpush2.msra.mxu0 0.0
        %4350 = vmatprep.subr.mxu0 0.0
        %4351 = vmatpush2.msra.mxu0 0.0
        %4352 = vmatprep.subr.mxu0 0.0
        %4353 = vmatpush2.msra.mxu0 0.0
        %4354 = vmatprep.subr.mxu0 0.0
        %4355 = vmatpush2.msra.mxu0 0.0
        %4356 = vmatprep.subr.mxu0 0.0
        %4357 = vmatpush2.msra.mxu0 0.0
        %4358 = vmatprep.subr.mxu0 0.0
        %4359 = vmatpush2.msra.mxu0 0.0
        %4360 = vmatprep.subr.mxu0 0.0
        %4361 = vmatpush2.msra.mxu0 0.0
        %4362 = vmatprep.subr.mxu0 0.0
        %4363 = vmatpush2.msra.mxu0 0.0
        %4364 = vmatprep.subr.mxu0 0.0
        %4365 = vmatpush2.msra.mxu0 0.0
        %4366 = vmatprep.subr.mxu0 0.0
        %4367 = vmatpush2.msra.mxu0 0.0
        %4368 = vmatprep.subr.mxu0 0.0
        %4369 = vmatpush2.msra.mxu0 0.0
        %4370 = vmatprep.subr.mxu0 0.0
        %4371 = vmatpush2.msra.mxu0 0.0
        %4372 = vmatprep.subr.mxu0 0.0
        %4373 = vmatpush2.msra.mxu0 0.0
        %4374 = vmatprep.subr.mxu0 0.0
        %4375 = vmatpush2.msra.mxu0 0.0
        %4376 = vmatprep.subr.mxu0 0.0
        %4377 = vmatpush2.msra.mxu0 0.0
        %4378 = vmatprep.subr.mxu0 0.0
        %4379 = vmatpush2.msra.mxu0 0.0
        %4380 = vmatprep.mubr.f32.mxu0 0.0
        %4381 = vmatmul.mubr.f32.gmra.mxu0 %v4174
        %v4382 = vpop.f32.mrf.mxu0
        %v4383 = vadd.f32 0.0, %v4382
        %v4384 = vpop.f32.mrf.mxu0
        %v4385 = vadd.f32 0.0, %v4384
        %4386 = vdwg.mxu0
        %v4387 = vadd.f32 %v4177, %v4312
        %v4388 = vadd.f32 %v4178, %v4314
        %v4389 = vadd.f32 %v4179, %v4383
        %v4390 = vadd.f32 %v4180, %v4385
        %v4391 = vtanh.pop %v4387
        %v4392 = vtanh.pop %v4388
        %v4393 = vtanh.pop %v4389
        %v4394 = vtanh.pop %v4390
        %v4395 = vmul.f32 %v4391, 0.5
        %v4396 = vadd.f32 %v4395, 0.5
        %v4397 = vmul.f32 %v4392, 0.5
        %v4398 = vadd.f32 %v4397, 0.5
        %v4399 = vmul.f32 %v4394, 0.5
        %v4400 = vadd.f32 %v4399, 0.5
        %v4401 = vmul.f32 %v4398, %v4172
        %v4402 = vmul.f32 %v4396, %v4393
        %v4403 = vadd.f32 %v4401, %v4402
        %v4404 = vtanh.pop %v4403
        %v4405 = vmul.f32 %v4400, %v4404
        %v4406 = vmax.f32 %v4405, 0.0
        %4407 = vst [vmem:[#allocation2 + $0x28] sm:$0xff] %v4406
        %v4408 = vld [vmem:[#allocation4 + $0x20] sm:$0xff]
        %v4409 = vld [vmem:[#allocation4 + $0x28] sm:$0xff]
        %v4410 = vld [vmem:[#allocation4 + $0x30] sm:$0xff]
        %v4411 = vld [vmem:[#allocation4 + $0x38] sm:$0xff]
        %v4412 = vld [vmem:[%s3025] sm:$0xff]
        %v4413 = vld [vmem:[%s3025 + $0x8] sm:$0xff]
        %v4414 = vld [vmem:[%s3025 + $0x10] sm:$0xff]
        %v4415 = vld [vmem:[%s3025 + $0x18] sm:$0xff]
        %v4416 = vld [vmem:[%s3025 + $0x20] sm:$0xff]
        %v4417 = vld [vmem:[%s3025 + $0x28] sm:$0xff]
        %v4418 = vld [vmem:[%s3025 + $0x30] sm:$0xff]
        %v4419 = vld [vmem:[%s3025 + $0x38] sm:$0xff]
        %v4420 = vld [vmem:[%s3025 + $0x40] sm:$0xff]
        %v4421 = vld [vmem:[%s3025 + $0x48] sm:$0xff]
        %v4422 = vld [vmem:[%s3025 + $0x50] sm:$0xff]
        %v4423 = vld [vmem:[%s3025 + $0x58] sm:$0xff]
        %v4424 = vld [vmem:[%s3025 + $0x60] sm:$0xff]
        %v4425 = vld [vmem:[%s3025 + $0x68] sm:$0xff]
        %v4426 = vld [vmem:[%s3025 + $0x70] sm:$0xff]
        %v4427 = vld [vmem:[%s3025 + $0x78] sm:$0xff]
        %v4428 = vld [vmem:[%s3025 + $0x80] sm:$0xff]
        %v4429 = vld [vmem:[%s3025 + $0x88] sm:$0xff]
        %v4430 = vld [vmem:[%s3025 + $0x90] sm:$0xff]
        %v4431 = vld [vmem:[%s3025 + $0x98] sm:$0xff]
        %v4432 = vld [vmem:[%s3025 + $0xa0] sm:$0xff]
        %v4433 = vld [vmem:[%s3025 + $0xa8] sm:$0xff]
        %v4434 = vld [vmem:[%s3025 + $0xb0] sm:$0xff]
        %v4435 = vld [vmem:[%s3025 + $0xb8] sm:$0xff]
        %v4436 = vld [vmem:[%s3025 + $0xc0] sm:$0xff]
        %v4437 = vld [vmem:[%s3025 + $0xc8] sm:$0xff]
        %v4438 = vld [vmem:[%s3025 + $0xd0] sm:$0xff]
        %v4439 = vld [vmem:[%s3025 + $0xd8] sm:$0xff]
        %v4440 = vld [vmem:[%s3025 + $0xe0] sm:$0xff]
        %v4441 = vld [vmem:[%s3025 + $0xe8] sm:$0xff]
        %v4442 = vld [vmem:[%s3025 + $0xf0] sm:$0xff]
        %v4443 = vld [vmem:[%s3025 + $0xf8] sm:$0xff]
        %v4444 = vld [vmem:[%s3025 + $0x100] sm:$0xff]
        %v4445 = vld [vmem:[%s3025 + $0x108] sm:$0xff]
        %v4446 = vld [vmem:[%s3025 + $0x110] sm:$0xff]
        %v4447 = vld [vmem:[%s3025 + $0x118] sm:$0xff]
        %v4448 = vld [vmem:[%s3025 + $0x120] sm:$0xff]
        %v4449 = vld [vmem:[%s3025 + $0x128] sm:$0xff]
        %v4450 = vld [vmem:[%s3025 + $0x130] sm:$0xff]
        %v4451 = vld [vmem:[%s3025 + $0x138] sm:$0xff]
        %v4452 = vld [vmem:[%s3025 + $0x140] sm:$0xff]
        %v4453 = vld [vmem:[%s3025 + $0x148] sm:$0xff]
        %v4454 = vld [vmem:[%s3025 + $0x150] sm:$0xff]
        %v4455 = vld [vmem:[%s3025 + $0x158] sm:$0xff]
        %v4456 = vld [vmem:[%s3025 + $0x160] sm:$0xff]
        %v4457 = vld [vmem:[%s3025 + $0x168] sm:$0xff]
        %v4458 = vld [vmem:[%s3025 + $0x170] sm:$0xff]
        %v4459 = vld [vmem:[%s3025 + $0x178] sm:$0xff]
        %v4460 = vld [vmem:[%s3025 + $0x180] sm:$0xff]
        %v4461 = vld [vmem:[%s3025 + $0x188] sm:$0xff]
        %v4462 = vld [vmem:[%s3025 + $0x190] sm:$0xff]
        %v4463 = vld [vmem:[%s3025 + $0x198] sm:$0xff]
        %v4464 = vld [vmem:[%s3025 + $0x1a0] sm:$0xff]
        %v4465 = vld [vmem:[%s3025 + $0x1a8] sm:$0xff]
        %v4466 = vld [vmem:[%s3025 + $0x1b0] sm:$0xff]
        %v4467 = vld [vmem:[%s3025 + $0x1b8] sm:$0xff]
        %v4468 = vld [vmem:[%s3025 + $0x1c0] sm:$0xff]
        %v4469 = vld [vmem:[%s3025 + $0x1c8] sm:$0xff]
        %v4470 = vld [vmem:[%s3025 + $0x1d0] sm:$0xff]
        %v4471 = vld [vmem:[%s3025 + $0x1d8] sm:$0xff]
        %v4472 = vld [vmem:[%s3025 + $0x1e0] sm:$0xff]
        %v4473 = vld [vmem:[%s3025 + $0x1e8] sm:$0xff]
        %v4474 = vld [vmem:[%s3025 + $0x1f0] sm:$0xff]
        %v4475 = vld [vmem:[%s3025 + $0x1f8] sm:$0xff]
        %4476 = vmatprep.subr.mxu0 %v4473
        %4477 = vmatpush1.msra.mxu0 %v4472
        %4478 = vmatprep.subr.mxu0 %v4469
        %4479 = vmatpush1.msra.mxu0 %v4468
        %4480 = vmatprep.subr.mxu0 %v4465
        %4481 = vmatpush1.msra.mxu0 %v4464
        %4482 = vmatprep.subr.mxu0 %v4461
        %4483 = vmatpush1.msra.mxu0 %v4460
        %4484 = vmatprep.subr.mxu0 %v4457
        %4485 = vmatpush1.msra.mxu0 %v4456
        %4486 = vmatprep.subr.mxu0 %v4453
        %4487 = vmatpush1.msra.mxu0 %v4452
        %4488 = vmatprep.subr.mxu0 %v4449
        %4489 = vmatpush1.msra.mxu0 %v4448
        %4490 = vmatprep.subr.mxu0 %v4445
        %4491 = vmatpush1.msra.mxu0 %v4444
        %4492 = vmatprep.subr.mxu0 %v4441
        %4493 = vmatpush1.msra.mxu0 %v4440
        %4494 = vmatprep.subr.mxu0 %v4437
        %4495 = vmatpush1.msra.mxu0 %v4436
        %4496 = vmatprep.subr.mxu0 %v4433
        %4497 = vmatpush1.msra.mxu0 %v4432
        %4498 = vmatprep.subr.mxu0 %v4429
        %4499 = vmatpush1.msra.mxu0 %v4428
        %4500 = vmatprep.subr.mxu0 %v4425
        %4501 = vmatpush1.msra.mxu0 %v4424
        %4502 = vmatprep.subr.mxu0 %v4421
        %4503 = vmatpush1.msra.mxu0 %v4420
        %4504 = vmatprep.subr.mxu0 %v4417
        %4505 = vmatpush1.msra.mxu0 %v4416
        %4506 = vmatprep.subr.mxu0 %v4413
        %4507 = vmatpush1.msra.mxu0 %v4412
        %4508 = vmatprep.subr.mxu0 0.0
        %4509 = vmatpush2.msra.mxu0 0.0
        %4510 = vmatprep.subr.mxu0 0.0
        %4511 = vmatpush2.msra.mxu0 0.0
        %4512 = vmatprep.subr.mxu0 0.0
        %4513 = vmatpush2.msra.mxu0 0.0
        %4514 = vmatprep.subr.mxu0 0.0
        %4515 = vmatpush2.msra.mxu0 0.0
        %4516 = vmatprep.subr.mxu0 0.0
        %4517 = vmatpush2.msra.mxu0 0.0
        %4518 = vmatprep.subr.mxu0 0.0
        %4519 = vmatpush2.msra.mxu0 0.0
        %4520 = vmatprep.subr.mxu0 0.0
        %4521 = vmatpush2.msra.mxu0 0.0
        %4522 = vmatprep.subr.mxu0 0.0
        %4523 = vmatpush2.msra.mxu0 0.0
        %4524 = vmatprep.subr.mxu0 0.0
        %4525 = vmatpush2.msra.mxu0 0.0
        %4526 = vmatprep.subr.mxu0 0.0
        %4527 = vmatpush2.msra.mxu0 0.0
        %4528 = vmatprep.subr.mxu0 0.0
        %4529 = vmatpush2.msra.mxu0 0.0
        %4530 = vmatprep.subr.mxu0 0.0
        %4531 = vmatpush2.msra.mxu0 0.0
        %4532 = vmatprep.subr.mxu0 0.0
        %4533 = vmatpush2.msra.mxu0 0.0
        %4534 = vmatprep.subr.mxu0 0.0
        %4535 = vmatpush2.msra.mxu0 0.0
        %4536 = vmatprep.subr.mxu0 0.0
        %4537 = vmatpush2.msra.mxu0 0.0
        %4538 = vmatprep.subr.mxu0 0.0
        %4539 = vmatpush2.msra.mxu0 0.0
        %4540 = vmatprep.mubr.f32.mxu0 0.0
        %4541 = vmatmul.mubr.f32.gmra.mxu0 %v4405
        %v4542 = vpop.f32.mrf.mxu0
        %v4543 = vadd.f32 0.0, %v4542
        %v4544 = vpop.f32.mrf.mxu0
        %v4545 = vadd.f32 0.0, %v4544
        %4546 = vdwg.mxu0
        %4547 = vmatprep.subr.mxu0 %v4475
        %4548 = vmatpush1.msra.mxu0 %v4474
        %4549 = vmatprep.subr.mxu0 %v4471
        %4550 = vmatpush1.msra.mxu0 %v4470
        %4551 = vmatprep.subr.mxu0 %v4467
        %4552 = vmatpush1.msra.mxu0 %v4466
        %4553 = vmatprep.subr.mxu0 %v4463
        %4554 = vmatpush1.msra.mxu0 %v4462
        %4555 = vmatprep.subr.mxu0 %v4459
        %4556 = vmatpush1.msra.mxu0 %v4458
        %4557 = vmatprep.subr.mxu0 %v4455
        %4558 = vmatpush1.msra.mxu0 %v4454
        %4559 = vmatprep.subr.mxu0 %v4451
        %4560 = vmatpush1.msra.mxu0 %v4450
        %4561 = vmatprep.subr.mxu0 %v4447
        %4562 = vmatpush1.msra.mxu0 %v4446
        %4563 = vmatprep.subr.mxu0 %v4443
        %4564 = vmatpush1.msra.mxu0 %v4442
        %4565 = vmatprep.subr.mxu0 %v4439
        %4566 = vmatpush1.msra.mxu0 %v4438
        %4567 = vmatprep.subr.mxu0 %v4435
        %4568 = vmatpush1.msra.mxu0 %v4434
        %4569 = vmatprep.subr.mxu0 %v4431
        %4570 = vmatpush1.msra.mxu0 %v4430
        %4571 = vmatprep.subr.mxu0 %v4427
        %4572 = vmatpush1.msra.mxu0 %v4426
        %4573 = vmatprep.subr.mxu0 %v4423
        %4574 = vmatpush1.msra.mxu0 %v4422
        %4575 = vmatprep.subr.mxu0 %v4419
        %4576 = vmatpush1.msra.mxu0 %v4418
        %4577 = vmatprep.subr.mxu0 %v4415
        %4578 = vmatpush1.msra.mxu0 %v4414
        %4579 = vmatprep.subr.mxu0 0.0
        %4580 = vmatpush2.msra.mxu0 0.0
        %4581 = vmatprep.subr.mxu0 0.0
        %4582 = vmatpush2.msra.mxu0 0.0
        %4583 = vmatprep.subr.mxu0 0.0
        %4584 = vmatpush2.msra.mxu0 0.0
        %4585 = vmatprep.subr.mxu0 0.0
        %4586 = vmatpush2.msra.mxu0 0.0
        %4587 = vmatprep.subr.mxu0 0.0
        %4588 = vmatpush2.msra.mxu0 0.0
        %4589 = vmatprep.subr.mxu0 0.0
        %4590 = vmatpush2.msra.mxu0 0.0
        %4591 = vmatprep.subr.mxu0 0.0
        %4592 = vmatpush2.msra.mxu0 0.0
        %4593 = vmatprep.subr.mxu0 0.0
        %4594 = vmatpush2.msra.mxu0 0.0
        %4595 = vmatprep.subr.mxu0 0.0
        %4596 = vmatpush2.msra.mxu0 0.0
        %4597 = vmatprep.subr.mxu0 0.0
        %4598 = vmatpush2.msra.mxu0 0.0
        %4599 = vmatprep.subr.mxu0 0.0
        %4600 = vmatpush2.msra.mxu0 0.0
        %4601 = vmatprep.subr.mxu0 0.0
        %4602 = vmatpush2.msra.mxu0 0.0
        %4603 = vmatprep.subr.mxu0 0.0
        %4604 = vmatpush2.msra.mxu0 0.0
        %4605 = vmatprep.subr.mxu0 0.0
        %4606 = vmatpush2.msra.mxu0 0.0
        %4607 = vmatprep.subr.mxu0 0.0
        %4608 = vmatpush2.msra.mxu0 0.0
        %4609 = vmatprep.subr.mxu0 0.0
        %4610 = vmatpush2.msra.mxu0 0.0
        %4611 = vmatprep.mubr.f32.mxu0 0.0
        %4612 = vmatmul.mubr.f32.gmra.mxu0 %v4405
        %v4613 = vpop.f32.mrf.mxu0
        %v4614 = vadd.f32 0.0, %v4613
        %v4615 = vpop.f32.mrf.mxu0
        %v4616 = vadd.f32 0.0, %v4615
        %4617 = vdwg.mxu0
        %v4618 = vadd.f32 %v4408, %v4543
        %v4619 = vadd.f32 %v4409, %v4545
        %v4620 = vadd.f32 %v4410, %v4614
        %v4621 = vadd.f32 %v4411, %v4616
        %v4622 = vtanh.pop %v4618
        %v4623 = vtanh.pop %v4619
        %v4624 = vtanh.pop %v4620
        %v4625 = vtanh.pop %v4621
        %v4626 = vmul.f32 %v4622, 0.5
        %v4627 = vadd.f32 %v4626, 0.5
        %v4628 = vmul.f32 %v4623, 0.5
        %v4629 = vadd.f32 %v4628, 0.5
        %v4630 = vmul.f32 %v4625, 0.5
        %v4631 = vadd.f32 %v4630, 0.5
        %v4632 = vmul.f32 %v4629, %v4403
        %v4633 = vmul.f32 %v4627, %v4624
        %v4634 = vadd.f32 %v4632, %v4633
        %v4635 = vtanh.pop %v4634
        %v4636 = vmul.f32 %v4631, %v4635
        %v4637 = vmax.f32 %v4636, 0.0
        %4638 = vst [vmem:[#allocation2 + $0x18] sm:$0xff] %v4637
        %v4639 = vld [vmem:[#allocation4] sm:$0xff]
        %v4640 = vld [vmem:[#allocation4 + $0x8] sm:$0xff]
        %v4641 = vld [vmem:[#allocation4 + $0x10] sm:$0xff]
        %v4642 = vld [vmem:[#allocation4 + $0x18] sm:$0xff]
        %v4643 = vld [vmem:[%s3025] sm:$0xff]
        %v4644 = vld [vmem:[%s3025 + $0x8] sm:$0xff]
        %v4645 = vld [vmem:[%s3025 + $0x10] sm:$0xff]
        %v4646 = vld [vmem:[%s3025 + $0x18] sm:$0xff]
        %v4647 = vld [vmem:[%s3025 + $0x20] sm:$0xff]
        %v4648 = vld [vmem:[%s3025 + $0x28] sm:$0xff]
        %v4649 = vld [vmem:[%s3025 + $0x30] sm:$0xff]
        %v4650 = vld [vmem:[%s3025 + $0x38] sm:$0xff]
        %v4651 = vld [vmem:[%s3025 + $0x40] sm:$0xff]
        %v4652 = vld [vmem:[%s3025 + $0x48] sm:$0xff]
        %v4653 = vld [vmem:[%s3025 + $0x50] sm:$0xff]
        %v4654 = vld [vmem:[%s3025 + $0x58] sm:$0xff]
        %v4655 = vld [vmem:[%s3025 + $0x60] sm:$0xff]
        %v4656 = vld [vmem:[%s3025 + $0x68] sm:$0xff]
        %v4657 = vld [vmem:[%s3025 + $0x70] sm:$0xff]
        %v4658 = vld [vmem:[%s3025 + $0x78] sm:$0xff]
        %v4659 = vld [vmem:[%s3025 + $0x80] sm:$0xff]
        %v4660 = vld [vmem:[%s3025 + $0x88] sm:$0xff]
        %v4661 = vld [vmem:[%s3025 + $0x90] sm:$0xff]
        %v4662 = vld [vmem:[%s3025 + $0x98] sm:$0xff]
        %v4663 = vld [vmem:[%s3025 + $0xa0] sm:$0xff]
        %v4664 = vld [vmem:[%s3025 + $0xa8] sm:$0xff]
        %v4665 = vld [vmem:[%s3025 + $0xb0] sm:$0xff]
        %v4666 = vld [vmem:[%s3025 + $0xb8] sm:$0xff]
        %v4667 = vld [vmem:[%s3025 + $0xc0] sm:$0xff]
        %v4668 = vld [vmem:[%s3025 + $0xc8] sm:$0xff]
        %v4669 = vld [vmem:[%s3025 + $0xd0] sm:$0xff]
        %v4670 = vld [vmem:[%s3025 + $0xd8] sm:$0xff]
        %v4671 = vld [vmem:[%s3025 + $0xe0] sm:$0xff]
        %v4672 = vld [vmem:[%s3025 + $0xe8] sm:$0xff]
        %v4673 = vld [vmem:[%s3025 + $0xf0] sm:$0xff]
        %v4674 = vld [vmem:[%s3025 + $0xf8] sm:$0xff]
        %v4675 = vld [vmem:[%s3025 + $0x100] sm:$0xff]
        %v4676 = vld [vmem:[%s3025 + $0x108] sm:$0xff]
        %v4677 = vld [vmem:[%s3025 + $0x110] sm:$0xff]
        %v4678 = vld [vmem:[%s3025 + $0x118] sm:$0xff]
        %v4679 = vld [vmem:[%s3025 + $0x120] sm:$0xff]
        %v4680 = vld [vmem:[%s3025 + $0x128] sm:$0xff]
        %v4681 = vld [vmem:[%s3025 + $0x130] sm:$0xff]
        %v4682 = vld [vmem:[%s3025 + $0x138] sm:$0xff]
        %v4683 = vld [vmem:[%s3025 + $0x140] sm:$0xff]
        %v4684 = vld [vmem:[%s3025 + $0x148] sm:$0xff]
        %v4685 = vld [vmem:[%s3025 + $0x150] sm:$0xff]
        %v4686 = vld [vmem:[%s3025 + $0x158] sm:$0xff]
        %v4687 = vld [vmem:[%s3025 + $0x160] sm:$0xff]
        %v4688 = vld [vmem:[%s3025 + $0x168] sm:$0xff]
        %v4689 = vld [vmem:[%s3025 + $0x170] sm:$0xff]
        %v4690 = vld [vmem:[%s3025 + $0x178] sm:$0xff]
        %v4691 = vld [vmem:[%s3025 + $0x180] sm:$0xff]
        %v4692 = vld [vmem:[%s3025 + $0x188] sm:$0xff]
        %v4693 = vld [vmem:[%s3025 + $0x190] sm:$0xff]
        %v4694 = vld [vmem:[%s3025 + $0x198] sm:$0xff]
        %v4695 = vld [vmem:[%s3025 + $0x1a0] sm:$0xff]
        %v4696 = vld [vmem:[%s3025 + $0x1a8] sm:$0xff]
        %v4697 = vld [vmem:[%s3025 + $0x1b0] sm:$0xff]
        %v4698 = vld [vmem:[%s3025 + $0x1b8] sm:$0xff]
        %v4699 = vld [vmem:[%s3025 + $0x1c0] sm:$0xff]
        %v4700 = vld [vmem:[%s3025 + $0x1c8] sm:$0xff]
        %v4701 = vld [vmem:[%s3025 + $0x1d0] sm:$0xff]
        %v4702 = vld [vmem:[%s3025 + $0x1d8] sm:$0xff]
        %v4703 = vld [vmem:[%s3025 + $0x1e0] sm:$0xff]
        %v4704 = vld [vmem:[%s3025 + $0x1e8] sm:$0xff]
        %v4705 = vld [vmem:[%s3025 + $0x1f0] sm:$0xff]
        %v4706 = vld [vmem:[%s3025 + $0x1f8] sm:$0xff]
        %4707 = vmatprep.subr.mxu0 %v4704
        %4708 = vmatpush1.msra.mxu0 %v4703
        %4709 = vmatprep.subr.mxu0 %v4700
        %4710 = vmatpush1.msra.mxu0 %v4699
        %4711 = vmatprep.subr.mxu0 %v4696
        %4712 = vmatpush1.msra.mxu0 %v4695
        %4713 = vmatprep.subr.mxu0 %v4692
        %4714 = vmatpush1.msra.mxu0 %v4691
        %4715 = vmatprep.subr.mxu0 %v4688
        %4716 = vmatpush1.msra.mxu0 %v4687
        %4717 = vmatprep.subr.mxu0 %v4684
        %4718 = vmatpush1.msra.mxu0 %v4683
        %4719 = vmatprep.subr.mxu0 %v4680
        %4720 = vmatpush1.msra.mxu0 %v4679
        %4721 = vmatprep.subr.mxu0 %v4676
        %4722 = vmatpush1.msra.mxu0 %v4675
        %4723 = vmatprep.subr.mxu0 %v4672
        %4724 = vmatpush1.msra.mxu0 %v4671
        %4725 = vmatprep.subr.mxu0 %v4668
        %4726 = vmatpush1.msra.mxu0 %v4667
        %4727 = vmatprep.subr.mxu0 %v4664
        %4728 = vmatpush1.msra.mxu0 %v4663
        %4729 = vmatprep.subr.mxu0 %v4660
        %4730 = vmatpush1.msra.mxu0 %v4659
        %4731 = vmatprep.subr.mxu0 %v4656
        %4732 = vmatpush1.msra.mxu0 %v4655
        %4733 = vmatprep.subr.mxu0 %v4652
        %4734 = vmatpush1.msra.mxu0 %v4651
        %4735 = vmatprep.subr.mxu0 %v4648
        %4736 = vmatpush1.msra.mxu0 %v4647
        %4737 = vmatprep.subr.mxu0 %v4644
        %4738 = vmatpush1.msra.mxu0 %v4643
        %4739 = vmatprep.subr.mxu0 0.0
        %4740 = vmatpush2.msra.mxu0 0.0
        %4741 = vmatprep.subr.mxu0 0.0
        %4742 = vmatpush2.msra.mxu0 0.0
        %4743 = vmatprep.subr.mxu0 0.0
        %4744 = vmatpush2.msra.mxu0 0.0
        %4745 = vmatprep.subr.mxu0 0.0
        %4746 = vmatpush2.msra.mxu0 0.0
        %4747 = vmatprep.subr.mxu0 0.0
        %4748 = vmatpush2.msra.mxu0 0.0
        %4749 = vmatprep.subr.mxu0 0.0
        %4750 = vmatpush2.msra.mxu0 0.0
        %4751 = vmatprep.subr.mxu0 0.0
        %4752 = vmatpush2.msra.mxu0 0.0
        %4753 = vmatprep.subr.mxu0 0.0
        %4754 = vmatpush2.msra.mxu0 0.0
        %4755 = vmatprep.subr.mxu0 0.0
        %4756 = vmatpush2.msra.mxu0 0.0
        %4757 = vmatprep.subr.mxu0 0.0
        %4758 = vmatpush2.msra.mxu0 0.0
        %4759 = vmatprep.subr.mxu0 0.0
        %4760 = vmatpush2.msra.mxu0 0.0
        %4761 = vmatprep.subr.mxu0 0.0
        %4762 = vmatpush2.msra.mxu0 0.0
        %4763 = vmatprep.subr.mxu0 0.0
        %4764 = vmatpush2.msra.mxu0 0.0
        %4765 = vmatprep.subr.mxu0 0.0
        %4766 = vmatpush2.msra.mxu0 0.0
        %4767 = vmatprep.subr.mxu0 0.0
        %4768 = vmatpush2.msra.mxu0 0.0
        %4769 = vmatprep.subr.mxu0 0.0
        %4770 = vmatpush2.msra.mxu0 0.0
        %4771 = vmatprep.mubr.f32.mxu0 0.0
        %4772 = vmatmul.mubr.f32.gmra.mxu0 %v4636
        %v4773 = vpop.f32.mrf.mxu0
        %v4774 = vadd.f32 0.0, %v4773
        %v4775 = vpop.f32.mrf.mxu0
        %v4776 = vadd.f32 0.0, %v4775
        %4777 = vdwg.mxu0
        %4778 = vmatprep.subr.mxu0 %v4706
        %4779 = vmatpush1.msra.mxu0 %v4705
        %4780 = vmatprep.subr.mxu0 %v4702
        %4781 = vmatpush1.msra.mxu0 %v4701
        %4782 = vmatprep.subr.mxu0 %v4698
        %4783 = vmatpush1.msra.mxu0 %v4697
        %4784 = vmatprep.subr.mxu0 %v4694
        %4785 = vmatpush1.msra.mxu0 %v4693
        %4786 = vmatprep.subr.mxu0 %v4690
        %4787 = vmatpush1.msra.mxu0 %v4689
        %4788 = vmatprep.subr.mxu0 %v4686
        %4789 = vmatpush1.msra.mxu0 %v4685
        %4790 = vmatprep.subr.mxu0 %v4682
        %4791 = vmatpush1.msra.mxu0 %v4681
        %4792 = vmatprep.subr.mxu0 %v4678
        %4793 = vmatpush1.msra.mxu0 %v4677
        %4794 = vmatprep.subr.mxu0 %v4674
        %4795 = vmatpush1.msra.mxu0 %v4673
        %4796 = vmatprep.subr.mxu0 %v4670
        %4797 = vmatpush1.msra.mxu0 %v4669
        %4798 = vmatprep.subr.mxu0 %v4666
        %4799 = vmatpush1.msra.mxu0 %v4665
        %4800 = vmatprep.subr.mxu0 %v4662
        %4801 = vmatpush1.msra.mxu0 %v4661
        %4802 = vmatprep.subr.mxu0 %v4658
        %4803 = vmatpush1.msra.mxu0 %v4657
        %4804 = vmatprep.subr.mxu0 %v4654
        %4805 = vmatpush1.msra.mxu0 %v4653
        %4806 = vmatprep.subr.mxu0 %v4650
        %4807 = vmatpush1.msra.mxu0 %v4649
        %4808 = vmatprep.subr.mxu0 %v4646
        %4809 = vmatpush1.msra.mxu0 %v4645
        %4810 = vmatprep.subr.mxu0 0.0
        %4811 = vmatpush2.msra.mxu0 0.0
        %4812 = vmatprep.subr.mxu0 0.0
        %4813 = vmatpush2.msra.mxu0 0.0
        %4814 = vmatprep.subr.mxu0 0.0
        %4815 = vmatpush2.msra.mxu0 0.0
        %4816 = vmatprep.subr.mxu0 0.0
        %4817 = vmatpush2.msra.mxu0 0.0
        %4818 = vmatprep.subr.mxu0 0.0
        %4819 = vmatpush2.msra.mxu0 0.0
        %4820 = vmatprep.subr.mxu0 0.0
        %4821 = vmatpush2.msra.mxu0 0.0
        %4822 = vmatprep.subr.mxu0 0.0
        %4823 = vmatpush2.msra.mxu0 0.0
        %4824 = vmatprep.subr.mxu0 0.0
        %4825 = vmatpush2.msra.mxu0 0.0
        %4826 = vmatprep.subr.mxu0 0.0
        %4827 = vmatpush2.msra.mxu0 0.0
        %4828 = vmatprep.subr.mxu0 0.0
        %4829 = vmatpush2.msra.mxu0 0.0
        %4830 = vmatprep.subr.mxu0 0.0
        %4831 = vmatpush2.msra.mxu0 0.0
        %4832 = vmatprep.subr.mxu0 0.0
        %4833 = vmatpush2.msra.mxu0 0.0
        %4834 = vmatprep.subr.mxu0 0.0
        %4835 = vmatpush2.msra.mxu0 0.0
        %4836 = vmatprep.subr.mxu0 0.0
        %4837 = vmatpush2.msra.mxu0 0.0
        %4838 = vmatprep.subr.mxu0 0.0
        %4839 = vmatpush2.msra.mxu0 0.0
        %4840 = vmatprep.subr.mxu0 0.0
        %4841 = vmatpush2.msra.mxu0 0.0
        %4842 = vmatprep.mubr.f32.mxu0 0.0
        %4843 = vmatmul.mubr.f32.gmra.mxu0 %v4636
        %v4844 = vpop.f32.mrf.mxu0
        %v4845 = vadd.f32 0.0, %v4844
        %v4846 = vpop.f32.mrf.mxu0
        %v4847 = vadd.f32 0.0, %v4846
        %4848 = vdwg.mxu0
        %v4849 = vadd.f32 %v4639, %v4774
        %v4850 = vadd.f32 %v4640, %v4776
        %v4851 = vadd.f32 %v4641, %v4845
        %v4852 = vadd.f32 %v4642, %v4847
        %v4853 = vtanh.pop %v4849
        %v4854 = vtanh.pop %v4850
        %v4855 = vtanh.pop %v4851
        %v4856 = vtanh.pop %v4852
        %v4857 = vmul.f32 %v4853, 0.5
        %v4858 = vadd.f32 %v4857, 0.5
        %v4859 = vmul.f32 %v4854, 0.5
        %v4860 = vadd.f32 %v4859, 0.5
        %v4861 = vmul.f32 %v4856, 0.5
        %v4862 = vadd.f32 %v4861, 0.5
        %v4863 = vmul.f32 %v4860, %v4634
        %v4864 = vmul.f32 %v4858, %v4855
        %v4865 = vadd.f32 %v4863, %v4864
        %v4866 = vtanh.pop %v4865
        %v4867 = vmul.f32 %v4862, %v4866
        %v4868 = vmax.f32 %v4867, 0.0
        %4869 = vst [vmem:[#allocation2 + $0x8] sm:$0xff] %v4868
        %p4870 = scmp.eq.s32.totalorder %s21, 2
        // Predicated region
        $region61: #{siamese_lstm_forward.1} parent=35 // pred_check
          %p4871 = pneg %p4870
        $region62: #{siamese_lstm_forward.1} parent=35 // pred_check_branch
          %4873 = sbr.rel (%p4871) target = $region64
        $region63: #{siamese_lstm_forward.1} parent=35 // pred_region
          %4874 = vst [vmem:[%s4] sm:$0xff] %v4867
        $region64: #{siamese_lstm_forward.1} parent=35 // pred_fallthru
          _
        // Predicated region
        $region65: #{siamese_lstm_forward.1} parent=35 // pred_check
          %p4875 = pneg %p133
        $region66: #{siamese_lstm_forward.1} parent=35 // pred_check_branch
          %4877 = sbr.rel (%p4875) target = $region68
        $region67: #{siamese_lstm_forward.1} parent=35 // pred_region
          _
        $region68: #{siamese_lstm_forward.1} parent=35 // pred_fallthru
          _
        // Predicated region
        $region69: #{siamese_lstm_forward.1} parent=35 // pred_check
          %p4878 = pneg %p133
        $region70: #{siamese_lstm_forward.1} parent=35 // pred_check_branch
          %4880 = sbr.rel (%p4878) target = $region72
        $region71: #{siamese_lstm_forward.1} parent=35 // pred_region
          _
        $region72: #{siamese_lstm_forward.1} parent=35 // pred_fallthru
          _
      $region36: #{siamese_lstm_forward.1} parent=5 // pred_fallthru
        _
      %p4881 = scmp.le.s32.totalorder 2, %s16
      // Predicated region
      $region73: #{siamese_lstm_forward.1} parent=5 // pred_check
        %p4882 = pneg %p4881
      $region74: #{siamese_lstm_forward.1} parent=5 // pred_check_branch
        %4884 = sbr.rel (%p4882) target = $region76
      $region75: #{siamese_lstm_forward.1} parent=5 // pred_region
        %s4885 = ssub.s32 %s16, 2
      $region76: #{siamese_lstm_forward.1} parent=5 // pred_fallthru
        _
    $region6: #{siamese_lstm_forward.1} parent=1 // loop_footer
      %s20 = sadd.s32 1, %s16
    $region7: #{siamese_lstm_forward.1} parent=1 // loop_footer_branch
      %15 = sbr.rel target = $region3
    $region8: #{siamese_lstm_forward.1} parent=1 // loop_exit
      _
    %4886 = vsyncpa [#allocation6], 1
    %s4887 = scalar_lea.sflag [#allocation6], 1
    %4888 = vsyncpa %s4887, 1
    %4889 = vsyncpa [#allocation8], 1
    %s4890 = scalar_lea.sflag [#allocation8], 1
    %4891 = vsyncpa %s4890, 1

</llo_original>
